<compile_context>
chip_gen: v7x
topology: tpu7x:2x2x1
jax: 0.10.0
libtpu: 0.0.40
codegen_flags: <defaults>
</compile_context>

<pallas_src>
import jax
import jax.numpy as jnp
from jax.experimental import pallas as pl
from jax.experimental.pallas import tpu as pltpu

# Matmul-operand dtype.  Accumulation (preferred_element_type) and all gate /
# elementwise math stay float32.  bf16 halves weight DMA / VMEM residency and
# is MXU-native on v6e/v7x; set to jnp.float32 for a bit-exact f32 path.
_MXU_DTYPE = jnp.bfloat16

_WEIGHT_NAMES = ('wlx', 'blx', 'whf', 'whb', 'wgi', 'bgi', 'wgh', 'bgh',
                 'wgen', 'bgen')


def _round_up(x, m):
    return ((x + m - 1) // m) * m


def _pick_b_tile(nB, max_tile=64):
    """Batch rows per grid step.

    Big enough to fill the MXU M-dim of the recurrent (B,H)@(H,4H) and
    (B,nC)@(nC,3nC) matmuls and amortize per-grid-step overhead; once there is
    enough batch, keep >=2 grid steps so v7x's two TensorCores (grid axis is
    "parallel") both get work.  max_tile bounds the per-block VMEM footprint
    (re-derive for v7x's 64 MiB VMEM at production shapes).
    """
    if nB >= 16:
        return min(max_tile, _round_up(nB, 2) // 2)
    return min(nB, max_tile)


# ------------------------------------------------------------------
# Fused per-batch-tile kernel:
#   attention pooling -> biLSTM -> GRUCell decode -> generator Linear
# ------------------------------------------------------------------
def _dtd_fused_kernel(a_ref, feat_ref, prev_ref,
                      wlx_ref, blx_ref, whf_ref, whb_ref,
                      wgi_ref, bgi_ref, wgh_ref, bgh_ref,
                      wgen_ref, bgen_ref,
                      out_ref, anorm_ref):
    B, nT, _ = a_ref.shape            # (B_TILE, nT, HW_pad)
    nC = feat_ref.shape[2]            # feature block is (B_TILE, HW_pad, nC)
    H = whf_ref.shape[0]              # LSTM hidden per direction (= nC // 2)
    mxu_dt = wlx_ref.dtype

    # ---- 1. spatial normalization of A + attention pooling -----------------
    a = a_ref[...]                                              # (B, nT, HWp) f32
    # Exact divide (matches PyTorch; no epsilon).  Padded spatial lanes are 0.
    an = a / jnp.sum(a, axis=-1, keepdims=True)
    anorm_ref[...] = an                                         # lane-dense store
    # C[b,t,c] = sum_hw an[b,t,hw] * featT[b,hw,c]; featT was pre-transposed in
    # the wrapper so this is a plain batched MXU contraction.
    c = jnp.einsum('bth,bhc->btc', an.astype(mxu_dt), feat_ref[...],
                   preferred_element_type=jnp.float32)          # (B, nT, nC) f32

    # ---- 2. bidirectional LSTM (hidden = nC // 2 per direction) ------------
    # Hoisted, fused input projection for both directions: one
    # (B*nT, nC) @ (nC, 8H) matmul, 8H = 4*nC lanes (lane-dense).
    # Gate column order per direction is [i | f | o | g].
    c2 = c.reshape(B * nT, nC)
    x2 = jnp.dot(c2.astype(mxu_dt), wlx_ref[...],
                 preferred_element_type=jnp.float32) + blx_ref[...]   # (B*nT, 8H)
    x_all = x2.reshape(B, nT, 8 * H)
    whf = whf_ref[...]
    whb = whb_ref[...]

    def lstm_step(g, c_prev):
        s = jax.nn.sigmoid(g[:, :3 * H])        # i|f|o in one EUP push
        g_g = jnp.tanh(g[:, 3 * H:])
        c_new = s[:, H:2 * H] * c_prev + s[:, :H] * g_g
        return s[:, 2 * H:] * jnp.tanh(c_new), c_new

    hf = jnp.zeros((B, H), jnp.float32)
    cf = jnp.zeros((B, H), jnp.float32)
    hb = jnp.zeros((B, H), jnp.float32)
    cb = jnp.zeros((B, H), jnp.float32)
    hf_seq = [None] * nT
    hb_seq = [None] * nT
    # Fully unrolled (static nT): the fwd/bwd chains are independent and
    # interleave in one basic block; per-step states are carried in registers
    # and stored once after the loop (no masked per-row stores on the chain).
    # TODO(synk): for production nT (>~16) switch to lax.fori_loop(unroll=2..4)
    # with a VMEM scratch for the hidden sequences to bound vreg live ranges.
    for k in range(nT):
        tb = nT - 1 - k
        gf = x_all[:, k, :4 * H] + jnp.dot(hf.astype(mxu_dt), whf,
                                           preferred_element_type=jnp.float32)
        gb = x_all[:, tb, 4 * H:] + jnp.dot(hb.astype(mxu_dt), whb,
                                            preferred_element_type=jnp.float32)
        hf, cf = lstm_step(gf, cf)
        hb, cb = lstm_step(gb, cb)
        hf_seq[k] = hf
        hb_seq[tb] = hb

    # TODO(synk): F.dropout(p=0.3) on the LSTM output and the generator Dropout
    # are stochastic in PyTorch training mode; identity (eval semantics) here.

    # ---- 3. GRUCell decoder (teacher forcing) ------------------------------
    # Single hoisted input projection: pack [h_fwd | h_bwd | prev_emb] into one
    # (B*nT, 2*nC) LHS and hit the full (2*nC, 3*nC) GRU input weight once.
    x_gru = jnp.concatenate(
        [jnp.stack(hf_seq, axis=1).astype(mxu_dt),
         jnp.stack(hb_seq, axis=1).astype(mxu_dt),
         prev_ref[...]], axis=-1)                               # (B, nT, 2*nC)
    gi = (jnp.dot(x_gru.reshape(B * nT, 2 * nC), wgi_ref[...],
                  preferred_element_type=jnp.float32)
          + bgi_ref[...]).reshape(B, nT, 3 * nC)
    wgh = wgh_ref[...]
    bgh = bgh_ref[...]
    h = jnp.zeros((B, nC), jnp.float32)
    h_seq = [None] * nT
    for t in range(nT):                         # PyTorch gate order: r | z | n
        gh = jnp.dot(h.astype(mxu_dt), wgh,
                     preferred_element_type=jnp.float32) + bgh
        gi_t = gi[:, t, :]
        rz = jax.nn.sigmoid(gi_t[:, :2 * nC] + gh[:, :2 * nC])   # fused r,z
        n = jnp.tanh(gi_t[:, 2 * nC:] + rz[:, :nC] * gh[:, 2 * nC:])
        h = (1.0 - rz[:, nC:]) * n + rz[:, nC:] * h
        h_seq[t] = h
    # Steps >= max(text_length) are computed too; those rows are never selected
    # by the ragged packing, so returned values match PyTorch.

    # ---- 4. generator: Dropout (identity in eval) + Linear(nC -> nclass) ----
    # Generator weight is zero-padded to a 128-lane multiple outside the
    # kernel, so both the matmul N dim and the output store are lane-dense.
    gru2 = jnp.stack(h_seq, axis=1).reshape(B * nT, nC)
    logits = (jnp.dot(gru2.astype(mxu_dt), wgen_ref[...],
                      preferred_element_type=jnp.float32) + bgen_ref[...])
    out_ref[...] = logits.reshape(B, nT, out_ref.shape[-1])


def dtd_fused(A_p, featT, prev_p, kp, b_tile):
    """A_p: (nBp, nT, HWp) f32; featT: (nBp, HWp, nC); prev_p: (nBp, nT, nC)."""
    nBp, nT, HWp = A_p.shape
    nC = featT.shape[2]
    ncls_pad = kp['wgen'].shape[1]
    grid = (nBp // b_tile,)
    weights = [kp[name] for name in _WEIGHT_NAMES]

    def act_spec(shape):
        return pl.BlockSpec((b_tile,) + tuple(shape[1:]), lambda i: (i, 0, 0))

    # Rough per-step VMEM budget: double-buffered activation/output blocks +
    # single-buffered weights + slack for kernel-internal values.  Capped well
    # below v7x's 64 MiB physical VMEM.
    act_bytes = (A_p.dtype.itemsize * b_tile * nT * HWp
                 + featT.dtype.itemsize * b_tile * HWp * nC
                 + prev_p.dtype.itemsize * b_tile * nT * nC
                 + 4 * b_tile * nT * ncls_pad
                 + 4 * b_tile * nT * HWp)
    w_bytes = sum(int(w.size) * w.dtype.itemsize for w in weights)
    vmem_limit = int(min(56 << 20, max(32 << 20, 2 * act_bytes + w_bytes + (8 << 20))))

    def build(single_buffer_weights):
        if single_buffer_weights:
            # Constant-index weights: double-buffering them is pure VMEM waste.
            def weight_spec(w):
                return pl.BlockSpec(w.shape, lambda i, _nd=w.ndim: (0,) * _nd,
                                    pipeline_mode=pl.Buffered(1))
        else:
            def weight_spec(w):
                return pl.BlockSpec(w.shape, lambda i, _nd=w.ndim: (0,) * _nd)

        return pl.pallas_call(
            _dtd_fused_kernel,
            out_shape=(jax.ShapeDtypeStruct((nBp, nT, ncls_pad), jnp.float32),
                       jax.ShapeDtypeStruct((nBp, nT, HWp), jnp.float32)),
            grid=grid,
            in_specs=([act_spec(A_p.shape), act_spec(featT.shape),
                       act_spec(prev_p.shape)]
                      + [weight_spec(w) for w in weights]),
            out_specs=(pl.BlockSpec((b_tile, nT, ncls_pad), lambda i: (i, 0, 0)),
                       pl.BlockSpec((b_tile, nT, HWp), lambda i: (i, 0, 0))),
            compiler_params=pltpu.CompilerParams(
                dimension_semantics=("parallel",),
                vmem_limit_bytes=vmem_limit),
        )(A_p, featT, prev_p, *weights)

    try:
        return build(True)
    except Exception:
        # Fallback for jax versions that reject per-operand pl.Buffered(1);
        # identical kernel, default double-buffered weights.
        return build(False)


# ------------------------------------------------------------------
# Parameters (deterministic synthetic init matching nn.Module shapes)
# ------------------------------------------------------------------
def init_params(key, nclass, nchannel):
    H = nchannel // 2
    ks = jax.random.split(key, 16)

    def rn(k, shape, scale=0.1):
        return scale * jax.random.normal(k, shape, dtype=jnp.float32)

    return {
        'lstm_wih_f': rn(ks[0], (4 * H, nchannel)),
        'lstm_whh_f': rn(ks[1], (4 * H, H)),
        'lstm_bih_f': rn(ks[2], (4 * H,)),
        'lstm_bhh_f': rn(ks[3], (4 * H,)),
        'lstm_wih_b': rn(ks[4], (4 * H, nchannel)),
        'lstm_whh_b': rn(ks[5], (4 * H, H)),
        'lstm_bih_b': rn(ks[6], (4 * H,)),
        'lstm_bhh_b': rn(ks[7], (4 * H,)),
        'gru_wih': rn(ks[8], (3 * nchannel, 2 * nchannel)),
        'gru_whh': rn(ks[9], (3 * nchannel, nchannel)),
        'gru_bih': rn(ks[10], (3 * nchannel,)),
        'gru_bhh': rn(ks[11], (3 * nchannel,)),
        'gen_w': rn(ks[12], (nclass, nchannel)),
        'gen_b': rn(ks[13], (nclass,)),
        'char_embeddings': jax.random.normal(ks[14], (nclass, nchannel),
                                             dtype=jnp.float32),
    }


def prepare_params(params, mxu_dtype=_MXU_DTYPE):
    """One-time weight re-layout (out of the per-call forward path):
    transposes, [i,f,g,o]->[i,f,o,g] gate reorder, fwd|bwd input-weight fusion,
    generator lane-padding to 128, and bf16 cast of MXU operands."""
    nC = params['gru_whh'].shape[1]
    H = nC // 2
    ncls = params['gen_w'].shape[0]
    ncls_pad = _round_up(ncls, 128)

    def reorder_ifog(w, axis):
        i_, f_, g_, o_ = jnp.split(w, 4, axis=axis)
        return jnp.concatenate([i_, f_, o_, g_], axis=axis)

    wx_f = reorder_ifog(params['lstm_wih_f'].T, axis=1)            # (nC, 4H)
    wx_b = reorder_ifog(params['lstm_wih_b'].T, axis=1)
    b_f = reorder_ifog(params['lstm_bih_f'] + params['lstm_bhh_f'], axis=0)
    b_b = reorder_ifog(params['lstm_bih_b'] + params['lstm_bhh_b'], axis=0)

    wgen = jnp.zeros((nC, ncls_pad), jnp.float32).at[:, :ncls].set(params['gen_w'].T)
    bgen = jnp.zeros((1, ncls_pad), jnp.float32).at[:, :ncls].set(params['gen_b'][None, :])

    return {
        'wlx': jnp.concatenate([wx_f, wx_b], axis=1).astype(mxu_dtype),   # (nC, 8H)
        'blx': jnp.concatenate([b_f, b_b])[None, :],                      # (1, 8H) f32
        'whf': reorder_ifog(params['lstm_whh_f'].T, axis=1).astype(mxu_dtype),  # (H, 4H)
        'whb': reorder_ifog(params['lstm_whh_b'].T, axis=1).astype(mxu_dtype),
        'wgi': params['gru_wih'].T.astype(mxu_dtype),   # (2nC, 3nC) rows = [C_lstm | prev]
        'bgi': params['gru_bih'][None, :],
        'wgh': params['gru_whh'].T.astype(mxu_dtype),   # (nC, 3nC)
        'bgh': params['gru_bhh'][None, :],
        'wgen': wgen.astype(mxu_dtype),                 # (nC, ncls_pad)
        'bgen': bgen,
        'char_embeddings': params['char_embeddings'],
        'nclass': ncls,
    }


# ------------------------------------------------------------------
# Full forward (training branch, test=False, current_epoch=0 => teacher forcing)
# ------------------------------------------------------------------
def dtd_forward(feature, A, text, text_length, kp, b_tile=None):
    nB, nC, nH, nW = feature.shape
    nT = A.shape[1]
    HW = nH * nW
    hw_pad = _round_up(HW, 128)
    if b_tile is None:
        b_tile = _pick_b_tile(nB)
    nBp = _round_up(nB, b_tile)

    # Layout plumbing hoisted out of the kernel (once per call, XLA glue):
    #  * A -> (nB, nT, HW), zero-padded to a 128-lane multiple (lane-dense I/O)
    #  * feature -> (nB, HW, nC), pre-transposed so pooling is a plain matmul
    A_p = jnp.pad(A.reshape(nB, nT, HW), ((0, 0), (0, 0), (0, hw_pad - HW)))
    featT = jnp.pad(jnp.transpose(feature.reshape(nB, nC, HW), (0, 2, 1)),
                    ((0, 0), (0, hw_pad - HW), (0, 0))).astype(_MXU_DTYPE)

    # Teacher-forcing embedding sequence (XLA gather):
    #   prev[b, 0] = emb[0];  prev[b, i] = emb[text[b, i-1]]
    emb = kp['char_embeddings']
    prev0 = jnp.broadcast_to(emb[0][None, None, :], (nB, 1, nC))
    prev = jnp.concatenate([prev0, emb[text[:, :nT - 1]]], axis=1).astype(_MXU_DTYPE)

    if nBp != nB:  # pad batch to a multiple of the batch tile
        A_p = jnp.pad(A_p, ((0, nBp - nB), (0, 0), (0, 0)), constant_values=1.0)
        featT = jnp.pad(featT, ((0, nBp - nB), (0, 0), (0, 0)))
        prev = jnp.pad(prev, ((0, nBp - nB), (0, 0), (0, 0)))

    logits_p, anorm_p = dtd_fused(A_p, featT, prev, kp, b_tile)
    logits = logits_p[:nB, :, :kp['nclass']]          # drop batch / lane padding
    anorm = anorm_p[:nB, :, :HW]

    # Ragged packing by text_length (host-side glue; lengths are concrete).
    # TODO(synk): the test=True greedy-decode branch (data-dependent early stop)
    # and the scheduled-sampling branch (current_epoch > 0) are not implemented;
    # only the training/teacher-forcing branch is covered.
    lengths = [int(l) for l in jax.device_get(text_length)]
    out_res = jnp.concatenate([logits[i, :lengths[i], :] for i in range(nB)], axis=0)
    out_attns = jnp.concatenate(
        [anorm[i, :lengths[i]].reshape(lengths[i], nH, nW) for i in range(nB)], axis=0)
    return out_res, out_attns


if __name__ == "__main__":
    nB, nC, nH, nW = 2, 32, 8, 8      # nchannel = 32
    nT = 8
    nclass = 16

    key = jax.random.PRNGKey(0)
    k_feat, k_A, k_text, k_params = jax.random.split(key, 4)

    feature = jax.random.normal(k_feat, (nB, nC, nH, nW), dtype=jnp.float32)
    A = jax.random.uniform(k_A, (nB, nT, nH, nW), dtype=jnp.float32) + 0.1
    text = jax.random.randint(k_text, (nB, nT), 1, nclass).astype(jnp.int32)
    text_length = jnp.array([5, 8], dtype=jnp.int32)

    params = init_params(k_params, nclass, nC)
    kp = prepare_params(params)       # one-time weight re-layout / casts

    out_res, out_attns = dtd_forward(feature, A, text, text_length, kp)
    out_res = jax.block_until_ready(out_res)
    out_attns = jax.block_until_ready(out_attns)

    lenText = int(jnp.sum(text_length))
    assert out_res.shape == (lenText, nclass)
    assert out_attns.shape == (lenText, nH, nW)
    assert bool(jnp.all(jnp.isfinite(out_res)))
    assert bool(jnp.all(jnp.isfinite(out_attns)))
    print("KERNEL_OK")
</pallas_src>

<mosaic_0001>
module attributes {stable_mosaic.version = 11 : i64} {
  func.func @_dtd_fused_kernel(%arg0: i32, %arg1: memref<2x8x128xf32, #tpu.memory_space<vmem>>, %arg2: memref<2x128x32xbf16, #tpu.memory_space<vmem>>, %arg3: memref<2x8x32xbf16, #tpu.memory_space<vmem>>, %arg4: memref<32x128xbf16, #tpu.memory_space<vmem>>, %arg5: memref<1x128xf32, #tpu.memory_space<vmem>>, %arg6: memref<16x64xbf16, #tpu.memory_space<vmem>>, %arg7: memref<16x64xbf16, #tpu.memory_space<vmem>>, %arg8: memref<64x96xbf16, #tpu.memory_space<vmem>>, %arg9: memref<1x96xf32, #tpu.memory_space<vmem>>, %arg10: memref<32x96xbf16, #tpu.memory_space<vmem>>, %arg11: memref<1x96xf32, #tpu.memory_space<vmem>>, %arg12: memref<32x128xbf16, #tpu.memory_space<vmem>>, %arg13: memref<1x128xf32, #tpu.memory_space<vmem>>, %arg14: memref<2x8x128xf32, #tpu.memory_space<vmem>>, %arg15: memref<2x8x128xf32, #tpu.memory_space<vmem>>) attributes {dimension_semantics = [#tpu.dimension_semantics<parallel>], iteration_bounds = array<i64: 1>, scalar_prefetch = 0 : i64, scratch_operands = 0 : i64, tpu.core_type = #tpu.core_type<tc>, window_params = [{transform_indices = @transform_0, window_bounds = array<i64: 2, 8, 128>}, {transform_indices = @transform_1, window_bounds = array<i64: 2, 128, 32>}, {transform_indices = @transform_2, window_bounds = array<i64: 2, 8, 32>}, {pipeline_mode = #tpu.pipeline_mode<synchronous>, transform_indices = @transform_3, window_bounds = array<i64: 32, 128>}, {pipeline_mode = #tpu.pipeline_mode<synchronous>, transform_indices = @transform_4, window_bounds = array<i64: 1, 128>}, {pipeline_mode = #tpu.pipeline_mode<synchronous>, transform_indices = @transform_5, window_bounds = array<i64: 16, 64>}, {pipeline_mode = #tpu.pipeline_mode<synchronous>, transform_indices = @transform_6, window_bounds = array<i64: 16, 64>}, {pipeline_mode = #tpu.pipeline_mode<synchronous>, transform_indices = @transform_7, window_bounds = array<i64: 64, 96>}, {pipeline_mode = #tpu.pipeline_mode<synchronous>, transform_indices = @transform_8, window_bounds = array<i64: 1, 96>}, {pipeline_mode = #tpu.pipeline_mode<synchronous>, transform_indices = @transform_9, window_bounds = array<i64: 32, 96>}, {pipeline_mode = #tpu.pipeline_mode<synchronous>, transform_indices = @transform_10, window_bounds = array<i64: 1, 96>}, {pipeline_mode = #tpu.pipeline_mode<synchronous>, transform_indices = @transform_11, window_bounds = array<i64: 32, 128>}, {pipeline_mode = #tpu.pipeline_mode<synchronous>, transform_indices = @transform_12, window_bounds = array<i64: 1, 128>}, {transform_indices = @transform_13, window_bounds = array<i64: 2, 8, 128>}, {transform_indices = @transform_14, window_bounds = array<i64: 2, 8, 128>}]} {
    %c0 = arith.constant 0 : index
    %c0_0 = arith.constant 0 : index
    %c0_1 = arith.constant 0 : index
    %0 = vector.load %arg1[%c0, %c0_0, %c0_1] : memref<2x8x128xf32, #tpu.memory_space<vmem>>, vector<2x8x128xf32>
    %cst = arith.constant dense<0.000000e+00> : vector<2x8xf32>
    %1 = vector.multi_reduction <add>, %0, %cst [2] : vector<2x8x128xf32> to vector<2x8xf32>
    %2 = vector.shape_cast %1 : vector<2x8xf32> to vector<2x8x1xf32>
    %3 = vector.broadcast %2 : vector<2x8x1xf32> to vector<2x8x128xf32>
    %4 = arith.divf %0, %3 : vector<2x8x128xf32>
    %c0_2 = arith.constant 0 : index
    %c0_3 = arith.constant 0 : index
    %c0_4 = arith.constant 0 : index
    %5 = vector.load %arg15[%c0_2, %c0_3, %c0_4] : memref<2x8x128xf32, #tpu.memory_space<vmem>>, vector<2x8x128xf32>
    tpu.vector_store %arg15[%c0_2, %c0_3, %c0_4], %4 {strides = array<i32>} : memref<2x8x128xf32, #tpu.memory_space<vmem>>, vector<2x8x128xf32>,
    %6 = arith.truncf %4 : vector<2x8x128xf32> to vector<2x8x128xbf16>
    %c0_5 = arith.constant 0 : index
    %c0_6 = arith.constant 0 : index
    %c0_7 = arith.constant 0 : index
    %7 = vector.load %arg2[%c0_5, %c0_6, %c0_7] : memref<2x128x32xbf16, #tpu.memory_space<vmem>>, vector<2x128x32xbf16>
    "tpu.trace_start"() <{level = 10 : i32, message = "bth,bhc->btc"}> : () -> ()
    %cst_8 = arith.constant dense<0.000000e+00> : vector<2x8x32xf32>
    %8 = tpu.matmul %6, %7, %cst_8 {dimension_numbers = #tpu.dot_dimension_numbers<[2], [1], [1], [2], [0, 0, 0, 1, 1, 2], [0], [0]>} : vector<2x8x128xbf16>, vector<2x128x32xbf16>, vector<2x8x32xf32> -> vector<2x8x32xf32>
    "tpu.trace_stop"() : () -> ()
    %9 = vector.shape_cast %8 : vector<2x8x32xf32> to vector<16x32xf32>
    %10 = arith.truncf %9 : vector<16x32xf32> to vector<16x32xbf16>
    %c0_9 = arith.constant 0 : index
    %c0_10 = arith.constant 0 : index
    %11 = vector.load %arg4[%c0_9, %c0_10] : memref<32x128xbf16, #tpu.memory_space<vmem>>, vector<32x128xbf16>
    %cst_11 = arith.constant dense<0.000000e+00> : vector<16x128xf32>
    %12 = tpu.matmul %10, %11, %cst_11 {dimension_numbers = #tpu.dot_dimension_numbers<[1], [0], [0], [1], [0, 0, 1, 1], [], []>} : vector<16x32xbf16>, vector<32x128xbf16>, vector<16x128xf32> -> vector<16x128xf32>
    %c0_12 = arith.constant 0 : index
    %c0_13 = arith.constant 0 : index
    %13 = vector.load %arg5[%c0_12, %c0_13] : memref<1x128xf32, #tpu.memory_space<vmem>>, vector<1x128xf32>
    %14 = vector.broadcast %13 : vector<1x128xf32> to vector<16x128xf32>
    %15 = arith.addf %12, %14 : vector<16x128xf32>
    %16 = vector.shape_cast %15 : vector<16x128xf32> to vector<2x8x128xf32>
    %c0_14 = arith.constant 0 : index
    %c0_15 = arith.constant 0 : index
    %17 = vector.load %arg6[%c0_14, %c0_15] : memref<16x64xbf16, #tpu.memory_space<vmem>>, vector<16x64xbf16>
    %c0_16 = arith.constant 0 : index
    %c0_17 = arith.constant 0 : index
    %18 = vector.load %arg7[%c0_16, %c0_17] : memref<16x64xbf16, #tpu.memory_space<vmem>>, vector<16x64xbf16>
    %cst_18 = arith.constant 0.000000e+00 : f32
    %19 = vector.broadcast %cst_18 : f32 to vector<2x16xf32>
    %cst_19 = arith.constant 0.000000e+00 : f32
    %20 = vector.broadcast %cst_19 : f32 to vector<2x16xf32>
    %cst_20 = arith.constant 0.000000e+00 : f32
    %21 = vector.broadcast %cst_20 : f32 to vector<2x16xf32>
    %cst_21 = arith.constant 0.000000e+00 : f32
    %22 = vector.broadcast %cst_21 : f32 to vector<2x16xf32>
    %23 = vector.extract_strided_slice %16 {offsets = [0, 0, 0], sizes = [2, 1, 64], strides = [1, 1, 1]} : vector<2x8x128xf32> to vector<2x1x64xf32>
    %24 = vector.shape_cast %23 : vector<2x1x64xf32> to vector<2x64xf32>
    %25 = arith.truncf %19 : vector<2x16xf32> to vector<2x16xbf16>
    %cst_22 = arith.constant dense<0.000000e+00> : vector<2x64xf32>
    %26 = tpu.matmul %25, %17, %cst_22 {dimension_numbers = #tpu.dot_dimension_numbers<[1], [0], [0], [1], [0, 0, 1, 1], [], []>} : vector<2x16xbf16>, vector<16x64xbf16>, vector<2x64xf32> -> vector<2x64xf32>
    %27 = arith.addf %24, %26 : vector<2x64xf32>
    %28 = vector.extract_strided_slice %16 {offsets = [0, 7, 64], sizes = [2, 1, 64], strides = [1, 1, 1]} : vector<2x8x128xf32> to vector<2x1x64xf32>
    %29 = vector.shape_cast %28 : vector<2x1x64xf32> to vector<2x64xf32>
    %30 = arith.truncf %21 : vector<2x16xf32> to vector<2x16xbf16>
    %cst_23 = arith.constant dense<0.000000e+00> : vector<2x64xf32>
    %31 = tpu.matmul %30, %18, %cst_23 {dimension_numbers = #tpu.dot_dimension_numbers<[1], [0], [0], [1], [0, 0, 1, 1], [], []>} : vector<2x16xbf16>, vector<16x64xbf16>, vector<2x64xf32> -> vector<2x64xf32>
    %32 = arith.addf %29, %31 : vector<2x64xf32>
    %33 = vector.extract_strided_slice %27 {offsets = [0, 0], sizes = [2, 48], strides = [1, 1]} : vector<2x64xf32> to vector<2x48xf32>
    %34 = arith.negf %33 : vector<2x48xf32>
    %35 = math.exp %34 : vector<2x48xf32>
    %cst_24 = arith.constant 1.000000e+00 : f32
    %36 = vector.broadcast %cst_24 : f32 to vector<2x48xf32>
    %37 = arith.addf %36, %35 : vector<2x48xf32>
    %38 = arith.divf %36, %37 : vector<2x48xf32>
    %39 = vector.extract_strided_slice %27 {offsets = [0, 48], sizes = [2, 16], strides = [1, 1]} : vector<2x64xf32> to vector<2x16xf32>
    %40 = math.tanh %39 : vector<2x16xf32>
    %41 = vector.extract_strided_slice %38 {offsets = [0, 16], sizes = [2, 16], strides = [1, 1]} : vector<2x48xf32> to vector<2x16xf32>
    %42 = arith.mulf %41, %20 : vector<2x16xf32>
    %43 = vector.extract_strided_slice %38 {offsets = [0, 0], sizes = [2, 16], strides = [1, 1]} : vector<2x48xf32> to vector<2x16xf32>
    %44 = arith.mulf %43, %40 : vector<2x16xf32>
    %45 = arith.addf %42, %44 : vector<2x16xf32>
    %46 = vector.extract_strided_slice %38 {offsets = [0, 32], sizes = [2, 16], strides = [1, 1]} : vector<2x48xf32> to vector<2x16xf32>
    %47 = math.tanh %45 : vector<2x16xf32>
    %48 = arith.mulf %46, %47 : vector<2x16xf32>
    %49 = vector.extract_strided_slice %32 {offsets = [0, 0], sizes = [2, 48], strides = [1, 1]} : vector<2x64xf32> to vector<2x48xf32>
    %50 = arith.negf %49 : vector<2x48xf32>
    %51 = math.exp %50 : vector<2x48xf32>
    %cst_25 = arith.constant 1.000000e+00 : f32
    %52 = vector.broadcast %cst_25 : f32 to vector<2x48xf32>
    %53 = arith.addf %52, %51 : vector<2x48xf32>
    %54 = arith.divf %52, %53 : vector<2x48xf32>
    %55 = vector.extract_strided_slice %32 {offsets = [0, 48], sizes = [2, 16], strides = [1, 1]} : vector<2x64xf32> to vector<2x16xf32>
    %56 = math.tanh %55 : vector<2x16xf32>
    %57 = vector.extract_strided_slice %54 {offsets = [0, 16], sizes = [2, 16], strides = [1, 1]} : vector<2x48xf32> to vector<2x16xf32>
    %58 = arith.mulf %57, %22 : vector<2x16xf32>
    %59 = vector.extract_strided_slice %54 {offsets = [0, 0], sizes = [2, 16], strides = [1, 1]} : vector<2x48xf32> to vector<2x16xf32>
    %60 = arith.mulf %59, %56 : vector<2x16xf32>
    %61 = arith.addf %58, %60 : vector<2x16xf32>
    %62 = vector.extract_strided_slice %54 {offsets = [0, 32], sizes = [2, 16], strides = [1, 1]} : vector<2x48xf32> to vector<2x16xf32>
    %63 = math.tanh %61 : vector<2x16xf32>
    %64 = arith.mulf %62, %63 : vector<2x16xf32>
    %65 = vector.extract_strided_slice %16 {offsets = [0, 1, 0], sizes = [2, 1, 64], strides = [1, 1, 1]} : vector<2x8x128xf32> to vector<2x1x64xf32>
    %66 = vector.shape_cast %65 : vector<2x1x64xf32> to vector<2x64xf32>
    %67 = arith.truncf %48 : vector<2x16xf32> to vector<2x16xbf16>
    %cst_26 = arith.constant dense<0.000000e+00> : vector<2x64xf32>
    %68 = tpu.matmul %67, %17, %cst_26 {dimension_numbers = #tpu.dot_dimension_numbers<[1], [0], [0], [1], [0, 0, 1, 1], [], []>} : vector<2x16xbf16>, vector<16x64xbf16>, vector<2x64xf32> -> vector<2x64xf32>
    %69 = arith.addf %66, %68 : vector<2x64xf32>
    %70 = vector.extract_strided_slice %16 {offsets = [0, 6, 64], sizes = [2, 1, 64], strides = [1, 1, 1]} : vector<2x8x128xf32> to vector<2x1x64xf32>
    %71 = vector.shape_cast %70 : vector<2x1x64xf32> to vector<2x64xf32>
    %72 = arith.truncf %64 : vector<2x16xf32> to vector<2x16xbf16>
    %cst_27 = arith.constant dense<0.000000e+00> : vector<2x64xf32>
    %73 = tpu.matmul %72, %18, %cst_27 {dimension_numbers = #tpu.dot_dimension_numbers<[1], [0], [0], [1], [0, 0, 1, 1], [], []>} : vector<2x16xbf16>, vector<16x64xbf16>, vector<2x64xf32> -> vector<2x64xf32>
    %74 = arith.addf %71, %73 : vector<2x64xf32>
    %75 = vector.extract_strided_slice %69 {offsets = [0, 0], sizes = [2, 48], strides = [1, 1]} : vector<2x64xf32> to vector<2x48xf32>
    %76 = arith.negf %75 : vector<2x48xf32>
    %77 = math.exp %76 : vector<2x48xf32>
    %cst_28 = arith.constant 1.000000e+00 : f32
    %78 = vector.broadcast %cst_28 : f32 to vector<2x48xf32>
    %79 = arith.addf %78, %77 : vector<2x48xf32>
    %80 = arith.divf %78, %79 : vector<2x48xf32>
    %81 = vector.extract_strided_slice %69 {offsets = [0, 48], sizes = [2, 16], strides = [1, 1]} : vector<2x64xf32> to vector<2x16xf32>
    %82 = math.tanh %81 : vector<2x16xf32>
    %83 = vector.extract_strided_slice %80 {offsets = [0, 16], sizes = [2, 16], strides = [1, 1]} : vector<2x48xf32> to vector<2x16xf32>
    %84 = arith.mulf %83, %45 : vector<2x16xf32>
    %85 = vector.extract_strided_slice %80 {offsets = [0, 0], sizes = [2, 16], strides = [1, 1]} : vector<2x48xf32> to vector<2x16xf32>
    %86 = arith.mulf %85, %82 : vector<2x16xf32>
    %87 = arith.addf %84, %86 : vector<2x16xf32>
    %88 = vector.extract_strided_slice %80 {offsets = [0, 32], sizes = [2, 16], strides = [1, 1]} : vector<2x48xf32> to vector<2x16xf32>
    %89 = math.tanh %87 : vector<2x16xf32>
    %90 = arith.mulf %88, %89 : vector<2x16xf32>
    %91 = vector.extract_strided_slice %74 {offsets = [0, 0], sizes = [2, 48], strides = [1, 1]} : vector<2x64xf32> to vector<2x48xf32>
    %92 = arith.negf %91 : vector<2x48xf32>
    %93 = math.exp %92 : vector<2x48xf32>
    %cst_29 = arith.constant 1.000000e+00 : f32
    %94 = vector.broadcast %cst_29 : f32 to vector<2x48xf32>
    %95 = arith.addf %94, %93 : vector<2x48xf32>
    %96 = arith.divf %94, %95 : vector<2x48xf32>
    %97 = vector.extract_strided_slice %74 {offsets = [0, 48], sizes = [2, 16], strides = [1, 1]} : vector<2x64xf32> to vector<2x16xf32>
    %98 = math.tanh %97 : vector<2x16xf32>
    %99 = vector.extract_strided_slice %96 {offsets = [0, 16], sizes = [2, 16], strides = [1, 1]} : vector<2x48xf32> to vector<2x16xf32>
    %100 = arith.mulf %99, %61 : vector<2x16xf32>
    %101 = vector.extract_strided_slice %96 {offsets = [0, 0], sizes = [2, 16], strides = [1, 1]} : vector<2x48xf32> to vector<2x16xf32>
    %102 = arith.mulf %101, %98 : vector<2x16xf32>
    %103 = arith.addf %100, %102 : vector<2x16xf32>
    %104 = vector.extract_strided_slice %96 {offsets = [0, 32], sizes = [2, 16], strides = [1, 1]} : vector<2x48xf32> to vector<2x16xf32>
    %105 = math.tanh %103 : vector<2x16xf32>
    %106 = arith.mulf %104, %105 : vector<2x16xf32>
    %107 = vector.extract_strided_slice %16 {offsets = [0, 2, 0], sizes = [2, 1, 64], strides = [1, 1, 1]} : vector<2x8x128xf32> to vector<2x1x64xf32>
    %108 = vector.shape_cast %107 : vector<2x1x64xf32> to vector<2x64xf32>
    %109 = arith.truncf %90 : vector<2x16xf32> to vector<2x16xbf16>
    %cst_30 = arith.constant dense<0.000000e+00> : vector<2x64xf32>
    %110 = tpu.matmul %109, %17, %cst_30 {dimension_numbers = #tpu.dot_dimension_numbers<[1], [0], [0], [1], [0, 0, 1, 1], [], []>} : vector<2x16xbf16>, vector<16x64xbf16>, vector<2x64xf32> -> vector<2x64xf32>
    %111 = arith.addf %108, %110 : vector<2x64xf32>
    %112 = vector.extract_strided_slice %16 {offsets = [0, 5, 64], sizes = [2, 1, 64], strides = [1, 1, 1]} : vector<2x8x128xf32> to vector<2x1x64xf32>
    %113 = vector.shape_cast %112 : vector<2x1x64xf32> to vector<2x64xf32>
    %114 = arith.truncf %106 : vector<2x16xf32> to vector<2x16xbf16>
    %cst_31 = arith.constant dense<0.000000e+00> : vector<2x64xf32>
    %115 = tpu.matmul %114, %18, %cst_31 {dimension_numbers = #tpu.dot_dimension_numbers<[1], [0], [0], [1], [0, 0, 1, 1], [], []>} : vector<2x16xbf16>, vector<16x64xbf16>, vector<2x64xf32> -> vector<2x64xf32>
    %116 = arith.addf %113, %115 : vector<2x64xf32>
    %117 = vector.extract_strided_slice %111 {offsets = [0, 0], sizes = [2, 48], strides = [1, 1]} : vector<2x64xf32> to vector<2x48xf32>
    %118 = arith.negf %117 : vector<2x48xf32>
    %119 = math.exp %118 : vector<2x48xf32>
    %cst_32 = arith.constant 1.000000e+00 : f32
    %120 = vector.broadcast %cst_32 : f32 to vector<2x48xf32>
    %121 = arith.addf %120, %119 : vector<2x48xf32>
    %122 = arith.divf %120, %121 : vector<2x48xf32>
    %123 = vector.extract_strided_slice %111 {offsets = [0, 48], sizes = [2, 16], strides = [1, 1]} : vector<2x64xf32> to vector<2x16xf32>
    %124 = math.tanh %123 : vector<2x16xf32>
    %125 = vector.extract_strided_slice %122 {offsets = [0, 16], sizes = [2, 16], strides = [1, 1]} : vector<2x48xf32> to vector<2x16xf32>
    %126 = arith.mulf %125, %87 : vector<2x16xf32>
    %127 = vector.extract_strided_slice %122 {offsets = [0, 0], sizes = [2, 16], strides = [1, 1]} : vector<2x48xf32> to vector<2x16xf32>
    %128 = arith.mulf %127, %124 : vector<2x16xf32>
    %129 = arith.addf %126, %128 : vector<2x16xf32>
    %130 = vector.extract_strided_slice %122 {offsets = [0, 32], sizes = [2, 16], strides = [1, 1]} : vector<2x48xf32> to vector<2x16xf32>
    %131 = math.tanh %129 : vector<2x16xf32>
    %132 = arith.mulf %130, %131 : vector<2x16xf32>
    %133 = vector.extract_strided_slice %116 {offsets = [0, 0], sizes = [2, 48], strides = [1, 1]} : vector<2x64xf32> to vector<2x48xf32>
    %134 = arith.negf %133 : vector<2x48xf32>
    %135 = math.exp %134 : vector<2x48xf32>
    %cst_33 = arith.constant 1.000000e+00 : f32
    %136 = vector.broadcast %cst_33 : f32 to vector<2x48xf32>
    %137 = arith.addf %136, %135 : vector<2x48xf32>
    %138 = arith.divf %136, %137 : vector<2x48xf32>
    %139 = vector.extract_strided_slice %116 {offsets = [0, 48], sizes = [2, 16], strides = [1, 1]} : vector<2x64xf32> to vector<2x16xf32>
    %140 = math.tanh %139 : vector<2x16xf32>
    %141 = vector.extract_strided_slice %138 {offsets = [0, 16], sizes = [2, 16], strides = [1, 1]} : vector<2x48xf32> to vector<2x16xf32>
    %142 = arith.mulf %141, %103 : vector<2x16xf32>
    %143 = vector.extract_strided_slice %138 {offsets = [0, 0], sizes = [2, 16], strides = [1, 1]} : vector<2x48xf32> to vector<2x16xf32>
    %144 = arith.mulf %143, %140 : vector<2x16xf32>
    %145 = arith.addf %142, %144 : vector<2x16xf32>
    %146 = vector.extract_strided_slice %138 {offsets = [0, 32], sizes = [2, 16], strides = [1, 1]} : vector<2x48xf32> to vector<2x16xf32>
    %147 = math.tanh %145 : vector<2x16xf32>
    %148 = arith.mulf %146, %147 : vector<2x16xf32>
    %149 = vector.extract_strided_slice %16 {offsets = [0, 3, 0], sizes = [2, 1, 64], strides = [1, 1, 1]} : vector<2x8x128xf32> to vector<2x1x64xf32>
    %150 = vector.shape_cast %149 : vector<2x1x64xf32> to vector<2x64xf32>
    %151 = arith.truncf %132 : vector<2x16xf32> to vector<2x16xbf16>
    %cst_34 = arith.constant dense<0.000000e+00> : vector<2x64xf32>
    %152 = tpu.matmul %151, %17, %cst_34 {dimension_numbers = #tpu.dot_dimension_numbers<[1], [0], [0], [1], [0, 0, 1, 1], [], []>} : vector<2x16xbf16>, vector<16x64xbf16>, vector<2x64xf32> -> vector<2x64xf32>
    %153 = arith.addf %150, %152 : vector<2x64xf32>
    %154 = vector.extract_strided_slice %16 {offsets = [0, 4, 64], sizes = [2, 1, 64], strides = [1, 1, 1]} : vector<2x8x128xf32> to vector<2x1x64xf32>
    %155 = vector.shape_cast %154 : vector<2x1x64xf32> to vector<2x64xf32>
    %156 = arith.truncf %148 : vector<2x16xf32> to vector<2x16xbf16>
    %cst_35 = arith.constant dense<0.000000e+00> : vector<2x64xf32>
    %157 = tpu.matmul %156, %18, %cst_35 {dimension_numbers = #tpu.dot_dimension_numbers<[1], [0], [0], [1], [0, 0, 1, 1], [], []>} : vector<2x16xbf16>, vector<16x64xbf16>, vector<2x64xf32> -> vector<2x64xf32>
    %158 = arith.addf %155, %157 : vector<2x64xf32>
    %159 = vector.extract_strided_slice %153 {offsets = [0, 0], sizes = [2, 48], strides = [1, 1]} : vector<2x64xf32> to vector<2x48xf32>
    %160 = arith.negf %159 : vector<2x48xf32>
    %161 = math.exp %160 : vector<2x48xf32>
    %cst_36 = arith.constant 1.000000e+00 : f32
    %162 = vector.broadcast %cst_36 : f32 to vector<2x48xf32>
    %163 = arith.addf %162, %161 : vector<2x48xf32>
    %164 = arith.divf %162, %163 : vector<2x48xf32>
    %165 = vector.extract_strided_slice %153 {offsets = [0, 48], sizes = [2, 16], strides = [1, 1]} : vector<2x64xf32> to vector<2x16xf32>
    %166 = math.tanh %165 : vector<2x16xf32>
    %167 = vector.extract_strided_slice %164 {offsets = [0, 16], sizes = [2, 16], strides = [1, 1]} : vector<2x48xf32> to vector<2x16xf32>
    %168 = arith.mulf %167, %129 : vector<2x16xf32>
    %169 = vector.extract_strided_slice %164 {offsets = [0, 0], sizes = [2, 16], strides = [1, 1]} : vector<2x48xf32> to vector<2x16xf32>
    %170 = arith.mulf %169, %166 : vector<2x16xf32>
    %171 = arith.addf %168, %170 : vector<2x16xf32>
    %172 = vector.extract_strided_slice %164 {offsets = [0, 32], sizes = [2, 16], strides = [1, 1]} : vector<2x48xf32> to vector<2x16xf32>
    %173 = math.tanh %171 : vector<2x16xf32>
    %174 = arith.mulf %172, %173 : vector<2x16xf32>
    %175 = vector.extract_strided_slice %158 {offsets = [0, 0], sizes = [2, 48], strides = [1, 1]} : vector<2x64xf32> to vector<2x48xf32>
    %176 = arith.negf %175 : vector<2x48xf32>
    %177 = math.exp %176 : vector<2x48xf32>
    %cst_37 = arith.constant 1.000000e+00 : f32
    %178 = vector.broadcast %cst_37 : f32 to vector<2x48xf32>
    %179 = arith.addf %178, %177 : vector<2x48xf32>
    %180 = arith.divf %178, %179 : vector<2x48xf32>
    %181 = vector.extract_strided_slice %158 {offsets = [0, 48], sizes = [2, 16], strides = [1, 1]} : vector<2x64xf32> to vector<2x16xf32>
    %182 = math.tanh %181 : vector<2x16xf32>
    %183 = vector.extract_strided_slice %180 {offsets = [0, 16], sizes = [2, 16], strides = [1, 1]} : vector<2x48xf32> to vector<2x16xf32>
    %184 = arith.mulf %183, %145 : vector<2x16xf32>
    %185 = vector.extract_strided_slice %180 {offsets = [0, 0], sizes = [2, 16], strides = [1, 1]} : vector<2x48xf32> to vector<2x16xf32>
    %186 = arith.mulf %185, %182 : vector<2x16xf32>
    %187 = arith.addf %184, %186 : vector<2x16xf32>
    %188 = vector.extract_strided_slice %180 {offsets = [0, 32], sizes = [2, 16], strides = [1, 1]} : vector<2x48xf32> to vector<2x16xf32>
    %189 = math.tanh %187 : vector<2x16xf32>
    %190 = arith.mulf %188, %189 : vector<2x16xf32>
    %191 = vector.extract_strided_slice %16 {offsets = [0, 4, 0], sizes = [2, 1, 64], strides = [1, 1, 1]} : vector<2x8x128xf32> to vector<2x1x64xf32>
    %192 = vector.shape_cast %191 : vector<2x1x64xf32> to vector<2x64xf32>
    %193 = arith.truncf %174 : vector<2x16xf32> to vector<2x16xbf16>
    %cst_38 = arith.constant dense<0.000000e+00> : vector<2x64xf32>
    %194 = tpu.matmul %193, %17, %cst_38 {dimension_numbers = #tpu.dot_dimension_numbers<[1], [0], [0], [1], [0, 0, 1, 1], [], []>} : vector<2x16xbf16>, vector<16x64xbf16>, vector<2x64xf32> -> vector<2x64xf32>
    %195 = arith.addf %192, %194 : vector<2x64xf32>
    %196 = vector.extract_strided_slice %16 {offsets = [0, 3, 64], sizes = [2, 1, 64], strides = [1, 1, 1]} : vector<2x8x128xf32> to vector<2x1x64xf32>
    %197 = vector.shape_cast %196 : vector<2x1x64xf32> to vector<2x64xf32>
    %198 = arith.truncf %190 : vector<2x16xf32> to vector<2x16xbf16>
    %cst_39 = arith.constant dense<0.000000e+00> : vector<2x64xf32>
    %199 = tpu.matmul %198, %18, %cst_39 {dimension_numbers = #tpu.dot_dimension_numbers<[1], [0], [0], [1], [0, 0, 1, 1], [], []>} : vector<2x16xbf16>, vector<16x64xbf16>, vector<2x64xf32> -> vector<2x64xf32>
    %200 = arith.addf %197, %199 : vector<2x64xf32>
    %201 = vector.extract_strided_slice %195 {offsets = [0, 0], sizes = [2, 48], strides = [1, 1]} : vector<2x64xf32> to vector<2x48xf32>
    %202 = arith.negf %201 : vector<2x48xf32>
    %203 = math.exp %202 : vector<2x48xf32>
    %cst_40 = arith.constant 1.000000e+00 : f32
    %204 = vector.broadcast %cst_40 : f32 to vector<2x48xf32>
    %205 = arith.addf %204, %203 : vector<2x48xf32>
    %206 = arith.divf %204, %205 : vector<2x48xf32>
    %207 = vector.extract_strided_slice %195 {offsets = [0, 48], sizes = [2, 16], strides = [1, 1]} : vector<2x64xf32> to vector<2x16xf32>
    %208 = math.tanh %207 : vector<2x16xf32>
    %209 = vector.extract_strided_slice %206 {offsets = [0, 16], sizes = [2, 16], strides = [1, 1]} : vector<2x48xf32> to vector<2x16xf32>
    %210 = arith.mulf %209, %171 : vector<2x16xf32>
    %211 = vector.extract_strided_slice %206 {offsets = [0, 0], sizes = [2, 16], strides = [1, 1]} : vector<2x48xf32> to vector<2x16xf32>
    %212 = arith.mulf %211, %208 : vector<2x16xf32>
    %213 = arith.addf %210, %212 : vector<2x16xf32>
    %214 = vector.extract_strided_slice %206 {offsets = [0, 32], sizes = [2, 16], strides = [1, 1]} : vector<2x48xf32> to vector<2x16xf32>
    %215 = math.tanh %213 : vector<2x16xf32>
    %216 = arith.mulf %214, %215 : vector<2x16xf32>
    %217 = vector.extract_strided_slice %200 {offsets = [0, 0], sizes = [2, 48], strides = [1, 1]} : vector<2x64xf32> to vector<2x48xf32>
    %218 = arith.negf %217 : vector<2x48xf32>
    %219 = math.exp %218 : vector<2x48xf32>
    %cst_41 = arith.constant 1.000000e+00 : f32
    %220 = vector.broadcast %cst_41 : f32 to vector<2x48xf32>
    %221 = arith.addf %220, %219 : vector<2x48xf32>
    %222 = arith.divf %220, %221 : vector<2x48xf32>
    %223 = vector.extract_strided_slice %200 {offsets = [0, 48], sizes = [2, 16], strides = [1, 1]} : vector<2x64xf32> to vector<2x16xf32>
    %224 = math.tanh %223 : vector<2x16xf32>
    %225 = vector.extract_strided_slice %222 {offsets = [0, 16], sizes = [2, 16], strides = [1, 1]} : vector<2x48xf32> to vector<2x16xf32>
    %226 = arith.mulf %225, %187 : vector<2x16xf32>
    %227 = vector.extract_strided_slice %222 {offsets = [0, 0], sizes = [2, 16], strides = [1, 1]} : vector<2x48xf32> to vector<2x16xf32>
    %228 = arith.mulf %227, %224 : vector<2x16xf32>
    %229 = arith.addf %226, %228 : vector<2x16xf32>
    %230 = vector.extract_strided_slice %222 {offsets = [0, 32], sizes = [2, 16], strides = [1, 1]} : vector<2x48xf32> to vector<2x16xf32>
    %231 = math.tanh %229 : vector<2x16xf32>
    %232 = arith.mulf %230, %231 : vector<2x16xf32>
    %233 = vector.extract_strided_slice %16 {offsets = [0, 5, 0], sizes = [2, 1, 64], strides = [1, 1, 1]} : vector<2x8x128xf32> to vector<2x1x64xf32>
    %234 = vector.shape_cast %233 : vector<2x1x64xf32> to vector<2x64xf32>
    %235 = arith.truncf %216 : vector<2x16xf32> to vector<2x16xbf16>
    %cst_42 = arith.constant dense<0.000000e+00> : vector<2x64xf32>
    %236 = tpu.matmul %235, %17, %cst_42 {dimension_numbers = #tpu.dot_dimension_numbers<[1], [0], [0], [1], [0, 0, 1, 1], [], []>} : vector<2x16xbf16>, vector<16x64xbf16>, vector<2x64xf32> -> vector<2x64xf32>
    %237 = arith.addf %234, %236 : vector<2x64xf32>
    %238 = vector.extract_strided_slice %16 {offsets = [0, 2, 64], sizes = [2, 1, 64], strides = [1, 1, 1]} : vector<2x8x128xf32> to vector<2x1x64xf32>
    %239 = vector.shape_cast %238 : vector<2x1x64xf32> to vector<2x64xf32>
    %240 = arith.truncf %232 : vector<2x16xf32> to vector<2x16xbf16>
    %cst_43 = arith.constant dense<0.000000e+00> : vector<2x64xf32>
    %241 = tpu.matmul %240, %18, %cst_43 {dimension_numbers = #tpu.dot_dimension_numbers<[1], [0], [0], [1], [0, 0, 1, 1], [], []>} : vector<2x16xbf16>, vector<16x64xbf16>, vector<2x64xf32> -> vector<2x64xf32>
    %242 = arith.addf %239, %241 : vector<2x64xf32>
    %243 = vector.extract_strided_slice %237 {offsets = [0, 0], sizes = [2, 48], strides = [1, 1]} : vector<2x64xf32> to vector<2x48xf32>
    %244 = arith.negf %243 : vector<2x48xf32>
    %245 = math.exp %244 : vector<2x48xf32>
    %cst_44 = arith.constant 1.000000e+00 : f32
    %246 = vector.broadcast %cst_44 : f32 to vector<2x48xf32>
    %247 = arith.addf %246, %245 : vector<2x48xf32>
    %248 = arith.divf %246, %247 : vector<2x48xf32>
    %249 = vector.extract_strided_slice %237 {offsets = [0, 48], sizes = [2, 16], strides = [1, 1]} : vector<2x64xf32> to vector<2x16xf32>
    %250 = math.tanh %249 : vector<2x16xf32>
    %251 = vector.extract_strided_slice %248 {offsets = [0, 16], sizes = [2, 16], strides = [1, 1]} : vector<2x48xf32> to vector<2x16xf32>
    %252 = arith.mulf %251, %213 : vector<2x16xf32>
    %253 = vector.extract_strided_slice %248 {offsets = [0, 0], sizes = [2, 16], strides = [1, 1]} : vector<2x48xf32> to vector<2x16xf32>
    %254 = arith.mulf %253, %250 : vector<2x16xf32>
    %255 = arith.addf %252, %254 : vector<2x16xf32>
    %256 = vector.extract_strided_slice %248 {offsets = [0, 32], sizes = [2, 16], strides = [1, 1]} : vector<2x48xf32> to vector<2x16xf32>
    %257 = math.tanh %255 : vector<2x16xf32>
    %258 = arith.mulf %256, %257 : vector<2x16xf32>
    %259 = vector.extract_strided_slice %242 {offsets = [0, 0], sizes = [2, 48], strides = [1, 1]} : vector<2x64xf32> to vector<2x48xf32>
    %260 = arith.negf %259 : vector<2x48xf32>
    %261 = math.exp %260 : vector<2x48xf32>
    %cst_45 = arith.constant 1.000000e+00 : f32
    %262 = vector.broadcast %cst_45 : f32 to vector<2x48xf32>
    %263 = arith.addf %262, %261 : vector<2x48xf32>
    %264 = arith.divf %262, %263 : vector<2x48xf32>
    %265 = vector.extract_strided_slice %242 {offsets = [0, 48], sizes = [2, 16], strides = [1, 1]} : vector<2x64xf32> to vector<2x16xf32>
    %266 = math.tanh %265 : vector<2x16xf32>
    %267 = vector.extract_strided_slice %264 {offsets = [0, 16], sizes = [2, 16], strides = [1, 1]} : vector<2x48xf32> to vector<2x16xf32>
    %268 = arith.mulf %267, %229 : vector<2x16xf32>
    %269 = vector.extract_strided_slice %264 {offsets = [0, 0], sizes = [2, 16], strides = [1, 1]} : vector<2x48xf32> to vector<2x16xf32>
    %270 = arith.mulf %269, %266 : vector<2x16xf32>
    %271 = arith.addf %268, %270 : vector<2x16xf32>
    %272 = vector.extract_strided_slice %264 {offsets = [0, 32], sizes = [2, 16], strides = [1, 1]} : vector<2x48xf32> to vector<2x16xf32>
    %273 = math.tanh %271 : vector<2x16xf32>
    %274 = arith.mulf %272, %273 : vector<2x16xf32>
    %275 = vector.extract_strided_slice %16 {offsets = [0, 6, 0], sizes = [2, 1, 64], strides = [1, 1, 1]} : vector<2x8x128xf32> to vector<2x1x64xf32>
    %276 = vector.shape_cast %275 : vector<2x1x64xf32> to vector<2x64xf32>
    %277 = arith.truncf %258 : vector<2x16xf32> to vector<2x16xbf16>
    %cst_46 = arith.constant dense<0.000000e+00> : vector<2x64xf32>
    %278 = tpu.matmul %277, %17, %cst_46 {dimension_numbers = #tpu.dot_dimension_numbers<[1], [0], [0], [1], [0, 0, 1, 1], [], []>} : vector<2x16xbf16>, vector<16x64xbf16>, vector<2x64xf32> -> vector<2x64xf32>
    %279 = arith.addf %276, %278 : vector<2x64xf32>
    %280 = vector.extract_strided_slice %16 {offsets = [0, 1, 64], sizes = [2, 1, 64], strides = [1, 1, 1]} : vector<2x8x128xf32> to vector<2x1x64xf32>
    %281 = vector.shape_cast %280 : vector<2x1x64xf32> to vector<2x64xf32>
    %282 = arith.truncf %274 : vector<2x16xf32> to vector<2x16xbf16>
    %cst_47 = arith.constant dense<0.000000e+00> : vector<2x64xf32>
    %283 = tpu.matmul %282, %18, %cst_47 {dimension_numbers = #tpu.dot_dimension_numbers<[1], [0], [0], [1], [0, 0, 1, 1], [], []>} : vector<2x16xbf16>, vector<16x64xbf16>, vector<2x64xf32> -> vector<2x64xf32>
    %284 = arith.addf %281, %283 : vector<2x64xf32>
    %285 = vector.extract_strided_slice %279 {offsets = [0, 0], sizes = [2, 48], strides = [1, 1]} : vector<2x64xf32> to vector<2x48xf32>
    %286 = arith.negf %285 : vector<2x48xf32>
    %287 = math.exp %286 : vector<2x48xf32>
    %cst_48 = arith.constant 1.000000e+00 : f32
    %288 = vector.broadcast %cst_48 : f32 to vector<2x48xf32>
    %289 = arith.addf %288, %287 : vector<2x48xf32>
    %290 = arith.divf %288, %289 : vector<2x48xf32>
    %291 = vector.extract_strided_slice %279 {offsets = [0, 48], sizes = [2, 16], strides = [1, 1]} : vector<2x64xf32> to vector<2x16xf32>
    %292 = math.tanh %291 : vector<2x16xf32>
    %293 = vector.extract_strided_slice %290 {offsets = [0, 16], sizes = [2, 16], strides = [1, 1]} : vector<2x48xf32> to vector<2x16xf32>
    %294 = arith.mulf %293, %255 : vector<2x16xf32>
    %295 = vector.extract_strided_slice %290 {offsets = [0, 0], sizes = [2, 16], strides = [1, 1]} : vector<2x48xf32> to vector<2x16xf32>
    %296 = arith.mulf %295, %292 : vector<2x16xf32>
    %297 = arith.addf %294, %296 : vector<2x16xf32>
    %298 = vector.extract_strided_slice %290 {offsets = [0, 32], sizes = [2, 16], strides = [1, 1]} : vector<2x48xf32> to vector<2x16xf32>
    %299 = math.tanh %297 : vector<2x16xf32>
    %300 = arith.mulf %298, %299 : vector<2x16xf32>
    %301 = vector.extract_strided_slice %284 {offsets = [0, 0], sizes = [2, 48], strides = [1, 1]} : vector<2x64xf32> to vector<2x48xf32>
    %302 = arith.negf %301 : vector<2x48xf32>
    %303 = math.exp %302 : vector<2x48xf32>
    %cst_49 = arith.constant 1.000000e+00 : f32
    %304 = vector.broadcast %cst_49 : f32 to vector<2x48xf32>
    %305 = arith.addf %304, %303 : vector<2x48xf32>
    %306 = arith.divf %304, %305 : vector<2x48xf32>
    %307 = vector.extract_strided_slice %284 {offsets = [0, 48], sizes = [2, 16], strides = [1, 1]} : vector<2x64xf32> to vector<2x16xf32>
    %308 = math.tanh %307 : vector<2x16xf32>
    %309 = vector.extract_strided_slice %306 {offsets = [0, 16], sizes = [2, 16], strides = [1, 1]} : vector<2x48xf32> to vector<2x16xf32>
    %310 = arith.mulf %309, %271 : vector<2x16xf32>
    %311 = vector.extract_strided_slice %306 {offsets = [0, 0], sizes = [2, 16], strides = [1, 1]} : vector<2x48xf32> to vector<2x16xf32>
    %312 = arith.mulf %311, %308 : vector<2x16xf32>
    %313 = arith.addf %310, %312 : vector<2x16xf32>
    %314 = vector.extract_strided_slice %306 {offsets = [0, 32], sizes = [2, 16], strides = [1, 1]} : vector<2x48xf32> to vector<2x16xf32>
    %315 = math.tanh %313 : vector<2x16xf32>
    %316 = arith.mulf %314, %315 : vector<2x16xf32>
    %317 = vector.extract_strided_slice %16 {offsets = [0, 7, 0], sizes = [2, 1, 64], strides = [1, 1, 1]} : vector<2x8x128xf32> to vector<2x1x64xf32>
    %318 = vector.shape_cast %317 : vector<2x1x64xf32> to vector<2x64xf32>
    %319 = arith.truncf %300 : vector<2x16xf32> to vector<2x16xbf16>
    %cst_50 = arith.constant dense<0.000000e+00> : vector<2x64xf32>
    %320 = tpu.matmul %319, %17, %cst_50 {dimension_numbers = #tpu.dot_dimension_numbers<[1], [0], [0], [1], [0, 0, 1, 1], [], []>} : vector<2x16xbf16>, vector<16x64xbf16>, vector<2x64xf32> -> vector<2x64xf32>
    %321 = arith.addf %318, %320 : vector<2x64xf32>
    %322 = vector.extract_strided_slice %16 {offsets = [0, 0, 64], sizes = [2, 1, 64], strides = [1, 1, 1]} : vector<2x8x128xf32> to vector<2x1x64xf32>
    %323 = vector.shape_cast %322 : vector<2x1x64xf32> to vector<2x64xf32>
    %324 = arith.truncf %316 : vector<2x16xf32> to vector<2x16xbf16>
    %cst_51 = arith.constant dense<0.000000e+00> : vector<2x64xf32>
    %325 = tpu.matmul %324, %18, %cst_51 {dimension_numbers = #tpu.dot_dimension_numbers<[1], [0], [0], [1], [0, 0, 1, 1], [], []>} : vector<2x16xbf16>, vector<16x64xbf16>, vector<2x64xf32> -> vector<2x64xf32>
    %326 = arith.addf %323, %325 : vector<2x64xf32>
    %327 = vector.extract_strided_slice %321 {offsets = [0, 0], sizes = [2, 48], strides = [1, 1]} : vector<2x64xf32> to vector<2x48xf32>
    %328 = arith.negf %327 : vector<2x48xf32>
    %329 = math.exp %328 : vector<2x48xf32>
    %cst_52 = arith.constant 1.000000e+00 : f32
    %330 = vector.broadcast %cst_52 : f32 to vector<2x48xf32>
    %331 = arith.addf %330, %329 : vector<2x48xf32>
    %332 = arith.divf %330, %331 : vector<2x48xf32>
    %333 = vector.extract_strided_slice %321 {offsets = [0, 48], sizes = [2, 16], strides = [1, 1]} : vector<2x64xf32> to vector<2x16xf32>
    %334 = math.tanh %333 : vector<2x16xf32>
    %335 = vector.extract_strided_slice %332 {offsets = [0, 16], sizes = [2, 16], strides = [1, 1]} : vector<2x48xf32> to vector<2x16xf32>
    %336 = arith.mulf %335, %297 : vector<2x16xf32>
    %337 = vector.extract_strided_slice %332 {offsets = [0, 0], sizes = [2, 16], strides = [1, 1]} : vector<2x48xf32> to vector<2x16xf32>
    %338 = arith.mulf %337, %334 : vector<2x16xf32>
    %339 = arith.addf %336, %338 : vector<2x16xf32>
    %340 = vector.extract_strided_slice %332 {offsets = [0, 32], sizes = [2, 16], strides = [1, 1]} : vector<2x48xf32> to vector<2x16xf32>
    %341 = math.tanh %339 : vector<2x16xf32>
    %342 = arith.mulf %340, %341 : vector<2x16xf32>
    %343 = vector.extract_strided_slice %326 {offsets = [0, 0], sizes = [2, 48], strides = [1, 1]} : vector<2x64xf32> to vector<2x48xf32>
    %344 = arith.negf %343 : vector<2x48xf32>
    %345 = math.exp %344 : vector<2x48xf32>
    %cst_53 = arith.constant 1.000000e+00 : f32
    %346 = vector.broadcast %cst_53 : f32 to vector<2x48xf32>
    %347 = arith.addf %346, %345 : vector<2x48xf32>
    %348 = arith.divf %346, %347 : vector<2x48xf32>
    %349 = vector.extract_strided_slice %326 {offsets = [0, 48], sizes = [2, 16], strides = [1, 1]} : vector<2x64xf32> to vector<2x16xf32>
    %350 = math.tanh %349 : vector<2x16xf32>
    %351 = vector.extract_strided_slice %348 {offsets = [0, 16], sizes = [2, 16], strides = [1, 1]} : vector<2x48xf32> to vector<2x16xf32>
    %352 = arith.mulf %351, %313 : vector<2x16xf32>
    %353 = vector.extract_strided_slice %348 {offsets = [0, 0], sizes = [2, 16], strides = [1, 1]} : vector<2x48xf32> to vector<2x16xf32>
    %354 = arith.mulf %353, %350 : vector<2x16xf32>
    %355 = arith.addf %352, %354 : vector<2x16xf32>
    %356 = vector.extract_strided_slice %348 {offsets = [0, 32], sizes = [2, 16], strides = [1, 1]} : vector<2x48xf32> to vector<2x16xf32>
    %357 = math.tanh %355 : vector<2x16xf32>
    %358 = arith.mulf %356, %357 : vector<2x16xf32>
    %359 = vector.shape_cast %48 : vector<2x16xf32> to vector<2x1x16xf32>
    %360 = vector.shape_cast %90 : vector<2x16xf32> to vector<2x1x16xf32>
    %361 = vector.shape_cast %132 : vector<2x16xf32> to vector<2x1x16xf32>
    %362 = vector.shape_cast %174 : vector<2x16xf32> to vector<2x1x16xf32>
    %363 = vector.shape_cast %216 : vector<2x16xf32> to vector<2x1x16xf32>
    %364 = vector.shape_cast %258 : vector<2x16xf32> to vector<2x1x16xf32>
    %365 = vector.shape_cast %300 : vector<2x16xf32> to vector<2x1x16xf32>
    %366 = vector.shape_cast %342 : vector<2x16xf32> to vector<2x1x16xf32>
    %367 = tpu.concatenate %359, %360, %361, %362, %363, %364, %365, %366 in 1 : vector<2x1x16xf32>, vector<2x1x16xf32>, vector<2x1x16xf32>, vector<2x1x16xf32>, vector<2x1x16xf32>, vector<2x1x16xf32>, vector<2x1x16xf32>, vector<2x1x16xf32> -> vector<2x8x16xf32>
    %368 = arith.truncf %367 : vector<2x8x16xf32> to vector<2x8x16xbf16>
    %369 = vector.shape_cast %358 : vector<2x16xf32> to vector<2x1x16xf32>
    %370 = vector.shape_cast %316 : vector<2x16xf32> to vector<2x1x16xf32>
    %371 = vector.shape_cast %274 : vector<2x16xf32> to vector<2x1x16xf32>
    %372 = vector.shape_cast %232 : vector<2x16xf32> to vector<2x1x16xf32>
    %373 = vector.shape_cast %190 : vector<2x16xf32> to vector<2x1x16xf32>
    %374 = vector.shape_cast %148 : vector<2x16xf32> to vector<2x1x16xf32>
    %375 = vector.shape_cast %106 : vector<2x16xf32> to vector<2x1x16xf32>
    %376 = vector.shape_cast %64 : vector<2x16xf32> to vector<2x1x16xf32>
    %377 = tpu.concatenate %369, %370, %371, %372, %373, %374, %375, %376 in 1 : vector<2x1x16xf32>, vector<2x1x16xf32>, vector<2x1x16xf32>, vector<2x1x16xf32>, vector<2x1x16xf32>, vector<2x1x16xf32>, vector<2x1x16xf32>, vector<2x1x16xf32> -> vector<2x8x16xf32>
    %378 = arith.truncf %377 : vector<2x8x16xf32> to vector<2x8x16xbf16>
    %c0_54 = arith.constant 0 : index
    %c0_55 = arith.constant 0 : index
    %c0_56 = arith.constant 0 : index
    %379 = vector.load %arg3[%c0_54, %c0_55, %c0_56] : memref<2x8x32xbf16, #tpu.memory_space<vmem>>, vector<2x8x32xbf16>
    %380 = tpu.concatenate %368, %378, %379 in 2 : vector<2x8x16xbf16>, vector<2x8x16xbf16>, vector<2x8x32xbf16> -> vector<2x8x64xbf16>
    %381 = vector.shape_cast %380 : vector<2x8x64xbf16> to vector<16x64xbf16>
    %c0_57 = arith.constant 0 : index
    %c0_58 = arith.constant 0 : index
    %382 = vector.load %arg8[%c0_57, %c0_58] : memref<64x96xbf16, #tpu.memory_space<vmem>>, vector<64x96xbf16>
    %cst_59 = arith.constant dense<0.000000e+00> : vector<16x96xf32>
    %383 = tpu.matmul %381, %382, %cst_59 {dimension_numbers = #tpu.dot_dimension_numbers<[1], [0], [0], [1], [0, 0, 1, 1], [], []>} : vector<16x64xbf16>, vector<64x96xbf16>, vector<16x96xf32> -> vector<16x96xf32>
    %c0_60 = arith.constant 0 : index
    %c0_61 = arith.constant 0 : index
    %384 = vector.load %arg9[%c0_60, %c0_61] : memref<1x96xf32, #tpu.memory_space<vmem>>, vector<1x96xf32>
    %385 = vector.broadcast %384 : vector<1x96xf32> to vector<16x96xf32>
    %386 = arith.addf %383, %385 : vector<16x96xf32>
    %387 = vector.shape_cast %386 : vector<16x96xf32> to vector<2x8x96xf32>
    %c0_62 = arith.constant 0 : index
    %c0_63 = arith.constant 0 : index
    %388 = vector.load %arg10[%c0_62, %c0_63] : memref<32x96xbf16, #tpu.memory_space<vmem>>, vector<32x96xbf16>
    %c0_64 = arith.constant 0 : index
    %c0_65 = arith.constant 0 : index
    %389 = vector.load %arg11[%c0_64, %c0_65] : memref<1x96xf32, #tpu.memory_space<vmem>>, vector<1x96xf32>
    %cst_66 = arith.constant 0.000000e+00 : f32
    %390 = vector.broadcast %cst_66 : f32 to vector<2x32xf32>
    %391 = arith.truncf %390 : vector<2x32xf32> to vector<2x32xbf16>
    %cst_67 = arith.constant dense<0.000000e+00> : vector<2x96xf32>
    %392 = tpu.matmul %391, %388, %cst_67 {dimension_numbers = #tpu.dot_dimension_numbers<[1], [0], [0], [1], [0, 0, 1, 1], [], []>} : vector<2x32xbf16>, vector<32x96xbf16>, vector<2x96xf32> -> vector<2x96xf32>
    %393 = vector.broadcast %389 : vector<1x96xf32> to vector<2x96xf32>
    %394 = arith.addf %392, %393 : vector<2x96xf32>
    %395 = vector.extract_strided_slice %387 {offsets = [0, 0, 0], sizes = [2, 1, 96], strides = [1, 1, 1]} : vector<2x8x96xf32> to vector<2x1x96xf32>
    %396 = vector.shape_cast %395 : vector<2x1x96xf32> to vector<2x96xf32>
    %397 = vector.extract_strided_slice %396 {offsets = [0, 0], sizes = [2, 64], strides = [1, 1]} : vector<2x96xf32> to vector<2x64xf32>
    %398 = vector.extract_strided_slice %394 {offsets = [0, 0], sizes = [2, 64], strides = [1, 1]} : vector<2x96xf32> to vector<2x64xf32>
    %399 = arith.addf %397, %398 : vector<2x64xf32>
    %400 = arith.negf %399 : vector<2x64xf32>
    %401 = math.exp %400 : vector<2x64xf32>
    %cst_68 = arith.constant 1.000000e+00 : f32
    %402 = vector.broadcast %cst_68 : f32 to vector<2x64xf32>
    %403 = arith.addf %402, %401 : vector<2x64xf32>
    %404 = arith.divf %402, %403 : vector<2x64xf32>
    %405 = vector.extract_strided_slice %396 {offsets = [0, 64], sizes = [2, 32], strides = [1, 1]} : vector<2x96xf32> to vector<2x32xf32>
    %406 = vector.extract_strided_slice %404 {offsets = [0, 0], sizes = [2, 32], strides = [1, 1]} : vector<2x64xf32> to vector<2x32xf32>
    %407 = vector.extract_strided_slice %394 {offsets = [0, 64], sizes = [2, 32], strides = [1, 1]} : vector<2x96xf32> to vector<2x32xf32>
    %408 = arith.mulf %406, %407 : vector<2x32xf32>
    %409 = arith.addf %405, %408 : vector<2x32xf32>
    %410 = math.tanh %409 : vector<2x32xf32>
    %411 = vector.extract_strided_slice %404 {offsets = [0, 32], sizes = [2, 32], strides = [1, 1]} : vector<2x64xf32> to vector<2x32xf32>
    %cst_69 = arith.constant 1.000000e+00 : f32
    %412 = vector.broadcast %cst_69 : f32 to vector<2x32xf32>
    %413 = arith.subf %412, %411 : vector<2x32xf32>
    %414 = arith.mulf %413, %410 : vector<2x32xf32>
    %415 = vector.extract_strided_slice %404 {offsets = [0, 32], sizes = [2, 32], strides = [1, 1]} : vector<2x64xf32> to vector<2x32xf32>
    %416 = arith.mulf %415, %390 : vector<2x32xf32>
    %417 = arith.addf %414, %416 : vector<2x32xf32>
    %418 = arith.truncf %417 : vector<2x32xf32> to vector<2x32xbf16>
    %cst_70 = arith.constant dense<0.000000e+00> : vector<2x96xf32>
    %419 = tpu.matmul %418, %388, %cst_70 {dimension_numbers = #tpu.dot_dimension_numbers<[1], [0], [0], [1], [0, 0, 1, 1], [], []>} : vector<2x32xbf16>, vector<32x96xbf16>, vector<2x96xf32> -> vector<2x96xf32>
    %420 = vector.broadcast %389 : vector<1x96xf32> to vector<2x96xf32>
    %421 = arith.addf %419, %420 : vector<2x96xf32>
    %422 = vector.extract_strided_slice %387 {offsets = [0, 1, 0], sizes = [2, 1, 96], strides = [1, 1, 1]} : vector<2x8x96xf32> to vector<2x1x96xf32>
    %423 = vector.shape_cast %422 : vector<2x1x96xf32> to vector<2x96xf32>
    %424 = vector.extract_strided_slice %423 {offsets = [0, 0], sizes = [2, 64], strides = [1, 1]} : vector<2x96xf32> to vector<2x64xf32>
    %425 = vector.extract_strided_slice %421 {offsets = [0, 0], sizes = [2, 64], strides = [1, 1]} : vector<2x96xf32> to vector<2x64xf32>
    %426 = arith.addf %424, %425 : vector<2x64xf32>
    %427 = arith.negf %426 : vector<2x64xf32>
    %428 = math.exp %427 : vector<2x64xf32>
    %cst_71 = arith.constant 1.000000e+00 : f32
    %429 = vector.broadcast %cst_71 : f32 to vector<2x64xf32>
    %430 = arith.addf %429, %428 : vector<2x64xf32>
    %431 = arith.divf %429, %430 : vector<2x64xf32>
    %432 = vector.extract_strided_slice %423 {offsets = [0, 64], sizes = [2, 32], strides = [1, 1]} : vector<2x96xf32> to vector<2x32xf32>
    %433 = vector.extract_strided_slice %431 {offsets = [0, 0], sizes = [2, 32], strides = [1, 1]} : vector<2x64xf32> to vector<2x32xf32>
    %434 = vector.extract_strided_slice %421 {offsets = [0, 64], sizes = [2, 32], strides = [1, 1]} : vector<2x96xf32> to vector<2x32xf32>
    %435 = arith.mulf %433, %434 : vector<2x32xf32>
    %436 = arith.addf %432, %435 : vector<2x32xf32>
    %437 = math.tanh %436 : vector<2x32xf32>
    %438 = vector.extract_strided_slice %431 {offsets = [0, 32], sizes = [2, 32], strides = [1, 1]} : vector<2x64xf32> to vector<2x32xf32>
    %cst_72 = arith.constant 1.000000e+00 : f32
    %439 = vector.broadcast %cst_72 : f32 to vector<2x32xf32>
    %440 = arith.subf %439, %438 : vector<2x32xf32>
    %441 = arith.mulf %440, %437 : vector<2x32xf32>
    %442 = vector.extract_strided_slice %431 {offsets = [0, 32], sizes = [2, 32], strides = [1, 1]} : vector<2x64xf32> to vector<2x32xf32>
    %443 = arith.mulf %442, %417 : vector<2x32xf32>
    %444 = arith.addf %441, %443 : vector<2x32xf32>
    %445 = arith.truncf %444 : vector<2x32xf32> to vector<2x32xbf16>
    %cst_73 = arith.constant dense<0.000000e+00> : vector<2x96xf32>
    %446 = tpu.matmul %445, %388, %cst_73 {dimension_numbers = #tpu.dot_dimension_numbers<[1], [0], [0], [1], [0, 0, 1, 1], [], []>} : vector<2x32xbf16>, vector<32x96xbf16>, vector<2x96xf32> -> vector<2x96xf32>
    %447 = vector.broadcast %389 : vector<1x96xf32> to vector<2x96xf32>
    %448 = arith.addf %446, %447 : vector<2x96xf32>
    %449 = vector.extract_strided_slice %387 {offsets = [0, 2, 0], sizes = [2, 1, 96], strides = [1, 1, 1]} : vector<2x8x96xf32> to vector<2x1x96xf32>
    %450 = vector.shape_cast %449 : vector<2x1x96xf32> to vector<2x96xf32>
    %451 = vector.extract_strided_slice %450 {offsets = [0, 0], sizes = [2, 64], strides = [1, 1]} : vector<2x96xf32> to vector<2x64xf32>
    %452 = vector.extract_strided_slice %448 {offsets = [0, 0], sizes = [2, 64], strides = [1, 1]} : vector<2x96xf32> to vector<2x64xf32>
    %453 = arith.addf %451, %452 : vector<2x64xf32>
    %454 = arith.negf %453 : vector<2x64xf32>
    %455 = math.exp %454 : vector<2x64xf32>
    %cst_74 = arith.constant 1.000000e+00 : f32
    %456 = vector.broadcast %cst_74 : f32 to vector<2x64xf32>
    %457 = arith.addf %456, %455 : vector<2x64xf32>
    %458 = arith.divf %456, %457 : vector<2x64xf32>
    %459 = vector.extract_strided_slice %450 {offsets = [0, 64], sizes = [2, 32], strides = [1, 1]} : vector<2x96xf32> to vector<2x32xf32>
    %460 = vector.extract_strided_slice %458 {offsets = [0, 0], sizes = [2, 32], strides = [1, 1]} : vector<2x64xf32> to vector<2x32xf32>
    %461 = vector.extract_strided_slice %448 {offsets = [0, 64], sizes = [2, 32], strides = [1, 1]} : vector<2x96xf32> to vector<2x32xf32>
    %462 = arith.mulf %460, %461 : vector<2x32xf32>
    %463 = arith.addf %459, %462 : vector<2x32xf32>
    %464 = math.tanh %463 : vector<2x32xf32>
    %465 = vector.extract_strided_slice %458 {offsets = [0, 32], sizes = [2, 32], strides = [1, 1]} : vector<2x64xf32> to vector<2x32xf32>
    %cst_75 = arith.constant 1.000000e+00 : f32
    %466 = vector.broadcast %cst_75 : f32 to vector<2x32xf32>
    %467 = arith.subf %466, %465 : vector<2x32xf32>
    %468 = arith.mulf %467, %464 : vector<2x32xf32>
    %469 = vector.extract_strided_slice %458 {offsets = [0, 32], sizes = [2, 32], strides = [1, 1]} : vector<2x64xf32> to vector<2x32xf32>
    %470 = arith.mulf %469, %444 : vector<2x32xf32>
    %471 = arith.addf %468, %470 : vector<2x32xf32>
    %472 = arith.truncf %471 : vector<2x32xf32> to vector<2x32xbf16>
    %cst_76 = arith.constant dense<0.000000e+00> : vector<2x96xf32>
    %473 = tpu.matmul %472, %388, %cst_76 {dimension_numbers = #tpu.dot_dimension_numbers<[1], [0], [0], [1], [0, 0, 1, 1], [], []>} : vector<2x32xbf16>, vector<32x96xbf16>, vector<2x96xf32> -> vector<2x96xf32>
    %474 = vector.broadcast %389 : vector<1x96xf32> to vector<2x96xf32>
    %475 = arith.addf %473, %474 : vector<2x96xf32>
    %476 = vector.extract_strided_slice %387 {offsets = [0, 3, 0], sizes = [2, 1, 96], strides = [1, 1, 1]} : vector<2x8x96xf32> to vector<2x1x96xf32>
    %477 = vector.shape_cast %476 : vector<2x1x96xf32> to vector<2x96xf32>
    %478 = vector.extract_strided_slice %477 {offsets = [0, 0], sizes = [2, 64], strides = [1, 1]} : vector<2x96xf32> to vector<2x64xf32>
    %479 = vector.extract_strided_slice %475 {offsets = [0, 0], sizes = [2, 64], strides = [1, 1]} : vector<2x96xf32> to vector<2x64xf32>
    %480 = arith.addf %478, %479 : vector<2x64xf32>
    %481 = arith.negf %480 : vector<2x64xf32>
    %482 = math.exp %481 : vector<2x64xf32>
    %cst_77 = arith.constant 1.000000e+00 : f32
    %483 = vector.broadcast %cst_77 : f32 to vector<2x64xf32>
    %484 = arith.addf %483, %482 : vector<2x64xf32>
    %485 = arith.divf %483, %484 : vector<2x64xf32>
    %486 = vector.extract_strided_slice %477 {offsets = [0, 64], sizes = [2, 32], strides = [1, 1]} : vector<2x96xf32> to vector<2x32xf32>
    %487 = vector.extract_strided_slice %485 {offsets = [0, 0], sizes = [2, 32], strides = [1, 1]} : vector<2x64xf32> to vector<2x32xf32>
    %488 = vector.extract_strided_slice %475 {offsets = [0, 64], sizes = [2, 32], strides = [1, 1]} : vector<2x96xf32> to vector<2x32xf32>
    %489 = arith.mulf %487, %488 : vector<2x32xf32>
    %490 = arith.addf %486, %489 : vector<2x32xf32>
    %491 = math.tanh %490 : vector<2x32xf32>
    %492 = vector.extract_strided_slice %485 {offsets = [0, 32], sizes = [2, 32], strides = [1, 1]} : vector<2x64xf32> to vector<2x32xf32>
    %cst_78 = arith.constant 1.000000e+00 : f32
    %493 = vector.broadcast %cst_78 : f32 to vector<2x32xf32>
    %494 = arith.subf %493, %492 : vector<2x32xf32>
    %495 = arith.mulf %494, %491 : vector<2x32xf32>
    %496 = vector.extract_strided_slice %485 {offsets = [0, 32], sizes = [2, 32], strides = [1, 1]} : vector<2x64xf32> to vector<2x32xf32>
    %497 = arith.mulf %496, %471 : vector<2x32xf32>
    %498 = arith.addf %495, %497 : vector<2x32xf32>
    %499 = arith.truncf %498 : vector<2x32xf32> to vector<2x32xbf16>
    %cst_79 = arith.constant dense<0.000000e+00> : vector<2x96xf32>
    %500 = tpu.matmul %499, %388, %cst_79 {dimension_numbers = #tpu.dot_dimension_numbers<[1], [0], [0], [1], [0, 0, 1, 1], [], []>} : vector<2x32xbf16>, vector<32x96xbf16>, vector<2x96xf32> -> vector<2x96xf32>
    %501 = vector.broadcast %389 : vector<1x96xf32> to vector<2x96xf32>
    %502 = arith.addf %500, %501 : vector<2x96xf32>
    %503 = vector.extract_strided_slice %387 {offsets = [0, 4, 0], sizes = [2, 1, 96], strides = [1, 1, 1]} : vector<2x8x96xf32> to vector<2x1x96xf32>
    %504 = vector.shape_cast %503 : vector<2x1x96xf32> to vector<2x96xf32>
    %505 = vector.extract_strided_slice %504 {offsets = [0, 0], sizes = [2, 64], strides = [1, 1]} : vector<2x96xf32> to vector<2x64xf32>
    %506 = vector.extract_strided_slice %502 {offsets = [0, 0], sizes = [2, 64], strides = [1, 1]} : vector<2x96xf32> to vector<2x64xf32>
    %507 = arith.addf %505, %506 : vector<2x64xf32>
    %508 = arith.negf %507 : vector<2x64xf32>
    %509 = math.exp %508 : vector<2x64xf32>
    %cst_80 = arith.constant 1.000000e+00 : f32
    %510 = vector.broadcast %cst_80 : f32 to vector<2x64xf32>
    %511 = arith.addf %510, %509 : vector<2x64xf32>
    %512 = arith.divf %510, %511 : vector<2x64xf32>
    %513 = vector.extract_strided_slice %504 {offsets = [0, 64], sizes = [2, 32], strides = [1, 1]} : vector<2x96xf32> to vector<2x32xf32>
    %514 = vector.extract_strided_slice %512 {offsets = [0, 0], sizes = [2, 32], strides = [1, 1]} : vector<2x64xf32> to vector<2x32xf32>
    %515 = vector.extract_strided_slice %502 {offsets = [0, 64], sizes = [2, 32], strides = [1, 1]} : vector<2x96xf32> to vector<2x32xf32>
    %516 = arith.mulf %514, %515 : vector<2x32xf32>
    %517 = arith.addf %513, %516 : vector<2x32xf32>
    %518 = math.tanh %517 : vector<2x32xf32>
    %519 = vector.extract_strided_slice %512 {offsets = [0, 32], sizes = [2, 32], strides = [1, 1]} : vector<2x64xf32> to vector<2x32xf32>
    %cst_81 = arith.constant 1.000000e+00 : f32
    %520 = vector.broadcast %cst_81 : f32 to vector<2x32xf32>
    %521 = arith.subf %520, %519 : vector<2x32xf32>
    %522 = arith.mulf %521, %518 : vector<2x32xf32>
    %523 = vector.extract_strided_slice %512 {offsets = [0, 32], sizes = [2, 32], strides = [1, 1]} : vector<2x64xf32> to vector<2x32xf32>
    %524 = arith.mulf %523, %498 : vector<2x32xf32>
    %525 = arith.addf %522, %524 : vector<2x32xf32>
    %526 = arith.truncf %525 : vector<2x32xf32> to vector<2x32xbf16>
    %cst_82 = arith.constant dense<0.000000e+00> : vector<2x96xf32>
    %527 = tpu.matmul %526, %388, %cst_82 {dimension_numbers = #tpu.dot_dimension_numbers<[1], [0], [0], [1], [0, 0, 1, 1], [], []>} : vector<2x32xbf16>, vector<32x96xbf16>, vector<2x96xf32> -> vector<2x96xf32>
    %528 = vector.broadcast %389 : vector<1x96xf32> to vector<2x96xf32>
    %529 = arith.addf %527, %528 : vector<2x96xf32>
    %530 = vector.extract_strided_slice %387 {offsets = [0, 5, 0], sizes = [2, 1, 96], strides = [1, 1, 1]} : vector<2x8x96xf32> to vector<2x1x96xf32>
    %531 = vector.shape_cast %530 : vector<2x1x96xf32> to vector<2x96xf32>
    %532 = vector.extract_strided_slice %531 {offsets = [0, 0], sizes = [2, 64], strides = [1, 1]} : vector<2x96xf32> to vector<2x64xf32>
    %533 = vector.extract_strided_slice %529 {offsets = [0, 0], sizes = [2, 64], strides = [1, 1]} : vector<2x96xf32> to vector<2x64xf32>
    %534 = arith.addf %532, %533 : vector<2x64xf32>
    %535 = arith.negf %534 : vector<2x64xf32>
    %536 = math.exp %535 : vector<2x64xf32>
    %cst_83 = arith.constant 1.000000e+00 : f32
    %537 = vector.broadcast %cst_83 : f32 to vector<2x64xf32>
    %538 = arith.addf %537, %536 : vector<2x64xf32>
    %539 = arith.divf %537, %538 : vector<2x64xf32>
    %540 = vector.extract_strided_slice %531 {offsets = [0, 64], sizes = [2, 32], strides = [1, 1]} : vector<2x96xf32> to vector<2x32xf32>
    %541 = vector.extract_strided_slice %539 {offsets = [0, 0], sizes = [2, 32], strides = [1, 1]} : vector<2x64xf32> to vector<2x32xf32>
    %542 = vector.extract_strided_slice %529 {offsets = [0, 64], sizes = [2, 32], strides = [1, 1]} : vector<2x96xf32> to vector<2x32xf32>
    %543 = arith.mulf %541, %542 : vector<2x32xf32>
    %544 = arith.addf %540, %543 : vector<2x32xf32>
    %545 = math.tanh %544 : vector<2x32xf32>
    %546 = vector.extract_strided_slice %539 {offsets = [0, 32], sizes = [2, 32], strides = [1, 1]} : vector<2x64xf32> to vector<2x32xf32>
    %cst_84 = arith.constant 1.000000e+00 : f32
    %547 = vector.broadcast %cst_84 : f32 to vector<2x32xf32>
    %548 = arith.subf %547, %546 : vector<2x32xf32>
    %549 = arith.mulf %548, %545 : vector<2x32xf32>
    %550 = vector.extract_strided_slice %539 {offsets = [0, 32], sizes = [2, 32], strides = [1, 1]} : vector<2x64xf32> to vector<2x32xf32>
    %551 = arith.mulf %550, %525 : vector<2x32xf32>
    %552 = arith.addf %549, %551 : vector<2x32xf32>
    %553 = arith.truncf %552 : vector<2x32xf32> to vector<2x32xbf16>
    %cst_85 = arith.constant dense<0.000000e+00> : vector<2x96xf32>
    %554 = tpu.matmul %553, %388, %cst_85 {dimension_numbers = #tpu.dot_dimension_numbers<[1], [0], [0], [1], [0, 0, 1, 1], [], []>} : vector<2x32xbf16>, vector<32x96xbf16>, vector<2x96xf32> -> vector<2x96xf32>
    %555 = vector.broadcast %389 : vector<1x96xf32> to vector<2x96xf32>
    %556 = arith.addf %554, %555 : vector<2x96xf32>
    %557 = vector.extract_strided_slice %387 {offsets = [0, 6, 0], sizes = [2, 1, 96], strides = [1, 1, 1]} : vector<2x8x96xf32> to vector<2x1x96xf32>
    %558 = vector.shape_cast %557 : vector<2x1x96xf32> to vector<2x96xf32>
    %559 = vector.extract_strided_slice %558 {offsets = [0, 0], sizes = [2, 64], strides = [1, 1]} : vector<2x96xf32> to vector<2x64xf32>
    %560 = vector.extract_strided_slice %556 {offsets = [0, 0], sizes = [2, 64], strides = [1, 1]} : vector<2x96xf32> to vector<2x64xf32>
    %561 = arith.addf %559, %560 : vector<2x64xf32>
    %562 = arith.negf %561 : vector<2x64xf32>
    %563 = math.exp %562 : vector<2x64xf32>
    %cst_86 = arith.constant 1.000000e+00 : f32
    %564 = vector.broadcast %cst_86 : f32 to vector<2x64xf32>
    %565 = arith.addf %564, %563 : vector<2x64xf32>
    %566 = arith.divf %564, %565 : vector<2x64xf32>
    %567 = vector.extract_strided_slice %558 {offsets = [0, 64], sizes = [2, 32], strides = [1, 1]} : vector<2x96xf32> to vector<2x32xf32>
    %568 = vector.extract_strided_slice %566 {offsets = [0, 0], sizes = [2, 32], strides = [1, 1]} : vector<2x64xf32> to vector<2x32xf32>
    %569 = vector.extract_strided_slice %556 {offsets = [0, 64], sizes = [2, 32], strides = [1, 1]} : vector<2x96xf32> to vector<2x32xf32>
    %570 = arith.mulf %568, %569 : vector<2x32xf32>
    %571 = arith.addf %567, %570 : vector<2x32xf32>
    %572 = math.tanh %571 : vector<2x32xf32>
    %573 = vector.extract_strided_slice %566 {offsets = [0, 32], sizes = [2, 32], strides = [1, 1]} : vector<2x64xf32> to vector<2x32xf32>
    %cst_87 = arith.constant 1.000000e+00 : f32
    %574 = vector.broadcast %cst_87 : f32 to vector<2x32xf32>
    %575 = arith.subf %574, %573 : vector<2x32xf32>
    %576 = arith.mulf %575, %572 : vector<2x32xf32>
    %577 = vector.extract_strided_slice %566 {offsets = [0, 32], sizes = [2, 32], strides = [1, 1]} : vector<2x64xf32> to vector<2x32xf32>
    %578 = arith.mulf %577, %552 : vector<2x32xf32>
    %579 = arith.addf %576, %578 : vector<2x32xf32>
    %580 = arith.truncf %579 : vector<2x32xf32> to vector<2x32xbf16>
    %cst_88 = arith.constant dense<0.000000e+00> : vector<2x96xf32>
    %581 = tpu.matmul %580, %388, %cst_88 {dimension_numbers = #tpu.dot_dimension_numbers<[1], [0], [0], [1], [0, 0, 1, 1], [], []>} : vector<2x32xbf16>, vector<32x96xbf16>, vector<2x96xf32> -> vector<2x96xf32>
    %582 = vector.broadcast %389 : vector<1x96xf32> to vector<2x96xf32>
    %583 = arith.addf %581, %582 : vector<2x96xf32>
    %584 = vector.extract_strided_slice %387 {offsets = [0, 7, 0], sizes = [2, 1, 96], strides = [1, 1, 1]} : vector<2x8x96xf32> to vector<2x1x96xf32>
    %585 = vector.shape_cast %584 : vector<2x1x96xf32> to vector<2x96xf32>
    %586 = vector.extract_strided_slice %585 {offsets = [0, 0], sizes = [2, 64], strides = [1, 1]} : vector<2x96xf32> to vector<2x64xf32>
    %587 = vector.extract_strided_slice %583 {offsets = [0, 0], sizes = [2, 64], strides = [1, 1]} : vector<2x96xf32> to vector<2x64xf32>
    %588 = arith.addf %586, %587 : vector<2x64xf32>
    %589 = arith.negf %588 : vector<2x64xf32>
    %590 = math.exp %589 : vector<2x64xf32>
    %cst_89 = arith.constant 1.000000e+00 : f32
    %591 = vector.broadcast %cst_89 : f32 to vector<2x64xf32>
    %592 = arith.addf %591, %590 : vector<2x64xf32>
    %593 = arith.divf %591, %592 : vector<2x64xf32>
    %594 = vector.extract_strided_slice %585 {offsets = [0, 64], sizes = [2, 32], strides = [1, 1]} : vector<2x96xf32> to vector<2x32xf32>
    %595 = vector.extract_strided_slice %593 {offsets = [0, 0], sizes = [2, 32], strides = [1, 1]} : vector<2x64xf32> to vector<2x32xf32>
    %596 = vector.extract_strided_slice %583 {offsets = [0, 64], sizes = [2, 32], strides = [1, 1]} : vector<2x96xf32> to vector<2x32xf32>
    %597 = arith.mulf %595, %596 : vector<2x32xf32>
    %598 = arith.addf %594, %597 : vector<2x32xf32>
    %599 = math.tanh %598 : vector<2x32xf32>
    %600 = vector.extract_strided_slice %593 {offsets = [0, 32], sizes = [2, 32], strides = [1, 1]} : vector<2x64xf32> to vector<2x32xf32>
    %cst_90 = arith.constant 1.000000e+00 : f32
    %601 = vector.broadcast %cst_90 : f32 to vector<2x32xf32>
    %602 = arith.subf %601, %600 : vector<2x32xf32>
    %603 = arith.mulf %602, %599 : vector<2x32xf32>
    %604 = vector.extract_strided_slice %593 {offsets = [0, 32], sizes = [2, 32], strides = [1, 1]} : vector<2x64xf32> to vector<2x32xf32>
    %605 = arith.mulf %604, %579 : vector<2x32xf32>
    %606 = arith.addf %603, %605 : vector<2x32xf32>
    %607 = vector.shape_cast %417 : vector<2x32xf32> to vector<2x1x32xf32>
    %608 = vector.shape_cast %444 : vector<2x32xf32> to vector<2x1x32xf32>
    %609 = vector.shape_cast %471 : vector<2x32xf32> to vector<2x1x32xf32>
    %610 = vector.shape_cast %498 : vector<2x32xf32> to vector<2x1x32xf32>
    %611 = vector.shape_cast %525 : vector<2x32xf32> to vector<2x1x32xf32>
    %612 = vector.shape_cast %552 : vector<2x32xf32> to vector<2x1x32xf32>
    %613 = vector.shape_cast %579 : vector<2x32xf32> to vector<2x1x32xf32>
    %614 = vector.shape_cast %606 : vector<2x32xf32> to vector<2x1x32xf32>
    %615 = tpu.concatenate %607, %608, %609, %610, %611, %612, %613, %614 in 1 : vector<2x1x32xf32>, vector<2x1x32xf32>, vector<2x1x32xf32>, vector<2x1x32xf32>, vector<2x1x32xf32>, vector<2x1x32xf32>, vector<2x1x32xf32>, vector<2x1x32xf32> -> vector<2x8x32xf32>
    %616 = vector.shape_cast %615 : vector<2x8x32xf32> to vector<16x32xf32>
    %617 = arith.truncf %616 : vector<16x32xf32> to vector<16x32xbf16>
    %c0_91 = arith.constant 0 : index
    %c0_92 = arith.constant 0 : index
    %618 = vector.load %arg12[%c0_91, %c0_92] : memref<32x128xbf16, #tpu.memory_space<vmem>>, vector<32x128xbf16>
    %cst_93 = arith.constant dense<0.000000e+00> : vector<16x128xf32>
    %619 = tpu.matmul %617, %618, %cst_93 {dimension_numbers = #tpu.dot_dimension_numbers<[1], [0], [0], [1], [0, 0, 1, 1], [], []>} : vector<16x32xbf16>, vector<32x128xbf16>, vector<16x128xf32> -> vector<16x128xf32>
    %c0_94 = arith.constant 0 : index
    %c0_95 = arith.constant 0 : index
    %620 = vector.load %arg13[%c0_94, %c0_95] : memref<1x128xf32, #tpu.memory_space<vmem>>, vector<1x128xf32>
    %621 = vector.broadcast %620 : vector<1x128xf32> to vector<16x128xf32>
    %622 = arith.addf %619, %621 : vector<16x128xf32>
    %623 = vector.shape_cast %622 : vector<16x128xf32> to vector<2x8x128xf32>
    %c0_96 = arith.constant 0 : index
    %c0_97 = arith.constant 0 : index
    %c0_98 = arith.constant 0 : index
    %624 = vector.load %arg14[%c0_96, %c0_97, %c0_98] : memref<2x8x128xf32, #tpu.memory_space<vmem>>, vector<2x8x128xf32>
    tpu.vector_store %arg14[%c0_96, %c0_97, %c0_98], %623 {strides = array<i32>} : memref<2x8x128xf32, #tpu.memory_space<vmem>>, vector<2x8x128xf32>,
    return
  }
  func.func @transform_0(%arg0: i32) -> (i32, i32, i32) {
    %c0_i32 = arith.constant 0 : i32
    %c0_i32_0 = arith.constant 0 : i32
    %c0_i32_1 = arith.constant 0 : i32
    return %arg0, %c0_i32, %c0_i32_0 : i32, i32, i32
  }
  func.func @transform_1(%arg0: i32) -> (i32, i32, i32) {
    %c0_i32 = arith.constant 0 : i32
    %c0_i32_0 = arith.constant 0 : i32
    %c0_i32_1 = arith.constant 0 : i32
    return %arg0, %c0_i32, %c0_i32_0 : i32, i32, i32
  }
  func.func @transform_2(%arg0: i32) -> (i32, i32, i32) {
    %c0_i32 = arith.constant 0 : i32
    %c0_i32_0 = arith.constant 0 : i32
    %c0_i32_1 = arith.constant 0 : i32
    return %arg0, %c0_i32, %c0_i32_0 : i32, i32, i32
  }
  func.func @transform_3(%arg0: i32) -> (i32, i32) {
    %c0_i32 = arith.constant 0 : i32
    %c0_i32_0 = arith.constant 0 : i32
    %c0_i32_1 = arith.constant 0 : i32
    return %c0_i32, %c0_i32_0 : i32, i32
  }
  func.func @transform_4(%arg0: i32) -> (i32, i32) {
    %c0_i32 = arith.constant 0 : i32
    %c0_i32_0 = arith.constant 0 : i32
    %c0_i32_1 = arith.constant 0 : i32
    return %c0_i32, %c0_i32_0 : i32, i32
  }
  func.func @transform_5(%arg0: i32) -> (i32, i32) {
    %c0_i32 = arith.constant 0 : i32
    %c0_i32_0 = arith.constant 0 : i32
    %c0_i32_1 = arith.constant 0 : i32
    return %c0_i32, %c0_i32_0 : i32, i32
  }
  func.func @transform_6(%arg0: i32) -> (i32, i32) {
    %c0_i32 = arith.constant 0 : i32
    %c0_i32_0 = arith.constant 0 : i32
    %c0_i32_1 = arith.constant 0 : i32
    return %c0_i32, %c0_i32_0 : i32, i32
  }
  func.func @transform_7(%arg0: i32) -> (i32, i32) {
    %c0_i32 = arith.constant 0 : i32
    %c0_i32_0 = arith.constant 0 : i32
    %c0_i32_1 = arith.constant 0 : i32
    return %c0_i32, %c0_i32_0 : i32, i32
  }
  func.func @transform_8(%arg0: i32) -> (i32, i32) {
    %c0_i32 = arith.constant 0 : i32
    %c0_i32_0 = arith.constant 0 : i32
    %c0_i32_1 = arith.constant 0 : i32
    return %c0_i32, %c0_i32_0 : i32, i32
  }
  func.func @transform_9(%arg0: i32) -> (i32, i32) {
    %c0_i32 = arith.constant 0 : i32
    %c0_i32_0 = arith.constant 0 : i32
    %c0_i32_1 = arith.constant 0 : i32
    return %c0_i32, %c0_i32_0 : i32, i32
  }
  func.func @transform_10(%arg0: i32) -> (i32, i32) {
    %c0_i32 = arith.constant 0 : i32
    %c0_i32_0 = arith.constant 0 : i32
    %c0_i32_1 = arith.constant 0 : i32
    return %c0_i32, %c0_i32_0 : i32, i32
  }
  func.func @transform_11(%arg0: i32) -> (i32, i32) {
    %c0_i32 = arith.constant 0 : i32
    %c0_i32_0 = arith.constant 0 : i32
    %c0_i32_1 = arith.constant 0 : i32
    return %c0_i32, %c0_i32_0 : i32, i32
  }
  func.func @transform_12(%arg0: i32) -> (i32, i32) {
    %c0_i32 = arith.constant 0 : i32
    %c0_i32_0 = arith.constant 0 : i32
    %c0_i32_1 = arith.constant 0 : i32
    return %c0_i32, %c0_i32_0 : i32, i32
  }
  func.func @transform_13(%arg0: i32) -> (i32, i32, i32) {
    %c0_i32 = arith.constant 0 : i32
    %c0_i32_0 = arith.constant 0 : i32
    %c0_i32_1 = arith.constant 0 : i32
    return %arg0, %c0_i32, %c0_i32_0 : i32, i32, i32
  }
  func.func @transform_14(%arg0: i32) -> (i32, i32, i32) {
    %c0_i32 = arith.constant 0 : i32
    %c0_i32_0 = arith.constant 0 : i32
    %c0_i32_1 = arith.constant 0 : i32
    return %arg0, %c0_i32, %c0_i32_0 : i32, i32, i32
  }
}

module attributes {stable_mosaic.version = 11 : i64} {
  func.func @_dtd_fused_kernel(%arg0: i32, %arg1: memref<2x8x128xf32, #tpu.memory_space<vmem>>, %arg2: memref<2x128x32xbf16, #tpu.memory_space<vmem>>, %arg3: memref<2x8x32xbf16, #tpu.memory_space<vmem>>, %arg4: memref<32x128xbf16, #tpu.memory_space<vmem>>, %arg5: memref<1x128xf32, #tpu.memory_space<vmem>>, %arg6: memref<16x64xbf16, #tpu.memory_space<vmem>>, %arg7: memref<16x64xbf16, #tpu.memory_space<vmem>>, %arg8: memref<64x96xbf16, #tpu.memory_space<vmem>>, %arg9: memref<1x96xf32, #tpu.memory_space<vmem>>, %arg10: memref<32x96xbf16, #tpu.memory_space<vmem>>, %arg11: memref<1x96xf32, #tpu.memory_space<vmem>>, %arg12: memref<32x128xbf16, #tpu.memory_space<vmem>>, %arg13: memref<1x128xf32, #tpu.memory_space<vmem>>, %arg14: memref<2x8x128xf32, #tpu.memory_space<vmem>>, %arg15: memref<2x8x128xf32, #tpu.memory_space<vmem>>) attributes {dimension_semantics = [#tpu.dimension_semantics<parallel>], iteration_bounds = array<i64: 1>, scalar_prefetch = 0 : i64, scratch_operands = 0 : i64, tpu.core_type = #tpu.core_type<tc>, window_params = [{transform_indices = @transform_0, window_bounds = array<i64: 2, 8, 128>}, {transform_indices = @transform_1, window_bounds = array<i64: 2, 128, 32>}, {transform_indices = @transform_2, window_bounds = array<i64: 2, 8, 32>}, {pipeline_mode = #tpu.pipeline_mode<synchronous>, transform_indices = @transform_3, window_bounds = array<i64: 32, 128>}, {pipeline_mode = #tpu.pipeline_mode<synchronous>, transform_indices = @transform_4, window_bounds = array<i64: 1, 128>}, {pipeline_mode = #tpu.pipeline_mode<synchronous>, transform_indices = @transform_5, window_bounds = array<i64: 16, 64>}, {pipeline_mode = #tpu.pipeline_mode<synchronous>, transform_indices = @transform_6, window_bounds = array<i64: 16, 64>}, {pipeline_mode = #tpu.pipeline_mode<synchronous>, transform_indices = @transform_7, window_bounds = array<i64: 64, 96>}, {pipeline_mode = #tpu.pipeline_mode<synchronous>, transform_indices = @transform_8, window_bounds = array<i64: 1, 96>}, {pipeline_mode = #tpu.pipeline_mode<synchronous>, transform_indices = @transform_9, window_bounds = array<i64: 32, 96>}, {pipeline_mode = #tpu.pipeline_mode<synchronous>, transform_indices = @transform_10, window_bounds = array<i64: 1, 96>}, {pipeline_mode = #tpu.pipeline_mode<synchronous>, transform_indices = @transform_11, window_bounds = array<i64: 32, 128>}, {pipeline_mode = #tpu.pipeline_mode<synchronous>, transform_indices = @transform_12, window_bounds = array<i64: 1, 128>}, {transform_indices = @transform_13, window_bounds = array<i64: 2, 8, 128>}, {transform_indices = @transform_14, window_bounds = array<i64: 2, 8, 128>}]} {
    %c0 = arith.constant 0 : index
    %c0_0 = arith.constant 0 : index
    %c0_1 = arith.constant 0 : index
    %0 = vector.load %arg1[%c0, %c0_0, %c0_1] : memref<2x8x128xf32, #tpu.memory_space<vmem>>, vector<2x8x128xf32>
    %cst = arith.constant dense<0.000000e+00> : vector<2x8xf32>
    %1 = vector.multi_reduction <add>, %0, %cst [2] : vector<2x8x128xf32> to vector<2x8xf32>
    %2 = vector.shape_cast %1 : vector<2x8xf32> to vector<2x8x1xf32>
    %3 = vector.broadcast %2 : vector<2x8x1xf32> to vector<2x8x128xf32>
    %4 = arith.divf %0, %3 : vector<2x8x128xf32>
    %c0_2 = arith.constant 0 : index
    %c0_3 = arith.constant 0 : index
    %c0_4 = arith.constant 0 : index
    %5 = vector.load %arg15[%c0_2, %c0_3, %c0_4] : memref<2x8x128xf32, #tpu.memory_space<vmem>>, vector<2x8x128xf32>
    tpu.vector_store %arg15[%c0_2, %c0_3, %c0_4], %4 {strides = array<i32>} : memref<2x8x128xf32, #tpu.memory_space<vmem>>, vector<2x8x128xf32>,
    %6 = arith.truncf %4 : vector<2x8x128xf32> to vector<2x8x128xbf16>
    %c0_5 = arith.constant 0 : index
    %c0_6 = arith.constant 0 : index
    %c0_7 = arith.constant 0 : index
    %7 = vector.load %arg2[%c0_5, %c0_6, %c0_7] : memref<2x128x32xbf16, #tpu.memory_space<vmem>>, vector<2x128x32xbf16>
    "tpu.trace_start"() <{level = 10 : i32, message = "bth,bhc->btc"}> : () -> ()
    %cst_8 = arith.constant dense<0.000000e+00> : vector<2x8x32xf32>
    %8 = tpu.matmul %6, %7, %cst_8 {dimension_numbers = #tpu.dot_dimension_numbers<[2], [1], [1], [2], [0, 0, 0, 1, 1, 2], [0], [0]>} : vector<2x8x128xbf16>, vector<2x128x32xbf16>, vector<2x8x32xf32> -> vector<2x8x32xf32>
    "tpu.trace_stop"() : () -> ()
    %9 = vector.shape_cast %8 : vector<2x8x32xf32> to vector<16x32xf32>
    %10 = arith.truncf %9 : vector<16x32xf32> to vector<16x32xbf16>
    %c0_9 = arith.constant 0 : index
    %c0_10 = arith.constant 0 : index
    %11 = vector.load %arg4[%c0_9, %c0_10] : memref<32x128xbf16, #tpu.memory_space<vmem>>, vector<32x128xbf16>
    %cst_11 = arith.constant dense<0.000000e+00> : vector<16x128xf32>
    %12 = tpu.matmul %10, %11, %cst_11 {dimension_numbers = #tpu.dot_dimension_numbers<[1], [0], [0], [1], [0, 0, 1, 1], [], []>} : vector<16x32xbf16>, vector<32x128xbf16>, vector<16x128xf32> -> vector<16x128xf32>
    %c0_12 = arith.constant 0 : index
    %c0_13 = arith.constant 0 : index
    %13 = vector.load %arg5[%c0_12, %c0_13] : memref<1x128xf32, #tpu.memory_space<vmem>>, vector<1x128xf32>
    %14 = vector.broadcast %13 : vector<1x128xf32> to vector<16x128xf32>
    %15 = arith.addf %12, %14 : vector<16x128xf32>
    %16 = vector.shape_cast %15 : vector<16x128xf32> to vector<2x8x128xf32>
    %c0_14 = arith.constant 0 : index
    %c0_15 = arith.constant 0 : index
    %17 = vector.load %arg6[%c0_14, %c0_15] : memref<16x64xbf16, #tpu.memory_space<vmem>>, vector<16x64xbf16>
    %c0_16 = arith.constant 0 : index
    %c0_17 = arith.constant 0 : index
    %18 = vector.load %arg7[%c0_16, %c0_17] : memref<16x64xbf16, #tpu.memory_space<vmem>>, vector<16x64xbf16>
    %cst_18 = arith.constant 0.000000e+00 : f32
    %19 = vector.broadcast %cst_18 : f32 to vector<2x16xf32>
    %cst_19 = arith.constant 0.000000e+00 : f32
    %20 = vector.broadcast %cst_19 : f32 to vector<2x16xf32>
    %cst_20 = arith.constant 0.000000e+00 : f32
    %21 = vector.broadcast %cst_20 : f32 to vector<2x16xf32>
    %cst_21 = arith.constant 0.000000e+00 : f32
    %22 = vector.broadcast %cst_21 : f32 to vector<2x16xf32>
    %23 = vector.extract_strided_slice %16 {offsets = [0, 0, 0], sizes = [2, 1, 64], strides = [1, 1, 1]} : vector<2x8x128xf32> to vector<2x1x64xf32>
    %24 = vector.shape_cast %23 : vector<2x1x64xf32> to vector<2x64xf32>
    %25 = arith.truncf %19 : vector<2x16xf32> to vector<2x16xbf16>
    %cst_22 = arith.constant dense<0.000000e+00> : vector<2x64xf32>
    %26 = tpu.matmul %25, %17, %cst_22 {dimension_numbers = #tpu.dot_dimension_numbers<[1], [0], [0], [1], [0, 0, 1, 1], [], []>} : vector<2x16xbf16>, vector<16x64xbf16>, vector<2x64xf32> -> vector<2x64xf32>
    %27 = arith.addf %24, %26 : vector<2x64xf32>
    %28 = vector.extract_strided_slice %16 {offsets = [0, 7, 64], sizes = [2, 1, 64], strides = [1, 1, 1]} : vector<2x8x128xf32> to vector<2x1x64xf32>
    %29 = vector.shape_cast %28 : vector<2x1x64xf32> to vector<2x64xf32>
    %30 = arith.truncf %21 : vector<2x16xf32> to vector<2x16xbf16>
    %cst_23 = arith.constant dense<0.000000e+00> : vector<2x64xf32>
    %31 = tpu.matmul %30, %18, %cst_23 {dimension_numbers = #tpu.dot_dimension_numbers<[1], [0], [0], [1], [0, 0, 1, 1], [], []>} : vector<2x16xbf16>, vector<16x64xbf16>, vector<2x64xf32> -> vector<2x64xf32>
    %32 = arith.addf %29, %31 : vector<2x64xf32>
    %33 = vector.extract_strided_slice %27 {offsets = [0, 0], sizes = [2, 48], strides = [1, 1]} : vector<2x64xf32> to vector<2x48xf32>
    %34 = arith.negf %33 : vector<2x48xf32>
    %35 = math.exp %34 : vector<2x48xf32>
    %cst_24 = arith.constant 1.000000e+00 : f32
    %36 = vector.broadcast %cst_24 : f32 to vector<2x48xf32>
    %37 = arith.addf %36, %35 : vector<2x48xf32>
    %38 = arith.divf %36, %37 : vector<2x48xf32>
    %39 = vector.extract_strided_slice %27 {offsets = [0, 48], sizes = [2, 16], strides = [1, 1]} : vector<2x64xf32> to vector<2x16xf32>
    %40 = math.tanh %39 : vector<2x16xf32>
    %41 = vector.extract_strided_slice %38 {offsets = [0, 16], sizes = [2, 16], strides = [1, 1]} : vector<2x48xf32> to vector<2x16xf32>
    %42 = arith.mulf %41, %20 : vector<2x16xf32>
    %43 = vector.extract_strided_slice %38 {offsets = [0, 0], sizes = [2, 16], strides = [1, 1]} : vector<2x48xf32> to vector<2x16xf32>
    %44 = arith.mulf %43, %40 : vector<2x16xf32>
    %45 = arith.addf %42, %44 : vector<2x16xf32>
    %46 = vector.extract_strided_slice %38 {offsets = [0, 32], sizes = [2, 16], strides = [1, 1]} : vector<2x48xf32> to vector<2x16xf32>
    %47 = math.tanh %45 : vector<2x16xf32>
    %48 = arith.mulf %46, %47 : vector<2x16xf32>
    %49 = vector.extract_strided_slice %32 {offsets = [0, 0], sizes = [2, 48], strides = [1, 1]} : vector<2x64xf32> to vector<2x48xf32>
    %50 = arith.negf %49 : vector<2x48xf32>
    %51 = math.exp %50 : vector<2x48xf32>
    %cst_25 = arith.constant 1.000000e+00 : f32
    %52 = vector.broadcast %cst_25 : f32 to vector<2x48xf32>
    %53 = arith.addf %52, %51 : vector<2x48xf32>
    %54 = arith.divf %52, %53 : vector<2x48xf32>
    %55 = vector.extract_strided_slice %32 {offsets = [0, 48], sizes = [2, 16], strides = [1, 1]} : vector<2x64xf32> to vector<2x16xf32>
    %56 = math.tanh %55 : vector<2x16xf32>
    %57 = vector.extract_strided_slice %54 {offsets = [0, 16], sizes = [2, 16], strides = [1, 1]} : vector<2x48xf32> to vector<2x16xf32>
    %58 = arith.mulf %57, %22 : vector<2x16xf32>
    %59 = vector.extract_strided_slice %54 {offsets = [0, 0], sizes = [2, 16], strides = [1, 1]} : vector<2x48xf32> to vector<2x16xf32>
    %60 = arith.mulf %59, %56 : vector<2x16xf32>
    %61 = arith.addf %58, %60 : vector<2x16xf32>
    %62 = vector.extract_strided_slice %54 {offsets = [0, 32], sizes = [2, 16], strides = [1, 1]} : vector<2x48xf32> to vector<2x16xf32>
    %63 = math.tanh %61 : vector<2x16xf32>
    %64 = arith.mulf %62, %63 : vector<2x16xf32>
    %65 = vector.extract_strided_slice %16 {offsets = [0, 1, 0], sizes = [2, 1, 64], strides = [1, 1, 1]} : vector<2x8x128xf32> to vector<2x1x64xf32>
    %66 = vector.shape_cast %65 : vector<2x1x64xf32> to vector<2x64xf32>
    %67 = arith.truncf %48 : vector<2x16xf32> to vector<2x16xbf16>
    %cst_26 = arith.constant dense<0.000000e+00> : vector<2x64xf32>
    %68 = tpu.matmul %67, %17, %cst_26 {dimension_numbers = #tpu.dot_dimension_numbers<[1], [0], [0], [1], [0, 0, 1, 1], [], []>} : vector<2x16xbf16>, vector<16x64xbf16>, vector<2x64xf32> -> vector<2x64xf32>
    %69 = arith.addf %66, %68 : vector<2x64xf32>
    %70 = vector.extract_strided_slice %16 {offsets = [0, 6, 64], sizes = [2, 1, 64], strides = [1, 1, 1]} : vector<2x8x128xf32> to vector<2x1x64xf32>
    %71 = vector.shape_cast %70 : vector<2x1x64xf32> to vector<2x64xf32>
    %72 = arith.truncf %64 : vector<2x16xf32> to vector<2x16xbf16>
    %cst_27 = arith.constant dense<0.000000e+00> : vector<2x64xf32>
    %73 = tpu.matmul %72, %18, %cst_27 {dimension_numbers = #tpu.dot_dimension_numbers<[1], [0], [0], [1], [0, 0, 1, 1], [], []>} : vector<2x16xbf16>, vector<16x64xbf16>, vector<2x64xf32> -> vector<2x64xf32>
    %74 = arith.addf %71, %73 : vector<2x64xf32>
    %75 = vector.extract_strided_slice %69 {offsets = [0, 0], sizes = [2, 48], strides = [1, 1]} : vector<2x64xf32> to vector<2x48xf32>
    %76 = arith.negf %75 : vector<2x48xf32>
    %77 = math.exp %76 : vector<2x48xf32>
    %cst_28 = arith.constant 1.000000e+00 : f32
    %78 = vector.broadcast %cst_28 : f32 to vector<2x48xf32>
    %79 = arith.addf %78, %77 : vector<2x48xf32>
    %80 = arith.divf %78, %79 : vector<2x48xf32>
    %81 = vector.extract_strided_slice %69 {offsets = [0, 48], sizes = [2, 16], strides = [1, 1]} : vector<2x64xf32> to vector<2x16xf32>
    %82 = math.tanh %81 : vector<2x16xf32>
    %83 = vector.extract_strided_slice %80 {offsets = [0, 16], sizes = [2, 16], strides = [1, 1]} : vector<2x48xf32> to vector<2x16xf32>
    %84 = arith.mulf %83, %45 : vector<2x16xf32>
    %85 = vector.extract_strided_slice %80 {offsets = [0, 0], sizes = [2, 16], strides = [1, 1]} : vector<2x48xf32> to vector<2x16xf32>
    %86 = arith.mulf %85, %82 : vector<2x16xf32>
    %87 = arith.addf %84, %86 : vector<2x16xf32>
    %88 = vector.extract_strided_slice %80 {offsets = [0, 32], sizes = [2, 16], strides = [1, 1]} : vector<2x48xf32> to vector<2x16xf32>
    %89 = math.tanh %87 : vector<2x16xf32>
    %90 = arith.mulf %88, %89 : vector<2x16xf32>
    %91 = vector.extract_strided_slice %74 {offsets = [0, 0], sizes = [2, 48], strides = [1, 1]} : vector<2x64xf32> to vector<2x48xf32>
    %92 = arith.negf %91 : vector<2x48xf32>
    %93 = math.exp %92 : vector<2x48xf32>
    %cst_29 = arith.constant 1.000000e+00 : f32
    %94 = vector.broadcast %cst_29 : f32 to vector<2x48xf32>
    %95 = arith.addf %94, %93 : vector<2x48xf32>
    %96 = arith.divf %94, %95 : vector<2x48xf32>
    %97 = vector.extract_strided_slice %74 {offsets = [0, 48], sizes = [2, 16], strides = [1, 1]} : vector<2x64xf32> to vector<2x16xf32>
    %98 = math.tanh %97 : vector<2x16xf32>
    %99 = vector.extract_strided_slice %96 {offsets = [0, 16], sizes = [2, 16], strides = [1, 1]} : vector<2x48xf32> to vector<2x16xf32>
    %100 = arith.mulf %99, %61 : vector<2x16xf32>
    %101 = vector.extract_strided_slice %96 {offsets = [0, 0], sizes = [2, 16], strides = [1, 1]} : vector<2x48xf32> to vector<2x16xf32>
    %102 = arith.mulf %101, %98 : vector<2x16xf32>
    %103 = arith.addf %100, %102 : vector<2x16xf32>
    %104 = vector.extract_strided_slice %96 {offsets = [0, 32], sizes = [2, 16], strides = [1, 1]} : vector<2x48xf32> to vector<2x16xf32>
    %105 = math.tanh %103 : vector<2x16xf32>
    %106 = arith.mulf %104, %105 : vector<2x16xf32>
    %107 = vector.extract_strided_slice %16 {offsets = [0, 2, 0], sizes = [2, 1, 64], strides = [1, 1, 1]} : vector<2x8x128xf32> to vector<2x1x64xf32>
    %108 = vector.shape_cast %107 : vector<2x1x64xf32> to vector<2x64xf32>
    %109 = arith.truncf %90 : vector<2x16xf32> to vector<2x16xbf16>
    %cst_30 = arith.constant dense<0.000000e+00> : vector<2x64xf32>
    %110 = tpu.matmul %109, %17, %cst_30 {dimension_numbers = #tpu.dot_dimension_numbers<[1], [0], [0], [1], [0, 0, 1, 1], [], []>} : vector<2x16xbf16>, vector<16x64xbf16>, vector<2x64xf32> -> vector<2x64xf32>
    %111 = arith.addf %108, %110 : vector<2x64xf32>
    %112 = vector.extract_strided_slice %16 {offsets = [0, 5, 64], sizes = [2, 1, 64], strides = [1, 1, 1]} : vector<2x8x128xf32> to vector<2x1x64xf32>
    %113 = vector.shape_cast %112 : vector<2x1x64xf32> to vector<2x64xf32>
    %114 = arith.truncf %106 : vector<2x16xf32> to vector<2x16xbf16>
    %cst_31 = arith.constant dense<0.000000e+00> : vector<2x64xf32>
    %115 = tpu.matmul %114, %18, %cst_31 {dimension_numbers = #tpu.dot_dimension_numbers<[1], [0], [0], [1], [0, 0, 1, 1], [], []>} : vector<2x16xbf16>, vector<16x64xbf16>, vector<2x64xf32> -> vector<2x64xf32>
    %116 = arith.addf %113, %115 : vector<2x64xf32>
    %117 = vector.extract_strided_slice %111 {offsets = [0, 0], sizes = [2, 48], strides = [1, 1]} : vector<2x64xf32> to vector<2x48xf32>
    %118 = arith.negf %117 : vector<2x48xf32>
    %119 = math.exp %118 : vector<2x48xf32>
    %cst_32 = arith.constant 1.000000e+00 : f32
    %120 = vector.broadcast %cst_32 : f32 to vector<2x48xf32>
    %121 = arith.addf %120, %119 : vector<2x48xf32>
    %122 = arith.divf %120, %121 : vector<2x48xf32>
    %123 = vector.extract_strided_slice %111 {offsets = [0, 48], sizes = [2, 16], strides = [1, 1]} : vector<2x64xf32> to vector<2x16xf32>
    %124 = math.tanh %123 : vector<2x16xf32>
    %125 = vector.extract_strided_slice %122 {offsets = [0, 16], sizes = [2, 16], strides = [1, 1]} : vector<2x48xf32> to vector<2x16xf32>
    %126 = arith.mulf %125, %87 : vector<2x16xf32>
    %127 = vector.extract_strided_slice %122 {offsets = [0, 0], sizes = [2, 16], strides = [1, 1]} : vector<2x48xf32> to vector<2x16xf32>
    %128 = arith.mulf %127, %124 : vector<2x16xf32>
    %129 = arith.addf %126, %128 : vector<2x16xf32>
    %130 = vector.extract_strided_slice %122 {offsets = [0, 32], sizes = [2, 16], strides = [1, 1]} : vector<2x48xf32> to vector<2x16xf32>
    %131 = math.tanh %129 : vector<2x16xf32>
    %132 = arith.mulf %130, %131 : vector<2x16xf32>
    %133 = vector.extract_strided_slice %116 {offsets = [0, 0], sizes = [2, 48], strides = [1, 1]} : vector<2x64xf32> to vector<2x48xf32>
    %134 = arith.negf %133 : vector<2x48xf32>
    %135 = math.exp %134 : vector<2x48xf32>
    %cst_33 = arith.constant 1.000000e+00 : f32
    %136 = vector.broadcast %cst_33 : f32 to vector<2x48xf32>
    %137 = arith.addf %136, %135 : vector<2x48xf32>
    %138 = arith.divf %136, %137 : vector<2x48xf32>
    %139 = vector.extract_strided_slice %116 {offsets = [0, 48], sizes = [2, 16], strides = [1, 1]} : vector<2x64xf32> to vector<2x16xf32>
    %140 = math.tanh %139 : vector<2x16xf32>
    %141 = vector.extract_strided_slice %138 {offsets = [0, 16], sizes = [2, 16], strides = [1, 1]} : vector<2x48xf32> to vector<2x16xf32>
    %142 = arith.mulf %141, %103 : vector<2x16xf32>
    %143 = vector.extract_strided_slice %138 {offsets = [0, 0], sizes = [2, 16], strides = [1, 1]} : vector<2x48xf32> to vector<2x16xf32>
    %144 = arith.mulf %143, %140 : vector<2x16xf32>
    %145 = arith.addf %142, %144 : vector<2x16xf32>
    %146 = vector.extract_strided_slice %138 {offsets = [0, 32], sizes = [2, 16], strides = [1, 1]} : vector<2x48xf32> to vector<2x16xf32>
    %147 = math.tanh %145 : vector<2x16xf32>
    %148 = arith.mulf %146, %147 : vector<2x16xf32>
    %149 = vector.extract_strided_slice %16 {offsets = [0, 3, 0], sizes = [2, 1, 64], strides = [1, 1, 1]} : vector<2x8x128xf32> to vector<2x1x64xf32>
    %150 = vector.shape_cast %149 : vector<2x1x64xf32> to vector<2x64xf32>
    %151 = arith.truncf %132 : vector<2x16xf32> to vector<2x16xbf16>
    %cst_34 = arith.constant dense<0.000000e+00> : vector<2x64xf32>
    %152 = tpu.matmul %151, %17, %cst_34 {dimension_numbers = #tpu.dot_dimension_numbers<[1], [0], [0], [1], [0, 0, 1, 1], [], []>} : vector<2x16xbf16>, vector<16x64xbf16>, vector<2x64xf32> -> vector<2x64xf32>
    %153 = arith.addf %150, %152 : vector<2x64xf32>
    %154 = vector.extract_strided_slice %16 {offsets = [0, 4, 64], sizes = [2, 1, 64], strides = [1, 1, 1]} : vector<2x8x128xf32> to vector<2x1x64xf32>
    %155 = vector.shape_cast %154 : vector<2x1x64xf32> to vector<2x64xf32>
    %156 = arith.truncf %148 : vector<2x16xf32> to vector<2x16xbf16>
    %cst_35 = arith.constant dense<0.000000e+00> : vector<2x64xf32>
    %157 = tpu.matmul %156, %18, %cst_35 {dimension_numbers = #tpu.dot_dimension_numbers<[1], [0], [0], [1], [0, 0, 1, 1], [], []>} : vector<2x16xbf16>, vector<16x64xbf16>, vector<2x64xf32> -> vector<2x64xf32>
    %158 = arith.addf %155, %157 : vector<2x64xf32>
    %159 = vector.extract_strided_slice %153 {offsets = [0, 0], sizes = [2, 48], strides = [1, 1]} : vector<2x64xf32> to vector<2x48xf32>
    %160 = arith.negf %159 : vector<2x48xf32>
    %161 = math.exp %160 : vector<2x48xf32>
    %cst_36 = arith.constant 1.000000e+00 : f32
    %162 = vector.broadcast %cst_36 : f32 to vector<2x48xf32>
    %163 = arith.addf %162, %161 : vector<2x48xf32>
    %164 = arith.divf %162, %163 : vector<2x48xf32>
    %165 = vector.extract_strided_slice %153 {offsets = [0, 48], sizes = [2, 16], strides = [1, 1]} : vector<2x64xf32> to vector<2x16xf32>
    %166 = math.tanh %165 : vector<2x16xf32>
    %167 = vector.extract_strided_slice %164 {offsets = [0, 16], sizes = [2, 16], strides = [1, 1]} : vector<2x48xf32> to vector<2x16xf32>
    %168 = arith.mulf %167, %129 : vector<2x16xf32>
    %169 = vector.extract_strided_slice %164 {offsets = [0, 0], sizes = [2, 16], strides = [1, 1]} : vector<2x48xf32> to vector<2x16xf32>
    %170 = arith.mulf %169, %166 : vector<2x16xf32>
    %171 = arith.addf %168, %170 : vector<2x16xf32>
    %172 = vector.extract_strided_slice %164 {offsets = [0, 32], sizes = [2, 16], strides = [1, 1]} : vector<2x48xf32> to vector<2x16xf32>
    %173 = math.tanh %171 : vector<2x16xf32>
    %174 = arith.mulf %172, %173 : vector<2x16xf32>
    %175 = vector.extract_strided_slice %158 {offsets = [0, 0], sizes = [2, 48], strides = [1, 1]} : vector<2x64xf32> to vector<2x48xf32>
    %176 = arith.negf %175 : vector<2x48xf32>
    %177 = math.exp %176 : vector<2x48xf32>
    %cst_37 = arith.constant 1.000000e+00 : f32
    %178 = vector.broadcast %cst_37 : f32 to vector<2x48xf32>
    %179 = arith.addf %178, %177 : vector<2x48xf32>
    %180 = arith.divf %178, %179 : vector<2x48xf32>
    %181 = vector.extract_strided_slice %158 {offsets = [0, 48], sizes = [2, 16], strides = [1, 1]} : vector<2x64xf32> to vector<2x16xf32>
    %182 = math.tanh %181 : vector<2x16xf32>
    %183 = vector.extract_strided_slice %180 {offsets = [0, 16], sizes = [2, 16], strides = [1, 1]} : vector<2x48xf32> to vector<2x16xf32>
    %184 = arith.mulf %183, %145 : vector<2x16xf32>
    %185 = vector.extract_strided_slice %180 {offsets = [0, 0], sizes = [2, 16], strides = [1, 1]} : vector<2x48xf32> to vector<2x16xf32>
    %186 = arith.mulf %185, %182 : vector<2x16xf32>
    %187 = arith.addf %184, %186 : vector<2x16xf32>
    %188 = vector.extract_strided_slice %180 {offsets = [0, 32], sizes = [2, 16], strides = [1, 1]} : vector<2x48xf32> to vector<2x16xf32>
    %189 = math.tanh %187 : vector<2x16xf32>
    %190 = arith.mulf %188, %189 : vector<2x16xf32>
    %191 = vector.extract_strided_slice %16 {offsets = [0, 4, 0], sizes = [2, 1, 64], strides = [1, 1, 1]} : vector<2x8x128xf32> to vector<2x1x64xf32>
    %192 = vector.shape_cast %191 : vector<2x1x64xf32> to vector<2x64xf32>
    %193 = arith.truncf %174 : vector<2x16xf32> to vector<2x16xbf16>
    %cst_38 = arith.constant dense<0.000000e+00> : vector<2x64xf32>
    %194 = tpu.matmul %193, %17, %cst_38 {dimension_numbers = #tpu.dot_dimension_numbers<[1], [0], [0], [1], [0, 0, 1, 1], [], []>} : vector<2x16xbf16>, vector<16x64xbf16>, vector<2x64xf32> -> vector<2x64xf32>
    %195 = arith.addf %192, %194 : vector<2x64xf32>
    %196 = vector.extract_strided_slice %16 {offsets = [0, 3, 64], sizes = [2, 1, 64], strides = [1, 1, 1]} : vector<2x8x128xf32> to vector<2x1x64xf32>
    %197 = vector.shape_cast %196 : vector<2x1x64xf32> to vector<2x64xf32>
    %198 = arith.truncf %190 : vector<2x16xf32> to vector<2x16xbf16>
    %cst_39 = arith.constant dense<0.000000e+00> : vector<2x64xf32>
    %199 = tpu.matmul %198, %18, %cst_39 {dimension_numbers = #tpu.dot_dimension_numbers<[1], [0], [0], [1], [0, 0, 1, 1], [], []>} : vector<2x16xbf16>, vector<16x64xbf16>, vector<2x64xf32> -> vector<2x64xf32>
    %200 = arith.addf %197, %199 : vector<2x64xf32>
    %201 = vector.extract_strided_slice %195 {offsets = [0, 0], sizes = [2, 48], strides = [1, 1]} : vector<2x64xf32> to vector<2x48xf32>
    %202 = arith.negf %201 : vector<2x48xf32>
    %203 = math.exp %202 : vector<2x48xf32>
    %cst_40 = arith.constant 1.000000e+00 : f32
    %204 = vector.broadcast %cst_40 : f32 to vector<2x48xf32>
    %205 = arith.addf %204, %203 : vector<2x48xf32>
    %206 = arith.divf %204, %205 : vector<2x48xf32>
    %207 = vector.extract_strided_slice %195 {offsets = [0, 48], sizes = [2, 16], strides = [1, 1]} : vector<2x64xf32> to vector<2x16xf32>
    %208 = math.tanh %207 : vector<2x16xf32>
    %209 = vector.extract_strided_slice %206 {offsets = [0, 16], sizes = [2, 16], strides = [1, 1]} : vector<2x48xf32> to vector<2x16xf32>
    %210 = arith.mulf %209, %171 : vector<2x16xf32>
    %211 = vector.extract_strided_slice %206 {offsets = [0, 0], sizes = [2, 16], strides = [1, 1]} : vector<2x48xf32> to vector<2x16xf32>
    %212 = arith.mulf %211, %208 : vector<2x16xf32>
    %213 = arith.addf %210, %212 : vector<2x16xf32>
    %214 = vector.extract_strided_slice %206 {offsets = [0, 32], sizes = [2, 16], strides = [1, 1]} : vector<2x48xf32> to vector<2x16xf32>
    %215 = math.tanh %213 : vector<2x16xf32>
    %216 = arith.mulf %214, %215 : vector<2x16xf32>
    %217 = vector.extract_strided_slice %200 {offsets = [0, 0], sizes = [2, 48], strides = [1, 1]} : vector<2x64xf32> to vector<2x48xf32>
    %218 = arith.negf %217 : vector<2x48xf32>
    %219 = math.exp %218 : vector<2x48xf32>
    %cst_41 = arith.constant 1.000000e+00 : f32
    %220 = vector.broadcast %cst_41 : f32 to vector<2x48xf32>
    %221 = arith.addf %220, %219 : vector<2x48xf32>
    %222 = arith.divf %220, %221 : vector<2x48xf32>
    %223 = vector.extract_strided_slice %200 {offsets = [0, 48], sizes = [2, 16], strides = [1, 1]} : vector<2x64xf32> to vector<2x16xf32>
    %224 = math.tanh %223 : vector<2x16xf32>
    %225 = vector.extract_strided_slice %222 {offsets = [0, 16], sizes = [2, 16], strides = [1, 1]} : vector<2x48xf32> to vector<2x16xf32>
    %226 = arith.mulf %225, %187 : vector<2x16xf32>
    %227 = vector.extract_strided_slice %222 {offsets = [0, 0], sizes = [2, 16], strides = [1, 1]} : vector<2x48xf32> to vector<2x16xf32>
    %228 = arith.mulf %227, %224 : vector<2x16xf32>
    %229 = arith.addf %226, %228 : vector<2x16xf32>
    %230 = vector.extract_strided_slice %222 {offsets = [0, 32], sizes = [2, 16], strides = [1, 1]} : vector<2x48xf32> to vector<2x16xf32>
    %231 = math.tanh %229 : vector<2x16xf32>
    %232 = arith.mulf %230, %231 : vector<2x16xf32>
    %233 = vector.extract_strided_slice %16 {offsets = [0, 5, 0], sizes = [2, 1, 64], strides = [1, 1, 1]} : vector<2x8x128xf32> to vector<2x1x64xf32>
    %234 = vector.shape_cast %233 : vector<2x1x64xf32> to vector<2x64xf32>
    %235 = arith.truncf %216 : vector<2x16xf32> to vector<2x16xbf16>
    %cst_42 = arith.constant dense<0.000000e+00> : vector<2x64xf32>
    %236 = tpu.matmul %235, %17, %cst_42 {dimension_numbers = #tpu.dot_dimension_numbers<[1], [0], [0], [1], [0, 0, 1, 1], [], []>} : vector<2x16xbf16>, vector<16x64xbf16>, vector<2x64xf32> -> vector<2x64xf32>
    %237 = arith.addf %234, %236 : vector<2x64xf32>
    %238 = vector.extract_strided_slice %16 {offsets = [0, 2, 64], sizes = [2, 1, 64], strides = [1, 1, 1]} : vector<2x8x128xf32> to vector<2x1x64xf32>
    %239 = vector.shape_cast %238 : vector<2x1x64xf32> to vector<2x64xf32>
    %240 = arith.truncf %232 : vector<2x16xf32> to vector<2x16xbf16>
    %cst_43 = arith.constant dense<0.000000e+00> : vector<2x64xf32>
    %241 = tpu.matmul %240, %18, %cst_43 {dimension_numbers = #tpu.dot_dimension_numbers<[1], [0], [0], [1], [0, 0, 1, 1], [], []>} : vector<2x16xbf16>, vector<16x64xbf16>, vector<2x64xf32> -> vector<2x64xf32>
    %242 = arith.addf %239, %241 : vector<2x64xf32>
    %243 = vector.extract_strided_slice %237 {offsets = [0, 0], sizes = [2, 48], strides = [1, 1]} : vector<2x64xf32> to vector<2x48xf32>
    %244 = arith.negf %243 : vector<2x48xf32>
    %245 = math.exp %244 : vector<2x48xf32>
    %cst_44 = arith.constant 1.000000e+00 : f32
    %246 = vector.broadcast %cst_44 : f32 to vector<2x48xf32>
    %247 = arith.addf %246, %245 : vector<2x48xf32>
    %248 = arith.divf %246, %247 : vector<2x48xf32>
    %249 = vector.extract_strided_slice %237 {offsets = [0, 48], sizes = [2, 16], strides = [1, 1]} : vector<2x64xf32> to vector<2x16xf32>
    %250 = math.tanh %249 : vector<2x16xf32>
    %251 = vector.extract_strided_slice %248 {offsets = [0, 16], sizes = [2, 16], strides = [1, 1]} : vector<2x48xf32> to vector<2x16xf32>
    %252 = arith.mulf %251, %213 : vector<2x16xf32>
    %253 = vector.extract_strided_slice %248 {offsets = [0, 0], sizes = [2, 16], strides = [1, 1]} : vector<2x48xf32> to vector<2x16xf32>
    %254 = arith.mulf %253, %250 : vector<2x16xf32>
    %255 = arith.addf %252, %254 : vector<2x16xf32>
    %256 = vector.extract_strided_slice %248 {offsets = [0, 32], sizes = [2, 16], strides = [1, 1]} : vector<2x48xf32> to vector<2x16xf32>
    %257 = math.tanh %255 : vector<2x16xf32>
    %258 = arith.mulf %256, %257 : vector<2x16xf32>
    %259 = vector.extract_strided_slice %242 {offsets = [0, 0], sizes = [2, 48], strides = [1, 1]} : vector<2x64xf32> to vector<2x48xf32>
    %260 = arith.negf %259 : vector<2x48xf32>
    %261 = math.exp %260 : vector<2x48xf32>
    %cst_45 = arith.constant 1.000000e+00 : f32
    %262 = vector.broadcast %cst_45 : f32 to vector<2x48xf32>
    %263 = arith.addf %262, %261 : vector<2x48xf32>
    %264 = arith.divf %262, %263 : vector<2x48xf32>
    %265 = vector.extract_strided_slice %242 {offsets = [0, 48], sizes = [2, 16], strides = [1, 1]} : vector<2x64xf32> to vector<2x16xf32>
    %266 = math.tanh %265 : vector<2x16xf32>
    %267 = vector.extract_strided_slice %264 {offsets = [0, 16], sizes = [2, 16], strides = [1, 1]} : vector<2x48xf32> to vector<2x16xf32>
    %268 = arith.mulf %267, %229 : vector<2x16xf32>
    %269 = vector.extract_strided_slice %264 {offsets = [0, 0], sizes = [2, 16], strides = [1, 1]} : vector<2x48xf32> to vector<2x16xf32>
    %270 = arith.mulf %269, %266 : vector<2x16xf32>
    %271 = arith.addf %268, %270 : vector<2x16xf32>
    %272 = vector.extract_strided_slice %264 {offsets = [0, 32], sizes = [2, 16], strides = [1, 1]} : vector<2x48xf32> to vector<2x16xf32>
    %273 = math.tanh %271 : vector<2x16xf32>
    %274 = arith.mulf %272, %273 : vector<2x16xf32>
    %275 = vector.extract_strided_slice %16 {offsets = [0, 6, 0], sizes = [2, 1, 64], strides = [1, 1, 1]} : vector<2x8x128xf32> to vector<2x1x64xf32>
    %276 = vector.shape_cast %275 : vector<2x1x64xf32> to vector<2x64xf32>
    %277 = arith.truncf %258 : vector<2x16xf32> to vector<2x16xbf16>
    %cst_46 = arith.constant dense<0.000000e+00> : vector<2x64xf32>
    %278 = tpu.matmul %277, %17, %cst_46 {dimension_numbers = #tpu.dot_dimension_numbers<[1], [0], [0], [1], [0, 0, 1, 1], [], []>} : vector<2x16xbf16>, vector<16x64xbf16>, vector<2x64xf32> -> vector<2x64xf32>
    %279 = arith.addf %276, %278 : vector<2x64xf32>
    %280 = vector.extract_strided_slice %16 {offsets = [0, 1, 64], sizes = [2, 1, 64], strides = [1, 1, 1]} : vector<2x8x128xf32> to vector<2x1x64xf32>
    %281 = vector.shape_cast %280 : vector<2x1x64xf32> to vector<2x64xf32>
    %282 = arith.truncf %274 : vector<2x16xf32> to vector<2x16xbf16>
    %cst_47 = arith.constant dense<0.000000e+00> : vector<2x64xf32>
    %283 = tpu.matmul %282, %18, %cst_47 {dimension_numbers = #tpu.dot_dimension_numbers<[1], [0], [0], [1], [0, 0, 1, 1], [], []>} : vector<2x16xbf16>, vector<16x64xbf16>, vector<2x64xf32> -> vector<2x64xf32>
    %284 = arith.addf %281, %283 : vector<2x64xf32>
    %285 = vector.extract_strided_slice %279 {offsets = [0, 0], sizes = [2, 48], strides = [1, 1]} : vector<2x64xf32> to vector<2x48xf32>
    %286 = arith.negf %285 : vector<2x48xf32>
    %287 = math.exp %286 : vector<2x48xf32>
    %cst_48 = arith.constant 1.000000e+00 : f32
    %288 = vector.broadcast %cst_48 : f32 to vector<2x48xf32>
    %289 = arith.addf %288, %287 : vector<2x48xf32>
    %290 = arith.divf %288, %289 : vector<2x48xf32>
    %291 = vector.extract_strided_slice %279 {offsets = [0, 48], sizes = [2, 16], strides = [1, 1]} : vector<2x64xf32> to vector<2x16xf32>
    %292 = math.tanh %291 : vector<2x16xf32>
    %293 = vector.extract_strided_slice %290 {offsets = [0, 16], sizes = [2, 16], strides = [1, 1]} : vector<2x48xf32> to vector<2x16xf32>
    %294 = arith.mulf %293, %255 : vector<2x16xf32>
    %295 = vector.extract_strided_slice %290 {offsets = [0, 0], sizes = [2, 16], strides = [1, 1]} : vector<2x48xf32> to vector<2x16xf32>
    %296 = arith.mulf %295, %292 : vector<2x16xf32>
    %297 = arith.addf %294, %296 : vector<2x16xf32>
    %298 = vector.extract_strided_slice %290 {offsets = [0, 32], sizes = [2, 16], strides = [1, 1]} : vector<2x48xf32> to vector<2x16xf32>
    %299 = math.tanh %297 : vector<2x16xf32>
    %300 = arith.mulf %298, %299 : vector<2x16xf32>
    %301 = vector.extract_strided_slice %284 {offsets = [0, 0], sizes = [2, 48], strides = [1, 1]} : vector<2x64xf32> to vector<2x48xf32>
    %302 = arith.negf %301 : vector<2x48xf32>
    %303 = math.exp %302 : vector<2x48xf32>
    %cst_49 = arith.constant 1.000000e+00 : f32
    %304 = vector.broadcast %cst_49 : f32 to vector<2x48xf32>
    %305 = arith.addf %304, %303 : vector<2x48xf32>
    %306 = arith.divf %304, %305 : vector<2x48xf32>
    %307 = vector.extract_strided_slice %284 {offsets = [0, 48], sizes = [2, 16], strides = [1, 1]} : vector<2x64xf32> to vector<2x16xf32>
    %308 = math.tanh %307 : vector<2x16xf32>
    %309 = vector.extract_strided_slice %306 {offsets = [0, 16], sizes = [2, 16], strides = [1, 1]} : vector<2x48xf32> to vector<2x16xf32>
    %310 = arith.mulf %309, %271 : vector<2x16xf32>
    %311 = vector.extract_strided_slice %306 {offsets = [0, 0], sizes = [2, 16], strides = [1, 1]} : vector<2x48xf32> to vector<2x16xf32>
    %312 = arith.mulf %311, %308 : vector<2x16xf32>
    %313 = arith.addf %310, %312 : vector<2x16xf32>
    %314 = vector.extract_strided_slice %306 {offsets = [0, 32], sizes = [2, 16], strides = [1, 1]} : vector<2x48xf32> to vector<2x16xf32>
    %315 = math.tanh %313 : vector<2x16xf32>
    %316 = arith.mulf %314, %315 : vector<2x16xf32>
    %317 = vector.extract_strided_slice %16 {offsets = [0, 7, 0], sizes = [2, 1, 64], strides = [1, 1, 1]} : vector<2x8x128xf32> to vector<2x1x64xf32>
    %318 = vector.shape_cast %317 : vector<2x1x64xf32> to vector<2x64xf32>
    %319 = arith.truncf %300 : vector<2x16xf32> to vector<2x16xbf16>
    %cst_50 = arith.constant dense<0.000000e+00> : vector<2x64xf32>
    %320 = tpu.matmul %319, %17, %cst_50 {dimension_numbers = #tpu.dot_dimension_numbers<[1], [0], [0], [1], [0, 0, 1, 1], [], []>} : vector<2x16xbf16>, vector<16x64xbf16>, vector<2x64xf32> -> vector<2x64xf32>
    %321 = arith.addf %318, %320 : vector<2x64xf32>
    %322 = vector.extract_strided_slice %16 {offsets = [0, 0, 64], sizes = [2, 1, 64], strides = [1, 1, 1]} : vector<2x8x128xf32> to vector<2x1x64xf32>
    %323 = vector.shape_cast %322 : vector<2x1x64xf32> to vector<2x64xf32>
    %324 = arith.truncf %316 : vector<2x16xf32> to vector<2x16xbf16>
    %cst_51 = arith.constant dense<0.000000e+00> : vector<2x64xf32>
    %325 = tpu.matmul %324, %18, %cst_51 {dimension_numbers = #tpu.dot_dimension_numbers<[1], [0], [0], [1], [0, 0, 1, 1], [], []>} : vector<2x16xbf16>, vector<16x64xbf16>, vector<2x64xf32> -> vector<2x64xf32>
    %326 = arith.addf %323, %325 : vector<2x64xf32>
    %327 = vector.extract_strided_slice %321 {offsets = [0, 0], sizes = [2, 48], strides = [1, 1]} : vector<2x64xf32> to vector<2x48xf32>
    %328 = arith.negf %327 : vector<2x48xf32>
    %329 = math.exp %328 : vector<2x48xf32>
    %cst_52 = arith.constant 1.000000e+00 : f32
    %330 = vector.broadcast %cst_52 : f32 to vector<2x48xf32>
    %331 = arith.addf %330, %329 : vector<2x48xf32>
    %332 = arith.divf %330, %331 : vector<2x48xf32>
    %333 = vector.extract_strided_slice %321 {offsets = [0, 48], sizes = [2, 16], strides = [1, 1]} : vector<2x64xf32> to vector<2x16xf32>
    %334 = math.tanh %333 : vector<2x16xf32>
    %335 = vector.extract_strided_slice %332 {offsets = [0, 16], sizes = [2, 16], strides = [1, 1]} : vector<2x48xf32> to vector<2x16xf32>
    %336 = arith.mulf %335, %297 : vector<2x16xf32>
    %337 = vector.extract_strided_slice %332 {offsets = [0, 0], sizes = [2, 16], strides = [1, 1]} : vector<2x48xf32> to vector<2x16xf32>
    %338 = arith.mulf %337, %334 : vector<2x16xf32>
    %339 = arith.addf %336, %338 : vector<2x16xf32>
    %340 = vector.extract_strided_slice %332 {offsets = [0, 32], sizes = [2, 16], strides = [1, 1]} : vector<2x48xf32> to vector<2x16xf32>
    %341 = math.tanh %339 : vector<2x16xf32>
    %342 = arith.mulf %340, %341 : vector<2x16xf32>
    %343 = vector.extract_strided_slice %326 {offsets = [0, 0], sizes = [2, 48], strides = [1, 1]} : vector<2x64xf32> to vector<2x48xf32>
    %344 = arith.negf %343 : vector<2x48xf32>
    %345 = math.exp %344 : vector<2x48xf32>
    %cst_53 = arith.constant 1.000000e+00 : f32
    %346 = vector.broadcast %cst_53 : f32 to vector<2x48xf32>
    %347 = arith.addf %346, %345 : vector<2x48xf32>
    %348 = arith.divf %346, %347 : vector<2x48xf32>
    %349 = vector.extract_strided_slice %326 {offsets = [0, 48], sizes = [2, 16], strides = [1, 1]} : vector<2x64xf32> to vector<2x16xf32>
    %350 = math.tanh %349 : vector<2x16xf32>
    %351 = vector.extract_strided_slice %348 {offsets = [0, 16], sizes = [2, 16], strides = [1, 1]} : vector<2x48xf32> to vector<2x16xf32>
    %352 = arith.mulf %351, %313 : vector<2x16xf32>
    %353 = vector.extract_strided_slice %348 {offsets = [0, 0], sizes = [2, 16], strides = [1, 1]} : vector<2x48xf32> to vector<2x16xf32>
    %354 = arith.mulf %353, %350 : vector<2x16xf32>
    %355 = arith.addf %352, %354 : vector<2x16xf32>
    %356 = vector.extract_strided_slice %348 {offsets = [0, 32], sizes = [2, 16], strides = [1, 1]} : vector<2x48xf32> to vector<2x16xf32>
    %357 = math.tanh %355 : vector<2x16xf32>
    %358 = arith.mulf %356, %357 : vector<2x16xf32>
    %359 = vector.shape_cast %48 : vector<2x16xf32> to vector<2x1x16xf32>
    %360 = vector.shape_cast %90 : vector<2x16xf32> to vector<2x1x16xf32>
    %361 = vector.shape_cast %132 : vector<2x16xf32> to vector<2x1x16xf32>
    %362 = vector.shape_cast %174 : vector<2x16xf32> to vector<2x1x16xf32>
    %363 = vector.shape_cast %216 : vector<2x16xf32> to vector<2x1x16xf32>
    %364 = vector.shape_cast %258 : vector<2x16xf32> to vector<2x1x16xf32>
    %365 = vector.shape_cast %300 : vector<2x16xf32> to vector<2x1x16xf32>
    %366 = vector.shape_cast %342 : vector<2x16xf32> to vector<2x1x16xf32>
    %367 = tpu.concatenate %359, %360, %361, %362, %363, %364, %365, %366 in 1 : vector<2x1x16xf32>, vector<2x1x16xf32>, vector<2x1x16xf32>, vector<2x1x16xf32>, vector<2x1x16xf32>, vector<2x1x16xf32>, vector<2x1x16xf32>, vector<2x1x16xf32> -> vector<2x8x16xf32>
    %368 = arith.truncf %367 : vector<2x8x16xf32> to vector<2x8x16xbf16>
    %369 = vector.shape_cast %358 : vector<2x16xf32> to vector<2x1x16xf32>
    %370 = vector.shape_cast %316 : vector<2x16xf32> to vector<2x1x16xf32>
    %371 = vector.shape_cast %274 : vector<2x16xf32> to vector<2x1x16xf32>
    %372 = vector.shape_cast %232 : vector<2x16xf32> to vector<2x1x16xf32>
    %373 = vector.shape_cast %190 : vector<2x16xf32> to vector<2x1x16xf32>
    %374 = vector.shape_cast %148 : vector<2x16xf32> to vector<2x1x16xf32>
    %375 = vector.shape_cast %106 : vector<2x16xf32> to vector<2x1x16xf32>
    %376 = vector.shape_cast %64 : vector<2x16xf32> to vector<2x1x16xf32>
    %377 = tpu.concatenate %369, %370, %371, %372, %373, %374, %375, %376 in 1 : vector<2x1x16xf32>, vector<2x1x16xf32>, vector<2x1x16xf32>, vector<2x1x16xf32>, vector<2x1x16xf32>, vector<2x1x16xf32>, vector<2x1x16xf32>, vector<2x1x16xf32> -> vector<2x8x16xf32>
    %378 = arith.truncf %377 : vector<2x8x16xf32> to vector<2x8x16xbf16>
    %c0_54 = arith.constant 0 : index
    %c0_55 = arith.constant 0 : index
    %c0_56 = arith.constant 0 : index
    %379 = vector.load %arg3[%c0_54, %c0_55, %c0_56] : memref<2x8x32xbf16, #tpu.memory_space<vmem>>, vector<2x8x32xbf16>
    %380 = tpu.concatenate %368, %378, %379 in 2 : vector<2x8x16xbf16>, vector<2x8x16xbf16>, vector<2x8x32xbf16> -> vector<2x8x64xbf16>
    %381 = vector.shape_cast %380 : vector<2x8x64xbf16> to vector<16x64xbf16>
    %c0_57 = arith.constant 0 : index
    %c0_58 = arith.constant 0 : index
    %382 = vector.load %arg8[%c0_57, %c0_58] : memref<64x96xbf16, #tpu.memory_space<vmem>>, vector<64x96xbf16>
    %cst_59 = arith.constant dense<0.000000e+00> : vector<16x96xf32>
    %383 = tpu.matmul %381, %382, %cst_59 {dimension_numbers = #tpu.dot_dimension_numbers<[1], [0], [0], [1], [0, 0, 1, 1], [], []>} : vector<16x64xbf16>, vector<64x96xbf16>, vector<16x96xf32> -> vector<16x96xf32>
    %c0_60 = arith.constant 0 : index
    %c0_61 = arith.constant 0 : index
    %384 = vector.load %arg9[%c0_60, %c0_61] : memref<1x96xf32, #tpu.memory_space<vmem>>, vector<1x96xf32>
    %385 = vector.broadcast %384 : vector<1x96xf32> to vector<16x96xf32>
    %386 = arith.addf %383, %385 : vector<16x96xf32>
    %387 = vector.shape_cast %386 : vector<16x96xf32> to vector<2x8x96xf32>
    %c0_62 = arith.constant 0 : index
    %c0_63 = arith.constant 0 : index
    %388 = vector.load %arg10[%c0_62, %c0_63] : memref<32x96xbf16, #tpu.memory_space<vmem>>, vector<32x96xbf16>
    %c0_64 = arith.constant 0 : index
    %c0_65 = arith.constant 0 : index
    %389 = vector.load %arg11[%c0_64, %c0_65] : memref<1x96xf32, #tpu.memory_space<vmem>>, vector<1x96xf32>
    %cst_66 = arith.constant 0.000000e+00 : f32
    %390 = vector.broadcast %cst_66 : f32 to vector<2x32xf32>
    %391 = arith.truncf %390 : vector<2x32xf32> to vector<2x32xbf16>
    %cst_67 = arith.constant dense<0.000000e+00> : vector<2x96xf32>
    %392 = tpu.matmul %391, %388, %cst_67 {dimension_numbers = #tpu.dot_dimension_numbers<[1], [0], [0], [1], [0, 0, 1, 1], [], []>} : vector<2x32xbf16>, vector<32x96xbf16>, vector<2x96xf32> -> vector<2x96xf32>
    %393 = vector.broadcast %389 : vector<1x96xf32> to vector<2x96xf32>
    %394 = arith.addf %392, %393 : vector<2x96xf32>
    %395 = vector.extract_strided_slice %387 {offsets = [0, 0, 0], sizes = [2, 1, 96], strides = [1, 1, 1]} : vector<2x8x96xf32> to vector<2x1x96xf32>
    %396 = vector.shape_cast %395 : vector<2x1x96xf32> to vector<2x96xf32>
    %397 = vector.extract_strided_slice %396 {offsets = [0, 0], sizes = [2, 64], strides = [1, 1]} : vector<2x96xf32> to vector<2x64xf32>
    %398 = vector.extract_strided_slice %394 {offsets = [0, 0], sizes = [2, 64], strides = [1, 1]} : vector<2x96xf32> to vector<2x64xf32>
    %399 = arith.addf %397, %398 : vector<2x64xf32>
    %400 = arith.negf %399 : vector<2x64xf32>
    %401 = math.exp %400 : vector<2x64xf32>
    %cst_68 = arith.constant 1.000000e+00 : f32
    %402 = vector.broadcast %cst_68 : f32 to vector<2x64xf32>
    %403 = arith.addf %402, %401 : vector<2x64xf32>
    %404 = arith.divf %402, %403 : vector<2x64xf32>
    %405 = vector.extract_strided_slice %396 {offsets = [0, 64], sizes = [2, 32], strides = [1, 1]} : vector<2x96xf32> to vector<2x32xf32>
    %406 = vector.extract_strided_slice %404 {offsets = [0, 0], sizes = [2, 32], strides = [1, 1]} : vector<2x64xf32> to vector<2x32xf32>
    %407 = vector.extract_strided_slice %394 {offsets = [0, 64], sizes = [2, 32], strides = [1, 1]} : vector<2x96xf32> to vector<2x32xf32>
    %408 = arith.mulf %406, %407 : vector<2x32xf32>
    %409 = arith.addf %405, %408 : vector<2x32xf32>
    %410 = math.tanh %409 : vector<2x32xf32>
    %411 = vector.extract_strided_slice %404 {offsets = [0, 32], sizes = [2, 32], strides = [1, 1]} : vector<2x64xf32> to vector<2x32xf32>
    %cst_69 = arith.constant 1.000000e+00 : f32
    %412 = vector.broadcast %cst_69 : f32 to vector<2x32xf32>
    %413 = arith.subf %412, %411 : vector<2x32xf32>
    %414 = arith.mulf %413, %410 : vector<2x32xf32>
    %415 = vector.extract_strided_slice %404 {offsets = [0, 32], sizes = [2, 32], strides = [1, 1]} : vector<2x64xf32> to vector<2x32xf32>
    %416 = arith.mulf %415, %390 : vector<2x32xf32>
    %417 = arith.addf %414, %416 : vector<2x32xf32>
    %418 = arith.truncf %417 : vector<2x32xf32> to vector<2x32xbf16>
    %cst_70 = arith.constant dense<0.000000e+00> : vector<2x96xf32>
    %419 = tpu.matmul %418, %388, %cst_70 {dimension_numbers = #tpu.dot_dimension_numbers<[1], [0], [0], [1], [0, 0, 1, 1], [], []>} : vector<2x32xbf16>, vector<32x96xbf16>, vector<2x96xf32> -> vector<2x96xf32>
    %420 = vector.broadcast %389 : vector<1x96xf32> to vector<2x96xf32>
    %421 = arith.addf %419, %420 : vector<2x96xf32>
    %422 = vector.extract_strided_slice %387 {offsets = [0, 1, 0], sizes = [2, 1, 96], strides = [1, 1, 1]} : vector<2x8x96xf32> to vector<2x1x96xf32>
    %423 = vector.shape_cast %422 : vector<2x1x96xf32> to vector<2x96xf32>
    %424 = vector.extract_strided_slice %423 {offsets = [0, 0], sizes = [2, 64], strides = [1, 1]} : vector<2x96xf32> to vector<2x64xf32>
    %425 = vector.extract_strided_slice %421 {offsets = [0, 0], sizes = [2, 64], strides = [1, 1]} : vector<2x96xf32> to vector<2x64xf32>
    %426 = arith.addf %424, %425 : vector<2x64xf32>
    %427 = arith.negf %426 : vector<2x64xf32>
    %428 = math.exp %427 : vector<2x64xf32>
    %cst_71 = arith.constant 1.000000e+00 : f32
    %429 = vector.broadcast %cst_71 : f32 to vector<2x64xf32>
    %430 = arith.addf %429, %428 : vector<2x64xf32>
    %431 = arith.divf %429, %430 : vector<2x64xf32>
    %432 = vector.extract_strided_slice %423 {offsets = [0, 64], sizes = [2, 32], strides = [1, 1]} : vector<2x96xf32> to vector<2x32xf32>
    %433 = vector.extract_strided_slice %431 {offsets = [0, 0], sizes = [2, 32], strides = [1, 1]} : vector<2x64xf32> to vector<2x32xf32>
    %434 = vector.extract_strided_slice %421 {offsets = [0, 64], sizes = [2, 32], strides = [1, 1]} : vector<2x96xf32> to vector<2x32xf32>
    %435 = arith.mulf %433, %434 : vector<2x32xf32>
    %436 = arith.addf %432, %435 : vector<2x32xf32>
    %437 = math.tanh %436 : vector<2x32xf32>
    %438 = vector.extract_strided_slice %431 {offsets = [0, 32], sizes = [2, 32], strides = [1, 1]} : vector<2x64xf32> to vector<2x32xf32>
    %cst_72 = arith.constant 1.000000e+00 : f32
    %439 = vector.broadcast %cst_72 : f32 to vector<2x32xf32>
    %440 = arith.subf %439, %438 : vector<2x32xf32>
    %441 = arith.mulf %440, %437 : vector<2x32xf32>
    %442 = vector.extract_strided_slice %431 {offsets = [0, 32], sizes = [2, 32], strides = [1, 1]} : vector<2x64xf32> to vector<2x32xf32>
    %443 = arith.mulf %442, %417 : vector<2x32xf32>
    %444 = arith.addf %441, %443 : vector<2x32xf32>
    %445 = arith.truncf %444 : vector<2x32xf32> to vector<2x32xbf16>
    %cst_73 = arith.constant dense<0.000000e+00> : vector<2x96xf32>
    %446 = tpu.matmul %445, %388, %cst_73 {dimension_numbers = #tpu.dot_dimension_numbers<[1], [0], [0], [1], [0, 0, 1, 1], [], []>} : vector<2x32xbf16>, vector<32x96xbf16>, vector<2x96xf32> -> vector<2x96xf32>
    %447 = vector.broadcast %389 : vector<1x96xf32> to vector<2x96xf32>
    %448 = arith.addf %446, %447 : vector<2x96xf32>
    %449 = vector.extract_strided_slice %387 {offsets = [0, 2, 0], sizes = [2, 1, 96], strides = [1, 1, 1]} : vector<2x8x96xf32> to vector<2x1x96xf32>
    %450 = vector.shape_cast %449 : vector<2x1x96xf32> to vector<2x96xf32>
    %451 = vector.extract_strided_slice %450 {offsets = [0, 0], sizes = [2, 64], strides = [1, 1]} : vector<2x96xf32> to vector<2x64xf32>
    %452 = vector.extract_strided_slice %448 {offsets = [0, 0], sizes = [2, 64], strides = [1, 1]} : vector<2x96xf32> to vector<2x64xf32>
    %453 = arith.addf %451, %452 : vector<2x64xf32>
    %454 = arith.negf %453 : vector<2x64xf32>
    %455 = math.exp %454 : vector<2x64xf32>
    %cst_74 = arith.constant 1.000000e+00 : f32
    %456 = vector.broadcast %cst_74 : f32 to vector<2x64xf32>
    %457 = arith.addf %456, %455 : vector<2x64xf32>
    %458 = arith.divf %456, %457 : vector<2x64xf32>
    %459 = vector.extract_strided_slice %450 {offsets = [0, 64], sizes = [2, 32], strides = [1, 1]} : vector<2x96xf32> to vector<2x32xf32>
    %460 = vector.extract_strided_slice %458 {offsets = [0, 0], sizes = [2, 32], strides = [1, 1]} : vector<2x64xf32> to vector<2x32xf32>
    %461 = vector.extract_strided_slice %448 {offsets = [0, 64], sizes = [2, 32], strides = [1, 1]} : vector<2x96xf32> to vector<2x32xf32>
    %462 = arith.mulf %460, %461 : vector<2x32xf32>
    %463 = arith.addf %459, %462 : vector<2x32xf32>
    %464 = math.tanh %463 : vector<2x32xf32>
    %465 = vector.extract_strided_slice %458 {offsets = [0, 32], sizes = [2, 32], strides = [1, 1]} : vector<2x64xf32> to vector<2x32xf32>
    %cst_75 = arith.constant 1.000000e+00 : f32
    %466 = vector.broadcast %cst_75 : f32 to vector<2x32xf32>
    %467 = arith.subf %466, %465 : vector<2x32xf32>
    %468 = arith.mulf %467, %464 : vector<2x32xf32>
    %469 = vector.extract_strided_slice %458 {offsets = [0, 32], sizes = [2, 32], strides = [1, 1]} : vector<2x64xf32> to vector<2x32xf32>
    %470 = arith.mulf %469, %444 : vector<2x32xf32>
    %471 = arith.addf %468, %470 : vector<2x32xf32>
    %472 = arith.truncf %471 : vector<2x32xf32> to vector<2x32xbf16>
    %cst_76 = arith.constant dense<0.000000e+00> : vector<2x96xf32>
    %473 = tpu.matmul %472, %388, %cst_76 {dimension_numbers = #tpu.dot_dimension_numbers<[1], [0], [0], [1], [0, 0, 1, 1], [], []>} : vector<2x32xbf16>, vector<32x96xbf16>, vector<2x96xf32> -> vector<2x96xf32>
    %474 = vector.broadcast %389 : vector<1x96xf32> to vector<2x96xf32>
    %475 = arith.addf %473, %474 : vector<2x96xf32>
    %476 = vector.extract_strided_slice %387 {offsets = [0, 3, 0], sizes = [2, 1, 96], strides = [1, 1, 1]} : vector<2x8x96xf32> to vector<2x1x96xf32>
    %477 = vector.shape_cast %476 : vector<2x1x96xf32> to vector<2x96xf32>
    %478 = vector.extract_strided_slice %477 {offsets = [0, 0], sizes = [2, 64], strides = [1, 1]} : vector<2x96xf32> to vector<2x64xf32>
    %479 = vector.extract_strided_slice %475 {offsets = [0, 0], sizes = [2, 64], strides = [1, 1]} : vector<2x96xf32> to vector<2x64xf32>
    %480 = arith.addf %478, %479 : vector<2x64xf32>
    %481 = arith.negf %480 : vector<2x64xf32>
    %482 = math.exp %481 : vector<2x64xf32>
    %cst_77 = arith.constant 1.000000e+00 : f32
    %483 = vector.broadcast %cst_77 : f32 to vector<2x64xf32>
    %484 = arith.addf %483, %482 : vector<2x64xf32>
    %485 = arith.divf %483, %484 : vector<2x64xf32>
    %486 = vector.extract_strided_slice %477 {offsets = [0, 64], sizes = [2, 32], strides = [1, 1]} : vector<2x96xf32> to vector<2x32xf32>
    %487 = vector.extract_strided_slice %485 {offsets = [0, 0], sizes = [2, 32], strides = [1, 1]} : vector<2x64xf32> to vector<2x32xf32>
    %488 = vector.extract_strided_slice %475 {offsets = [0, 64], sizes = [2, 32], strides = [1, 1]} : vector<2x96xf32> to vector<2x32xf32>
    %489 = arith.mulf %487, %488 : vector<2x32xf32>
    %490 = arith.addf %486, %489 : vector<2x32xf32>
    %491 = math.tanh %490 : vector<2x32xf32>
    %492 = vector.extract_strided_slice %485 {offsets = [0, 32], sizes = [2, 32], strides = [1, 1]} : vector<2x64xf32> to vector<2x32xf32>
    %cst_78 = arith.constant 1.000000e+00 : f32
    %493 = vector.broadcast %cst_78 : f32 to vector<2x32xf32>
    %494 = arith.subf %493, %492 : vector<2x32xf32>
    %495 = arith.mulf %494, %491 : vector<2x32xf32>
    %496 = vector.extract_strided_slice %485 {offsets = [0, 32], sizes = [2, 32], strides = [1, 1]} : vector<2x64xf32> to vector<2x32xf32>
    %497 = arith.mulf %496, %471 : vector<2x32xf32>
    %498 = arith.addf %495, %497 : vector<2x32xf32>
    %499 = arith.truncf %498 : vector<2x32xf32> to vector<2x32xbf16>
    %cst_79 = arith.constant dense<0.000000e+00> : vector<2x96xf32>
    %500 = tpu.matmul %499, %388, %cst_79 {dimension_numbers = #tpu.dot_dimension_numbers<[1], [0], [0], [1], [0, 0, 1, 1], [], []>} : vector<2x32xbf16>, vector<32x96xbf16>, vector<2x96xf32> -> vector<2x96xf32>
    %501 = vector.broadcast %389 : vector<1x96xf32> to vector<2x96xf32>
    %502 = arith.addf %500, %501 : vector<2x96xf32>
    %503 = vector.extract_strided_slice %387 {offsets = [0, 4, 0], sizes = [2, 1, 96], strides = [1, 1, 1]} : vector<2x8x96xf32> to vector<2x1x96xf32>
    %504 = vector.shape_cast %503 : vector<2x1x96xf32> to vector<2x96xf32>
    %505 = vector.extract_strided_slice %504 {offsets = [0, 0], sizes = [2, 64], strides = [1, 1]} : vector<2x96xf32> to vector<2x64xf32>
    %506 = vector.extract_strided_slice %502 {offsets = [0, 0], sizes = [2, 64], strides = [1, 1]} : vector<2x96xf32> to vector<2x64xf32>
    %507 = arith.addf %505, %506 : vector<2x64xf32>
    %508 = arith.negf %507 : vector<2x64xf32>
    %509 = math.exp %508 : vector<2x64xf32>
    %cst_80 = arith.constant 1.000000e+00 : f32
    %510 = vector.broadcast %cst_80 : f32 to vector<2x64xf32>
    %511 = arith.addf %510, %509 : vector<2x64xf32>
    %512 = arith.divf %510, %511 : vector<2x64xf32>
    %513 = vector.extract_strided_slice %504 {offsets = [0, 64], sizes = [2, 32], strides = [1, 1]} : vector<2x96xf32> to vector<2x32xf32>
    %514 = vector.extract_strided_slice %512 {offsets = [0, 0], sizes = [2, 32], strides = [1, 1]} : vector<2x64xf32> to vector<2x32xf32>
    %515 = vector.extract_strided_slice %502 {offsets = [0, 64], sizes = [2, 32], strides = [1, 1]} : vector<2x96xf32> to vector<2x32xf32>
    %516 = arith.mulf %514, %515 : vector<2x32xf32>
    %517 = arith.addf %513, %516 : vector<2x32xf32>
    %518 = math.tanh %517 : vector<2x32xf32>
    %519 = vector.extract_strided_slice %512 {offsets = [0, 32], sizes = [2, 32], strides = [1, 1]} : vector<2x64xf32> to vector<2x32xf32>
    %cst_81 = arith.constant 1.000000e+00 : f32
    %520 = vector.broadcast %cst_81 : f32 to vector<2x32xf32>
    %521 = arith.subf %520, %519 : vector<2x32xf32>
    %522 = arith.mulf %521, %518 : vector<2x32xf32>
    %523 = vector.extract_strided_slice %512 {offsets = [0, 32], sizes = [2, 32], strides = [1, 1]} : vector<2x64xf32> to vector<2x32xf32>
    %524 = arith.mulf %523, %498 : vector<2x32xf32>
    %525 = arith.addf %522, %524 : vector<2x32xf32>
    %526 = arith.truncf %525 : vector<2x32xf32> to vector<2x32xbf16>
    %cst_82 = arith.constant dense<0.000000e+00> : vector<2x96xf32>
    %527 = tpu.matmul %526, %388, %cst_82 {dimension_numbers = #tpu.dot_dimension_numbers<[1], [0], [0], [1], [0, 0, 1, 1], [], []>} : vector<2x32xbf16>, vector<32x96xbf16>, vector<2x96xf32> -> vector<2x96xf32>
    %528 = vector.broadcast %389 : vector<1x96xf32> to vector<2x96xf32>
    %529 = arith.addf %527, %528 : vector<2x96xf32>
    %530 = vector.extract_strided_slice %387 {offsets = [0, 5, 0], sizes = [2, 1, 96], strides = [1, 1, 1]} : vector<2x8x96xf32> to vector<2x1x96xf32>
    %531 = vector.shape_cast %530 : vector<2x1x96xf32> to vector<2x96xf32>
    %532 = vector.extract_strided_slice %531 {offsets = [0, 0], sizes = [2, 64], strides = [1, 1]} : vector<2x96xf32> to vector<2x64xf32>
    %533 = vector.extract_strided_slice %529 {offsets = [0, 0], sizes = [2, 64], strides = [1, 1]} : vector<2x96xf32> to vector<2x64xf32>
    %534 = arith.addf %532, %533 : vector<2x64xf32>
    %535 = arith.negf %534 : vector<2x64xf32>
    %536 = math.exp %535 : vector<2x64xf32>
    %cst_83 = arith.constant 1.000000e+00 : f32
    %537 = vector.broadcast %cst_83 : f32 to vector<2x64xf32>
    %538 = arith.addf %537, %536 : vector<2x64xf32>
    %539 = arith.divf %537, %538 : vector<2x64xf32>
    %540 = vector.extract_strided_slice %531 {offsets = [0, 64], sizes = [2, 32], strides = [1, 1]} : vector<2x96xf32> to vector<2x32xf32>
    %541 = vector.extract_strided_slice %539 {offsets = [0, 0], sizes = [2, 32], strides = [1, 1]} : vector<2x64xf32> to vector<2x32xf32>
    %542 = vector.extract_strided_slice %529 {offsets = [0, 64], sizes = [2, 32], strides = [1, 1]} : vector<2x96xf32> to vector<2x32xf32>
    %543 = arith.mulf %541, %542 : vector<2x32xf32>
    %544 = arith.addf %540, %543 : vector<2x32xf32>
    %545 = math.tanh %544 : vector<2x32xf32>
    %546 = vector.extract_strided_slice %539 {offsets = [0, 32], sizes = [2, 32], strides = [1, 1]} : vector<2x64xf32> to vector<2x32xf32>
    %cst_84 = arith.constant 1.000000e+00 : f32
    %547 = vector.broadcast %cst_84 : f32 to vector<2x32xf32>
    %548 = arith.subf %547, %546 : vector<2x32xf32>
    %549 = arith.mulf %548, %545 : vector<2x32xf32>
    %550 = vector.extract_strided_slice %539 {offsets = [0, 32], sizes = [2, 32], strides = [1, 1]} : vector<2x64xf32> to vector<2x32xf32>
    %551 = arith.mulf %550, %525 : vector<2x32xf32>
    %552 = arith.addf %549, %551 : vector<2x32xf32>
    %553 = arith.truncf %552 : vector<2x32xf32> to vector<2x32xbf16>
    %cst_85 = arith.constant dense<0.000000e+00> : vector<2x96xf32>
    %554 = tpu.matmul %553, %388, %cst_85 {dimension_numbers = #tpu.dot_dimension_numbers<[1], [0], [0], [1], [0, 0, 1, 1], [], []>} : vector<2x32xbf16>, vector<32x96xbf16>, vector<2x96xf32> -> vector<2x96xf32>
    %555 = vector.broadcast %389 : vector<1x96xf32> to vector<2x96xf32>
    %556 = arith.addf %554, %555 : vector<2x96xf32>
    %557 = vector.extract_strided_slice %387 {offsets = [0, 6, 0], sizes = [2, 1, 96], strides = [1, 1, 1]} : vector<2x8x96xf32> to vector<2x1x96xf32>
    %558 = vector.shape_cast %557 : vector<2x1x96xf32> to vector<2x96xf32>
    %559 = vector.extract_strided_slice %558 {offsets = [0, 0], sizes = [2, 64], strides = [1, 1]} : vector<2x96xf32> to vector<2x64xf32>
    %560 = vector.extract_strided_slice %556 {offsets = [0, 0], sizes = [2, 64], strides = [1, 1]} : vector<2x96xf32> to vector<2x64xf32>
    %561 = arith.addf %559, %560 : vector<2x64xf32>
    %562 = arith.negf %561 : vector<2x64xf32>
    %563 = math.exp %562 : vector<2x64xf32>
    %cst_86 = arith.constant 1.000000e+00 : f32
    %564 = vector.broadcast %cst_86 : f32 to vector<2x64xf32>
    %565 = arith.addf %564, %563 : vector<2x64xf32>
    %566 = arith.divf %564, %565 : vector<2x64xf32>
    %567 = vector.extract_strided_slice %558 {offsets = [0, 64], sizes = [2, 32], strides = [1, 1]} : vector<2x96xf32> to vector<2x32xf32>
    %568 = vector.extract_strided_slice %566 {offsets = [0, 0], sizes = [2, 32], strides = [1, 1]} : vector<2x64xf32> to vector<2x32xf32>
    %569 = vector.extract_strided_slice %556 {offsets = [0, 64], sizes = [2, 32], strides = [1, 1]} : vector<2x96xf32> to vector<2x32xf32>
    %570 = arith.mulf %568, %569 : vector<2x32xf32>
    %571 = arith.addf %567, %570 : vector<2x32xf32>
    %572 = math.tanh %571 : vector<2x32xf32>
    %573 = vector.extract_strided_slice %566 {offsets = [0, 32], sizes = [2, 32], strides = [1, 1]} : vector<2x64xf32> to vector<2x32xf32>
    %cst_87 = arith.constant 1.000000e+00 : f32
    %574 = vector.broadcast %cst_87 : f32 to vector<2x32xf32>
    %575 = arith.subf %574, %573 : vector<2x32xf32>
    %576 = arith.mulf %575, %572 : vector<2x32xf32>
    %577 = vector.extract_strided_slice %566 {offsets = [0, 32], sizes = [2, 32], strides = [1, 1]} : vector<2x64xf32> to vector<2x32xf32>
    %578 = arith.mulf %577, %552 : vector<2x32xf32>
    %579 = arith.addf %576, %578 : vector<2x32xf32>
    %580 = arith.truncf %579 : vector<2x32xf32> to vector<2x32xbf16>
    %cst_88 = arith.constant dense<0.000000e+00> : vector<2x96xf32>
    %581 = tpu.matmul %580, %388, %cst_88 {dimension_numbers = #tpu.dot_dimension_numbers<[1], [0], [0], [1], [0, 0, 1, 1], [], []>} : vector<2x32xbf16>, vector<32x96xbf16>, vector<2x96xf32> -> vector<2x96xf32>
    %582 = vector.broadcast %389 : vector<1x96xf32> to vector<2x96xf32>
    %583 = arith.addf %581, %582 : vector<2x96xf32>
    %584 = vector.extract_strided_slice %387 {offsets = [0, 7, 0], sizes = [2, 1, 96], strides = [1, 1, 1]} : vector<2x8x96xf32> to vector<2x1x96xf32>
    %585 = vector.shape_cast %584 : vector<2x1x96xf32> to vector<2x96xf32>
    %586 = vector.extract_strided_slice %585 {offsets = [0, 0], sizes = [2, 64], strides = [1, 1]} : vector<2x96xf32> to vector<2x64xf32>
    %587 = vector.extract_strided_slice %583 {offsets = [0, 0], sizes = [2, 64], strides = [1, 1]} : vector<2x96xf32> to vector<2x64xf32>
    %588 = arith.addf %586, %587 : vector<2x64xf32>
    %589 = arith.negf %588 : vector<2x64xf32>
    %590 = math.exp %589 : vector<2x64xf32>
    %cst_89 = arith.constant 1.000000e+00 : f32
    %591 = vector.broadcast %cst_89 : f32 to vector<2x64xf32>
    %592 = arith.addf %591, %590 : vector<2x64xf32>
    %593 = arith.divf %591, %592 : vector<2x64xf32>
    %594 = vector.extract_strided_slice %585 {offsets = [0, 64], sizes = [2, 32], strides = [1, 1]} : vector<2x96xf32> to vector<2x32xf32>
    %595 = vector.extract_strided_slice %593 {offsets = [0, 0], sizes = [2, 32], strides = [1, 1]} : vector<2x64xf32> to vector<2x32xf32>
    %596 = vector.extract_strided_slice %583 {offsets = [0, 64], sizes = [2, 32], strides = [1, 1]} : vector<2x96xf32> to vector<2x32xf32>
    %597 = arith.mulf %595, %596 : vector<2x32xf32>
    %598 = arith.addf %594, %597 : vector<2x32xf32>
    %599 = math.tanh %598 : vector<2x32xf32>
    %600 = vector.extract_strided_slice %593 {offsets = [0, 32], sizes = [2, 32], strides = [1, 1]} : vector<2x64xf32> to vector<2x32xf32>
    %cst_90 = arith.constant 1.000000e+00 : f32
    %601 = vector.broadcast %cst_90 : f32 to vector<2x32xf32>
    %602 = arith.subf %601, %600 : vector<2x32xf32>
    %603 = arith.mulf %602, %599 : vector<2x32xf32>
    %604 = vector.extract_strided_slice %593 {offsets = [0, 32], sizes = [2, 32], strides = [1, 1]} : vector<2x64xf32> to vector<2x32xf32>
    %605 = arith.mulf %604, %579 : vector<2x32xf32>
    %606 = arith.addf %603, %605 : vector<2x32xf32>
    %607 = vector.shape_cast %417 : vector<2x32xf32> to vector<2x1x32xf32>
    %608 = vector.shape_cast %444 : vector<2x32xf32> to vector<2x1x32xf32>
    %609 = vector.shape_cast %471 : vector<2x32xf32> to vector<2x1x32xf32>
    %610 = vector.shape_cast %498 : vector<2x32xf32> to vector<2x1x32xf32>
    %611 = vector.shape_cast %525 : vector<2x32xf32> to vector<2x1x32xf32>
    %612 = vector.shape_cast %552 : vector<2x32xf32> to vector<2x1x32xf32>
    %613 = vector.shape_cast %579 : vector<2x32xf32> to vector<2x1x32xf32>
    %614 = vector.shape_cast %606 : vector<2x32xf32> to vector<2x1x32xf32>
    %615 = tpu.concatenate %607, %608, %609, %610, %611, %612, %613, %614 in 1 : vector<2x1x32xf32>, vector<2x1x32xf32>, vector<2x1x32xf32>, vector<2x1x32xf32>, vector<2x1x32xf32>, vector<2x1x32xf32>, vector<2x1x32xf32>, vector<2x1x32xf32> -> vector<2x8x32xf32>
    %616 = vector.shape_cast %615 : vector<2x8x32xf32> to vector<16x32xf32>
    %617 = arith.truncf %616 : vector<16x32xf32> to vector<16x32xbf16>
    %c0_91 = arith.constant 0 : index
    %c0_92 = arith.constant 0 : index
    %618 = vector.load %arg12[%c0_91, %c0_92] : memref<32x128xbf16, #tpu.memory_space<vmem>>, vector<32x128xbf16>
    %cst_93 = arith.constant dense<0.000000e+00> : vector<16x128xf32>
    %619 = tpu.matmul %617, %618, %cst_93 {dimension_numbers = #tpu.dot_dimension_numbers<[1], [0], [0], [1], [0, 0, 1, 1], [], []>} : vector<16x32xbf16>, vector<32x128xbf16>, vector<16x128xf32> -> vector<16x128xf32>
    %c0_94 = arith.constant 0 : index
    %c0_95 = arith.constant 0 : index
    %620 = vector.load %arg13[%c0_94, %c0_95] : memref<1x128xf32, #tpu.memory_space<vmem>>, vector<1x128xf32>
    %621 = vector.broadcast %620 : vector<1x128xf32> to vector<16x128xf32>
    %622 = arith.addf %619, %621 : vector<16x128xf32>
    %623 = vector.shape_cast %622 : vector<16x128xf32> to vector<2x8x128xf32>
    %c0_96 = arith.constant 0 : index
    %c0_97 = arith.constant 0 : index
    %c0_98 = arith.constant 0 : index
    %624 = vector.load %arg14[%c0_96, %c0_97, %c0_98] : memref<2x8x128xf32, #tpu.memory_space<vmem>>, vector<2x8x128xf32>
    tpu.vector_store %arg14[%c0_96, %c0_97, %c0_98], %623 {strides = array<i32>} : memref<2x8x128xf32, #tpu.memory_space<vmem>>, vector<2x8x128xf32>,
    return
  }
  func.func @transform_0(%arg0: i32) -> (i32, i32, i32) {
    %c0_i32 = arith.constant 0 : i32
    %c0_i32_0 = arith.constant 0 : i32
    %c0_i32_1 = arith.constant 0 : i32
    return %arg0, %c0_i32, %c0_i32_0 : i32, i32, i32
  }
  func.func @transform_1(%arg0: i32) -> (i32, i32, i32) {
    %c0_i32 = arith.constant 0 : i32
    %c0_i32_0 = arith.constant 0 : i32
    %c0_i32_1 = arith.constant 0 : i32
    return %arg0, %c0_i32, %c0_i32_0 : i32, i32, i32
  }
  func.func @transform_2(%arg0: i32) -> (i32, i32, i32) {
    %c0_i32 = arith.constant 0 : i32
    %c0_i32_0 = arith.constant 0 : i32
    %c0_i32_1 = arith.constant 0 : i32
    return %arg0, %c0_i32, %c0_i32_0 : i32, i32, i32
  }
  func.func @transform_3(%arg0: i32) -> (i32, i32) {
    %c0_i32 = arith.constant 0 : i32
    %c0_i32_0 = arith.constant 0 : i32
    %c0_i32_1 = arith.constant 0 : i32
    return %c0_i32, %c0_i32_0 : i32, i32
  }
  func.func @transform_4(%arg0: i32) -> (i32, i32) {
    %c0_i32 = arith.constant 0 : i32
    %c0_i32_0 = arith.constant 0 : i32
    %c0_i32_1 = arith.constant 0 : i32
    return %c0_i32, %c0_i32_0 : i32, i32
  }
  func.func @transform_5(%arg0: i32) -> (i32, i32) {
    %c0_i32 = arith.constant 0 : i32
    %c0_i32_0 = arith.constant 0 : i32
    %c0_i32_1 = arith.constant 0 : i32
    return %c0_i32, %c0_i32_0 : i32, i32
  }
  func.func @transform_6(%arg0: i32) -> (i32, i32) {
    %c0_i32 = arith.constant 0 : i32
    %c0_i32_0 = arith.constant 0 : i32
    %c0_i32_1 = arith.constant 0 : i32
    return %c0_i32, %c0_i32_0 : i32, i32
  }
  func.func @transform_7(%arg0: i32) -> (i32, i32) {
    %c0_i32 = arith.constant 0 : i32
    %c0_i32_0 = arith.constant 0 : i32
    %c0_i32_1 = arith.constant 0 : i32
    return %c0_i32, %c0_i32_0 : i32, i32
  }
  func.func @transform_8(%arg0: i32) -> (i32, i32) {
    %c0_i32 = arith.constant 0 : i32
    %c0_i32_0 = arith.constant 0 : i32
    %c0_i32_1 = arith.constant 0 : i32
    return %c0_i32, %c0_i32_0 : i32, i32
  }
  func.func @transform_9(%arg0: i32) -> (i32, i32) {
    %c0_i32 = arith.constant 0 : i32
    %c0_i32_0 = arith.constant 0 : i32
    %c0_i32_1 = arith.constant 0 : i32
    return %c0_i32, %c0_i32_0 : i32, i32
  }
  func.func @transform_10(%arg0: i32) -> (i32, i32) {
    %c0_i32 = arith.constant 0 : i32
    %c0_i32_0 = arith.constant 0 : i32
    %c0_i32_1 = arith.constant 0 : i32
    return %c0_i32, %c0_i32_0 : i32, i32
  }
  func.func @transform_11(%arg0: i32) -> (i32, i32) {
    %c0_i32 = arith.constant 0 : i32
    %c0_i32_0 = arith.constant 0 : i32
    %c0_i32_1 = arith.constant 0 : i32
    return %c0_i32, %c0_i32_0 : i32, i32
  }
  func.func @transform_12(%arg0: i32) -> (i32, i32) {
    %c0_i32 = arith.constant 0 : i32
    %c0_i32_0 = arith.constant 0 : i32
    %c0_i32_1 = arith.constant 0 : i32
    return %c0_i32, %c0_i32_0 : i32, i32
  }
  func.func @transform_13(%arg0: i32) -> (i32, i32, i32) {
    %c0_i32 = arith.constant 0 : i32
    %c0_i32_0 = arith.constant 0 : i32
    %c0_i32_1 = arith.constant 0 : i32
    return %arg0, %c0_i32, %c0_i32_0 : i32, i32, i32
  }
  func.func @transform_14(%arg0: i32) -> (i32, i32, i32) {
    %c0_i32 = arith.constant 0 : i32
    %c0_i32_0 = arith.constant 0 : i32
    %c0_i32_1 = arith.constant 0 : i32
    return %arg0, %c0_i32, %c0_i32_0 : i32, i32, i32
  }
}

</mosaic_0001>

<llo_original>
// kernel: tpu_custom_call.1
$region0: #{tpu_custom_call.1}
  #allocation0 [shape = 'u32[]', space=smem, size = 0x4, offset = 0x4, fixed_abs, tag = 'smem constant byte address 0x4 - core index']
  #allocation1 [shape = 'u32[144,128]{1,0:T(1,128)}', space=vmem, size = 0x12000, scoped, tag = 'internal scratch']
  %s0 = inlined_call_operand.vmem [shape: f32[2,8,128], index: 0, kind: input, shape index: {}]
  %s1 = inlined_call_operand.vmem [shape: bf16[2,128,32], index: 1, kind: input, shape index: {}]
  %s2 = inlined_call_operand.vmem [shape: bf16[2,8,32], index: 2, kind: input, shape index: {}]
  %s3 = inlined_call_operand.vmem [shape: bf16[32,128], index: 3, kind: input, shape index: {}]
  %s4 = inlined_call_operand.vmem [shape: f32[1,128], index: 4, kind: input, shape index: {}]
  %s5 = inlined_call_operand.vmem [shape: bf16[16,64], index: 5, kind: input, shape index: {}]
  %s6 = inlined_call_operand.vmem [shape: bf16[16,64], index: 6, kind: input, shape index: {}]
  %s7 = inlined_call_operand.vmem [shape: bf16[64,96], index: 7, kind: input, shape index: {}]
  %s8 = inlined_call_operand.vmem [shape: f32[1,96], index: 8, kind: input, shape index: {}]
  %s9 = inlined_call_operand.vmem [shape: bf16[32,96], index: 9, kind: input, shape index: {}]
  %s10 = inlined_call_operand.vmem [shape: f32[1,96], index: 10, kind: input, shape index: {}]
  %s11 = inlined_call_operand.vmem [shape: bf16[32,128], index: 11, kind: input, shape index: {}]
  %s12 = inlined_call_operand.vmem [shape: f32[1,128], index: 12, kind: input, shape index: {}]
  %s13 = inlined_call_operand.hbm [shape: f32[2,8,128], index: 13, kind: output, shape index: {0}]
  %s14 = inlined_call_operand.hbm [shape: f32[2,8,128], index: 14, kind: output, shape index: {1}]
  %15 = xla_tuple %s13, %s14
  %s16 = sld [smem:[#allocation0]]
  $region70: #{tpu_custom_call.1} parent=0
    _
  %s18 = ssub.s32 1, %s16
  %s19 = scalar_select 0, %s18, %s16
  $region1: #{tpu_custom_call.1} parent=0
    #allocation2 [shape = 'u8[8192]{0}', space=vmem, size = 0x2000, scoped, tag = 'output window, operand 0, single buffered']
    #allocation3 [shape = 's32[1]{0}', space=sflag, size = 0x4, scoped, tag = 'scoped memory for tpu_custom_call.1']
    #allocation4 [shape = 'u8[8192]{0}', space=vmem, size = 0x2000, scoped, tag = 'output window, operand 1, single buffered']
    #allocation5 [shape = 's32[1]{0}', space=sflag, size = 0x4, scoped, tag = 'scoped memory for tpu_custom_call.1']
    %20 = vsyncpa [#allocation3], 0
    %21 = vsyncpa [#allocation5], 0
    // Predicated region
    $region2: #{tpu_custom_call.1} parent=1 // pred_check
      _
    $region3: #{tpu_custom_call.1} parent=1 // pred_check_branch
      %23 = sbr.rel (0) target = $region5
    $region4: #{tpu_custom_call.1} parent=1 // pred_region
      _
    $region5: #{tpu_custom_call.1} parent=1 // pred_fallthru
      _
    // Predicated region
    $region6: #{tpu_custom_call.1} parent=1 // pred_check
      _
    $region7: #{tpu_custom_call.1} parent=1 // pred_check_branch
      %25 = sbr.rel (0) target = $region9
    $region8: #{tpu_custom_call.1} parent=1 // pred_region
      _
    $region9: #{tpu_custom_call.1} parent=1 // pred_fallthru
      _
    // Predicated region
    $region10: #{tpu_custom_call.1} parent=1 // pred_check
      _
    $region11: #{tpu_custom_call.1} parent=1 // pred_check_branch
      %27 = sbr.rel (0) target = $region13
    $region12: #{tpu_custom_call.1} parent=1 // pred_region
      _
    $region13: #{tpu_custom_call.1} parent=1 // pred_fallthru
      _
    // Predicated region
    $region14: #{tpu_custom_call.1} parent=1 // pred_check
      _
    $region15: #{tpu_custom_call.1} parent=1 // pred_check_branch
      %29 = sbr.rel (0) target = $region17
    $region16: #{tpu_custom_call.1} parent=1 // pred_region
      _
    $region17: #{tpu_custom_call.1} parent=1 // pred_fallthru
      _
    // Predicated region
    $region18: #{tpu_custom_call.1} parent=1 // pred_check
      _
    $region19: #{tpu_custom_call.1} parent=1 // pred_check_branch
      %31 = sbr.rel (0) target = $region21
    $region20: #{tpu_custom_call.1} parent=1 // pred_region
      _
    $region21: #{tpu_custom_call.1} parent=1 // pred_fallthru
      _
    // Predicated region
    $region22: #{tpu_custom_call.1} parent=1 // pred_check
      _
    $region23: #{tpu_custom_call.1} parent=1 // pred_check_branch
      %33 = sbr.rel (0) target = $region25
    $region24: #{tpu_custom_call.1} parent=1 // pred_region
      _
    $region25: #{tpu_custom_call.1} parent=1 // pred_fallthru
      _
    // Predicated region
    $region26: #{tpu_custom_call.1} parent=1 // pred_check
      _
    $region27: #{tpu_custom_call.1} parent=1 // pred_check_branch
      %35 = sbr.rel (0) target = $region29
    $region28: #{tpu_custom_call.1} parent=1 // pred_region
      _
    $region29: #{tpu_custom_call.1} parent=1 // pred_fallthru
      _
    // Predicated region
    $region30: #{tpu_custom_call.1} parent=1 // pred_check
      _
    $region31: #{tpu_custom_call.1} parent=1 // pred_check_branch
      %37 = sbr.rel (0) target = $region33
    $region32: #{tpu_custom_call.1} parent=1 // pred_region
      _
    $region33: #{tpu_custom_call.1} parent=1 // pred_fallthru
      _
    // Predicated region
    $region34: #{tpu_custom_call.1} parent=1 // pred_check
      _
    $region35: #{tpu_custom_call.1} parent=1 // pred_check_branch
      %39 = sbr.rel (0) target = $region37
    $region36: #{tpu_custom_call.1} parent=1 // pred_region
      _
    $region37: #{tpu_custom_call.1} parent=1 // pred_fallthru
      _
    // Predicated region
    $region38: #{tpu_custom_call.1} parent=1 // pred_check
      _
    $region39: #{tpu_custom_call.1} parent=1 // pred_check_branch
      %41 = sbr.rel (0) target = $region41
    $region40: #{tpu_custom_call.1} parent=1 // pred_region
      _
    $region41: #{tpu_custom_call.1} parent=1 // pred_fallthru
      _
    // Predicated region
    $region42: #{tpu_custom_call.1} parent=1 // pred_check
      _
    $region43: #{tpu_custom_call.1} parent=1 // pred_check_branch
      %43 = sbr.rel (0) target = $region45
    $region44: #{tpu_custom_call.1} parent=1 // pred_region
      _
    $region45: #{tpu_custom_call.1} parent=1 // pred_fallthru
      _
    // Predicated region
    $region46: #{tpu_custom_call.1} parent=1 // pred_check
      _
    $region47: #{tpu_custom_call.1} parent=1 // pred_check_branch
      %45 = sbr.rel (0) target = $region49
    $region48: #{tpu_custom_call.1} parent=1 // pred_region
      _
    $region49: #{tpu_custom_call.1} parent=1 // pred_fallthru
      _
    // Predicated region
    $region50: #{tpu_custom_call.1} parent=1 // pred_check
      _
    $region51: #{tpu_custom_call.1} parent=1 // pred_check_branch
      %47 = sbr.rel (0) target = $region53
    $region52: #{tpu_custom_call.1} parent=1 // pred_region
      _
    $region53: #{tpu_custom_call.1} parent=1 // pred_fallthru
      _
    %v49 = vld [vmem:[%s0] sm:$0xff]
    %v50 = vld [vmem:[%s0 + $0x8] sm:$0xff]
    %51 = vadd.xlane.f32.xlu0 %v49
    %v52 = vpop.xlane.xlu0 %51
    %53 = vadd.xlane.f32.xlu0 %v50
    %v54 = vpop.xlane.xlu0 %53
    %v55 = vrcp.pop %v52
    %v56 = vmul.f32 %v49, %v55
    %v57 = vrcp.pop %v54
    %v58 = vmul.f32 %v50, %v57
    %59 = vst [vmem:[#allocation4] sm:$0xff] %v56
    %60 = vst [vmem:[#allocation4 + $0x8] sm:$0xff] %v58
    %v61 = vpack.c.bf16 %v56, %v56
    %v62 = vpack.c.bf16 %v58, %v58
    %v63 = vld [vmem:[%s1] sm:$0xf]
    %v64 = vld [vmem:[%s1 + $0x4] sm:$0xf]
    %v65 = vld [vmem:[%s1 + $0x8] sm:$0xf]
    %v66 = vld [vmem:[%s1 + $0xc] sm:$0xf]
    %v67 = vld [vmem:[%s1 + $0x10] sm:$0xf]
    %v68 = vld [vmem:[%s1 + $0x14] sm:$0xf]
    %v69 = vld [vmem:[%s1 + $0x18] sm:$0xf]
    %v70 = vld [vmem:[%s1 + $0x1c] sm:$0xf]
    %v71 = vld [vmem:[%s1 + $0x20] sm:$0xf]
    %v72 = vld [vmem:[%s1 + $0x24] sm:$0xf]
    %v73 = vld [vmem:[%s1 + $0x28] sm:$0xf]
    %v74 = vld [vmem:[%s1 + $0x2c] sm:$0xf]
    %v75 = vld [vmem:[%s1 + $0x30] sm:$0xf]
    %v76 = vld [vmem:[%s1 + $0x34] sm:$0xf]
    %v77 = vld [vmem:[%s1 + $0x38] sm:$0xf]
    %v78 = vld [vmem:[%s1 + $0x3c] sm:$0xf]
    %v79 = vld [vmem:[%s1 + $0x40] sm:$0xf]
    %v80 = vld [vmem:[%s1 + $0x44] sm:$0xf]
    %v81 = vld [vmem:[%s1 + $0x48] sm:$0xf]
    %v82 = vld [vmem:[%s1 + $0x4c] sm:$0xf]
    %v83 = vld [vmem:[%s1 + $0x50] sm:$0xf]
    %v84 = vld [vmem:[%s1 + $0x54] sm:$0xf]
    %v85 = vld [vmem:[%s1 + $0x58] sm:$0xf]
    %v86 = vld [vmem:[%s1 + $0x5c] sm:$0xf]
    %v87 = vld [vmem:[%s1 + $0x60] sm:$0xf]
    %v88 = vld [vmem:[%s1 + $0x64] sm:$0xf]
    %v89 = vld [vmem:[%s1 + $0x68] sm:$0xf]
    %v90 = vld [vmem:[%s1 + $0x6c] sm:$0xf]
    %v91 = vld [vmem:[%s1 + $0x70] sm:$0xf]
    %v92 = vld [vmem:[%s1 + $0x74] sm:$0xf]
    %v93 = vld [vmem:[%s1 + $0x78] sm:$0xf]
    %v94 = vld [vmem:[%s1 + $0x7c] sm:$0xf]
    %v111 = vunpack.c.l.b16 %v63
    %v112 = vunpack.c.l.b16 %v64
    %v113 = vunpack.c.l.b16 %v65
    %v114 = vunpack.c.l.b16 %v66
    %v115 = vunpack.c.l.b16 %v67
    %v116 = vunpack.c.l.b16 %v68
    %v117 = vunpack.c.l.b16 %v69
    %v118 = vunpack.c.l.b16 %v70
    %v119 = vunpack.c.l.b16 %v71
    %v120 = vunpack.c.l.b16 %v72
    %v121 = vunpack.c.l.b16 %v73
    %v122 = vunpack.c.l.b16 %v74
    %v123 = vunpack.c.l.b16 %v75
    %v124 = vunpack.c.l.b16 %v76
    %v125 = vunpack.c.l.b16 %v77
    %v126 = vunpack.c.l.b16 %v78
    %v127 = vpack.c.b16 %v112, %v111
    %v128 = vpack.c.b16 %v114, %v113
    %v129 = vpack.c.b16 %v116, %v115
    %v130 = vpack.c.b16 %v118, %v117
    %v131 = vpack.c.b16 %v120, %v119
    %v132 = vpack.c.b16 %v122, %v121
    %v133 = vpack.c.b16 %v124, %v123
    %v134 = vpack.c.b16 %v126, %v125
    %143 = vmatprep.subr.bf16.mxu0 0
    %144 = vmatpush1.bf16.msra.mxu0 %v127
    %145 = vmatprep.subr.bf16.mxu0 0
    %146 = vmatpush1.bf16.msra.mxu0 %v128
    %147 = vmatprep.subr.bf16.mxu0 0
    %148 = vmatpush1.bf16.msra.mxu0 %v129
    %149 = vmatprep.subr.bf16.mxu0 0
    %150 = vmatpush1.bf16.msra.mxu0 %v130
    %151 = vmatprep.subr.bf16.mxu0 0
    %152 = vmatpush1.bf16.msra.mxu0 %v131
    %153 = vmatprep.subr.bf16.mxu0 0
    %154 = vmatpush1.bf16.msra.mxu0 %v132
    %155 = vmatprep.subr.bf16.mxu0 0
    %156 = vmatpush1.bf16.msra.mxu0 %v133
    %157 = vmatprep.subr.bf16.mxu0 0
    %158 = vmatpush1.bf16.msra.mxu0 %v134
    %159 = vmatprep.subr.bf16.mxu0 0
    %160 = vmatpush1.bf16.msra.mxu0 0
    %161 = vmatprep.subr.bf16.mxu0 0
    %162 = vmatpush1.bf16.msra.mxu0 0
    %163 = vmatprep.subr.bf16.mxu0 0
    %164 = vmatpush1.bf16.msra.mxu0 0
    %165 = vmatprep.subr.bf16.mxu0 0
    %166 = vmatpush1.bf16.msra.mxu0 0
    %167 = vmatprep.subr.bf16.mxu0 0
    %168 = vmatpush1.bf16.msra.mxu0 0
    %169 = vmatprep.subr.bf16.mxu0 0
    %170 = vmatpush1.bf16.msra.mxu0 0
    %171 = vmatprep.subr.bf16.mxu0 0
    %172 = vmatpush1.bf16.msra.mxu0 0
    %173 = vmatprep.subr.bf16.mxu0 0
    %174 = vmatpush1.bf16.msra.mxu0 0
    %175 = vmatprep.mubr.bf16.mxu0 0
    %176 = vmatmul.mubr.bf16.gmra.mrb[0].mxu0 %v61
    %v177 = vpop.f32.mrb[0].mxu0
    %v178 = vadd.f32 0.0, %v177
    %v179 = vpop.f32.mrb[0].mxu0
    %v180 = vpop.f32.mrb[0].mxu0
    %v181 = vpop.f32.mrb[0].mxu0
    %182 = vdwg.mxu0
    %v199 = vunpack.c.l.b16 %v79
    %v200 = vunpack.c.l.b16 %v80
    %v201 = vunpack.c.l.b16 %v81
    %v202 = vunpack.c.l.b16 %v82
    %v203 = vunpack.c.l.b16 %v83
    %v204 = vunpack.c.l.b16 %v84
    %v205 = vunpack.c.l.b16 %v85
    %v206 = vunpack.c.l.b16 %v86
    %v207 = vunpack.c.l.b16 %v87
    %v208 = vunpack.c.l.b16 %v88
    %v209 = vunpack.c.l.b16 %v89
    %v210 = vunpack.c.l.b16 %v90
    %v211 = vunpack.c.l.b16 %v91
    %v212 = vunpack.c.l.b16 %v92
    %v213 = vunpack.c.l.b16 %v93
    %v214 = vunpack.c.l.b16 %v94
    %v215 = vpack.c.b16 %v200, %v199
    %v216 = vpack.c.b16 %v202, %v201
    %v217 = vpack.c.b16 %v204, %v203
    %v218 = vpack.c.b16 %v206, %v205
    %v219 = vpack.c.b16 %v208, %v207
    %v220 = vpack.c.b16 %v210, %v209
    %v221 = vpack.c.b16 %v212, %v211
    %v222 = vpack.c.b16 %v214, %v213
    %231 = vmatprep.subr.bf16.mxu0 0
    %232 = vmatpush1.bf16.msra.mxu0 %v215
    %233 = vmatprep.subr.bf16.mxu0 0
    %234 = vmatpush1.bf16.msra.mxu0 %v216
    %235 = vmatprep.subr.bf16.mxu0 0
    %236 = vmatpush1.bf16.msra.mxu0 %v217
    %237 = vmatprep.subr.bf16.mxu0 0
    %238 = vmatpush1.bf16.msra.mxu0 %v218
    %239 = vmatprep.subr.bf16.mxu0 0
    %240 = vmatpush1.bf16.msra.mxu0 %v219
    %241 = vmatprep.subr.bf16.mxu0 0
    %242 = vmatpush1.bf16.msra.mxu0 %v220
    %243 = vmatprep.subr.bf16.mxu0 0
    %244 = vmatpush1.bf16.msra.mxu0 %v221
    %245 = vmatprep.subr.bf16.mxu0 0
    %246 = vmatpush1.bf16.msra.mxu0 %v222
    %247 = vmatprep.subr.bf16.mxu0 0
    %248 = vmatpush1.bf16.msra.mxu0 0
    %249 = vmatprep.subr.bf16.mxu0 0
    %250 = vmatpush1.bf16.msra.mxu0 0
    %251 = vmatprep.subr.bf16.mxu0 0
    %252 = vmatpush1.bf16.msra.mxu0 0
    %253 = vmatprep.subr.bf16.mxu0 0
    %254 = vmatpush1.bf16.msra.mxu0 0
    %255 = vmatprep.subr.bf16.mxu0 0
    %256 = vmatpush1.bf16.msra.mxu0 0
    %257 = vmatprep.subr.bf16.mxu0 0
    %258 = vmatpush1.bf16.msra.mxu0 0
    %259 = vmatprep.subr.bf16.mxu0 0
    %260 = vmatpush1.bf16.msra.mxu0 0
    %261 = vmatprep.subr.bf16.mxu0 0
    %262 = vmatpush1.bf16.msra.mxu0 0
    %263 = vmatprep.mubr.bf16.mxu0 0
    %264 = vmatmul.mubr.bf16.gmra.mrb[0].mxu0 %v62
    %v265 = vpop.f32.mrb[0].mxu0
    %v266 = vadd.f32 0.0, %v265
    %v267 = vpop.f32.mrb[0].mxu0
    %v268 = vpop.f32.mrb[0].mxu0
    %v269 = vpop.f32.mrb[0].mxu0
    %270 = vdwg.mxu0
    %v271 = vpack.c.bf16 %v266, %v178
    %v272 = vld [vmem:[%s3] sm:$0xf]
    %v273 = vld [vmem:[%s3 + $0x4] sm:$0xf]
    %v274 = vld [vmem:[%s3 + $0x8] sm:$0xf]
    %v275 = vld [vmem:[%s3 + $0xc] sm:$0xf]
    %v276 = vld [vmem:[%s4] sm:$0x1]
    %v278 = vlaneseq
    %v279 = vshrl.u32 %v278, 7
    %v280 = vsub.s32 0, %v279
    %v281 = vrot.slane %v276, %v280
    %v287 = vunpack.c.l.b16 %v272
    %v288 = vunpack.c.l.b16 %v273
    %v289 = vunpack.c.l.b16 %v274
    %v290 = vunpack.c.l.b16 %v275
    %v291 = vpack.c.b16 %v288, %v287
    %v292 = vpack.c.b16 %v290, %v289
    %vm295 = vcmask 261120
    %v297 = vsel %vm295, %v271, 0
    %299 = vmatprep.subr.bf16.mxu0 0
    %300 = vmatpush1.bf16.msra.mxu0 %v291
    %301 = vmatprep.subr.bf16.mxu0 0
    %302 = vmatpush1.bf16.msra.mxu0 %v292
    %303 = vmatprep.subr.bf16.mxu0 0
    %304 = vmatpush1.bf16.msra.mxu0 0
    %305 = vmatprep.subr.bf16.mxu0 0
    %306 = vmatpush1.bf16.msra.mxu0 0
    %307 = vmatprep.subr.bf16.mxu0 0
    %308 = vmatpush1.bf16.msra.mxu0 0
    %309 = vmatprep.subr.bf16.mxu0 0
    %310 = vmatpush1.bf16.msra.mxu0 0
    %311 = vmatprep.subr.bf16.mxu0 0
    %312 = vmatpush1.bf16.msra.mxu0 0
    %313 = vmatprep.subr.bf16.mxu0 0
    %314 = vmatpush1.bf16.msra.mxu0 0
    %315 = vmatprep.subr.bf16.mxu0 0
    %316 = vmatpush1.bf16.msra.mxu0 0
    %317 = vmatprep.subr.bf16.mxu0 0
    %318 = vmatpush1.bf16.msra.mxu0 0
    %319 = vmatprep.subr.bf16.mxu0 0
    %320 = vmatpush1.bf16.msra.mxu0 0
    %321 = vmatprep.subr.bf16.mxu0 0
    %322 = vmatpush1.bf16.msra.mxu0 0
    %323 = vmatprep.subr.bf16.mxu0 0
    %324 = vmatpush1.bf16.msra.mxu0 0
    %325 = vmatprep.subr.bf16.mxu0 0
    %326 = vmatpush1.bf16.msra.mxu0 0
    %327 = vmatprep.subr.bf16.mxu0 0
    %328 = vmatpush1.bf16.msra.mxu0 0
    %329 = vmatprep.subr.bf16.mxu0 0
    %330 = vmatpush1.bf16.msra.mxu0 0
    %331 = vmatprep.mubr.bf16.mxu0 0
    %332 = vmatmul.mubr.bf16.gmra.mrb[0].mxu0 %v297
    %v333 = vpop.f32.mrb[0].mxu0
    %v334 = vadd.f32 %v281, %v333
    %v335 = vpop.f32.mrb[0].mxu0
    %v336 = vpop.f32.mrb[0].mxu0
    %v337 = vadd.f32 %v281, %v336
    %v338 = vpop.f32.mrb[0].mxu0
    %339 = vdwg.mxu0
    %v340 = vld [vmem:[%s5] sm:$0xf]
    %v341 = vld [vmem:[%s5 + $0x4] sm:$0xf]
    %v342 = vld [vmem:[%s6] sm:$0xf]
    %v343 = vld [vmem:[%s6 + $0x4] sm:$0xf]
    %v346 = vunpack.c.l.b16 %v340
    %v347 = vunpack.c.l.b16 %v341
    %v348 = vpack.c.b16 %v347, %v346
    %vm350 = vcmask 130048
    %v352 = vsel %vm350, 0, 0
    %354 = vmatprep.subr.bf16.mxu0 0
    %355 = vmatpush1.bf16.msra.mxu0 %v348
    %356 = vmatprep.subr.bf16.mxu0 0
    %357 = vmatpush1.bf16.msra.mxu0 0
    %358 = vmatprep.subr.bf16.mxu0 0
    %359 = vmatpush1.bf16.msra.mxu0 0
    %360 = vmatprep.subr.bf16.mxu0 0
    %361 = vmatpush1.bf16.msra.mxu0 0
    %362 = vmatprep.subr.bf16.mxu0 0
    %363 = vmatpush1.bf16.msra.mxu0 0
    %364 = vmatprep.subr.bf16.mxu0 0
    %365 = vmatpush1.bf16.msra.mxu0 0
    %366 = vmatprep.subr.bf16.mxu0 0
    %367 = vmatpush1.bf16.msra.mxu0 0
    %368 = vmatprep.subr.bf16.mxu0 0
    %369 = vmatpush1.bf16.msra.mxu0 0
    %370 = vmatprep.subr.bf16.mxu0 0
    %371 = vmatpush1.bf16.msra.mxu0 0
    %372 = vmatprep.subr.bf16.mxu0 0
    %373 = vmatpush1.bf16.msra.mxu0 0
    %374 = vmatprep.subr.bf16.mxu0 0
    %375 = vmatpush1.bf16.msra.mxu0 0
    %376 = vmatprep.subr.bf16.mxu0 0
    %377 = vmatpush1.bf16.msra.mxu0 0
    %378 = vmatprep.subr.bf16.mxu0 0
    %379 = vmatpush1.bf16.msra.mxu0 0
    %380 = vmatprep.subr.bf16.mxu0 0
    %381 = vmatpush1.bf16.msra.mxu0 0
    %382 = vmatprep.subr.bf16.mxu0 0
    %383 = vmatpush1.bf16.msra.mxu0 0
    %384 = vmatprep.subr.bf16.mxu0 0
    %385 = vmatpush1.bf16.msra.mxu0 0
    %386 = vmatprep.mubr.bf16.mxu0 0
    %387 = vmatmul.mubr.bf16.gmra.mrb[0].mxu0 %v352
    %v388 = vpop.f32.mrb[0].mxu0
    %v389 = vadd.f32 0.0, %v388
    %v390 = vpop.f32.mrb[0].mxu0
    %v391 = vpop.f32.mrb[0].mxu0
    %v392 = vpop.f32.mrb[0].mxu0
    %393 = vdwg.mxu0
    %v395 = vrot.slane %v389, 1
    %v398 = vadd.f32 %v334, %v389
    %v399 = vadd.f32 %v337, %v395
    %v402 = vunpack.c.l.b16 %v342
    %v403 = vunpack.c.l.b16 %v343
    %v404 = vpack.c.b16 %v403, %v402
    %406 = vmatprep.subr.bf16.mxu0 0
    %407 = vmatpush1.bf16.msra.mxu0 %v404
    %408 = vmatprep.subr.bf16.mxu0 0
    %409 = vmatpush1.bf16.msra.mxu0 0
    %410 = vmatprep.subr.bf16.mxu0 0
    %411 = vmatpush1.bf16.msra.mxu0 0
    %412 = vmatprep.subr.bf16.mxu0 0
    %413 = vmatpush1.bf16.msra.mxu0 0
    %414 = vmatprep.subr.bf16.mxu0 0
    %415 = vmatpush1.bf16.msra.mxu0 0
    %416 = vmatprep.subr.bf16.mxu0 0
    %417 = vmatpush1.bf16.msra.mxu0 0
    %418 = vmatprep.subr.bf16.mxu0 0
    %419 = vmatpush1.bf16.msra.mxu0 0
    %420 = vmatprep.subr.bf16.mxu0 0
    %421 = vmatpush1.bf16.msra.mxu0 0
    %422 = vmatprep.subr.bf16.mxu0 0
    %423 = vmatpush1.bf16.msra.mxu0 0
    %424 = vmatprep.subr.bf16.mxu0 0
    %425 = vmatpush1.bf16.msra.mxu0 0
    %426 = vmatprep.subr.bf16.mxu0 0
    %427 = vmatpush1.bf16.msra.mxu0 0
    %428 = vmatprep.subr.bf16.mxu0 0
    %429 = vmatpush1.bf16.msra.mxu0 0
    %430 = vmatprep.subr.bf16.mxu0 0
    %431 = vmatpush1.bf16.msra.mxu0 0
    %432 = vmatprep.subr.bf16.mxu0 0
    %433 = vmatpush1.bf16.msra.mxu0 0
    %434 = vmatprep.subr.bf16.mxu0 0
    %435 = vmatpush1.bf16.msra.mxu0 0
    %436 = vmatprep.subr.bf16.mxu0 0
    %437 = vmatpush1.bf16.msra.mxu0 0
    %438 = vmatprep.mubr.bf16.mxu0 0
    %439 = vmatmul.mubr.bf16.gmra.mrb[0].mxu0 %v352
    %v440 = vpop.f32.mrb[0].mxu0
    %v441 = vadd.f32 0.0, %v440
    %v442 = vpop.f32.mrb[0].mxu0
    %v443 = vpop.f32.mrb[0].mxu0
    %v444 = vpop.f32.mrb[0].mxu0
    %445 = vdwg.mxu0
    %v447 = vrot.slane %v441, 1
    %v448 = vrot.slane %v441, 2
    %449 = vrot.lane.b32.xlu0 %v447, 64
    %v450 = vpop.permute.xlu0 %449
    %451 = vrot.lane.b32.xlu0 %v448, 64
    %v452 = vpop.permute.xlu0 %451
    %v455 = vadd.f32 %v334, %v450
    %v456 = vadd.f32 %v337, %v452
    %v457 = vxor.u32 %v398, 2147483648
    %v458 = vxor.u32 %v399, 2147483648
    %v459 = vmul.f32 %v457, 1.442695
    %v460 = vpow.pop %v459
    %v461 = vmul.f32 %v458, 1.442695
    %v462 = vpow.pop %v461
    %v463 = vadd.f32 %v460, 1.0
    %v464 = vadd.f32 %v462, 1.0
    %v465 = vrcp.pop %v463
    %v466 = vmul.f32 1.0, %v465
    %v467 = vrcp.pop %v464
    %v468 = vmul.f32 1.0, %v467
    %v469 = vtanh.pop %v398
    %v470 = vtanh.pop %v399
    %v471 = vmul.f32 %v466, 0.0
    %v472 = vmul.f32 %v468, 0.0
    %475 = vrot.lane.b32.xlu0 %v469, 80
    %v476 = vpop.permute.xlu0 %475
    %477 = vrot.lane.b32.xlu0 %v470, 80
    %v478 = vpop.permute.xlu0 %477
    %v481 = vmul.f32 %v466, %v476
    %v482 = vmul.f32 %v468, %v478
    %485 = vrot.lane.b32.xlu0 %v481, 16
    %v486 = vpop.permute.xlu0 %485
    %487 = vrot.lane.b32.xlu0 %v482, 16
    %v488 = vpop.permute.xlu0 %487
    %v491 = vadd.f32 %v471, %v486
    %v492 = vadd.f32 %v472, %v488
    %v493 = vtanh.pop %v491
    %v494 = vtanh.pop %v492
    %497 = vrot.lane.b32.xlu0 %v493, 16
    %v498 = vpop.permute.xlu0 %497
    %499 = vrot.lane.b32.xlu0 %v494, 16
    %v500 = vpop.permute.xlu0 %499
    %v503 = vmul.f32 %v466, %v498
    %v504 = vmul.f32 %v468, %v500
    %v505 = vxor.u32 %v455, 2147483648
    %v506 = vxor.u32 %v456, 2147483648
    %v507 = vmul.f32 %v505, 1.442695
    %v508 = vpow.pop %v507
    %v509 = vmul.f32 %v506, 1.442695
    %v510 = vpow.pop %v509
    %v511 = vadd.f32 %v508, 1.0
    %v512 = vadd.f32 %v510, 1.0
    %v513 = vrcp.pop %v511
    %v514 = vmul.f32 1.0, %v513
    %v515 = vrcp.pop %v512
    %v516 = vmul.f32 1.0, %v515
    %v517 = vtanh.pop %v455
    %v518 = vtanh.pop %v456
    %v519 = vmul.f32 %v514, 0.0
    %v520 = vmul.f32 %v516, 0.0
    %523 = vrot.lane.b32.xlu0 %v517, 80
    %v524 = vpop.permute.xlu0 %523
    %525 = vrot.lane.b32.xlu0 %v518, 80
    %v526 = vpop.permute.xlu0 %525
    %v529 = vmul.f32 %v514, %v524
    %v530 = vmul.f32 %v516, %v526
    %533 = vrot.lane.b32.xlu0 %v529, 16
    %v534 = vpop.permute.xlu0 %533
    %535 = vrot.lane.b32.xlu0 %v530, 16
    %v536 = vpop.permute.xlu0 %535
    %v539 = vadd.f32 %v519, %v534
    %v540 = vadd.f32 %v520, %v536
    %v541 = vtanh.pop %v539
    %v542 = vtanh.pop %v540
    %545 = vrot.lane.b32.xlu0 %v541, 16
    %v546 = vpop.permute.xlu0 %545
    %547 = vrot.lane.b32.xlu0 %v542, 16
    %v548 = vpop.permute.xlu0 %547
    %v551 = vmul.f32 %v514, %v546
    %v552 = vmul.f32 %v516, %v548
    %v553 = vpack.c.bf16 %v503, %v503
    %v554 = vpack.c.bf16 %v504, %v504
    %v557 = vunpack.c.l.b16 %v553
    %v558 = vunpack.c.l.b16 %v554
    %v559 = vrot.slane %v558, 7
    %vm560 = vcmask 1041409
    %v561 = vsel %vm560, %v559, %v557
    %v562 = vpack.c.b16 %v561, %v561
    %563 = vrot.lane.b32.xlu0 %v562, 96
    %v564 = vpop.permute.xlu0 %563
    %v566 = vsel %vm350, %v564, 0
    %568 = vmatprep.subr.bf16.mxu0 0
    %569 = vmatpush1.bf16.msra.mxu0 %v348
    %570 = vmatprep.subr.bf16.mxu0 0
    %571 = vmatpush1.bf16.msra.mxu0 0
    %572 = vmatprep.subr.bf16.mxu0 0
    %573 = vmatpush1.bf16.msra.mxu0 0
    %574 = vmatprep.subr.bf16.mxu0 0
    %575 = vmatpush1.bf16.msra.mxu0 0
    %576 = vmatprep.subr.bf16.mxu0 0
    %577 = vmatpush1.bf16.msra.mxu0 0
    %578 = vmatprep.subr.bf16.mxu0 0
    %579 = vmatpush1.bf16.msra.mxu0 0
    %580 = vmatprep.subr.bf16.mxu0 0
    %581 = vmatpush1.bf16.msra.mxu0 0
    %582 = vmatprep.subr.bf16.mxu0 0
    %583 = vmatpush1.bf16.msra.mxu0 0
    %584 = vmatprep.subr.bf16.mxu0 0
    %585 = vmatpush1.bf16.msra.mxu0 0
    %586 = vmatprep.subr.bf16.mxu0 0
    %587 = vmatpush1.bf16.msra.mxu0 0
    %588 = vmatprep.subr.bf16.mxu0 0
    %589 = vmatpush1.bf16.msra.mxu0 0
    %590 = vmatprep.subr.bf16.mxu0 0
    %591 = vmatpush1.bf16.msra.mxu0 0
    %592 = vmatprep.subr.bf16.mxu0 0
    %593 = vmatpush1.bf16.msra.mxu0 0
    %594 = vmatprep.subr.bf16.mxu0 0
    %595 = vmatpush1.bf16.msra.mxu0 0
    %596 = vmatprep.subr.bf16.mxu0 0
    %597 = vmatpush1.bf16.msra.mxu0 0
    %598 = vmatprep.subr.bf16.mxu0 0
    %599 = vmatpush1.bf16.msra.mxu0 0
    %600 = vmatprep.mubr.bf16.mxu0 0
    %601 = vmatmul.mubr.bf16.gmra.mrb[0].mxu0 %v566
    %v602 = vpop.f32.mrb[0].mxu0
    %v603 = vadd.f32 0.0, %v602
    %v604 = vpop.f32.mrb[0].mxu0
    %v605 = vpop.f32.mrb[0].mxu0
    %v606 = vpop.f32.mrb[0].mxu0
    %607 = vdwg.mxu0
    %v609 = vrot.slane %v603, 7
    %v612 = vadd.f32 %v334, %v609
    %v613 = vadd.f32 %v337, %v603
    %v614 = vpack.c.bf16 %v551, %v551
    %v615 = vpack.c.bf16 %v552, %v552
    %v618 = vunpack.c.l.b16 %v614
    %v619 = vunpack.c.l.b16 %v615
    %v620 = vrot.slane %v618, 7
    %v621 = vrot.slane %v619, 6
    %v622 = vsel %vm560, %v621, %v620
    %v623 = vpack.c.b16 %v622, %v622
    %624 = vrot.lane.b32.xlu0 %v623, 32
    %v625 = vpop.permute.xlu0 %624
    %v627 = vsel %vm350, %v625, 0
    %629 = vmatprep.subr.bf16.mxu0 0
    %630 = vmatpush1.bf16.msra.mxu0 %v404
    %631 = vmatprep.subr.bf16.mxu0 0
    %632 = vmatpush1.bf16.msra.mxu0 0
    %633 = vmatprep.subr.bf16.mxu0 0
    %634 = vmatpush1.bf16.msra.mxu0 0
    %635 = vmatprep.subr.bf16.mxu0 0
    %636 = vmatpush1.bf16.msra.mxu0 0
    %637 = vmatprep.subr.bf16.mxu0 0
    %638 = vmatpush1.bf16.msra.mxu0 0
    %639 = vmatprep.subr.bf16.mxu0 0
    %640 = vmatpush1.bf16.msra.mxu0 0
    %641 = vmatprep.subr.bf16.mxu0 0
    %642 = vmatpush1.bf16.msra.mxu0 0
    %643 = vmatprep.subr.bf16.mxu0 0
    %644 = vmatpush1.bf16.msra.mxu0 0
    %645 = vmatprep.subr.bf16.mxu0 0
    %646 = vmatpush1.bf16.msra.mxu0 0
    %647 = vmatprep.subr.bf16.mxu0 0
    %648 = vmatpush1.bf16.msra.mxu0 0
    %649 = vmatprep.subr.bf16.mxu0 0
    %650 = vmatpush1.bf16.msra.mxu0 0
    %651 = vmatprep.subr.bf16.mxu0 0
    %652 = vmatpush1.bf16.msra.mxu0 0
    %653 = vmatprep.subr.bf16.mxu0 0
    %654 = vmatpush1.bf16.msra.mxu0 0
    %655 = vmatprep.subr.bf16.mxu0 0
    %656 = vmatpush1.bf16.msra.mxu0 0
    %657 = vmatprep.subr.bf16.mxu0 0
    %658 = vmatpush1.bf16.msra.mxu0 0
    %659 = vmatprep.subr.bf16.mxu0 0
    %660 = vmatpush1.bf16.msra.mxu0 0
    %661 = vmatprep.mubr.bf16.mxu0 0
    %662 = vmatmul.mubr.bf16.gmra.mrb[0].mxu0 %v627
    %v663 = vpop.f32.mrb[0].mxu0
    %v664 = vadd.f32 0.0, %v663
    %v665 = vpop.f32.mrb[0].mxu0
    %v666 = vpop.f32.mrb[0].mxu0
    %v667 = vpop.f32.mrb[0].mxu0
    %668 = vdwg.mxu0
    %v670 = vrot.slane %v664, 2
    %v671 = vrot.slane %v664, 3
    %672 = vrot.lane.b32.xlu0 %v670, 64
    %v673 = vpop.permute.xlu0 %672
    %674 = vrot.lane.b32.xlu0 %v671, 64
    %v675 = vpop.permute.xlu0 %674
    %v678 = vadd.f32 %v334, %v673
    %v679 = vadd.f32 %v337, %v675
    %v680 = vxor.u32 %v612, 2147483648
    %v681 = vxor.u32 %v613, 2147483648
    %v682 = vmul.f32 %v680, 1.442695
    %v683 = vpow.pop %v682
    %v684 = vmul.f32 %v681, 1.442695
    %v685 = vpow.pop %v684
    %v686 = vadd.f32 %v683, 1.0
    %v687 = vadd.f32 %v685, 1.0
    %v688 = vrcp.pop %v686
    %v689 = vmul.f32 1.0, %v688
    %v690 = vrcp.pop %v687
    %v691 = vmul.f32 1.0, %v690
    %v692 = vtanh.pop %v612
    %v693 = vtanh.pop %v613
    %v696 = vrot.slane %v491, 7
    %v697 = vrot.slane %v492, 7
    %v700 = vmul.f32 %v689, %v696
    %v701 = vmul.f32 %v691, %v697
    %704 = vrot.lane.b32.xlu0 %v692, 80
    %v705 = vpop.permute.xlu0 %704
    %706 = vrot.lane.b32.xlu0 %v693, 80
    %v707 = vpop.permute.xlu0 %706
    %v710 = vmul.f32 %v689, %v705
    %v711 = vmul.f32 %v691, %v707
    %714 = vrot.lane.b32.xlu0 %v710, 16
    %v715 = vpop.permute.xlu0 %714
    %716 = vrot.lane.b32.xlu0 %v711, 16
    %v717 = vpop.permute.xlu0 %716
    %v720 = vadd.f32 %v700, %v715
    %v721 = vadd.f32 %v701, %v717
    %v722 = vtanh.pop %v720
    %v723 = vtanh.pop %v721
    %726 = vrot.lane.b32.xlu0 %v722, 16
    %v727 = vpop.permute.xlu0 %726
    %728 = vrot.lane.b32.xlu0 %v723, 16
    %v729 = vpop.permute.xlu0 %728
    %v732 = vmul.f32 %v689, %v727
    %v733 = vmul.f32 %v691, %v729
    %v734 = vxor.u32 %v678, 2147483648
    %v735 = vxor.u32 %v679, 2147483648
    %v736 = vmul.f32 %v734, 1.442695
    %v737 = vpow.pop %v736
    %v738 = vmul.f32 %v735, 1.442695
    %v739 = vpow.pop %v738
    %v740 = vadd.f32 %v737, 1.0
    %v741 = vadd.f32 %v739, 1.0
    %v742 = vrcp.pop %v740
    %v743 = vmul.f32 1.0, %v742
    %v744 = vrcp.pop %v741
    %v745 = vmul.f32 1.0, %v744
    %v746 = vtanh.pop %v678
    %v747 = vtanh.pop %v679
    %v750 = vrot.slane %v539, 1
    %v751 = vrot.slane %v540, 1
    %v754 = vmul.f32 %v743, %v750
    %v755 = vmul.f32 %v745, %v751
    %758 = vrot.lane.b32.xlu0 %v746, 80
    %v759 = vpop.permute.xlu0 %758
    %760 = vrot.lane.b32.xlu0 %v747, 80
    %v761 = vpop.permute.xlu0 %760
    %v764 = vmul.f32 %v743, %v759
    %v765 = vmul.f32 %v745, %v761
    %768 = vrot.lane.b32.xlu0 %v764, 16
    %v769 = vpop.permute.xlu0 %768
    %770 = vrot.lane.b32.xlu0 %v765, 16
    %v771 = vpop.permute.xlu0 %770
    %v774 = vadd.f32 %v754, %v769
    %v775 = vadd.f32 %v755, %v771
    %v776 = vtanh.pop %v774
    %v777 = vtanh.pop %v775
    %780 = vrot.lane.b32.xlu0 %v776, 16
    %v781 = vpop.permute.xlu0 %780
    %782 = vrot.lane.b32.xlu0 %v777, 16
    %v783 = vpop.permute.xlu0 %782
    %v786 = vmul.f32 %v743, %v781
    %v787 = vmul.f32 %v745, %v783
    %v788 = vpack.c.bf16 %v732, %v732
    %v789 = vpack.c.bf16 %v733, %v733
    %v792 = vunpack.c.l.b16 %v788
    %v793 = vunpack.c.l.b16 %v789
    %v794 = vrot.slane %v792, 1
    %v795 = vsel %vm560, %v793, %v794
    %v796 = vpack.c.b16 %v795, %v795
    %797 = vrot.lane.b32.xlu0 %v796, 96
    %v798 = vpop.permute.xlu0 %797
    %v800 = vsel %vm350, %v798, 0
    %802 = vmatprep.subr.bf16.mxu0 0
    %803 = vmatpush1.bf16.msra.mxu0 %v348
    %804 = vmatprep.subr.bf16.mxu0 0
    %805 = vmatpush1.bf16.msra.mxu0 0
    %806 = vmatprep.subr.bf16.mxu0 0
    %807 = vmatpush1.bf16.msra.mxu0 0
    %808 = vmatprep.subr.bf16.mxu0 0
    %809 = vmatpush1.bf16.msra.mxu0 0
    %810 = vmatprep.subr.bf16.mxu0 0
    %811 = vmatpush1.bf16.msra.mxu0 0
    %812 = vmatprep.subr.bf16.mxu0 0
    %813 = vmatpush1.bf16.msra.mxu0 0
    %814 = vmatprep.subr.bf16.mxu0 0
    %815 = vmatpush1.bf16.msra.mxu0 0
    %816 = vmatprep.subr.bf16.mxu0 0
    %817 = vmatpush1.bf16.msra.mxu0 0
    %818 = vmatprep.subr.bf16.mxu0 0
    %819 = vmatpush1.bf16.msra.mxu0 0
    %820 = vmatprep.subr.bf16.mxu0 0
    %821 = vmatpush1.bf16.msra.mxu0 0
    %822 = vmatprep.subr.bf16.mxu0 0
    %823 = vmatpush1.bf16.msra.mxu0 0
    %824 = vmatprep.subr.bf16.mxu0 0
    %825 = vmatpush1.bf16.msra.mxu0 0
    %826 = vmatprep.subr.bf16.mxu0 0
    %827 = vmatpush1.bf16.msra.mxu0 0
    %828 = vmatprep.subr.bf16.mxu0 0
    %829 = vmatpush1.bf16.msra.mxu0 0
    %830 = vmatprep.subr.bf16.mxu0 0
    %831 = vmatpush1.bf16.msra.mxu0 0
    %832 = vmatprep.subr.bf16.mxu0 0
    %833 = vmatpush1.bf16.msra.mxu0 0
    %834 = vmatprep.mubr.bf16.mxu0 0
    %835 = vmatmul.mubr.bf16.gmra.mrb[0].mxu0 %v800
    %v836 = vpop.f32.mrb[0].mxu0
    %v837 = vadd.f32 0.0, %v836
    %v838 = vpop.f32.mrb[0].mxu0
    %v839 = vpop.f32.mrb[0].mxu0
    %v840 = vpop.f32.mrb[0].mxu0
    %841 = vdwg.mxu0
    %v843 = vrot.slane %v837, 6
    %v844 = vrot.slane %v837, 7
    %v847 = vadd.f32 %v334, %v843
    %v848 = vadd.f32 %v337, %v844
    %v849 = vpack.c.bf16 %v786, %v786
    %v850 = vpack.c.bf16 %v787, %v787
    %v853 = vunpack.c.l.b16 %v849
    %v854 = vunpack.c.l.b16 %v850
    %v855 = vrot.slane %v853, 6
    %v856 = vrot.slane %v854, 5
    %v857 = vsel %vm560, %v856, %v855
    %v858 = vpack.c.b16 %v857, %v857
    %859 = vrot.lane.b32.xlu0 %v858, 32
    %v860 = vpop.permute.xlu0 %859
    %v862 = vsel %vm350, %v860, 0
    %864 = vmatprep.subr.bf16.mxu0 0
    %865 = vmatpush1.bf16.msra.mxu0 %v404
    %866 = vmatprep.subr.bf16.mxu0 0
    %867 = vmatpush1.bf16.msra.mxu0 0
    %868 = vmatprep.subr.bf16.mxu0 0
    %869 = vmatpush1.bf16.msra.mxu0 0
    %870 = vmatprep.subr.bf16.mxu0 0
    %871 = vmatpush1.bf16.msra.mxu0 0
    %872 = vmatprep.subr.bf16.mxu0 0
    %873 = vmatpush1.bf16.msra.mxu0 0
    %874 = vmatprep.subr.bf16.mxu0 0
    %875 = vmatpush1.bf16.msra.mxu0 0
    %876 = vmatprep.subr.bf16.mxu0 0
    %877 = vmatpush1.bf16.msra.mxu0 0
    %878 = vmatprep.subr.bf16.mxu0 0
    %879 = vmatpush1.bf16.msra.mxu0 0
    %880 = vmatprep.subr.bf16.mxu0 0
    %881 = vmatpush1.bf16.msra.mxu0 0
    %882 = vmatprep.subr.bf16.mxu0 0
    %883 = vmatpush1.bf16.msra.mxu0 0
    %884 = vmatprep.subr.bf16.mxu0 0
    %885 = vmatpush1.bf16.msra.mxu0 0
    %886 = vmatprep.subr.bf16.mxu0 0
    %887 = vmatpush1.bf16.msra.mxu0 0
    %888 = vmatprep.subr.bf16.mxu0 0
    %889 = vmatpush1.bf16.msra.mxu0 0
    %890 = vmatprep.subr.bf16.mxu0 0
    %891 = vmatpush1.bf16.msra.mxu0 0
    %892 = vmatprep.subr.bf16.mxu0 0
    %893 = vmatpush1.bf16.msra.mxu0 0
    %894 = vmatprep.subr.bf16.mxu0 0
    %895 = vmatpush1.bf16.msra.mxu0 0
    %896 = vmatprep.mubr.bf16.mxu0 0
    %897 = vmatmul.mubr.bf16.gmra.mrb[0].mxu0 %v862
    %v898 = vpop.f32.mrb[0].mxu0
    %v899 = vadd.f32 0.0, %v898
    %v900 = vpop.f32.mrb[0].mxu0
    %v901 = vpop.f32.mrb[0].mxu0
    %v902 = vpop.f32.mrb[0].mxu0
    %903 = vdwg.mxu0
    %v905 = vrot.slane %v899, 3
    %v906 = vrot.slane %v899, 4
    %907 = vrot.lane.b32.xlu0 %v905, 64
    %v908 = vpop.permute.xlu0 %907
    %909 = vrot.lane.b32.xlu0 %v906, 64
    %v910 = vpop.permute.xlu0 %909
    %v913 = vadd.f32 %v334, %v908
    %v914 = vadd.f32 %v337, %v910
    %v915 = vxor.u32 %v847, 2147483648
    %v916 = vxor.u32 %v848, 2147483648
    %v917 = vmul.f32 %v915, 1.442695
    %v918 = vpow.pop %v917
    %v919 = vmul.f32 %v916, 1.442695
    %v920 = vpow.pop %v919
    %v921 = vadd.f32 %v918, 1.0
    %v922 = vadd.f32 %v920, 1.0
    %v923 = vrcp.pop %v921
    %v924 = vmul.f32 1.0, %v923
    %v925 = vrcp.pop %v922
    %v926 = vmul.f32 1.0, %v925
    %v927 = vtanh.pop %v847
    %v928 = vtanh.pop %v848
    %v931 = vrot.slane %v720, 7
    %v932 = vrot.slane %v721, 7
    %v935 = vmul.f32 %v924, %v931
    %v936 = vmul.f32 %v926, %v932
    %939 = vrot.lane.b32.xlu0 %v927, 80
    %v940 = vpop.permute.xlu0 %939
    %941 = vrot.lane.b32.xlu0 %v928, 80
    %v942 = vpop.permute.xlu0 %941
    %v945 = vmul.f32 %v924, %v940
    %v946 = vmul.f32 %v926, %v942
    %949 = vrot.lane.b32.xlu0 %v945, 16
    %v950 = vpop.permute.xlu0 %949
    %951 = vrot.lane.b32.xlu0 %v946, 16
    %v952 = vpop.permute.xlu0 %951
    %v955 = vadd.f32 %v935, %v950
    %v956 = vadd.f32 %v936, %v952
    %v957 = vtanh.pop %v955
    %v958 = vtanh.pop %v956
    %961 = vrot.lane.b32.xlu0 %v957, 16
    %v962 = vpop.permute.xlu0 %961
    %963 = vrot.lane.b32.xlu0 %v958, 16
    %v964 = vpop.permute.xlu0 %963
    %v967 = vmul.f32 %v924, %v962
    %v968 = vmul.f32 %v926, %v964
    %v969 = vxor.u32 %v913, 2147483648
    %v970 = vxor.u32 %v914, 2147483648
    %v971 = vmul.f32 %v969, 1.442695
    %v972 = vpow.pop %v971
    %v973 = vmul.f32 %v970, 1.442695
    %v974 = vpow.pop %v973
    %v975 = vadd.f32 %v972, 1.0
    %v976 = vadd.f32 %v974, 1.0
    %v977 = vrcp.pop %v975
    %v978 = vmul.f32 1.0, %v977
    %v979 = vrcp.pop %v976
    %v980 = vmul.f32 1.0, %v979
    %v981 = vtanh.pop %v913
    %v982 = vtanh.pop %v914
    %v985 = vrot.slane %v774, 1
    %v986 = vrot.slane %v775, 1
    %v989 = vmul.f32 %v978, %v985
    %v990 = vmul.f32 %v980, %v986
    %993 = vrot.lane.b32.xlu0 %v981, 80
    %v994 = vpop.permute.xlu0 %993
    %995 = vrot.lane.b32.xlu0 %v982, 80
    %v996 = vpop.permute.xlu0 %995
    %v999 = vmul.f32 %v978, %v994
    %v1000 = vmul.f32 %v980, %v996
    %1003 = vrot.lane.b32.xlu0 %v999, 16
    %v1004 = vpop.permute.xlu0 %1003
    %1005 = vrot.lane.b32.xlu0 %v1000, 16
    %v1006 = vpop.permute.xlu0 %1005
    %v1009 = vadd.f32 %v989, %v1004
    %v1010 = vadd.f32 %v990, %v1006
    %v1011 = vtanh.pop %v1009
    %v1012 = vtanh.pop %v1010
    %1015 = vrot.lane.b32.xlu0 %v1011, 16
    %v1016 = vpop.permute.xlu0 %1015
    %1017 = vrot.lane.b32.xlu0 %v1012, 16
    %v1018 = vpop.permute.xlu0 %1017
    %v1021 = vmul.f32 %v978, %v1016
    %v1022 = vmul.f32 %v980, %v1018
    %v1023 = vpack.c.bf16 %v967, %v967
    %v1024 = vpack.c.bf16 %v968, %v968
    %v1027 = vunpack.c.l.b16 %v1023
    %v1028 = vunpack.c.l.b16 %v1024
    %v1029 = vrot.slane %v1027, 2
    %v1030 = vrot.slane %v1028, 1
    %v1031 = vsel %vm560, %v1030, %v1029
    %v1032 = vpack.c.b16 %v1031, %v1031
    %1033 = vrot.lane.b32.xlu0 %v1032, 96
    %v1034 = vpop.permute.xlu0 %1033
    %v1036 = vsel %vm350, %v1034, 0
    %1038 = vmatprep.subr.bf16.mxu0 0
    %1039 = vmatpush1.bf16.msra.mxu0 %v348
    %1040 = vmatprep.subr.bf16.mxu0 0
    %1041 = vmatpush1.bf16.msra.mxu0 0
    %1042 = vmatprep.subr.bf16.mxu0 0
    %1043 = vmatpush1.bf16.msra.mxu0 0
    %1044 = vmatprep.subr.bf16.mxu0 0
    %1045 = vmatpush1.bf16.msra.mxu0 0
    %1046 = vmatprep.subr.bf16.mxu0 0
    %1047 = vmatpush1.bf16.msra.mxu0 0
    %1048 = vmatprep.subr.bf16.mxu0 0
    %1049 = vmatpush1.bf16.msra.mxu0 0
    %1050 = vmatprep.subr.bf16.mxu0 0
    %1051 = vmatpush1.bf16.msra.mxu0 0
    %1052 = vmatprep.subr.bf16.mxu0 0
    %1053 = vmatpush1.bf16.msra.mxu0 0
    %1054 = vmatprep.subr.bf16.mxu0 0
    %1055 = vmatpush1.bf16.msra.mxu0 0
    %1056 = vmatprep.subr.bf16.mxu0 0
    %1057 = vmatpush1.bf16.msra.mxu0 0
    %1058 = vmatprep.subr.bf16.mxu0 0
    %1059 = vmatpush1.bf16.msra.mxu0 0
    %1060 = vmatprep.subr.bf16.mxu0 0
    %1061 = vmatpush1.bf16.msra.mxu0 0
    %1062 = vmatprep.subr.bf16.mxu0 0
    %1063 = vmatpush1.bf16.msra.mxu0 0
    %1064 = vmatprep.subr.bf16.mxu0 0
    %1065 = vmatpush1.bf16.msra.mxu0 0
    %1066 = vmatprep.subr.bf16.mxu0 0
    %1067 = vmatpush1.bf16.msra.mxu0 0
    %1068 = vmatprep.subr.bf16.mxu0 0
    %1069 = vmatpush1.bf16.msra.mxu0 0
    %1070 = vmatprep.mubr.bf16.mxu0 0
    %1071 = vmatmul.mubr.bf16.gmra.mrb[0].mxu0 %v1036
    %v1072 = vpop.f32.mrb[0].mxu0
    %v1073 = vadd.f32 0.0, %v1072
    %v1074 = vpop.f32.mrb[0].mxu0
    %v1075 = vpop.f32.mrb[0].mxu0
    %v1076 = vpop.f32.mrb[0].mxu0
    %1077 = vdwg.mxu0
    %v1079 = vrot.slane %v1073, 5
    %v1080 = vrot.slane %v1073, 6
    %v1083 = vadd.f32 %v334, %v1079
    %v1084 = vadd.f32 %v337, %v1080
    %v1085 = vpack.c.bf16 %v1021, %v1021
    %v1086 = vpack.c.bf16 %v1022, %v1022
    %v1089 = vunpack.c.l.b16 %v1085
    %v1090 = vunpack.c.l.b16 %v1086
    %v1091 = vrot.slane %v1089, 5
    %v1092 = vrot.slane %v1090, 4
    %v1093 = vsel %vm560, %v1092, %v1091
    %v1094 = vpack.c.b16 %v1093, %v1093
    %1095 = vrot.lane.b32.xlu0 %v1094, 32
    %v1096 = vpop.permute.xlu0 %1095
    %v1098 = vsel %vm350, %v1096, 0
    %1100 = vmatprep.subr.bf16.mxu0 0
    %1101 = vmatpush1.bf16.msra.mxu0 %v404
    %1102 = vmatprep.subr.bf16.mxu0 0
    %1103 = vmatpush1.bf16.msra.mxu0 0
    %1104 = vmatprep.subr.bf16.mxu0 0
    %1105 = vmatpush1.bf16.msra.mxu0 0
    %1106 = vmatprep.subr.bf16.mxu0 0
    %1107 = vmatpush1.bf16.msra.mxu0 0
    %1108 = vmatprep.subr.bf16.mxu0 0
    %1109 = vmatpush1.bf16.msra.mxu0 0
    %1110 = vmatprep.subr.bf16.mxu0 0
    %1111 = vmatpush1.bf16.msra.mxu0 0
    %1112 = vmatprep.subr.bf16.mxu0 0
    %1113 = vmatpush1.bf16.msra.mxu0 0
    %1114 = vmatprep.subr.bf16.mxu0 0
    %1115 = vmatpush1.bf16.msra.mxu0 0
    %1116 = vmatprep.subr.bf16.mxu0 0
    %1117 = vmatpush1.bf16.msra.mxu0 0
    %1118 = vmatprep.subr.bf16.mxu0 0
    %1119 = vmatpush1.bf16.msra.mxu0 0
    %1120 = vmatprep.subr.bf16.mxu0 0
    %1121 = vmatpush1.bf16.msra.mxu0 0
    %1122 = vmatprep.subr.bf16.mxu0 0
    %1123 = vmatpush1.bf16.msra.mxu0 0
    %1124 = vmatprep.subr.bf16.mxu0 0
    %1125 = vmatpush1.bf16.msra.mxu0 0
    %1126 = vmatprep.subr.bf16.mxu0 0
    %1127 = vmatpush1.bf16.msra.mxu0 0
    %1128 = vmatprep.subr.bf16.mxu0 0
    %1129 = vmatpush1.bf16.msra.mxu0 0
    %1130 = vmatprep.subr.bf16.mxu0 0
    %1131 = vmatpush1.bf16.msra.mxu0 0
    %1132 = vmatprep.mubr.bf16.mxu0 0
    %1133 = vmatmul.mubr.bf16.gmra.mrb[0].mxu0 %v1098
    %v1134 = vpop.f32.mrb[0].mxu0
    %v1135 = vadd.f32 0.0, %v1134
    %v1136 = vpop.f32.mrb[0].mxu0
    %v1137 = vpop.f32.mrb[0].mxu0
    %v1138 = vpop.f32.mrb[0].mxu0
    %1139 = vdwg.mxu0
    %v1141 = vrot.slane %v1135, 4
    %v1142 = vrot.slane %v1135, 5
    %1143 = vrot.lane.b32.xlu0 %v1141, 64
    %v1144 = vpop.permute.xlu0 %1143
    %1145 = vrot.lane.b32.xlu0 %v1142, 64
    %v1146 = vpop.permute.xlu0 %1145
    %v1149 = vadd.f32 %v334, %v1144
    %v1150 = vadd.f32 %v337, %v1146
    %v1151 = vxor.u32 %v1083, 2147483648
    %v1152 = vxor.u32 %v1084, 2147483648
    %v1153 = vmul.f32 %v1151, 1.442695
    %v1154 = vpow.pop %v1153
    %v1155 = vmul.f32 %v1152, 1.442695
    %v1156 = vpow.pop %v1155
    %v1157 = vadd.f32 %v1154, 1.0
    %v1158 = vadd.f32 %v1156, 1.0
    %v1159 = vrcp.pop %v1157
    %v1160 = vmul.f32 1.0, %v1159
    %v1161 = vrcp.pop %v1158
    %v1162 = vmul.f32 1.0, %v1161
    %v1163 = vtanh.pop %v1083
    %v1164 = vtanh.pop %v1084
    %v1167 = vrot.slane %v955, 7
    %v1168 = vrot.slane %v956, 7
    %v1171 = vmul.f32 %v1160, %v1167
    %v1172 = vmul.f32 %v1162, %v1168
    %1175 = vrot.lane.b32.xlu0 %v1163, 80
    %v1176 = vpop.permute.xlu0 %1175
    %1177 = vrot.lane.b32.xlu0 %v1164, 80
    %v1178 = vpop.permute.xlu0 %1177
    %v1181 = vmul.f32 %v1160, %v1176
    %v1182 = vmul.f32 %v1162, %v1178
    %1185 = vrot.lane.b32.xlu0 %v1181, 16
    %v1186 = vpop.permute.xlu0 %1185
    %1187 = vrot.lane.b32.xlu0 %v1182, 16
    %v1188 = vpop.permute.xlu0 %1187
    %v1191 = vadd.f32 %v1171, %v1186
    %v1192 = vadd.f32 %v1172, %v1188
    %v1193 = vtanh.pop %v1191
    %v1194 = vtanh.pop %v1192
    %1197 = vrot.lane.b32.xlu0 %v1193, 16
    %v1198 = vpop.permute.xlu0 %1197
    %1199 = vrot.lane.b32.xlu0 %v1194, 16
    %v1200 = vpop.permute.xlu0 %1199
    %v1203 = vmul.f32 %v1160, %v1198
    %v1204 = vmul.f32 %v1162, %v1200
    %v1205 = vxor.u32 %v1149, 2147483648
    %v1206 = vxor.u32 %v1150, 2147483648
    %v1207 = vmul.f32 %v1205, 1.442695
    %v1208 = vpow.pop %v1207
    %v1209 = vmul.f32 %v1206, 1.442695
    %v1210 = vpow.pop %v1209
    %v1211 = vadd.f32 %v1208, 1.0
    %v1212 = vadd.f32 %v1210, 1.0
    %v1213 = vrcp.pop %v1211
    %v1214 = vmul.f32 1.0, %v1213
    %v1215 = vrcp.pop %v1212
    %v1216 = vmul.f32 1.0, %v1215
    %v1217 = vtanh.pop %v1149
    %v1218 = vtanh.pop %v1150
    %v1221 = vrot.slane %v1009, 1
    %v1222 = vrot.slane %v1010, 1
    %v1225 = vmul.f32 %v1214, %v1221
    %v1226 = vmul.f32 %v1216, %v1222
    %1229 = vrot.lane.b32.xlu0 %v1217, 80
    %v1230 = vpop.permute.xlu0 %1229
    %1231 = vrot.lane.b32.xlu0 %v1218, 80
    %v1232 = vpop.permute.xlu0 %1231
    %v1235 = vmul.f32 %v1214, %v1230
    %v1236 = vmul.f32 %v1216, %v1232
    %1239 = vrot.lane.b32.xlu0 %v1235, 16
    %v1240 = vpop.permute.xlu0 %1239
    %1241 = vrot.lane.b32.xlu0 %v1236, 16
    %v1242 = vpop.permute.xlu0 %1241
    %v1245 = vadd.f32 %v1225, %v1240
    %v1246 = vadd.f32 %v1226, %v1242
    %v1247 = vtanh.pop %v1245
    %v1248 = vtanh.pop %v1246
    %1251 = vrot.lane.b32.xlu0 %v1247, 16
    %v1252 = vpop.permute.xlu0 %1251
    %1253 = vrot.lane.b32.xlu0 %v1248, 16
    %v1254 = vpop.permute.xlu0 %1253
    %v1257 = vmul.f32 %v1214, %v1252
    %v1258 = vmul.f32 %v1216, %v1254
    %v1259 = vpack.c.bf16 %v1203, %v1203
    %v1260 = vpack.c.bf16 %v1204, %v1204
    %v1263 = vunpack.c.l.b16 %v1259
    %v1264 = vunpack.c.l.b16 %v1260
    %v1265 = vrot.slane %v1263, 3
    %v1266 = vrot.slane %v1264, 2
    %v1267 = vsel %vm560, %v1266, %v1265
    %v1268 = vpack.c.b16 %v1267, %v1267
    %1269 = vrot.lane.b32.xlu0 %v1268, 96
    %v1270 = vpop.permute.xlu0 %1269
    %v1272 = vsel %vm350, %v1270, 0
    %1274 = vmatprep.subr.bf16.mxu0 0
    %1275 = vmatpush1.bf16.msra.mxu0 %v348
    %1276 = vmatprep.subr.bf16.mxu0 0
    %1277 = vmatpush1.bf16.msra.mxu0 0
    %1278 = vmatprep.subr.bf16.mxu0 0
    %1279 = vmatpush1.bf16.msra.mxu0 0
    %1280 = vmatprep.subr.bf16.mxu0 0
    %1281 = vmatpush1.bf16.msra.mxu0 0
    %1282 = vmatprep.subr.bf16.mxu0 0
    %1283 = vmatpush1.bf16.msra.mxu0 0
    %1284 = vmatprep.subr.bf16.mxu0 0
    %1285 = vmatpush1.bf16.msra.mxu0 0
    %1286 = vmatprep.subr.bf16.mxu0 0
    %1287 = vmatpush1.bf16.msra.mxu0 0
    %1288 = vmatprep.subr.bf16.mxu0 0
    %1289 = vmatpush1.bf16.msra.mxu0 0
    %1290 = vmatprep.subr.bf16.mxu0 0
    %1291 = vmatpush1.bf16.msra.mxu0 0
    %1292 = vmatprep.subr.bf16.mxu0 0
    %1293 = vmatpush1.bf16.msra.mxu0 0
    %1294 = vmatprep.subr.bf16.mxu0 0
    %1295 = vmatpush1.bf16.msra.mxu0 0
    %1296 = vmatprep.subr.bf16.mxu0 0
    %1297 = vmatpush1.bf16.msra.mxu0 0
    %1298 = vmatprep.subr.bf16.mxu0 0
    %1299 = vmatpush1.bf16.msra.mxu0 0
    %1300 = vmatprep.subr.bf16.mxu0 0
    %1301 = vmatpush1.bf16.msra.mxu0 0
    %1302 = vmatprep.subr.bf16.mxu0 0
    %1303 = vmatpush1.bf16.msra.mxu0 0
    %1304 = vmatprep.subr.bf16.mxu0 0
    %1305 = vmatpush1.bf16.msra.mxu0 0
    %1306 = vmatprep.mubr.bf16.mxu0 0
    %1307 = vmatmul.mubr.bf16.gmra.mrb[0].mxu0 %v1272
    %v1308 = vpop.f32.mrb[0].mxu0
    %v1309 = vadd.f32 0.0, %v1308
    %v1310 = vpop.f32.mrb[0].mxu0
    %v1311 = vpop.f32.mrb[0].mxu0
    %v1312 = vpop.f32.mrb[0].mxu0
    %1313 = vdwg.mxu0
    %v1315 = vrot.slane %v1309, 4
    %v1316 = vrot.slane %v1309, 5
    %v1319 = vadd.f32 %v334, %v1315
    %v1320 = vadd.f32 %v337, %v1316
    %v1321 = vpack.c.bf16 %v1257, %v1257
    %v1322 = vpack.c.bf16 %v1258, %v1258
    %v1325 = vunpack.c.l.b16 %v1321
    %v1326 = vunpack.c.l.b16 %v1322
    %v1327 = vrot.slane %v1325, 4
    %v1328 = vrot.slane %v1326, 3
    %v1329 = vsel %vm560, %v1328, %v1327
    %v1330 = vpack.c.b16 %v1329, %v1329
    %1331 = vrot.lane.b32.xlu0 %v1330, 32
    %v1332 = vpop.permute.xlu0 %1331
    %v1334 = vsel %vm350, %v1332, 0
    %1336 = vmatprep.subr.bf16.mxu0 0
    %1337 = vmatpush1.bf16.msra.mxu0 %v404
    %1338 = vmatprep.subr.bf16.mxu0 0
    %1339 = vmatpush1.bf16.msra.mxu0 0
    %1340 = vmatprep.subr.bf16.mxu0 0
    %1341 = vmatpush1.bf16.msra.mxu0 0
    %1342 = vmatprep.subr.bf16.mxu0 0
    %1343 = vmatpush1.bf16.msra.mxu0 0
    %1344 = vmatprep.subr.bf16.mxu0 0
    %1345 = vmatpush1.bf16.msra.mxu0 0
    %1346 = vmatprep.subr.bf16.mxu0 0
    %1347 = vmatpush1.bf16.msra.mxu0 0
    %1348 = vmatprep.subr.bf16.mxu0 0
    %1349 = vmatpush1.bf16.msra.mxu0 0
    %1350 = vmatprep.subr.bf16.mxu0 0
    %1351 = vmatpush1.bf16.msra.mxu0 0
    %1352 = vmatprep.subr.bf16.mxu0 0
    %1353 = vmatpush1.bf16.msra.mxu0 0
    %1354 = vmatprep.subr.bf16.mxu0 0
    %1355 = vmatpush1.bf16.msra.mxu0 0
    %1356 = vmatprep.subr.bf16.mxu0 0
    %1357 = vmatpush1.bf16.msra.mxu0 0
    %1358 = vmatprep.subr.bf16.mxu0 0
    %1359 = vmatpush1.bf16.msra.mxu0 0
    %1360 = vmatprep.subr.bf16.mxu0 0
    %1361 = vmatpush1.bf16.msra.mxu0 0
    %1362 = vmatprep.subr.bf16.mxu0 0
    %1363 = vmatpush1.bf16.msra.mxu0 0
    %1364 = vmatprep.subr.bf16.mxu0 0
    %1365 = vmatpush1.bf16.msra.mxu0 0
    %1366 = vmatprep.subr.bf16.mxu0 0
    %1367 = vmatpush1.bf16.msra.mxu0 0
    %1368 = vmatprep.mubr.bf16.mxu0 0
    %1369 = vmatmul.mubr.bf16.gmra.mrb[0].mxu0 %v1334
    %v1370 = vpop.f32.mrb[0].mxu0
    %v1371 = vadd.f32 0.0, %v1370
    %v1372 = vpop.f32.mrb[0].mxu0
    %v1373 = vpop.f32.mrb[0].mxu0
    %v1374 = vpop.f32.mrb[0].mxu0
    %1375 = vdwg.mxu0
    %v1377 = vrot.slane %v1371, 5
    %v1378 = vrot.slane %v1371, 6
    %1379 = vrot.lane.b32.xlu0 %v1377, 64
    %v1380 = vpop.permute.xlu0 %1379
    %1381 = vrot.lane.b32.xlu0 %v1378, 64
    %v1382 = vpop.permute.xlu0 %1381
    %v1385 = vadd.f32 %v334, %v1380
    %v1386 = vadd.f32 %v337, %v1382
    %v1387 = vxor.u32 %v1319, 2147483648
    %v1388 = vxor.u32 %v1320, 2147483648
    %v1389 = vmul.f32 %v1387, 1.442695
    %v1390 = vpow.pop %v1389
    %v1391 = vmul.f32 %v1388, 1.442695
    %v1392 = vpow.pop %v1391
    %v1393 = vadd.f32 %v1390, 1.0
    %v1394 = vadd.f32 %v1392, 1.0
    %v1395 = vrcp.pop %v1393
    %v1396 = vmul.f32 1.0, %v1395
    %v1397 = vrcp.pop %v1394
    %v1398 = vmul.f32 1.0, %v1397
    %v1399 = vtanh.pop %v1319
    %v1400 = vtanh.pop %v1320
    %v1403 = vrot.slane %v1191, 7
    %v1404 = vrot.slane %v1192, 7
    %v1407 = vmul.f32 %v1396, %v1403
    %v1408 = vmul.f32 %v1398, %v1404
    %1411 = vrot.lane.b32.xlu0 %v1399, 80
    %v1412 = vpop.permute.xlu0 %1411
    %1413 = vrot.lane.b32.xlu0 %v1400, 80
    %v1414 = vpop.permute.xlu0 %1413
    %v1417 = vmul.f32 %v1396, %v1412
    %v1418 = vmul.f32 %v1398, %v1414
    %1421 = vrot.lane.b32.xlu0 %v1417, 16
    %v1422 = vpop.permute.xlu0 %1421
    %1423 = vrot.lane.b32.xlu0 %v1418, 16
    %v1424 = vpop.permute.xlu0 %1423
    %v1427 = vadd.f32 %v1407, %v1422
    %v1428 = vadd.f32 %v1408, %v1424
    %v1429 = vtanh.pop %v1427
    %v1430 = vtanh.pop %v1428
    %1433 = vrot.lane.b32.xlu0 %v1429, 16
    %v1434 = vpop.permute.xlu0 %1433
    %1435 = vrot.lane.b32.xlu0 %v1430, 16
    %v1436 = vpop.permute.xlu0 %1435
    %v1439 = vmul.f32 %v1396, %v1434
    %v1440 = vmul.f32 %v1398, %v1436
    %v1441 = vxor.u32 %v1385, 2147483648
    %v1442 = vxor.u32 %v1386, 2147483648
    %v1443 = vmul.f32 %v1441, 1.442695
    %v1444 = vpow.pop %v1443
    %v1445 = vmul.f32 %v1442, 1.442695
    %v1446 = vpow.pop %v1445
    %v1447 = vadd.f32 %v1444, 1.0
    %v1448 = vadd.f32 %v1446, 1.0
    %v1449 = vrcp.pop %v1447
    %v1450 = vmul.f32 1.0, %v1449
    %v1451 = vrcp.pop %v1448
    %v1452 = vmul.f32 1.0, %v1451
    %v1453 = vtanh.pop %v1385
    %v1454 = vtanh.pop %v1386
    %v1457 = vrot.slane %v1245, 1
    %v1458 = vrot.slane %v1246, 1
    %v1461 = vmul.f32 %v1450, %v1457
    %v1462 = vmul.f32 %v1452, %v1458
    %1465 = vrot.lane.b32.xlu0 %v1453, 80
    %v1466 = vpop.permute.xlu0 %1465
    %1467 = vrot.lane.b32.xlu0 %v1454, 80
    %v1468 = vpop.permute.xlu0 %1467
    %v1471 = vmul.f32 %v1450, %v1466
    %v1472 = vmul.f32 %v1452, %v1468
    %1475 = vrot.lane.b32.xlu0 %v1471, 16
    %v1476 = vpop.permute.xlu0 %1475
    %1477 = vrot.lane.b32.xlu0 %v1472, 16
    %v1478 = vpop.permute.xlu0 %1477
    %v1481 = vadd.f32 %v1461, %v1476
    %v1482 = vadd.f32 %v1462, %v1478
    %v1483 = vtanh.pop %v1481
    %v1484 = vtanh.pop %v1482
    %1487 = vrot.lane.b32.xlu0 %v1483, 16
    %v1488 = vpop.permute.xlu0 %1487
    %1489 = vrot.lane.b32.xlu0 %v1484, 16
    %v1490 = vpop.permute.xlu0 %1489
    %v1493 = vmul.f32 %v1450, %v1488
    %v1494 = vmul.f32 %v1452, %v1490
    %v1495 = vpack.c.bf16 %v1439, %v1439
    %v1496 = vpack.c.bf16 %v1440, %v1440
    %v1499 = vunpack.c.l.b16 %v1495
    %v1500 = vunpack.c.l.b16 %v1496
    %v1501 = vrot.slane %v1499, 4
    %v1502 = vrot.slane %v1500, 3
    %v1503 = vsel %vm560, %v1502, %v1501
    %v1504 = vpack.c.b16 %v1503, %v1503
    %1505 = vrot.lane.b32.xlu0 %v1504, 96
    %v1506 = vpop.permute.xlu0 %1505
    %v1508 = vsel %vm350, %v1506, 0
    %1510 = vmatprep.subr.bf16.mxu0 0
    %1511 = vmatpush1.bf16.msra.mxu0 %v348
    %1512 = vmatprep.subr.bf16.mxu0 0
    %1513 = vmatpush1.bf16.msra.mxu0 0
    %1514 = vmatprep.subr.bf16.mxu0 0
    %1515 = vmatpush1.bf16.msra.mxu0 0
    %1516 = vmatprep.subr.bf16.mxu0 0
    %1517 = vmatpush1.bf16.msra.mxu0 0
    %1518 = vmatprep.subr.bf16.mxu0 0
    %1519 = vmatpush1.bf16.msra.mxu0 0
    %1520 = vmatprep.subr.bf16.mxu0 0
    %1521 = vmatpush1.bf16.msra.mxu0 0
    %1522 = vmatprep.subr.bf16.mxu0 0
    %1523 = vmatpush1.bf16.msra.mxu0 0
    %1524 = vmatprep.subr.bf16.mxu0 0
    %1525 = vmatpush1.bf16.msra.mxu0 0
    %1526 = vmatprep.subr.bf16.mxu0 0
    %1527 = vmatpush1.bf16.msra.mxu0 0
    %1528 = vmatprep.subr.bf16.mxu0 0
    %1529 = vmatpush1.bf16.msra.mxu0 0
    %1530 = vmatprep.subr.bf16.mxu0 0
    %1531 = vmatpush1.bf16.msra.mxu0 0
    %1532 = vmatprep.subr.bf16.mxu0 0
    %1533 = vmatpush1.bf16.msra.mxu0 0
    %1534 = vmatprep.subr.bf16.mxu0 0
    %1535 = vmatpush1.bf16.msra.mxu0 0
    %1536 = vmatprep.subr.bf16.mxu0 0
    %1537 = vmatpush1.bf16.msra.mxu0 0
    %1538 = vmatprep.subr.bf16.mxu0 0
    %1539 = vmatpush1.bf16.msra.mxu0 0
    %1540 = vmatprep.subr.bf16.mxu0 0
    %1541 = vmatpush1.bf16.msra.mxu0 0
    %1542 = vmatprep.mubr.bf16.mxu0 0
    %1543 = vmatmul.mubr.bf16.gmra.mrb[0].mxu0 %v1508
    %v1544 = vpop.f32.mrb[0].mxu0
    %v1545 = vadd.f32 0.0, %v1544
    %v1546 = vpop.f32.mrb[0].mxu0
    %v1547 = vpop.f32.mrb[0].mxu0
    %v1548 = vpop.f32.mrb[0].mxu0
    %1549 = vdwg.mxu0
    %v1551 = vrot.slane %v1545, 3
    %v1552 = vrot.slane %v1545, 4
    %v1555 = vadd.f32 %v334, %v1551
    %v1556 = vadd.f32 %v337, %v1552
    %v1557 = vpack.c.bf16 %v1493, %v1493
    %v1558 = vpack.c.bf16 %v1494, %v1494
    %v1561 = vunpack.c.l.b16 %v1557
    %v1562 = vunpack.c.l.b16 %v1558
    %v1563 = vrot.slane %v1561, 3
    %v1564 = vrot.slane %v1562, 2
    %v1565 = vsel %vm560, %v1564, %v1563
    %v1566 = vpack.c.b16 %v1565, %v1565
    %1567 = vrot.lane.b32.xlu0 %v1566, 32
    %v1568 = vpop.permute.xlu0 %1567
    %v1570 = vsel %vm350, %v1568, 0
    %1572 = vmatprep.subr.bf16.mxu0 0
    %1573 = vmatpush1.bf16.msra.mxu0 %v404
    %1574 = vmatprep.subr.bf16.mxu0 0
    %1575 = vmatpush1.bf16.msra.mxu0 0
    %1576 = vmatprep.subr.bf16.mxu0 0
    %1577 = vmatpush1.bf16.msra.mxu0 0
    %1578 = vmatprep.subr.bf16.mxu0 0
    %1579 = vmatpush1.bf16.msra.mxu0 0
    %1580 = vmatprep.subr.bf16.mxu0 0
    %1581 = vmatpush1.bf16.msra.mxu0 0
    %1582 = vmatprep.subr.bf16.mxu0 0
    %1583 = vmatpush1.bf16.msra.mxu0 0
    %1584 = vmatprep.subr.bf16.mxu0 0
    %1585 = vmatpush1.bf16.msra.mxu0 0
    %1586 = vmatprep.subr.bf16.mxu0 0
    %1587 = vmatpush1.bf16.msra.mxu0 0
    %1588 = vmatprep.subr.bf16.mxu0 0
    %1589 = vmatpush1.bf16.msra.mxu0 0
    %1590 = vmatprep.subr.bf16.mxu0 0
    %1591 = vmatpush1.bf16.msra.mxu0 0
    %1592 = vmatprep.subr.bf16.mxu0 0
    %1593 = vmatpush1.bf16.msra.mxu0 0
    %1594 = vmatprep.subr.bf16.mxu0 0
    %1595 = vmatpush1.bf16.msra.mxu0 0
    %1596 = vmatprep.subr.bf16.mxu0 0
    %1597 = vmatpush1.bf16.msra.mxu0 0
    %1598 = vmatprep.subr.bf16.mxu0 0
    %1599 = vmatpush1.bf16.msra.mxu0 0
    %1600 = vmatprep.subr.bf16.mxu0 0
    %1601 = vmatpush1.bf16.msra.mxu0 0
    %1602 = vmatprep.subr.bf16.mxu0 0
    %1603 = vmatpush1.bf16.msra.mxu0 0
    %1604 = vmatprep.mubr.bf16.mxu0 0
    %1605 = vmatmul.mubr.bf16.gmra.mrb[0].mxu0 %v1570
    %v1606 = vpop.f32.mrb[0].mxu0
    %v1607 = vadd.f32 0.0, %v1606
    %v1608 = vpop.f32.mrb[0].mxu0
    %v1609 = vpop.f32.mrb[0].mxu0
    %v1610 = vpop.f32.mrb[0].mxu0
    %1611 = vdwg.mxu0
    %v1613 = vrot.slane %v1607, 6
    %v1614 = vrot.slane %v1607, 7
    %1615 = vrot.lane.b32.xlu0 %v1613, 64
    %v1616 = vpop.permute.xlu0 %1615
    %1617 = vrot.lane.b32.xlu0 %v1614, 64
    %v1618 = vpop.permute.xlu0 %1617
    %v1621 = vadd.f32 %v334, %v1616
    %v1622 = vadd.f32 %v337, %v1618
    %v1623 = vxor.u32 %v1555, 2147483648
    %v1624 = vxor.u32 %v1556, 2147483648
    %v1625 = vmul.f32 %v1623, 1.442695
    %v1626 = vpow.pop %v1625
    %v1627 = vmul.f32 %v1624, 1.442695
    %v1628 = vpow.pop %v1627
    %v1629 = vadd.f32 %v1626, 1.0
    %v1630 = vadd.f32 %v1628, 1.0
    %v1631 = vrcp.pop %v1629
    %v1632 = vmul.f32 1.0, %v1631
    %v1633 = vrcp.pop %v1630
    %v1634 = vmul.f32 1.0, %v1633
    %v1635 = vtanh.pop %v1555
    %v1636 = vtanh.pop %v1556
    %v1639 = vrot.slane %v1427, 7
    %v1640 = vrot.slane %v1428, 7
    %v1643 = vmul.f32 %v1632, %v1639
    %v1644 = vmul.f32 %v1634, %v1640
    %1647 = vrot.lane.b32.xlu0 %v1635, 80
    %v1648 = vpop.permute.xlu0 %1647
    %1649 = vrot.lane.b32.xlu0 %v1636, 80
    %v1650 = vpop.permute.xlu0 %1649
    %v1653 = vmul.f32 %v1632, %v1648
    %v1654 = vmul.f32 %v1634, %v1650
    %1657 = vrot.lane.b32.xlu0 %v1653, 16
    %v1658 = vpop.permute.xlu0 %1657
    %1659 = vrot.lane.b32.xlu0 %v1654, 16
    %v1660 = vpop.permute.xlu0 %1659
    %v1663 = vadd.f32 %v1643, %v1658
    %v1664 = vadd.f32 %v1644, %v1660
    %v1665 = vtanh.pop %v1663
    %v1666 = vtanh.pop %v1664
    %1669 = vrot.lane.b32.xlu0 %v1665, 16
    %v1670 = vpop.permute.xlu0 %1669
    %1671 = vrot.lane.b32.xlu0 %v1666, 16
    %v1672 = vpop.permute.xlu0 %1671
    %v1675 = vmul.f32 %v1632, %v1670
    %v1676 = vmul.f32 %v1634, %v1672
    %v1677 = vxor.u32 %v1621, 2147483648
    %v1678 = vxor.u32 %v1622, 2147483648
    %v1679 = vmul.f32 %v1677, 1.442695
    %v1680 = vpow.pop %v1679
    %v1681 = vmul.f32 %v1678, 1.442695
    %v1682 = vpow.pop %v1681
    %v1683 = vadd.f32 %v1680, 1.0
    %v1684 = vadd.f32 %v1682, 1.0
    %v1685 = vrcp.pop %v1683
    %v1686 = vmul.f32 1.0, %v1685
    %v1687 = vrcp.pop %v1684
    %v1688 = vmul.f32 1.0, %v1687
    %v1689 = vtanh.pop %v1621
    %v1690 = vtanh.pop %v1622
    %v1693 = vrot.slane %v1481, 1
    %v1694 = vrot.slane %v1482, 1
    %v1697 = vmul.f32 %v1686, %v1693
    %v1698 = vmul.f32 %v1688, %v1694
    %1701 = vrot.lane.b32.xlu0 %v1689, 80
    %v1702 = vpop.permute.xlu0 %1701
    %1703 = vrot.lane.b32.xlu0 %v1690, 80
    %v1704 = vpop.permute.xlu0 %1703
    %v1707 = vmul.f32 %v1686, %v1702
    %v1708 = vmul.f32 %v1688, %v1704
    %1711 = vrot.lane.b32.xlu0 %v1707, 16
    %v1712 = vpop.permute.xlu0 %1711
    %1713 = vrot.lane.b32.xlu0 %v1708, 16
    %v1714 = vpop.permute.xlu0 %1713
    %v1717 = vadd.f32 %v1697, %v1712
    %v1718 = vadd.f32 %v1698, %v1714
    %v1719 = vtanh.pop %v1717
    %v1720 = vtanh.pop %v1718
    %1723 = vrot.lane.b32.xlu0 %v1719, 16
    %v1724 = vpop.permute.xlu0 %1723
    %1725 = vrot.lane.b32.xlu0 %v1720, 16
    %v1726 = vpop.permute.xlu0 %1725
    %v1729 = vmul.f32 %v1686, %v1724
    %v1730 = vmul.f32 %v1688, %v1726
    %v1731 = vpack.c.bf16 %v1675, %v1675
    %v1732 = vpack.c.bf16 %v1676, %v1676
    %v1735 = vunpack.c.l.b16 %v1731
    %v1736 = vunpack.c.l.b16 %v1732
    %v1737 = vrot.slane %v1735, 5
    %v1738 = vrot.slane %v1736, 4
    %v1739 = vsel %vm560, %v1738, %v1737
    %v1740 = vpack.c.b16 %v1739, %v1739
    %1741 = vrot.lane.b32.xlu0 %v1740, 96
    %v1742 = vpop.permute.xlu0 %1741
    %v1744 = vsel %vm350, %v1742, 0
    %1746 = vmatprep.subr.bf16.mxu0 0
    %1747 = vmatpush1.bf16.msra.mxu0 %v348
    %1748 = vmatprep.subr.bf16.mxu0 0
    %1749 = vmatpush1.bf16.msra.mxu0 0
    %1750 = vmatprep.subr.bf16.mxu0 0
    %1751 = vmatpush1.bf16.msra.mxu0 0
    %1752 = vmatprep.subr.bf16.mxu0 0
    %1753 = vmatpush1.bf16.msra.mxu0 0
    %1754 = vmatprep.subr.bf16.mxu0 0
    %1755 = vmatpush1.bf16.msra.mxu0 0
    %1756 = vmatprep.subr.bf16.mxu0 0
    %1757 = vmatpush1.bf16.msra.mxu0 0
    %1758 = vmatprep.subr.bf16.mxu0 0
    %1759 = vmatpush1.bf16.msra.mxu0 0
    %1760 = vmatprep.subr.bf16.mxu0 0
    %1761 = vmatpush1.bf16.msra.mxu0 0
    %1762 = vmatprep.subr.bf16.mxu0 0
    %1763 = vmatpush1.bf16.msra.mxu0 0
    %1764 = vmatprep.subr.bf16.mxu0 0
    %1765 = vmatpush1.bf16.msra.mxu0 0
    %1766 = vmatprep.subr.bf16.mxu0 0
    %1767 = vmatpush1.bf16.msra.mxu0 0
    %1768 = vmatprep.subr.bf16.mxu0 0
    %1769 = vmatpush1.bf16.msra.mxu0 0
    %1770 = vmatprep.subr.bf16.mxu0 0
    %1771 = vmatpush1.bf16.msra.mxu0 0
    %1772 = vmatprep.subr.bf16.mxu0 0
    %1773 = vmatpush1.bf16.msra.mxu0 0
    %1774 = vmatprep.subr.bf16.mxu0 0
    %1775 = vmatpush1.bf16.msra.mxu0 0
    %1776 = vmatprep.subr.bf16.mxu0 0
    %1777 = vmatpush1.bf16.msra.mxu0 0
    %1778 = vmatprep.mubr.bf16.mxu0 0
    %1779 = vmatmul.mubr.bf16.gmra.mrb[0].mxu0 %v1744
    %v1780 = vpop.f32.mrb[0].mxu0
    %v1781 = vadd.f32 0.0, %v1780
    %v1782 = vpop.f32.mrb[0].mxu0
    %v1783 = vpop.f32.mrb[0].mxu0
    %v1784 = vpop.f32.mrb[0].mxu0
    %1785 = vdwg.mxu0
    %v1787 = vrot.slane %v1781, 2
    %v1788 = vrot.slane %v1781, 3
    %v1791 = vadd.f32 %v334, %v1787
    %v1792 = vadd.f32 %v337, %v1788
    %v1793 = vpack.c.bf16 %v1729, %v1729
    %v1794 = vpack.c.bf16 %v1730, %v1730
    %v1797 = vunpack.c.l.b16 %v1793
    %v1798 = vunpack.c.l.b16 %v1794
    %v1799 = vrot.slane %v1797, 2
    %v1800 = vrot.slane %v1798, 1
    %v1801 = vsel %vm560, %v1800, %v1799
    %v1802 = vpack.c.b16 %v1801, %v1801
    %1803 = vrot.lane.b32.xlu0 %v1802, 32
    %v1804 = vpop.permute.xlu0 %1803
    %v1806 = vsel %vm350, %v1804, 0
    %1808 = vmatprep.subr.bf16.mxu0 0
    %1809 = vmatpush1.bf16.msra.mxu0 %v404
    %1810 = vmatprep.subr.bf16.mxu0 0
    %1811 = vmatpush1.bf16.msra.mxu0 0
    %1812 = vmatprep.subr.bf16.mxu0 0
    %1813 = vmatpush1.bf16.msra.mxu0 0
    %1814 = vmatprep.subr.bf16.mxu0 0
    %1815 = vmatpush1.bf16.msra.mxu0 0
    %1816 = vmatprep.subr.bf16.mxu0 0
    %1817 = vmatpush1.bf16.msra.mxu0 0
    %1818 = vmatprep.subr.bf16.mxu0 0
    %1819 = vmatpush1.bf16.msra.mxu0 0
    %1820 = vmatprep.subr.bf16.mxu0 0
    %1821 = vmatpush1.bf16.msra.mxu0 0
    %1822 = vmatprep.subr.bf16.mxu0 0
    %1823 = vmatpush1.bf16.msra.mxu0 0
    %1824 = vmatprep.subr.bf16.mxu0 0
    %1825 = vmatpush1.bf16.msra.mxu0 0
    %1826 = vmatprep.subr.bf16.mxu0 0
    %1827 = vmatpush1.bf16.msra.mxu0 0
    %1828 = vmatprep.subr.bf16.mxu0 0
    %1829 = vmatpush1.bf16.msra.mxu0 0
    %1830 = vmatprep.subr.bf16.mxu0 0
    %1831 = vmatpush1.bf16.msra.mxu0 0
    %1832 = vmatprep.subr.bf16.mxu0 0
    %1833 = vmatpush1.bf16.msra.mxu0 0
    %1834 = vmatprep.subr.bf16.mxu0 0
    %1835 = vmatpush1.bf16.msra.mxu0 0
    %1836 = vmatprep.subr.bf16.mxu0 0
    %1837 = vmatpush1.bf16.msra.mxu0 0
    %1838 = vmatprep.subr.bf16.mxu0 0
    %1839 = vmatpush1.bf16.msra.mxu0 0
    %1840 = vmatprep.mubr.bf16.mxu0 0
    %1841 = vmatmul.mubr.bf16.gmra.mrb[0].mxu0 %v1806
    %v1842 = vpop.f32.mrb[0].mxu0
    %v1843 = vadd.f32 0.0, %v1842
    %v1844 = vpop.f32.mrb[0].mxu0
    %v1845 = vpop.f32.mrb[0].mxu0
    %v1846 = vpop.f32.mrb[0].mxu0
    %1847 = vdwg.mxu0
    %v1849 = vrot.slane %v1843, 7
    %1850 = vrot.lane.b32.xlu0 %v1849, 64
    %v1851 = vpop.permute.xlu0 %1850
    %1852 = vrot.lane.b32.xlu0 %v1843, 64
    %v1853 = vpop.permute.xlu0 %1852
    %v1856 = vadd.f32 %v334, %v1851
    %v1857 = vadd.f32 %v337, %v1853
    %v1858 = vxor.u32 %v1791, 2147483648
    %v1859 = vxor.u32 %v1792, 2147483648
    %v1860 = vmul.f32 %v1858, 1.442695
    %v1861 = vpow.pop %v1860
    %v1862 = vmul.f32 %v1859, 1.442695
    %v1863 = vpow.pop %v1862
    %v1864 = vadd.f32 %v1861, 1.0
    %v1865 = vadd.f32 %v1863, 1.0
    %v1866 = vrcp.pop %v1864
    %v1867 = vmul.f32 1.0, %v1866
    %v1868 = vrcp.pop %v1865
    %v1869 = vmul.f32 1.0, %v1868
    %v1870 = vtanh.pop %v1791
    %v1871 = vtanh.pop %v1792
    %v1874 = vrot.slane %v1663, 7
    %v1875 = vrot.slane %v1664, 7
    %v1878 = vmul.f32 %v1867, %v1874
    %v1879 = vmul.f32 %v1869, %v1875
    %1882 = vrot.lane.b32.xlu0 %v1870, 80
    %v1883 = vpop.permute.xlu0 %1882
    %1884 = vrot.lane.b32.xlu0 %v1871, 80
    %v1885 = vpop.permute.xlu0 %1884
    %v1888 = vmul.f32 %v1867, %v1883
    %v1889 = vmul.f32 %v1869, %v1885
    %1892 = vrot.lane.b32.xlu0 %v1888, 16
    %v1893 = vpop.permute.xlu0 %1892
    %1894 = vrot.lane.b32.xlu0 %v1889, 16
    %v1895 = vpop.permute.xlu0 %1894
    %v1898 = vadd.f32 %v1878, %v1893
    %v1899 = vadd.f32 %v1879, %v1895
    %v1900 = vtanh.pop %v1898
    %v1901 = vtanh.pop %v1899
    %1904 = vrot.lane.b32.xlu0 %v1900, 16
    %v1905 = vpop.permute.xlu0 %1904
    %1906 = vrot.lane.b32.xlu0 %v1901, 16
    %v1907 = vpop.permute.xlu0 %1906
    %v1910 = vmul.f32 %v1867, %v1905
    %v1911 = vmul.f32 %v1869, %v1907
    %v1912 = vxor.u32 %v1856, 2147483648
    %v1913 = vxor.u32 %v1857, 2147483648
    %v1914 = vmul.f32 %v1912, 1.442695
    %v1915 = vpow.pop %v1914
    %v1916 = vmul.f32 %v1913, 1.442695
    %v1917 = vpow.pop %v1916
    %v1918 = vadd.f32 %v1915, 1.0
    %v1919 = vadd.f32 %v1917, 1.0
    %v1920 = vrcp.pop %v1918
    %v1921 = vmul.f32 1.0, %v1920
    %v1922 = vrcp.pop %v1919
    %v1923 = vmul.f32 1.0, %v1922
    %v1924 = vtanh.pop %v1856
    %v1925 = vtanh.pop %v1857
    %v1928 = vrot.slane %v1717, 1
    %v1929 = vrot.slane %v1718, 1
    %v1932 = vmul.f32 %v1921, %v1928
    %v1933 = vmul.f32 %v1923, %v1929
    %1936 = vrot.lane.b32.xlu0 %v1924, 80
    %v1937 = vpop.permute.xlu0 %1936
    %1938 = vrot.lane.b32.xlu0 %v1925, 80
    %v1939 = vpop.permute.xlu0 %1938
    %v1942 = vmul.f32 %v1921, %v1937
    %v1943 = vmul.f32 %v1923, %v1939
    %1946 = vrot.lane.b32.xlu0 %v1942, 16
    %v1947 = vpop.permute.xlu0 %1946
    %1948 = vrot.lane.b32.xlu0 %v1943, 16
    %v1949 = vpop.permute.xlu0 %1948
    %v1952 = vadd.f32 %v1932, %v1947
    %v1953 = vadd.f32 %v1933, %v1949
    %v1954 = vtanh.pop %v1952
    %v1955 = vtanh.pop %v1953
    %1958 = vrot.lane.b32.xlu0 %v1954, 16
    %v1959 = vpop.permute.xlu0 %1958
    %1960 = vrot.lane.b32.xlu0 %v1955, 16
    %v1961 = vpop.permute.xlu0 %1960
    %v1964 = vmul.f32 %v1921, %v1959
    %v1965 = vmul.f32 %v1923, %v1961
    %v1966 = vpack.c.bf16 %v1910, %v1910
    %v1967 = vpack.c.bf16 %v1911, %v1911
    %v1970 = vunpack.c.l.b16 %v1966
    %v1971 = vunpack.c.l.b16 %v1967
    %v1972 = vrot.slane %v1970, 6
    %v1973 = vrot.slane %v1971, 5
    %v1974 = vsel %vm560, %v1973, %v1972
    %v1975 = vpack.c.b16 %v1974, %v1974
    %1976 = vrot.lane.b32.xlu0 %v1975, 96
    %v1977 = vpop.permute.xlu0 %1976
    %v1979 = vsel %vm350, %v1977, 0
    %1981 = vmatprep.subr.bf16.mxu0 0
    %1982 = vmatpush1.bf16.msra.mxu0 %v348
    %1983 = vmatprep.subr.bf16.mxu0 0
    %1984 = vmatpush1.bf16.msra.mxu0 0
    %1985 = vmatprep.subr.bf16.mxu0 0
    %1986 = vmatpush1.bf16.msra.mxu0 0
    %1987 = vmatprep.subr.bf16.mxu0 0
    %1988 = vmatpush1.bf16.msra.mxu0 0
    %1989 = vmatprep.subr.bf16.mxu0 0
    %1990 = vmatpush1.bf16.msra.mxu0 0
    %1991 = vmatprep.subr.bf16.mxu0 0
    %1992 = vmatpush1.bf16.msra.mxu0 0
    %1993 = vmatprep.subr.bf16.mxu0 0
    %1994 = vmatpush1.bf16.msra.mxu0 0
    %1995 = vmatprep.subr.bf16.mxu0 0
    %1996 = vmatpush1.bf16.msra.mxu0 0
    %1997 = vmatprep.subr.bf16.mxu0 0
    %1998 = vmatpush1.bf16.msra.mxu0 0
    %1999 = vmatprep.subr.bf16.mxu0 0
    %2000 = vmatpush1.bf16.msra.mxu0 0
    %2001 = vmatprep.subr.bf16.mxu0 0
    %2002 = vmatpush1.bf16.msra.mxu0 0
    %2003 = vmatprep.subr.bf16.mxu0 0
    %2004 = vmatpush1.bf16.msra.mxu0 0
    %2005 = vmatprep.subr.bf16.mxu0 0
    %2006 = vmatpush1.bf16.msra.mxu0 0
    %2007 = vmatprep.subr.bf16.mxu0 0
    %2008 = vmatpush1.bf16.msra.mxu0 0
    %2009 = vmatprep.subr.bf16.mxu0 0
    %2010 = vmatpush1.bf16.msra.mxu0 0
    %2011 = vmatprep.subr.bf16.mxu0 0
    %2012 = vmatpush1.bf16.msra.mxu0 0
    %2013 = vmatprep.mubr.bf16.mxu0 0
    %2014 = vmatmul.mubr.bf16.gmra.mrb[0].mxu0 %v1979
    %v2015 = vpop.f32.mrb[0].mxu0
    %v2016 = vadd.f32 0.0, %v2015
    %v2017 = vpop.f32.mrb[0].mxu0
    %v2018 = vpop.f32.mrb[0].mxu0
    %v2019 = vpop.f32.mrb[0].mxu0
    %2020 = vdwg.mxu0
    %v2022 = vrot.slane %v2016, 1
    %v2023 = vrot.slane %v2016, 2
    %v2026 = vadd.f32 %v334, %v2022
    %v2027 = vadd.f32 %v337, %v2023
    %v2028 = vpack.c.bf16 %v1964, %v1964
    %v2029 = vpack.c.bf16 %v1965, %v1965
    %v2032 = vunpack.c.l.b16 %v2028
    %v2033 = vunpack.c.l.b16 %v2029
    %v2034 = vrot.slane %v2032, 1
    %v2035 = vsel %vm560, %v2033, %v2034
    %v2036 = vpack.c.b16 %v2035, %v2035
    %2037 = vrot.lane.b32.xlu0 %v2036, 32
    %v2038 = vpop.permute.xlu0 %2037
    %v2040 = vsel %vm350, %v2038, 0
    %2042 = vmatprep.subr.bf16.mxu0 0
    %2043 = vmatpush1.bf16.msra.mxu0 %v404
    %2044 = vmatprep.subr.bf16.mxu0 0
    %2045 = vmatpush1.bf16.msra.mxu0 0
    %2046 = vmatprep.subr.bf16.mxu0 0
    %2047 = vmatpush1.bf16.msra.mxu0 0
    %2048 = vmatprep.subr.bf16.mxu0 0
    %2049 = vmatpush1.bf16.msra.mxu0 0
    %2050 = vmatprep.subr.bf16.mxu0 0
    %2051 = vmatpush1.bf16.msra.mxu0 0
    %2052 = vmatprep.subr.bf16.mxu0 0
    %2053 = vmatpush1.bf16.msra.mxu0 0
    %2054 = vmatprep.subr.bf16.mxu0 0
    %2055 = vmatpush1.bf16.msra.mxu0 0
    %2056 = vmatprep.subr.bf16.mxu0 0
    %2057 = vmatpush1.bf16.msra.mxu0 0
    %2058 = vmatprep.subr.bf16.mxu0 0
    %2059 = vmatpush1.bf16.msra.mxu0 0
    %2060 = vmatprep.subr.bf16.mxu0 0
    %2061 = vmatpush1.bf16.msra.mxu0 0
    %2062 = vmatprep.subr.bf16.mxu0 0
    %2063 = vmatpush1.bf16.msra.mxu0 0
    %2064 = vmatprep.subr.bf16.mxu0 0
    %2065 = vmatpush1.bf16.msra.mxu0 0
    %2066 = vmatprep.subr.bf16.mxu0 0
    %2067 = vmatpush1.bf16.msra.mxu0 0
    %2068 = vmatprep.subr.bf16.mxu0 0
    %2069 = vmatpush1.bf16.msra.mxu0 0
    %2070 = vmatprep.subr.bf16.mxu0 0
    %2071 = vmatpush1.bf16.msra.mxu0 0
    %2072 = vmatprep.subr.bf16.mxu0 0
    %2073 = vmatpush1.bf16.msra.mxu0 0
    %2074 = vmatprep.mubr.bf16.mxu0 0
    %2075 = vmatmul.mubr.bf16.gmra.mrb[0].mxu0 %v2040
    %v2076 = vpop.f32.mrb[0].mxu0
    %v2077 = vadd.f32 0.0, %v2076
    %v2078 = vpop.f32.mrb[0].mxu0
    %v2079 = vpop.f32.mrb[0].mxu0
    %v2080 = vpop.f32.mrb[0].mxu0
    %2081 = vdwg.mxu0
    %v2083 = vrot.slane %v2077, 1
    %2084 = vrot.lane.b32.xlu0 %v2077, 64
    %v2085 = vpop.permute.xlu0 %2084
    %2086 = vrot.lane.b32.xlu0 %v2083, 64
    %v2087 = vpop.permute.xlu0 %2086
    %v2090 = vadd.f32 %v334, %v2085
    %v2091 = vadd.f32 %v337, %v2087
    %v2092 = vxor.u32 %v2026, 2147483648
    %v2093 = vxor.u32 %v2027, 2147483648
    %v2094 = vmul.f32 %v2092, 1.442695
    %v2095 = vpow.pop %v2094
    %v2096 = vmul.f32 %v2093, 1.442695
    %v2097 = vpow.pop %v2096
    %v2098 = vadd.f32 %v2095, 1.0
    %v2099 = vadd.f32 %v2097, 1.0
    %v2100 = vrcp.pop %v2098
    %v2101 = vmul.f32 1.0, %v2100
    %v2102 = vrcp.pop %v2099
    %v2103 = vmul.f32 1.0, %v2102
    %v2104 = vtanh.pop %v2026
    %v2105 = vtanh.pop %v2027
    %v2108 = vrot.slane %v1898, 7
    %v2109 = vrot.slane %v1899, 7
    %v2112 = vmul.f32 %v2101, %v2108
    %v2113 = vmul.f32 %v2103, %v2109
    %2116 = vrot.lane.b32.xlu0 %v2104, 80
    %v2117 = vpop.permute.xlu0 %2116
    %2118 = vrot.lane.b32.xlu0 %v2105, 80
    %v2119 = vpop.permute.xlu0 %2118
    %v2122 = vmul.f32 %v2101, %v2117
    %v2123 = vmul.f32 %v2103, %v2119
    %2126 = vrot.lane.b32.xlu0 %v2122, 16
    %v2127 = vpop.permute.xlu0 %2126
    %2128 = vrot.lane.b32.xlu0 %v2123, 16
    %v2129 = vpop.permute.xlu0 %2128
    %v2132 = vadd.f32 %v2112, %v2127
    %v2133 = vadd.f32 %v2113, %v2129
    %v2134 = vtanh.pop %v2132
    %v2135 = vtanh.pop %v2133
    %2138 = vrot.lane.b32.xlu0 %v2134, 16
    %v2139 = vpop.permute.xlu0 %2138
    %2140 = vrot.lane.b32.xlu0 %v2135, 16
    %v2141 = vpop.permute.xlu0 %2140
    %v2144 = vmul.f32 %v2101, %v2139
    %v2145 = vmul.f32 %v2103, %v2141
    %v2146 = vxor.u32 %v2090, 2147483648
    %v2147 = vxor.u32 %v2091, 2147483648
    %v2148 = vmul.f32 %v2146, 1.442695
    %v2149 = vpow.pop %v2148
    %v2150 = vmul.f32 %v2147, 1.442695
    %v2151 = vpow.pop %v2150
    %v2152 = vadd.f32 %v2149, 1.0
    %v2153 = vadd.f32 %v2151, 1.0
    %v2154 = vrcp.pop %v2152
    %v2155 = vmul.f32 1.0, %v2154
    %v2156 = vrcp.pop %v2153
    %v2157 = vmul.f32 1.0, %v2156
    %v2158 = vtanh.pop %v2090
    %v2159 = vtanh.pop %v2091
    %v2162 = vrot.slane %v1952, 1
    %v2163 = vrot.slane %v1953, 1
    %v2166 = vmul.f32 %v2155, %v2162
    %v2167 = vmul.f32 %v2157, %v2163
    %2170 = vrot.lane.b32.xlu0 %v2158, 80
    %v2171 = vpop.permute.xlu0 %2170
    %2172 = vrot.lane.b32.xlu0 %v2159, 80
    %v2173 = vpop.permute.xlu0 %2172
    %v2176 = vmul.f32 %v2155, %v2171
    %v2177 = vmul.f32 %v2157, %v2173
    %2180 = vrot.lane.b32.xlu0 %v2176, 16
    %v2181 = vpop.permute.xlu0 %2180
    %2182 = vrot.lane.b32.xlu0 %v2177, 16
    %v2183 = vpop.permute.xlu0 %2182
    %v2186 = vadd.f32 %v2166, %v2181
    %v2187 = vadd.f32 %v2167, %v2183
    %v2188 = vtanh.pop %v2186
    %v2189 = vtanh.pop %v2187
    %2192 = vrot.lane.b32.xlu0 %v2188, 16
    %v2193 = vpop.permute.xlu0 %2192
    %2194 = vrot.lane.b32.xlu0 %v2189, 16
    %v2195 = vpop.permute.xlu0 %2194
    %v2198 = vmul.f32 %v2155, %v2193
    %v2199 = vmul.f32 %v2157, %v2195
    %vm2200 = vcmask 1040384
    %v2201 = vsel %vm2200, %v503, %v732
    %v2202 = vsel %vm2200, %v504, %v733
    %vm2203 = vcmask 1041408
    %v2204 = vsel %vm2203, %v2201, %v967
    %v2205 = vsel %vm2203, %v2202, %v968
    %vm2206 = vcmask 1042432
    %v2207 = vsel %vm2206, %v2204, %v1203
    %v2208 = vsel %vm2206, %v2205, %v1204
    %vm2209 = vcmask 1043456
    %v2210 = vsel %vm2209, %v2207, %v1439
    %v2211 = vsel %vm2209, %v2208, %v1440
    %vm2212 = vcmask 1044480
    %v2213 = vsel %vm2212, %v2210, %v1675
    %v2214 = vsel %vm2212, %v2211, %v1676
    %vm2215 = vcmask 1045504
    %v2216 = vsel %vm2215, %v2213, %v1910
    %v2217 = vsel %vm2215, %v2214, %v1911
    %vm2218 = vcmask 1046528
    %v2219 = vsel %vm2218, %v2216, %v2144
    %v2220 = vsel %vm2218, %v2217, %v2145
    %v2221 = vpack.c.bf16 %v2219, %v2219
    %v2222 = vpack.c.bf16 %v2220, %v2220
    %v2223 = vsel %vm2200, %v2198, %v1964
    %v2224 = vsel %vm2200, %v2199, %v1965
    %v2225 = vsel %vm2203, %v2223, %v1729
    %v2226 = vsel %vm2203, %v2224, %v1730
    %v2227 = vsel %vm2206, %v2225, %v1493
    %v2228 = vsel %vm2206, %v2226, %v1494
    %v2229 = vsel %vm2209, %v2227, %v1257
    %v2230 = vsel %vm2209, %v2228, %v1258
    %v2231 = vsel %vm2212, %v2229, %v1021
    %v2232 = vsel %vm2212, %v2230, %v1022
    %v2233 = vsel %vm2215, %v2231, %v786
    %v2234 = vsel %vm2215, %v2232, %v787
    %v2235 = vsel %vm2218, %v2233, %v551
    %v2236 = vsel %vm2218, %v2234, %v552
    %v2237 = vpack.c.bf16 %v2235, %v2235
    %v2238 = vpack.c.bf16 %v2236, %v2236
    %v2239 = vld [vmem:[%s2] sm:$0xf]
    %v2240 = vld [vmem:[%s2 + $0x4] sm:$0xf]
    %2243 = vrot.lane.b32.xlu0 %v2221, 96
    %v2244 = vpop.permute.xlu0 %2243
    %2245 = vrot.lane.b32.xlu0 %v2222, 96
    %v2246 = vpop.permute.xlu0 %2245
    %2249 = vrot.lane.b32.xlu0 %v2237, 48
    %v2250 = vpop.permute.xlu0 %2249
    %2251 = vrot.lane.b32.xlu0 %v2238, 48
    %v2252 = vpop.permute.xlu0 %2251
    %v2255 = vunpack.c.l.b16 %v2239
    %v2256 = vunpack.c.l.b16 %v2240
    %v2257 = vpack.c.b16 %v2255, %v2255
    %v2258 = vpack.c.b16 %v2256, %v2256
    %2259 = vrot.lane.b32.xlu0 %v2257, 32
    %v2260 = vpop.permute.xlu0 %2259
    %2261 = vrot.lane.b32.xlu0 %v2258, 32
    %v2262 = vpop.permute.xlu0 %2261
    %v2265 = vsel %vm350, %v2244, %v2250
    %v2268 = vsel %vm350, %v2246, %v2252
    %v2270 = vsel %vm295, %v2265, %v2260
    %v2272 = vsel %vm295, %v2268, %v2262
    %v2273 = vld [vmem:[%s7] sm:$0xf]
    %v2274 = vld [vmem:[%s7 + $0x4] sm:$0xf]
    %v2275 = vld [vmem:[%s7 + $0x8] sm:$0xf]
    %v2276 = vld [vmem:[%s7 + $0xc] sm:$0xf]
    %v2277 = vld [vmem:[%s7 + $0x10] sm:$0xf]
    %v2278 = vld [vmem:[%s7 + $0x14] sm:$0xf]
    %v2279 = vld [vmem:[%s7 + $0x18] sm:$0xf]
    %v2280 = vld [vmem:[%s7 + $0x1c] sm:$0xf]
    %v2281 = vld [vmem:[%s8] sm:$0x1]
    %v2283 = vlaneseq
    %v2284 = vshrl.u32 %v2283, 7
    %v2285 = vsub.s32 0, %v2284
    %v2286 = vrot.slane %v2281, %v2285
    %v2290 = vunpack.c.l.b16 %v2270
    %v2291 = vunpack.c.l.b16 %v2272
    %v2292 = vpack.c.b16 %v2291, %v2290
    %v2301 = vunpack.c.l.b16 %v2273
    %v2302 = vunpack.c.l.b16 %v2274
    %v2303 = vunpack.c.l.b16 %v2275
    %v2304 = vunpack.c.l.b16 %v2276
    %v2305 = vunpack.c.l.b16 %v2277
    %v2306 = vunpack.c.l.b16 %v2278
    %v2307 = vunpack.c.l.b16 %v2279
    %v2308 = vunpack.c.l.b16 %v2280
    %v2309 = vpack.c.b16 %v2302, %v2301
    %v2310 = vpack.c.b16 %v2304, %v2303
    %v2311 = vpack.c.b16 %v2306, %v2305
    %v2312 = vpack.c.b16 %v2308, %v2307
    %vm2317 = vcmask 523264
    %v2319 = vsel %vm2317, %v2292, 0
    %2321 = vmatprep.subr.bf16.mxu0 0
    %2322 = vmatpush1.bf16.msra.mxu0 %v2309
    %2323 = vmatprep.subr.bf16.mxu0 0
    %2324 = vmatpush1.bf16.msra.mxu0 %v2310
    %2325 = vmatprep.subr.bf16.mxu0 0
    %2326 = vmatpush1.bf16.msra.mxu0 %v2311
    %2327 = vmatprep.subr.bf16.mxu0 0
    %2328 = vmatpush1.bf16.msra.mxu0 %v2312
    %2329 = vmatprep.subr.bf16.mxu0 0
    %2330 = vmatpush1.bf16.msra.mxu0 0
    %2331 = vmatprep.subr.bf16.mxu0 0
    %2332 = vmatpush1.bf16.msra.mxu0 0
    %2333 = vmatprep.subr.bf16.mxu0 0
    %2334 = vmatpush1.bf16.msra.mxu0 0
    %2335 = vmatprep.subr.bf16.mxu0 0
    %2336 = vmatpush1.bf16.msra.mxu0 0
    %2337 = vmatprep.subr.bf16.mxu0 0
    %2338 = vmatpush1.bf16.msra.mxu0 0
    %2339 = vmatprep.subr.bf16.mxu0 0
    %2340 = vmatpush1.bf16.msra.mxu0 0
    %2341 = vmatprep.subr.bf16.mxu0 0
    %2342 = vmatpush1.bf16.msra.mxu0 0
    %2343 = vmatprep.subr.bf16.mxu0 0
    %2344 = vmatpush1.bf16.msra.mxu0 0
    %2345 = vmatprep.subr.bf16.mxu0 0
    %2346 = vmatpush1.bf16.msra.mxu0 0
    %2347 = vmatprep.subr.bf16.mxu0 0
    %2348 = vmatpush1.bf16.msra.mxu0 0
    %2349 = vmatprep.subr.bf16.mxu0 0
    %2350 = vmatpush1.bf16.msra.mxu0 0
    %2351 = vmatprep.subr.bf16.mxu0 0
    %2352 = vmatpush1.bf16.msra.mxu0 0
    %2353 = vmatprep.mubr.bf16.mxu0 0
    %2354 = vmatmul.mubr.bf16.gmra.mrb[0].mxu0 %v2319
    %v2355 = vpop.f32.mrb[0].mxu0
    %v2356 = vadd.f32 %v2286, %v2355
    %v2357 = vpop.f32.mrb[0].mxu0
    %v2358 = vpop.f32.mrb[0].mxu0
    %v2359 = vadd.f32 %v2286, %v2358
    %v2360 = vpop.f32.mrb[0].mxu0
    %2361 = vdwg.mxu0
    %v2362 = vld [vmem:[%s9] sm:$0xf]
    %v2363 = vld [vmem:[%s9 + $0x4] sm:$0xf]
    %v2364 = vld [vmem:[%s9 + $0x8] sm:$0xf]
    %v2365 = vld [vmem:[%s9 + $0xc] sm:$0xf]
    %v2366 = vld [vmem:[%s10] sm:$0x1]
    %v2368 = vlaneseq
    %v2369 = vshrl.u32 %v2368, 7
    %v2370 = vsub.s32 0, %v2369
    %v2371 = vrot.slane %v2366, %v2370
    %v2377 = vunpack.c.l.b16 %v2362
    %v2378 = vunpack.c.l.b16 %v2363
    %v2379 = vunpack.c.l.b16 %v2364
    %v2380 = vunpack.c.l.b16 %v2365
    %v2381 = vpack.c.b16 %v2378, %v2377
    %v2382 = vpack.c.b16 %v2380, %v2379
    %v2385 = vsel %vm295, 0, 0
    %2387 = vmatprep.subr.bf16.mxu0 0
    %2388 = vmatpush1.bf16.msra.mxu0 %v2381
    %2389 = vmatprep.subr.bf16.mxu0 0
    %2390 = vmatpush1.bf16.msra.mxu0 %v2382
    %2391 = vmatprep.subr.bf16.mxu0 0
    %2392 = vmatpush1.bf16.msra.mxu0 0
    %2393 = vmatprep.subr.bf16.mxu0 0
    %2394 = vmatpush1.bf16.msra.mxu0 0
    %2395 = vmatprep.subr.bf16.mxu0 0
    %2396 = vmatpush1.bf16.msra.mxu0 0
    %2397 = vmatprep.subr.bf16.mxu0 0
    %2398 = vmatpush1.bf16.msra.mxu0 0
    %2399 = vmatprep.subr.bf16.mxu0 0
    %2400 = vmatpush1.bf16.msra.mxu0 0
    %2401 = vmatprep.subr.bf16.mxu0 0
    %2402 = vmatpush1.bf16.msra.mxu0 0
    %2403 = vmatprep.subr.bf16.mxu0 0
    %2404 = vmatpush1.bf16.msra.mxu0 0
    %2405 = vmatprep.subr.bf16.mxu0 0
    %2406 = vmatpush1.bf16.msra.mxu0 0
    %2407 = vmatprep.subr.bf16.mxu0 0
    %2408 = vmatpush1.bf16.msra.mxu0 0
    %2409 = vmatprep.subr.bf16.mxu0 0
    %2410 = vmatpush1.bf16.msra.mxu0 0
    %2411 = vmatprep.subr.bf16.mxu0 0
    %2412 = vmatpush1.bf16.msra.mxu0 0
    %2413 = vmatprep.subr.bf16.mxu0 0
    %2414 = vmatpush1.bf16.msra.mxu0 0
    %2415 = vmatprep.subr.bf16.mxu0 0
    %2416 = vmatpush1.bf16.msra.mxu0 0
    %2417 = vmatprep.subr.bf16.mxu0 0
    %2418 = vmatpush1.bf16.msra.mxu0 0
    %2419 = vmatprep.mubr.bf16.mxu0 0
    %2420 = vmatmul.mubr.bf16.gmra.mrb[0].mxu0 %v2385
    %v2421 = vpop.f32.mrb[0].mxu0
    %v2422 = vadd.f32 %v2371, %v2421
    %v2423 = vpop.f32.mrb[0].mxu0
    %v2424 = vpop.f32.mrb[0].mxu0
    %v2425 = vpop.f32.mrb[0].mxu0
    %2426 = vdwg.mxu0
    %v2428 = vrot.slane %v2422, 1
    %v2431 = vadd.f32 %v2356, %v2422
    %v2432 = vadd.f32 %v2359, %v2428
    %v2433 = vxor.u32 %v2431, 2147483648
    %v2434 = vxor.u32 %v2432, 2147483648
    %v2435 = vmul.f32 %v2433, 1.442695
    %v2436 = vpow.pop %v2435
    %v2437 = vmul.f32 %v2434, 1.442695
    %v2438 = vpow.pop %v2437
    %v2439 = vadd.f32 %v2436, 1.0
    %v2440 = vadd.f32 %v2438, 1.0
    %v2441 = vrcp.pop %v2439
    %v2442 = vmul.f32 1.0, %v2441
    %v2443 = vrcp.pop %v2440
    %v2444 = vmul.f32 1.0, %v2443
    %2445 = vrot.lane.b32.xlu0 %v2422, 64
    %v2446 = vpop.permute.xlu0 %2445
    %2447 = vrot.lane.b32.xlu0 %v2428, 64
    %v2448 = vpop.permute.xlu0 %2447
    %v2451 = vmul.f32 %v2442, %v2446
    %v2452 = vmul.f32 %v2444, %v2448
    %2455 = vrot.lane.b32.xlu0 %v2451, 64
    %v2456 = vpop.permute.xlu0 %2455
    %2457 = vrot.lane.b32.xlu0 %v2452, 64
    %v2458 = vpop.permute.xlu0 %2457
    %v2461 = vadd.f32 %v2356, %v2456
    %v2462 = vadd.f32 %v2359, %v2458
    %v2463 = vtanh.pop %v2461
    %v2464 = vtanh.pop %v2462
    %v2465 = vsub.f32 1.0, %v2442
    %v2466 = vsub.f32 1.0, %v2444
    %2469 = vrot.lane.b32.xlu0 %v2463, 96
    %v2470 = vpop.permute.xlu0 %2469
    %2471 = vrot.lane.b32.xlu0 %v2464, 96
    %v2472 = vpop.permute.xlu0 %2471
    %v2475 = vmul.f32 %v2465, %v2470
    %v2476 = vmul.f32 %v2466, %v2472
    %v2477 = vmul.f32 %v2442, 0.0
    %v2478 = vmul.f32 %v2444, 0.0
    %v2479 = vadd.f32 %v2475, %v2477
    %v2480 = vadd.f32 %v2476, %v2478
    %v2481 = vpack.c.bf16 %v2479, %v2479
    %v2482 = vpack.c.bf16 %v2480, %v2480
    %v2485 = vunpack.c.l.b16 %v2481
    %v2486 = vunpack.c.l.b16 %v2482
    %v2487 = vrot.slane %v2486, 7
    %v2488 = vsel %vm560, %v2487, %v2485
    %v2489 = vpack.c.b16 %v2488, %v2488
    %2490 = vrot.lane.b32.xlu0 %v2489, 96
    %v2491 = vpop.permute.xlu0 %2490
    %v2493 = vsel %vm295, %v2491, 0
    %2495 = vmatprep.subr.bf16.mxu0 0
    %2496 = vmatpush1.bf16.msra.mxu0 %v2381
    %2497 = vmatprep.subr.bf16.mxu0 0
    %2498 = vmatpush1.bf16.msra.mxu0 %v2382
    %2499 = vmatprep.subr.bf16.mxu0 0
    %2500 = vmatpush1.bf16.msra.mxu0 0
    %2501 = vmatprep.subr.bf16.mxu0 0
    %2502 = vmatpush1.bf16.msra.mxu0 0
    %2503 = vmatprep.subr.bf16.mxu0 0
    %2504 = vmatpush1.bf16.msra.mxu0 0
    %2505 = vmatprep.subr.bf16.mxu0 0
    %2506 = vmatpush1.bf16.msra.mxu0 0
    %2507 = vmatprep.subr.bf16.mxu0 0
    %2508 = vmatpush1.bf16.msra.mxu0 0
    %2509 = vmatprep.subr.bf16.mxu0 0
    %2510 = vmatpush1.bf16.msra.mxu0 0
    %2511 = vmatprep.subr.bf16.mxu0 0
    %2512 = vmatpush1.bf16.msra.mxu0 0
    %2513 = vmatprep.subr.bf16.mxu0 0
    %2514 = vmatpush1.bf16.msra.mxu0 0
    %2515 = vmatprep.subr.bf16.mxu0 0
    %2516 = vmatpush1.bf16.msra.mxu0 0
    %2517 = vmatprep.subr.bf16.mxu0 0
    %2518 = vmatpush1.bf16.msra.mxu0 0
    %2519 = vmatprep.subr.bf16.mxu0 0
    %2520 = vmatpush1.bf16.msra.mxu0 0
    %2521 = vmatprep.subr.bf16.mxu0 0
    %2522 = vmatpush1.bf16.msra.mxu0 0
    %2523 = vmatprep.subr.bf16.mxu0 0
    %2524 = vmatpush1.bf16.msra.mxu0 0
    %2525 = vmatprep.subr.bf16.mxu0 0
    %2526 = vmatpush1.bf16.msra.mxu0 0
    %2527 = vmatprep.mubr.bf16.mxu0 0
    %2528 = vmatmul.mubr.bf16.gmra.mrb[0].mxu0 %v2493
    %v2529 = vpop.f32.mrb[0].mxu0
    %v2530 = vadd.f32 %v2371, %v2529
    %v2531 = vpop.f32.mrb[0].mxu0
    %v2532 = vpop.f32.mrb[0].mxu0
    %v2533 = vpop.f32.mrb[0].mxu0
    %2534 = vdwg.mxu0
    %v2536 = vrot.slane %v2530, 7
    %v2539 = vadd.f32 %v2356, %v2536
    %v2540 = vadd.f32 %v2359, %v2530
    %v2541 = vxor.u32 %v2539, 2147483648
    %v2542 = vxor.u32 %v2540, 2147483648
    %v2543 = vmul.f32 %v2541, 1.442695
    %v2544 = vpow.pop %v2543
    %v2545 = vmul.f32 %v2542, 1.442695
    %v2546 = vpow.pop %v2545
    %v2547 = vadd.f32 %v2544, 1.0
    %v2548 = vadd.f32 %v2546, 1.0
    %v2549 = vrcp.pop %v2547
    %v2550 = vmul.f32 1.0, %v2549
    %v2551 = vrcp.pop %v2548
    %v2552 = vmul.f32 1.0, %v2551
    %2553 = vrot.lane.b32.xlu0 %v2536, 64
    %v2554 = vpop.permute.xlu0 %2553
    %2555 = vrot.lane.b32.xlu0 %v2530, 64
    %v2556 = vpop.permute.xlu0 %2555
    %v2559 = vmul.f32 %v2550, %v2554
    %v2560 = vmul.f32 %v2552, %v2556
    %2563 = vrot.lane.b32.xlu0 %v2559, 64
    %v2564 = vpop.permute.xlu0 %2563
    %2565 = vrot.lane.b32.xlu0 %v2560, 64
    %v2566 = vpop.permute.xlu0 %2565
    %v2569 = vadd.f32 %v2356, %v2564
    %v2570 = vadd.f32 %v2359, %v2566
    %v2571 = vtanh.pop %v2569
    %v2572 = vtanh.pop %v2570
    %v2573 = vsub.f32 1.0, %v2550
    %v2574 = vsub.f32 1.0, %v2552
    %2577 = vrot.lane.b32.xlu0 %v2571, 96
    %v2578 = vpop.permute.xlu0 %2577
    %2579 = vrot.lane.b32.xlu0 %v2572, 96
    %v2580 = vpop.permute.xlu0 %2579
    %v2583 = vmul.f32 %v2573, %v2578
    %v2584 = vmul.f32 %v2574, %v2580
    %v2587 = vrot.slane %v2479, 7
    %v2588 = vrot.slane %v2480, 7
    %v2591 = vmul.f32 %v2550, %v2587
    %v2592 = vmul.f32 %v2552, %v2588
    %v2593 = vadd.f32 %v2583, %v2591
    %v2594 = vadd.f32 %v2584, %v2592
    %v2595 = vpack.c.bf16 %v2593, %v2593
    %v2596 = vpack.c.bf16 %v2594, %v2594
    %v2599 = vunpack.c.l.b16 %v2595
    %v2600 = vunpack.c.l.b16 %v2596
    %v2601 = vrot.slane %v2599, 1
    %v2602 = vsel %vm560, %v2600, %v2601
    %v2603 = vpack.c.b16 %v2602, %v2602
    %2604 = vrot.lane.b32.xlu0 %v2603, 96
    %v2605 = vpop.permute.xlu0 %2604
    %v2607 = vsel %vm295, %v2605, 0
    %2609 = vmatprep.subr.bf16.mxu0 0
    %2610 = vmatpush1.bf16.msra.mxu0 %v2381
    %2611 = vmatprep.subr.bf16.mxu0 0
    %2612 = vmatpush1.bf16.msra.mxu0 %v2382
    %2613 = vmatprep.subr.bf16.mxu0 0
    %2614 = vmatpush1.bf16.msra.mxu0 0
    %2615 = vmatprep.subr.bf16.mxu0 0
    %2616 = vmatpush1.bf16.msra.mxu0 0
    %2617 = vmatprep.subr.bf16.mxu0 0
    %2618 = vmatpush1.bf16.msra.mxu0 0
    %2619 = vmatprep.subr.bf16.mxu0 0
    %2620 = vmatpush1.bf16.msra.mxu0 0
    %2621 = vmatprep.subr.bf16.mxu0 0
    %2622 = vmatpush1.bf16.msra.mxu0 0
    %2623 = vmatprep.subr.bf16.mxu0 0
    %2624 = vmatpush1.bf16.msra.mxu0 0
    %2625 = vmatprep.subr.bf16.mxu0 0
    %2626 = vmatpush1.bf16.msra.mxu0 0
    %2627 = vmatprep.subr.bf16.mxu0 0
    %2628 = vmatpush1.bf16.msra.mxu0 0
    %2629 = vmatprep.subr.bf16.mxu0 0
    %2630 = vmatpush1.bf16.msra.mxu0 0
    %2631 = vmatprep.subr.bf16.mxu0 0
    %2632 = vmatpush1.bf16.msra.mxu0 0
    %2633 = vmatprep.subr.bf16.mxu0 0
    %2634 = vmatpush1.bf16.msra.mxu0 0
    %2635 = vmatprep.subr.bf16.mxu0 0
    %2636 = vmatpush1.bf16.msra.mxu0 0
    %2637 = vmatprep.subr.bf16.mxu0 0
    %2638 = vmatpush1.bf16.msra.mxu0 0
    %2639 = vmatprep.subr.bf16.mxu0 0
    %2640 = vmatpush1.bf16.msra.mxu0 0
    %2641 = vmatprep.mubr.bf16.mxu0 0
    %2642 = vmatmul.mubr.bf16.gmra.mrb[0].mxu0 %v2607
    %v2643 = vpop.f32.mrb[0].mxu0
    %v2644 = vadd.f32 %v2371, %v2643
    %v2645 = vpop.f32.mrb[0].mxu0
    %v2646 = vpop.f32.mrb[0].mxu0
    %v2647 = vpop.f32.mrb[0].mxu0
    %2648 = vdwg.mxu0
    %v2650 = vrot.slane %v2644, 6
    %v2651 = vrot.slane %v2644, 7
    %v2654 = vadd.f32 %v2356, %v2650
    %v2655 = vadd.f32 %v2359, %v2651
    %v2656 = vxor.u32 %v2654, 2147483648
    %v2657 = vxor.u32 %v2655, 2147483648
    %v2658 = vmul.f32 %v2656, 1.442695
    %v2659 = vpow.pop %v2658
    %v2660 = vmul.f32 %v2657, 1.442695
    %v2661 = vpow.pop %v2660
    %v2662 = vadd.f32 %v2659, 1.0
    %v2663 = vadd.f32 %v2661, 1.0
    %v2664 = vrcp.pop %v2662
    %v2665 = vmul.f32 1.0, %v2664
    %v2666 = vrcp.pop %v2663
    %v2667 = vmul.f32 1.0, %v2666
    %2668 = vrot.lane.b32.xlu0 %v2650, 64
    %v2669 = vpop.permute.xlu0 %2668
    %2670 = vrot.lane.b32.xlu0 %v2651, 64
    %v2671 = vpop.permute.xlu0 %2670
    %v2674 = vmul.f32 %v2665, %v2669
    %v2675 = vmul.f32 %v2667, %v2671
    %2678 = vrot.lane.b32.xlu0 %v2674, 64
    %v2679 = vpop.permute.xlu0 %2678
    %2680 = vrot.lane.b32.xlu0 %v2675, 64
    %v2681 = vpop.permute.xlu0 %2680
    %v2684 = vadd.f32 %v2356, %v2679
    %v2685 = vadd.f32 %v2359, %v2681
    %v2686 = vtanh.pop %v2684
    %v2687 = vtanh.pop %v2685
    %v2688 = vsub.f32 1.0, %v2665
    %v2689 = vsub.f32 1.0, %v2667
    %2692 = vrot.lane.b32.xlu0 %v2686, 96
    %v2693 = vpop.permute.xlu0 %2692
    %2694 = vrot.lane.b32.xlu0 %v2687, 96
    %v2695 = vpop.permute.xlu0 %2694
    %v2698 = vmul.f32 %v2688, %v2693
    %v2699 = vmul.f32 %v2689, %v2695
    %v2702 = vrot.slane %v2593, 7
    %v2703 = vrot.slane %v2594, 7
    %v2706 = vmul.f32 %v2665, %v2702
    %v2707 = vmul.f32 %v2667, %v2703
    %v2708 = vadd.f32 %v2698, %v2706
    %v2709 = vadd.f32 %v2699, %v2707
    %v2710 = vpack.c.bf16 %v2708, %v2708
    %v2711 = vpack.c.bf16 %v2709, %v2709
    %v2714 = vunpack.c.l.b16 %v2710
    %v2715 = vunpack.c.l.b16 %v2711
    %v2716 = vrot.slane %v2714, 2
    %v2717 = vrot.slane %v2715, 1
    %v2718 = vsel %vm560, %v2717, %v2716
    %v2719 = vpack.c.b16 %v2718, %v2718
    %2720 = vrot.lane.b32.xlu0 %v2719, 96
    %v2721 = vpop.permute.xlu0 %2720
    %v2723 = vsel %vm295, %v2721, 0
    %2725 = vmatprep.subr.bf16.mxu0 0
    %2726 = vmatpush1.bf16.msra.mxu0 %v2381
    %2727 = vmatprep.subr.bf16.mxu0 0
    %2728 = vmatpush1.bf16.msra.mxu0 %v2382
    %2729 = vmatprep.subr.bf16.mxu0 0
    %2730 = vmatpush1.bf16.msra.mxu0 0
    %2731 = vmatprep.subr.bf16.mxu0 0
    %2732 = vmatpush1.bf16.msra.mxu0 0
    %2733 = vmatprep.subr.bf16.mxu0 0
    %2734 = vmatpush1.bf16.msra.mxu0 0
    %2735 = vmatprep.subr.bf16.mxu0 0
    %2736 = vmatpush1.bf16.msra.mxu0 0
    %2737 = vmatprep.subr.bf16.mxu0 0
    %2738 = vmatpush1.bf16.msra.mxu0 0
    %2739 = vmatprep.subr.bf16.mxu0 0
    %2740 = vmatpush1.bf16.msra.mxu0 0
    %2741 = vmatprep.subr.bf16.mxu0 0
    %2742 = vmatpush1.bf16.msra.mxu0 0
    %2743 = vmatprep.subr.bf16.mxu0 0
    %2744 = vmatpush1.bf16.msra.mxu0 0
    %2745 = vmatprep.subr.bf16.mxu0 0
    %2746 = vmatpush1.bf16.msra.mxu0 0
    %2747 = vmatprep.subr.bf16.mxu0 0
    %2748 = vmatpush1.bf16.msra.mxu0 0
    %2749 = vmatprep.subr.bf16.mxu0 0
    %2750 = vmatpush1.bf16.msra.mxu0 0
    %2751 = vmatprep.subr.bf16.mxu0 0
    %2752 = vmatpush1.bf16.msra.mxu0 0
    %2753 = vmatprep.subr.bf16.mxu0 0
    %2754 = vmatpush1.bf16.msra.mxu0 0
    %2755 = vmatprep.subr.bf16.mxu0 0
    %2756 = vmatpush1.bf16.msra.mxu0 0
    %2757 = vmatprep.mubr.bf16.mxu0 0
    %2758 = vmatmul.mubr.bf16.gmra.mrb[0].mxu0 %v2723
    %v2759 = vpop.f32.mrb[0].mxu0
    %v2760 = vadd.f32 %v2371, %v2759
    %v2761 = vpop.f32.mrb[0].mxu0
    %v2762 = vpop.f32.mrb[0].mxu0
    %v2763 = vpop.f32.mrb[0].mxu0
    %2764 = vdwg.mxu0
    %v2766 = vrot.slane %v2760, 5
    %v2767 = vrot.slane %v2760, 6
    %v2770 = vadd.f32 %v2356, %v2766
    %v2771 = vadd.f32 %v2359, %v2767
    %v2772 = vxor.u32 %v2770, 2147483648
    %v2773 = vxor.u32 %v2771, 2147483648
    %v2774 = vmul.f32 %v2772, 1.442695
    %v2775 = vpow.pop %v2774
    %v2776 = vmul.f32 %v2773, 1.442695
    %v2777 = vpow.pop %v2776
    %v2778 = vadd.f32 %v2775, 1.0
    %v2779 = vadd.f32 %v2777, 1.0
    %v2780 = vrcp.pop %v2778
    %v2781 = vmul.f32 1.0, %v2780
    %v2782 = vrcp.pop %v2779
    %v2783 = vmul.f32 1.0, %v2782
    %2784 = vrot.lane.b32.xlu0 %v2766, 64
    %v2785 = vpop.permute.xlu0 %2784
    %2786 = vrot.lane.b32.xlu0 %v2767, 64
    %v2787 = vpop.permute.xlu0 %2786
    %v2790 = vmul.f32 %v2781, %v2785
    %v2791 = vmul.f32 %v2783, %v2787
    %2794 = vrot.lane.b32.xlu0 %v2790, 64
    %v2795 = vpop.permute.xlu0 %2794
    %2796 = vrot.lane.b32.xlu0 %v2791, 64
    %v2797 = vpop.permute.xlu0 %2796
    %v2800 = vadd.f32 %v2356, %v2795
    %v2801 = vadd.f32 %v2359, %v2797
    %v2802 = vtanh.pop %v2800
    %v2803 = vtanh.pop %v2801
    %v2804 = vsub.f32 1.0, %v2781
    %v2805 = vsub.f32 1.0, %v2783
    %2808 = vrot.lane.b32.xlu0 %v2802, 96
    %v2809 = vpop.permute.xlu0 %2808
    %2810 = vrot.lane.b32.xlu0 %v2803, 96
    %v2811 = vpop.permute.xlu0 %2810
    %v2814 = vmul.f32 %v2804, %v2809
    %v2815 = vmul.f32 %v2805, %v2811
    %v2818 = vrot.slane %v2708, 7
    %v2819 = vrot.slane %v2709, 7
    %v2822 = vmul.f32 %v2781, %v2818
    %v2823 = vmul.f32 %v2783, %v2819
    %v2824 = vadd.f32 %v2814, %v2822
    %v2825 = vadd.f32 %v2815, %v2823
    %v2826 = vpack.c.bf16 %v2824, %v2824
    %v2827 = vpack.c.bf16 %v2825, %v2825
    %v2830 = vunpack.c.l.b16 %v2826
    %v2831 = vunpack.c.l.b16 %v2827
    %v2832 = vrot.slane %v2830, 3
    %v2833 = vrot.slane %v2831, 2
    %v2834 = vsel %vm560, %v2833, %v2832
    %v2835 = vpack.c.b16 %v2834, %v2834
    %2836 = vrot.lane.b32.xlu0 %v2835, 96
    %v2837 = vpop.permute.xlu0 %2836
    %v2839 = vsel %vm295, %v2837, 0
    %2841 = vmatprep.subr.bf16.mxu0 0
    %2842 = vmatpush1.bf16.msra.mxu0 %v2381
    %2843 = vmatprep.subr.bf16.mxu0 0
    %2844 = vmatpush1.bf16.msra.mxu0 %v2382
    %2845 = vmatprep.subr.bf16.mxu0 0
    %2846 = vmatpush1.bf16.msra.mxu0 0
    %2847 = vmatprep.subr.bf16.mxu0 0
    %2848 = vmatpush1.bf16.msra.mxu0 0
    %2849 = vmatprep.subr.bf16.mxu0 0
    %2850 = vmatpush1.bf16.msra.mxu0 0
    %2851 = vmatprep.subr.bf16.mxu0 0
    %2852 = vmatpush1.bf16.msra.mxu0 0
    %2853 = vmatprep.subr.bf16.mxu0 0
    %2854 = vmatpush1.bf16.msra.mxu0 0
    %2855 = vmatprep.subr.bf16.mxu0 0
    %2856 = vmatpush1.bf16.msra.mxu0 0
    %2857 = vmatprep.subr.bf16.mxu0 0
    %2858 = vmatpush1.bf16.msra.mxu0 0
    %2859 = vmatprep.subr.bf16.mxu0 0
    %2860 = vmatpush1.bf16.msra.mxu0 0
    %2861 = vmatprep.subr.bf16.mxu0 0
    %2862 = vmatpush1.bf16.msra.mxu0 0
    %2863 = vmatprep.subr.bf16.mxu0 0
    %2864 = vmatpush1.bf16.msra.mxu0 0
    %2865 = vmatprep.subr.bf16.mxu0 0
    %2866 = vmatpush1.bf16.msra.mxu0 0
    %2867 = vmatprep.subr.bf16.mxu0 0
    %2868 = vmatpush1.bf16.msra.mxu0 0
    %2869 = vmatprep.subr.bf16.mxu0 0
    %2870 = vmatpush1.bf16.msra.mxu0 0
    %2871 = vmatprep.subr.bf16.mxu0 0
    %2872 = vmatpush1.bf16.msra.mxu0 0
    %2873 = vmatprep.mubr.bf16.mxu0 0
    %2874 = vmatmul.mubr.bf16.gmra.mrb[0].mxu0 %v2839
    %v2875 = vpop.f32.mrb[0].mxu0
    %v2876 = vadd.f32 %v2371, %v2875
    %v2877 = vpop.f32.mrb[0].mxu0
    %v2878 = vpop.f32.mrb[0].mxu0
    %v2879 = vpop.f32.mrb[0].mxu0
    %2880 = vdwg.mxu0
    %v2882 = vrot.slane %v2876, 4
    %v2883 = vrot.slane %v2876, 5
    %v2886 = vadd.f32 %v2356, %v2882
    %v2887 = vadd.f32 %v2359, %v2883
    %v2888 = vxor.u32 %v2886, 2147483648
    %v2889 = vxor.u32 %v2887, 2147483648
    %v2890 = vmul.f32 %v2888, 1.442695
    %v2891 = vpow.pop %v2890
    %v2892 = vmul.f32 %v2889, 1.442695
    %v2893 = vpow.pop %v2892
    %v2894 = vadd.f32 %v2891, 1.0
    %v2895 = vadd.f32 %v2893, 1.0
    %v2896 = vrcp.pop %v2894
    %v2897 = vmul.f32 1.0, %v2896
    %v2898 = vrcp.pop %v2895
    %v2899 = vmul.f32 1.0, %v2898
    %2900 = vrot.lane.b32.xlu0 %v2882, 64
    %v2901 = vpop.permute.xlu0 %2900
    %2902 = vrot.lane.b32.xlu0 %v2883, 64
    %v2903 = vpop.permute.xlu0 %2902
    %v2906 = vmul.f32 %v2897, %v2901
    %v2907 = vmul.f32 %v2899, %v2903
    %2910 = vrot.lane.b32.xlu0 %v2906, 64
    %v2911 = vpop.permute.xlu0 %2910
    %2912 = vrot.lane.b32.xlu0 %v2907, 64
    %v2913 = vpop.permute.xlu0 %2912
    %v2916 = vadd.f32 %v2356, %v2911
    %v2917 = vadd.f32 %v2359, %v2913
    %v2918 = vtanh.pop %v2916
    %v2919 = vtanh.pop %v2917
    %v2920 = vsub.f32 1.0, %v2897
    %v2921 = vsub.f32 1.0, %v2899
    %2924 = vrot.lane.b32.xlu0 %v2918, 96
    %v2925 = vpop.permute.xlu0 %2924
    %2926 = vrot.lane.b32.xlu0 %v2919, 96
    %v2927 = vpop.permute.xlu0 %2926
    %v2930 = vmul.f32 %v2920, %v2925
    %v2931 = vmul.f32 %v2921, %v2927
    %v2934 = vrot.slane %v2824, 7
    %v2935 = vrot.slane %v2825, 7
    %v2938 = vmul.f32 %v2897, %v2934
    %v2939 = vmul.f32 %v2899, %v2935
    %v2940 = vadd.f32 %v2930, %v2938
    %v2941 = vadd.f32 %v2931, %v2939
    %v2942 = vpack.c.bf16 %v2940, %v2940
    %v2943 = vpack.c.bf16 %v2941, %v2941
    %v2946 = vunpack.c.l.b16 %v2942
    %v2947 = vunpack.c.l.b16 %v2943
    %v2948 = vrot.slane %v2946, 4
    %v2949 = vrot.slane %v2947, 3
    %v2950 = vsel %vm560, %v2949, %v2948
    %v2951 = vpack.c.b16 %v2950, %v2950
    %2952 = vrot.lane.b32.xlu0 %v2951, 96
    %v2953 = vpop.permute.xlu0 %2952
    %v2955 = vsel %vm295, %v2953, 0
    %2957 = vmatprep.subr.bf16.mxu0 0
    %2958 = vmatpush1.bf16.msra.mxu0 %v2381
    %2959 = vmatprep.subr.bf16.mxu0 0
    %2960 = vmatpush1.bf16.msra.mxu0 %v2382
    %2961 = vmatprep.subr.bf16.mxu0 0
    %2962 = vmatpush1.bf16.msra.mxu0 0
    %2963 = vmatprep.subr.bf16.mxu0 0
    %2964 = vmatpush1.bf16.msra.mxu0 0
    %2965 = vmatprep.subr.bf16.mxu0 0
    %2966 = vmatpush1.bf16.msra.mxu0 0
    %2967 = vmatprep.subr.bf16.mxu0 0
    %2968 = vmatpush1.bf16.msra.mxu0 0
    %2969 = vmatprep.subr.bf16.mxu0 0
    %2970 = vmatpush1.bf16.msra.mxu0 0
    %2971 = vmatprep.subr.bf16.mxu0 0
    %2972 = vmatpush1.bf16.msra.mxu0 0
    %2973 = vmatprep.subr.bf16.mxu0 0
    %2974 = vmatpush1.bf16.msra.mxu0 0
    %2975 = vmatprep.subr.bf16.mxu0 0
    %2976 = vmatpush1.bf16.msra.mxu0 0
    %2977 = vmatprep.subr.bf16.mxu0 0
    %2978 = vmatpush1.bf16.msra.mxu0 0
    %2979 = vmatprep.subr.bf16.mxu0 0
    %2980 = vmatpush1.bf16.msra.mxu0 0
    %2981 = vmatprep.subr.bf16.mxu0 0
    %2982 = vmatpush1.bf16.msra.mxu0 0
    %2983 = vmatprep.subr.bf16.mxu0 0
    %2984 = vmatpush1.bf16.msra.mxu0 0
    %2985 = vmatprep.subr.bf16.mxu0 0
    %2986 = vmatpush1.bf16.msra.mxu0 0
    %2987 = vmatprep.subr.bf16.mxu0 0
    %2988 = vmatpush1.bf16.msra.mxu0 0
    %2989 = vmatprep.mubr.bf16.mxu0 0
    %2990 = vmatmul.mubr.bf16.gmra.mrb[0].mxu0 %v2955
    %v2991 = vpop.f32.mrb[0].mxu0
    %v2992 = vadd.f32 %v2371, %v2991
    %v2993 = vpop.f32.mrb[0].mxu0
    %v2994 = vpop.f32.mrb[0].mxu0
    %v2995 = vpop.f32.mrb[0].mxu0
    %2996 = vdwg.mxu0
    %v2998 = vrot.slane %v2992, 3
    %v2999 = vrot.slane %v2992, 4
    %v3002 = vadd.f32 %v2356, %v2998
    %v3003 = vadd.f32 %v2359, %v2999
    %v3004 = vxor.u32 %v3002, 2147483648
    %v3005 = vxor.u32 %v3003, 2147483648
    %v3006 = vmul.f32 %v3004, 1.442695
    %v3007 = vpow.pop %v3006
    %v3008 = vmul.f32 %v3005, 1.442695
    %v3009 = vpow.pop %v3008
    %v3010 = vadd.f32 %v3007, 1.0
    %v3011 = vadd.f32 %v3009, 1.0
    %v3012 = vrcp.pop %v3010
    %v3013 = vmul.f32 1.0, %v3012
    %v3014 = vrcp.pop %v3011
    %v3015 = vmul.f32 1.0, %v3014
    %3016 = vrot.lane.b32.xlu0 %v2998, 64
    %v3017 = vpop.permute.xlu0 %3016
    %3018 = vrot.lane.b32.xlu0 %v2999, 64
    %v3019 = vpop.permute.xlu0 %3018
    %v3022 = vmul.f32 %v3013, %v3017
    %v3023 = vmul.f32 %v3015, %v3019
    %3026 = vrot.lane.b32.xlu0 %v3022, 64
    %v3027 = vpop.permute.xlu0 %3026
    %3028 = vrot.lane.b32.xlu0 %v3023, 64
    %v3029 = vpop.permute.xlu0 %3028
    %v3032 = vadd.f32 %v2356, %v3027
    %v3033 = vadd.f32 %v2359, %v3029
    %v3034 = vtanh.pop %v3032
    %v3035 = vtanh.pop %v3033
    %v3036 = vsub.f32 1.0, %v3013
    %v3037 = vsub.f32 1.0, %v3015
    %3040 = vrot.lane.b32.xlu0 %v3034, 96
    %v3041 = vpop.permute.xlu0 %3040
    %3042 = vrot.lane.b32.xlu0 %v3035, 96
    %v3043 = vpop.permute.xlu0 %3042
    %v3046 = vmul.f32 %v3036, %v3041
    %v3047 = vmul.f32 %v3037, %v3043
    %v3050 = vrot.slane %v2940, 7
    %v3051 = vrot.slane %v2941, 7
    %v3054 = vmul.f32 %v3013, %v3050
    %v3055 = vmul.f32 %v3015, %v3051
    %v3056 = vadd.f32 %v3046, %v3054
    %v3057 = vadd.f32 %v3047, %v3055
    %v3058 = vpack.c.bf16 %v3056, %v3056
    %v3059 = vpack.c.bf16 %v3057, %v3057
    %v3062 = vunpack.c.l.b16 %v3058
    %v3063 = vunpack.c.l.b16 %v3059
    %v3064 = vrot.slane %v3062, 5
    %v3065 = vrot.slane %v3063, 4
    %v3066 = vsel %vm560, %v3065, %v3064
    %v3067 = vpack.c.b16 %v3066, %v3066
    %3068 = vrot.lane.b32.xlu0 %v3067, 96
    %v3069 = vpop.permute.xlu0 %3068
    %v3071 = vsel %vm295, %v3069, 0
    %3073 = vmatprep.subr.bf16.mxu0 0
    %3074 = vmatpush1.bf16.msra.mxu0 %v2381
    %3075 = vmatprep.subr.bf16.mxu0 0
    %3076 = vmatpush1.bf16.msra.mxu0 %v2382
    %3077 = vmatprep.subr.bf16.mxu0 0
    %3078 = vmatpush1.bf16.msra.mxu0 0
    %3079 = vmatprep.subr.bf16.mxu0 0
    %3080 = vmatpush1.bf16.msra.mxu0 0
    %3081 = vmatprep.subr.bf16.mxu0 0
    %3082 = vmatpush1.bf16.msra.mxu0 0
    %3083 = vmatprep.subr.bf16.mxu0 0
    %3084 = vmatpush1.bf16.msra.mxu0 0
    %3085 = vmatprep.subr.bf16.mxu0 0
    %3086 = vmatpush1.bf16.msra.mxu0 0
    %3087 = vmatprep.subr.bf16.mxu0 0
    %3088 = vmatpush1.bf16.msra.mxu0 0
    %3089 = vmatprep.subr.bf16.mxu0 0
    %3090 = vmatpush1.bf16.msra.mxu0 0
    %3091 = vmatprep.subr.bf16.mxu0 0
    %3092 = vmatpush1.bf16.msra.mxu0 0
    %3093 = vmatprep.subr.bf16.mxu0 0
    %3094 = vmatpush1.bf16.msra.mxu0 0
    %3095 = vmatprep.subr.bf16.mxu0 0
    %3096 = vmatpush1.bf16.msra.mxu0 0
    %3097 = vmatprep.subr.bf16.mxu0 0
    %3098 = vmatpush1.bf16.msra.mxu0 0
    %3099 = vmatprep.subr.bf16.mxu0 0
    %3100 = vmatpush1.bf16.msra.mxu0 0
    %3101 = vmatprep.subr.bf16.mxu0 0
    %3102 = vmatpush1.bf16.msra.mxu0 0
    %3103 = vmatprep.subr.bf16.mxu0 0
    %3104 = vmatpush1.bf16.msra.mxu0 0
    %3105 = vmatprep.mubr.bf16.mxu0 0
    %3106 = vmatmul.mubr.bf16.gmra.mrb[0].mxu0 %v3071
    %v3107 = vpop.f32.mrb[0].mxu0
    %v3108 = vadd.f32 %v2371, %v3107
    %v3109 = vpop.f32.mrb[0].mxu0
    %v3110 = vpop.f32.mrb[0].mxu0
    %v3111 = vpop.f32.mrb[0].mxu0
    %3112 = vdwg.mxu0
    %v3114 = vrot.slane %v3108, 2
    %v3115 = vrot.slane %v3108, 3
    %v3118 = vadd.f32 %v2356, %v3114
    %v3119 = vadd.f32 %v2359, %v3115
    %v3120 = vxor.u32 %v3118, 2147483648
    %v3121 = vxor.u32 %v3119, 2147483648
    %v3122 = vmul.f32 %v3120, 1.442695
    %v3123 = vpow.pop %v3122
    %v3124 = vmul.f32 %v3121, 1.442695
    %v3125 = vpow.pop %v3124
    %v3126 = vadd.f32 %v3123, 1.0
    %v3127 = vadd.f32 %v3125, 1.0
    %v3128 = vrcp.pop %v3126
    %v3129 = vmul.f32 1.0, %v3128
    %v3130 = vrcp.pop %v3127
    %v3131 = vmul.f32 1.0, %v3130
    %3132 = vrot.lane.b32.xlu0 %v3114, 64
    %v3133 = vpop.permute.xlu0 %3132
    %3134 = vrot.lane.b32.xlu0 %v3115, 64
    %v3135 = vpop.permute.xlu0 %3134
    %v3138 = vmul.f32 %v3129, %v3133
    %v3139 = vmul.f32 %v3131, %v3135
    %3142 = vrot.lane.b32.xlu0 %v3138, 64
    %v3143 = vpop.permute.xlu0 %3142
    %3144 = vrot.lane.b32.xlu0 %v3139, 64
    %v3145 = vpop.permute.xlu0 %3144
    %v3148 = vadd.f32 %v2356, %v3143
    %v3149 = vadd.f32 %v2359, %v3145
    %v3150 = vtanh.pop %v3148
    %v3151 = vtanh.pop %v3149
    %v3152 = vsub.f32 1.0, %v3129
    %v3153 = vsub.f32 1.0, %v3131
    %3156 = vrot.lane.b32.xlu0 %v3150, 96
    %v3157 = vpop.permute.xlu0 %3156
    %3158 = vrot.lane.b32.xlu0 %v3151, 96
    %v3159 = vpop.permute.xlu0 %3158
    %v3162 = vmul.f32 %v3152, %v3157
    %v3163 = vmul.f32 %v3153, %v3159
    %v3166 = vrot.slane %v3056, 7
    %v3167 = vrot.slane %v3057, 7
    %v3170 = vmul.f32 %v3129, %v3166
    %v3171 = vmul.f32 %v3131, %v3167
    %v3172 = vadd.f32 %v3162, %v3170
    %v3173 = vadd.f32 %v3163, %v3171
    %v3174 = vpack.c.bf16 %v3172, %v3172
    %v3175 = vpack.c.bf16 %v3173, %v3173
    %v3178 = vunpack.c.l.b16 %v3174
    %v3179 = vunpack.c.l.b16 %v3175
    %v3180 = vrot.slane %v3178, 6
    %v3181 = vrot.slane %v3179, 5
    %v3182 = vsel %vm560, %v3181, %v3180
    %v3183 = vpack.c.b16 %v3182, %v3182
    %3184 = vrot.lane.b32.xlu0 %v3183, 96
    %v3185 = vpop.permute.xlu0 %3184
    %v3187 = vsel %vm295, %v3185, 0
    %3189 = vmatprep.subr.bf16.mxu0 0
    %3190 = vmatpush1.bf16.msra.mxu0 %v2381
    %3191 = vmatprep.subr.bf16.mxu0 0
    %3192 = vmatpush1.bf16.msra.mxu0 %v2382
    %3193 = vmatprep.subr.bf16.mxu0 0
    %3194 = vmatpush1.bf16.msra.mxu0 0
    %3195 = vmatprep.subr.bf16.mxu0 0
    %3196 = vmatpush1.bf16.msra.mxu0 0
    %3197 = vmatprep.subr.bf16.mxu0 0
    %3198 = vmatpush1.bf16.msra.mxu0 0
    %3199 = vmatprep.subr.bf16.mxu0 0
    %3200 = vmatpush1.bf16.msra.mxu0 0
    %3201 = vmatprep.subr.bf16.mxu0 0
    %3202 = vmatpush1.bf16.msra.mxu0 0
    %3203 = vmatprep.subr.bf16.mxu0 0
    %3204 = vmatpush1.bf16.msra.mxu0 0
    %3205 = vmatprep.subr.bf16.mxu0 0
    %3206 = vmatpush1.bf16.msra.mxu0 0
    %3207 = vmatprep.subr.bf16.mxu0 0
    %3208 = vmatpush1.bf16.msra.mxu0 0
    %3209 = vmatprep.subr.bf16.mxu0 0
    %3210 = vmatpush1.bf16.msra.mxu0 0
    %3211 = vmatprep.subr.bf16.mxu0 0
    %3212 = vmatpush1.bf16.msra.mxu0 0
    %3213 = vmatprep.subr.bf16.mxu0 0
    %3214 = vmatpush1.bf16.msra.mxu0 0
    %3215 = vmatprep.subr.bf16.mxu0 0
    %3216 = vmatpush1.bf16.msra.mxu0 0
    %3217 = vmatprep.subr.bf16.mxu0 0
    %3218 = vmatpush1.bf16.msra.mxu0 0
    %3219 = vmatprep.subr.bf16.mxu0 0
    %3220 = vmatpush1.bf16.msra.mxu0 0
    %3221 = vmatprep.mubr.bf16.mxu0 0
    %3222 = vmatmul.mubr.bf16.gmra.mrb[0].mxu0 %v3187
    %v3223 = vpop.f32.mrb[0].mxu0
    %v3224 = vadd.f32 %v2371, %v3223
    %v3225 = vpop.f32.mrb[0].mxu0
    %v3226 = vpop.f32.mrb[0].mxu0
    %v3227 = vpop.f32.mrb[0].mxu0
    %3228 = vdwg.mxu0
    %v3230 = vrot.slane %v3224, 1
    %v3231 = vrot.slane %v3224, 2
    %v3234 = vadd.f32 %v2356, %v3230
    %v3235 = vadd.f32 %v2359, %v3231
    %v3236 = vxor.u32 %v3234, 2147483648
    %v3237 = vxor.u32 %v3235, 2147483648
    %v3238 = vmul.f32 %v3236, 1.442695
    %v3239 = vpow.pop %v3238
    %v3240 = vmul.f32 %v3237, 1.442695
    %v3241 = vpow.pop %v3240
    %v3242 = vadd.f32 %v3239, 1.0
    %v3243 = vadd.f32 %v3241, 1.0
    %v3244 = vrcp.pop %v3242
    %v3245 = vmul.f32 1.0, %v3244
    %v3246 = vrcp.pop %v3243
    %v3247 = vmul.f32 1.0, %v3246
    %3248 = vrot.lane.b32.xlu0 %v3230, 64
    %v3249 = vpop.permute.xlu0 %3248
    %3250 = vrot.lane.b32.xlu0 %v3231, 64
    %v3251 = vpop.permute.xlu0 %3250
    %v3254 = vmul.f32 %v3245, %v3249
    %v3255 = vmul.f32 %v3247, %v3251
    %3258 = vrot.lane.b32.xlu0 %v3254, 64
    %v3259 = vpop.permute.xlu0 %3258
    %3260 = vrot.lane.b32.xlu0 %v3255, 64
    %v3261 = vpop.permute.xlu0 %3260
    %v3264 = vadd.f32 %v2356, %v3259
    %v3265 = vadd.f32 %v2359, %v3261
    %v3266 = vtanh.pop %v3264
    %v3267 = vtanh.pop %v3265
    %v3268 = vsub.f32 1.0, %v3245
    %v3269 = vsub.f32 1.0, %v3247
    %3272 = vrot.lane.b32.xlu0 %v3266, 96
    %v3273 = vpop.permute.xlu0 %3272
    %3274 = vrot.lane.b32.xlu0 %v3267, 96
    %v3275 = vpop.permute.xlu0 %3274
    %v3278 = vmul.f32 %v3268, %v3273
    %v3279 = vmul.f32 %v3269, %v3275
    %v3282 = vrot.slane %v3172, 7
    %v3283 = vrot.slane %v3173, 7
    %v3286 = vmul.f32 %v3245, %v3282
    %v3287 = vmul.f32 %v3247, %v3283
    %v3288 = vadd.f32 %v3278, %v3286
    %v3289 = vadd.f32 %v3279, %v3287
    %v3290 = vsel %vm2200, %v2479, %v2593
    %v3291 = vsel %vm2200, %v2480, %v2594
    %v3292 = vsel %vm2203, %v3290, %v2708
    %v3293 = vsel %vm2203, %v3291, %v2709
    %v3294 = vsel %vm2206, %v3292, %v2824
    %v3295 = vsel %vm2206, %v3293, %v2825
    %v3296 = vsel %vm2209, %v3294, %v2940
    %v3297 = vsel %vm2209, %v3295, %v2941
    %v3298 = vsel %vm2212, %v3296, %v3056
    %v3299 = vsel %vm2212, %v3297, %v3057
    %v3300 = vsel %vm2215, %v3298, %v3172
    %v3301 = vsel %vm2215, %v3299, %v3173
    %v3302 = vsel %vm2218, %v3300, %v3288
    %v3303 = vsel %vm2218, %v3301, %v3289
    %v3304 = vpack.c.bf16 %v3303, %v3302
    %v3305 = vld [vmem:[%s11] sm:$0xf]
    %v3306 = vld [vmem:[%s11 + $0x4] sm:$0xf]
    %v3307 = vld [vmem:[%s11 + $0x8] sm:$0xf]
    %v3308 = vld [vmem:[%s11 + $0xc] sm:$0xf]
    %v3309 = vld [vmem:[%s12] sm:$0x1]
    %v3311 = vlaneseq
    %v3312 = vshrl.u32 %v3311, 7
    %v3313 = vsub.s32 0, %v3312
    %v3314 = vrot.slane %v3309, %v3313
    %3317 = vrot.lane.b32.xlu0 %v3304, 96
    %v3318 = vpop.permute.xlu0 %3317
    %v3323 = vunpack.c.l.b16 %v3305
    %v3324 = vunpack.c.l.b16 %v3306
    %v3325 = vunpack.c.l.b16 %v3307
    %v3326 = vunpack.c.l.b16 %v3308
    %v3327 = vpack.c.b16 %v3324, %v3323
    %v3328 = vpack.c.b16 %v3326, %v3325
    %v3332 = vsel %vm295, %v3318, 0
    %3334 = vmatprep.subr.bf16.mxu0 0
    %3335 = vmatpush1.bf16.msra.mxu0 %v3327
    %3336 = vmatprep.subr.bf16.mxu0 0
    %3337 = vmatpush1.bf16.msra.mxu0 %v3328
    %3338 = vmatprep.subr.bf16.mxu0 0
    %3339 = vmatpush1.bf16.msra.mxu0 0
    %3340 = vmatprep.subr.bf16.mxu0 0
    %3341 = vmatpush1.bf16.msra.mxu0 0
    %3342 = vmatprep.subr.bf16.mxu0 0
    %3343 = vmatpush1.bf16.msra.mxu0 0
    %3344 = vmatprep.subr.bf16.mxu0 0
    %3345 = vmatpush1.bf16.msra.mxu0 0
    %3346 = vmatprep.subr.bf16.mxu0 0
    %3347 = vmatpush1.bf16.msra.mxu0 0
    %3348 = vmatprep.subr.bf16.mxu0 0
    %3349 = vmatpush1.bf16.msra.mxu0 0
    %3350 = vmatprep.subr.bf16.mxu0 0
    %3351 = vmatpush1.bf16.msra.mxu0 0
    %3352 = vmatprep.subr.bf16.mxu0 0
    %3353 = vmatpush1.bf16.msra.mxu0 0
    %3354 = vmatprep.subr.bf16.mxu0 0
    %3355 = vmatpush1.bf16.msra.mxu0 0
    %3356 = vmatprep.subr.bf16.mxu0 0
    %3357 = vmatpush1.bf16.msra.mxu0 0
    %3358 = vmatprep.subr.bf16.mxu0 0
    %3359 = vmatpush1.bf16.msra.mxu0 0
    %3360 = vmatprep.subr.bf16.mxu0 0
    %3361 = vmatpush1.bf16.msra.mxu0 0
    %3362 = vmatprep.subr.bf16.mxu0 0
    %3363 = vmatpush1.bf16.msra.mxu0 0
    %3364 = vmatprep.subr.bf16.mxu0 0
    %3365 = vmatpush1.bf16.msra.mxu0 0
    %3366 = vmatprep.mubr.bf16.mxu0 0
    %3367 = vmatmul.mubr.bf16.gmra.mrb[0].mxu0 %v3332
    %v3368 = vpop.f32.mrb[0].mxu0
    %v3369 = vadd.f32 %v3314, %v3368
    %v3370 = vpop.f32.mrb[0].mxu0
    %v3371 = vpop.f32.mrb[0].mxu0
    %v3372 = vadd.f32 %v3314, %v3371
    %v3373 = vpop.f32.mrb[0].mxu0
    %3374 = vdwg.mxu0
    %3375 = vst [vmem:[#allocation2] sm:$0xff] %v3369
    %3376 = vst [vmem:[#allocation2 + $0x8] sm:$0xff] %v3372
    // Predicated region
    $region54: #{tpu_custom_call.1} parent=1 // pred_check
      _
    $region55: #{tpu_custom_call.1} parent=1 // pred_check_branch
      %3378 = sbr.rel (0) target = $region57
    $region56: #{tpu_custom_call.1} parent=1 // pred_region
      %s3380 = ssub.s32 256, 256
      %3381 = vsyncadd [#allocation3], %s3380
      %s3382 = sshll.u32 [#allocation2], 4
      %s3383 = int_to_ptr.vmem [resolvable:$true] %s3382
      %3388 = dma.vmem_to_hbm [thread:$0]  %s3383, 256, %s13, [#allocation3], 128, 128, 8
    $region57: #{tpu_custom_call.1} parent=1 // pred_fallthru
      _
    // Predicated region
    $region58: #{tpu_custom_call.1} parent=1 // pred_check
      _
    $region59: #{tpu_custom_call.1} parent=1 // pred_check_branch
      %3390 = sbr.rel (0) target = $region61
    $region60: #{tpu_custom_call.1} parent=1 // pred_region
      %s3392 = ssub.s32 256, 256
      %3393 = vsyncadd [#allocation5], %s3392
      %s3394 = sshll.u32 [#allocation4], 4
      %s3395 = int_to_ptr.vmem [resolvable:$true] %s3394
      %3400 = dma.vmem_to_hbm [thread:$0]  %s3395, 256, %s14, [#allocation5], 128, 128, 8
    $region61: #{tpu_custom_call.1} parent=1 // pred_fallthru
      _
    // Predicated region
    $region62: #{tpu_custom_call.1} parent=1 // pred_check
      _
    $region63: #{tpu_custom_call.1} parent=1 // pred_check_branch
      %3402 = sbr.rel (0) target = $region65
    $region64: #{tpu_custom_call.1} parent=1 // pred_region
      %3403 = dma.done [#allocation3], 256
    $region65: #{tpu_custom_call.1} parent=1 // pred_fallthru
      _
    // Predicated region
    $region66: #{tpu_custom_call.1} parent=1 // pred_check
      _
    $region67: #{tpu_custom_call.1} parent=1 // pred_check_branch
      %3405 = sbr.rel (0) target = $region69
    $region68: #{tpu_custom_call.1} parent=1 // pred_region
      %3406 = dma.done [#allocation5], 256
    $region69: #{tpu_custom_call.1} parent=1 // pred_fallthru
      _
    %3407 = vsyncpa [#allocation3], 1
    %3408 = vsyncpa [#allocation5], 1

// kernel: tpu_custom_call.1
$region0: #{tpu_custom_call.1}
  #allocation0 [shape = 'u32[]', space=smem, size = 0x4, offset = 0x4, fixed_abs, tag = 'smem constant byte address 0x4 - core index']
  #allocation1 [shape = 'u32[144,128]{1,0:T(1,128)}', space=vmem, size = 0x12000, scoped, tag = 'internal scratch']
  %s0 = inlined_call_operand.vmem [shape: f32[2,8,128], index: 0, kind: input, shape index: {}]
  %s1 = inlined_call_operand.vmem [shape: bf16[2,128,32], index: 1, kind: input, shape index: {}]
  %s2 = inlined_call_operand.vmem [shape: bf16[2,8,32], index: 2, kind: input, shape index: {}]
  %s3 = inlined_call_operand.vmem [shape: bf16[32,128], index: 3, kind: input, shape index: {}]
  %s4 = inlined_call_operand.vmem [shape: f32[1,128], index: 4, kind: input, shape index: {}]
  %s5 = inlined_call_operand.vmem [shape: bf16[16,64], index: 5, kind: input, shape index: {}]
  %s6 = inlined_call_operand.vmem [shape: bf16[16,64], index: 6, kind: input, shape index: {}]
  %s7 = inlined_call_operand.vmem [shape: bf16[64,96], index: 7, kind: input, shape index: {}]
  %s8 = inlined_call_operand.vmem [shape: f32[1,96], index: 8, kind: input, shape index: {}]
  %s9 = inlined_call_operand.vmem [shape: bf16[32,96], index: 9, kind: input, shape index: {}]
  %s10 = inlined_call_operand.vmem [shape: f32[1,96], index: 10, kind: input, shape index: {}]
  %s11 = inlined_call_operand.vmem [shape: bf16[32,128], index: 11, kind: input, shape index: {}]
  %s12 = inlined_call_operand.vmem [shape: f32[1,128], index: 12, kind: input, shape index: {}]
  %s13 = inlined_call_operand.hbm [shape: f32[2,8,128], index: 13, kind: output, shape index: {0}]
  %s14 = inlined_call_operand.hbm [shape: f32[2,8,128], index: 14, kind: output, shape index: {1}]
  %15 = xla_tuple %s13, %s14
  %s16 = sld [smem:[#allocation0]]
  $region70: #{tpu_custom_call.1} parent=0
    _
  %s18 = ssub.s32 1, %s16
  %s19 = scalar_select 0, %s18, %s16
  $region1: #{tpu_custom_call.1} parent=0
    #allocation2 [shape = 'u8[8192]{0}', space=vmem, size = 0x2000, scoped, tag = 'output window, operand 0, single buffered']
    #allocation3 [shape = 's32[1]{0}', space=sflag, size = 0x4, scoped, tag = 'scoped memory for tpu_custom_call.1']
    #allocation4 [shape = 'u8[8192]{0}', space=vmem, size = 0x2000, scoped, tag = 'output window, operand 1, single buffered']
    #allocation5 [shape = 's32[1]{0}', space=sflag, size = 0x4, scoped, tag = 'scoped memory for tpu_custom_call.1']
    %20 = vsyncpa [#allocation3], 0
    %21 = vsyncpa [#allocation5], 0
    // Predicated region
    $region2: #{tpu_custom_call.1} parent=1 // pred_check
      _
    $region3: #{tpu_custom_call.1} parent=1 // pred_check_branch
      %23 = sbr.rel (0) target = $region5
    $region4: #{tpu_custom_call.1} parent=1 // pred_region
      _
    $region5: #{tpu_custom_call.1} parent=1 // pred_fallthru
      _
    // Predicated region
    $region6: #{tpu_custom_call.1} parent=1 // pred_check
      _
    $region7: #{tpu_custom_call.1} parent=1 // pred_check_branch
      %25 = sbr.rel (0) target = $region9
    $region8: #{tpu_custom_call.1} parent=1 // pred_region
      _
    $region9: #{tpu_custom_call.1} parent=1 // pred_fallthru
      _
    // Predicated region
    $region10: #{tpu_custom_call.1} parent=1 // pred_check
      _
    $region11: #{tpu_custom_call.1} parent=1 // pred_check_branch
      %27 = sbr.rel (0) target = $region13
    $region12: #{tpu_custom_call.1} parent=1 // pred_region
      _
    $region13: #{tpu_custom_call.1} parent=1 // pred_fallthru
      _
    // Predicated region
    $region14: #{tpu_custom_call.1} parent=1 // pred_check
      _
    $region15: #{tpu_custom_call.1} parent=1 // pred_check_branch
      %29 = sbr.rel (0) target = $region17
    $region16: #{tpu_custom_call.1} parent=1 // pred_region
      _
    $region17: #{tpu_custom_call.1} parent=1 // pred_fallthru
      _
    // Predicated region
    $region18: #{tpu_custom_call.1} parent=1 // pred_check
      _
    $region19: #{tpu_custom_call.1} parent=1 // pred_check_branch
      %31 = sbr.rel (0) target = $region21
    $region20: #{tpu_custom_call.1} parent=1 // pred_region
      _
    $region21: #{tpu_custom_call.1} parent=1 // pred_fallthru
      _
    // Predicated region
    $region22: #{tpu_custom_call.1} parent=1 // pred_check
      _
    $region23: #{tpu_custom_call.1} parent=1 // pred_check_branch
      %33 = sbr.rel (0) target = $region25
    $region24: #{tpu_custom_call.1} parent=1 // pred_region
      _
    $region25: #{tpu_custom_call.1} parent=1 // pred_fallthru
      _
    // Predicated region
    $region26: #{tpu_custom_call.1} parent=1 // pred_check
      _
    $region27: #{tpu_custom_call.1} parent=1 // pred_check_branch
      %35 = sbr.rel (0) target = $region29
    $region28: #{tpu_custom_call.1} parent=1 // pred_region
      _
    $region29: #{tpu_custom_call.1} parent=1 // pred_fallthru
      _
    // Predicated region
    $region30: #{tpu_custom_call.1} parent=1 // pred_check
      _
    $region31: #{tpu_custom_call.1} parent=1 // pred_check_branch
      %37 = sbr.rel (0) target = $region33
    $region32: #{tpu_custom_call.1} parent=1 // pred_region
      _
    $region33: #{tpu_custom_call.1} parent=1 // pred_fallthru
      _
    // Predicated region
    $region34: #{tpu_custom_call.1} parent=1 // pred_check
      _
    $region35: #{tpu_custom_call.1} parent=1 // pred_check_branch
      %39 = sbr.rel (0) target = $region37
    $region36: #{tpu_custom_call.1} parent=1 // pred_region
      _
    $region37: #{tpu_custom_call.1} parent=1 // pred_fallthru
      _
    // Predicated region
    $region38: #{tpu_custom_call.1} parent=1 // pred_check
      _
    $region39: #{tpu_custom_call.1} parent=1 // pred_check_branch
      %41 = sbr.rel (0) target = $region41
    $region40: #{tpu_custom_call.1} parent=1 // pred_region
      _
    $region41: #{tpu_custom_call.1} parent=1 // pred_fallthru
      _
    // Predicated region
    $region42: #{tpu_custom_call.1} parent=1 // pred_check
      _
    $region43: #{tpu_custom_call.1} parent=1 // pred_check_branch
      %43 = sbr.rel (0) target = $region45
    $region44: #{tpu_custom_call.1} parent=1 // pred_region
      _
    $region45: #{tpu_custom_call.1} parent=1 // pred_fallthru
      _
    // Predicated region
    $region46: #{tpu_custom_call.1} parent=1 // pred_check
      _
    $region47: #{tpu_custom_call.1} parent=1 // pred_check_branch
      %45 = sbr.rel (0) target = $region49
    $region48: #{tpu_custom_call.1} parent=1 // pred_region
      _
    $region49: #{tpu_custom_call.1} parent=1 // pred_fallthru
      _
    // Predicated region
    $region50: #{tpu_custom_call.1} parent=1 // pred_check
      _
    $region51: #{tpu_custom_call.1} parent=1 // pred_check_branch
      %47 = sbr.rel (0) target = $region53
    $region52: #{tpu_custom_call.1} parent=1 // pred_region
      _
    $region53: #{tpu_custom_call.1} parent=1 // pred_fallthru
      _
    %v49 = vld [vmem:[%s0] sm:$0xff]
    %v50 = vld [vmem:[%s0 + $0x8] sm:$0xff]
    %51 = vadd.xlane.f32.xlu0 %v49
    %v52 = vpop.xlane.xlu0 %51
    %53 = vadd.xlane.f32.xlu0 %v50
    %v54 = vpop.xlane.xlu0 %53
    %v55 = vrcp.pop %v52
    %v56 = vmul.f32 %v49, %v55
    %v57 = vrcp.pop %v54
    %v58 = vmul.f32 %v50, %v57
    %59 = vst [vmem:[#allocation4] sm:$0xff] %v56
    %60 = vst [vmem:[#allocation4 + $0x8] sm:$0xff] %v58
    %v61 = vpack.c.bf16 %v56, %v56
    %v62 = vpack.c.bf16 %v58, %v58
    %v63 = vld [vmem:[%s1] sm:$0xf]
    %v64 = vld [vmem:[%s1 + $0x4] sm:$0xf]
    %v65 = vld [vmem:[%s1 + $0x8] sm:$0xf]
    %v66 = vld [vmem:[%s1 + $0xc] sm:$0xf]
    %v67 = vld [vmem:[%s1 + $0x10] sm:$0xf]
    %v68 = vld [vmem:[%s1 + $0x14] sm:$0xf]
    %v69 = vld [vmem:[%s1 + $0x18] sm:$0xf]
    %v70 = vld [vmem:[%s1 + $0x1c] sm:$0xf]
    %v71 = vld [vmem:[%s1 + $0x20] sm:$0xf]
    %v72 = vld [vmem:[%s1 + $0x24] sm:$0xf]
    %v73 = vld [vmem:[%s1 + $0x28] sm:$0xf]
    %v74 = vld [vmem:[%s1 + $0x2c] sm:$0xf]
    %v75 = vld [vmem:[%s1 + $0x30] sm:$0xf]
    %v76 = vld [vmem:[%s1 + $0x34] sm:$0xf]
    %v77 = vld [vmem:[%s1 + $0x38] sm:$0xf]
    %v78 = vld [vmem:[%s1 + $0x3c] sm:$0xf]
    %v79 = vld [vmem:[%s1 + $0x40] sm:$0xf]
    %v80 = vld [vmem:[%s1 + $0x44] sm:$0xf]
    %v81 = vld [vmem:[%s1 + $0x48] sm:$0xf]
    %v82 = vld [vmem:[%s1 + $0x4c] sm:$0xf]
    %v83 = vld [vmem:[%s1 + $0x50] sm:$0xf]
    %v84 = vld [vmem:[%s1 + $0x54] sm:$0xf]
    %v85 = vld [vmem:[%s1 + $0x58] sm:$0xf]
    %v86 = vld [vmem:[%s1 + $0x5c] sm:$0xf]
    %v87 = vld [vmem:[%s1 + $0x60] sm:$0xf]
    %v88 = vld [vmem:[%s1 + $0x64] sm:$0xf]
    %v89 = vld [vmem:[%s1 + $0x68] sm:$0xf]
    %v90 = vld [vmem:[%s1 + $0x6c] sm:$0xf]
    %v91 = vld [vmem:[%s1 + $0x70] sm:$0xf]
    %v92 = vld [vmem:[%s1 + $0x74] sm:$0xf]
    %v93 = vld [vmem:[%s1 + $0x78] sm:$0xf]
    %v94 = vld [vmem:[%s1 + $0x7c] sm:$0xf]
    %v111 = vunpack.c.l.b16 %v63
    %v112 = vunpack.c.l.b16 %v64
    %v113 = vunpack.c.l.b16 %v65
    %v114 = vunpack.c.l.b16 %v66
    %v115 = vunpack.c.l.b16 %v67
    %v116 = vunpack.c.l.b16 %v68
    %v117 = vunpack.c.l.b16 %v69
    %v118 = vunpack.c.l.b16 %v70
    %v119 = vunpack.c.l.b16 %v71
    %v120 = vunpack.c.l.b16 %v72
    %v121 = vunpack.c.l.b16 %v73
    %v122 = vunpack.c.l.b16 %v74
    %v123 = vunpack.c.l.b16 %v75
    %v124 = vunpack.c.l.b16 %v76
    %v125 = vunpack.c.l.b16 %v77
    %v126 = vunpack.c.l.b16 %v78
    %v127 = vpack.c.b16 %v112, %v111
    %v128 = vpack.c.b16 %v114, %v113
    %v129 = vpack.c.b16 %v116, %v115
    %v130 = vpack.c.b16 %v118, %v117
    %v131 = vpack.c.b16 %v120, %v119
    %v132 = vpack.c.b16 %v122, %v121
    %v133 = vpack.c.b16 %v124, %v123
    %v134 = vpack.c.b16 %v126, %v125
    %143 = vmatprep.subr.bf16.mxu0 0
    %144 = vmatpush1.bf16.msra.mxu0 %v127
    %145 = vmatprep.subr.bf16.mxu0 0
    %146 = vmatpush1.bf16.msra.mxu0 %v128
    %147 = vmatprep.subr.bf16.mxu0 0
    %148 = vmatpush1.bf16.msra.mxu0 %v129
    %149 = vmatprep.subr.bf16.mxu0 0
    %150 = vmatpush1.bf16.msra.mxu0 %v130
    %151 = vmatprep.subr.bf16.mxu0 0
    %152 = vmatpush1.bf16.msra.mxu0 %v131
    %153 = vmatprep.subr.bf16.mxu0 0
    %154 = vmatpush1.bf16.msra.mxu0 %v132
    %155 = vmatprep.subr.bf16.mxu0 0
    %156 = vmatpush1.bf16.msra.mxu0 %v133
    %157 = vmatprep.subr.bf16.mxu0 0
    %158 = vmatpush1.bf16.msra.mxu0 %v134
    %159 = vmatprep.subr.bf16.mxu0 0
    %160 = vmatpush1.bf16.msra.mxu0 0
    %161 = vmatprep.subr.bf16.mxu0 0
    %162 = vmatpush1.bf16.msra.mxu0 0
    %163 = vmatprep.subr.bf16.mxu0 0
    %164 = vmatpush1.bf16.msra.mxu0 0
    %165 = vmatprep.subr.bf16.mxu0 0
    %166 = vmatpush1.bf16.msra.mxu0 0
    %167 = vmatprep.subr.bf16.mxu0 0
    %168 = vmatpush1.bf16.msra.mxu0 0
    %169 = vmatprep.subr.bf16.mxu0 0
    %170 = vmatpush1.bf16.msra.mxu0 0
    %171 = vmatprep.subr.bf16.mxu0 0
    %172 = vmatpush1.bf16.msra.mxu0 0
    %173 = vmatprep.subr.bf16.mxu0 0
    %174 = vmatpush1.bf16.msra.mxu0 0
    %175 = vmatprep.mubr.bf16.mxu0 0
    %176 = vmatmul.mubr.bf16.gmra.mrb[0].mxu0 %v61
    %v177 = vpop.f32.mrb[0].mxu0
    %v178 = vadd.f32 0.0, %v177
    %v179 = vpop.f32.mrb[0].mxu0
    %v180 = vpop.f32.mrb[0].mxu0
    %v181 = vpop.f32.mrb[0].mxu0
    %182 = vdwg.mxu0
    %v199 = vunpack.c.l.b16 %v79
    %v200 = vunpack.c.l.b16 %v80
    %v201 = vunpack.c.l.b16 %v81
    %v202 = vunpack.c.l.b16 %v82
    %v203 = vunpack.c.l.b16 %v83
    %v204 = vunpack.c.l.b16 %v84
    %v205 = vunpack.c.l.b16 %v85
    %v206 = vunpack.c.l.b16 %v86
    %v207 = vunpack.c.l.b16 %v87
    %v208 = vunpack.c.l.b16 %v88
    %v209 = vunpack.c.l.b16 %v89
    %v210 = vunpack.c.l.b16 %v90
    %v211 = vunpack.c.l.b16 %v91
    %v212 = vunpack.c.l.b16 %v92
    %v213 = vunpack.c.l.b16 %v93
    %v214 = vunpack.c.l.b16 %v94
    %v215 = vpack.c.b16 %v200, %v199
    %v216 = vpack.c.b16 %v202, %v201
    %v217 = vpack.c.b16 %v204, %v203
    %v218 = vpack.c.b16 %v206, %v205
    %v219 = vpack.c.b16 %v208, %v207
    %v220 = vpack.c.b16 %v210, %v209
    %v221 = vpack.c.b16 %v212, %v211
    %v222 = vpack.c.b16 %v214, %v213
    %231 = vmatprep.subr.bf16.mxu0 0
    %232 = vmatpush1.bf16.msra.mxu0 %v215
    %233 = vmatprep.subr.bf16.mxu0 0
    %234 = vmatpush1.bf16.msra.mxu0 %v216
    %235 = vmatprep.subr.bf16.mxu0 0
    %236 = vmatpush1.bf16.msra.mxu0 %v217
    %237 = vmatprep.subr.bf16.mxu0 0
    %238 = vmatpush1.bf16.msra.mxu0 %v218
    %239 = vmatprep.subr.bf16.mxu0 0
    %240 = vmatpush1.bf16.msra.mxu0 %v219
    %241 = vmatprep.subr.bf16.mxu0 0
    %242 = vmatpush1.bf16.msra.mxu0 %v220
    %243 = vmatprep.subr.bf16.mxu0 0
    %244 = vmatpush1.bf16.msra.mxu0 %v221
    %245 = vmatprep.subr.bf16.mxu0 0
    %246 = vmatpush1.bf16.msra.mxu0 %v222
    %247 = vmatprep.subr.bf16.mxu0 0
    %248 = vmatpush1.bf16.msra.mxu0 0
    %249 = vmatprep.subr.bf16.mxu0 0
    %250 = vmatpush1.bf16.msra.mxu0 0
    %251 = vmatprep.subr.bf16.mxu0 0
    %252 = vmatpush1.bf16.msra.mxu0 0
    %253 = vmatprep.subr.bf16.mxu0 0
    %254 = vmatpush1.bf16.msra.mxu0 0
    %255 = vmatprep.subr.bf16.mxu0 0
    %256 = vmatpush1.bf16.msra.mxu0 0
    %257 = vmatprep.subr.bf16.mxu0 0
    %258 = vmatpush1.bf16.msra.mxu0 0
    %259 = vmatprep.subr.bf16.mxu0 0
    %260 = vmatpush1.bf16.msra.mxu0 0
    %261 = vmatprep.subr.bf16.mxu0 0
    %262 = vmatpush1.bf16.msra.mxu0 0
    %263 = vmatprep.mubr.bf16.mxu0 0
    %264 = vmatmul.mubr.bf16.gmra.mrb[0].mxu0 %v62
    %v265 = vpop.f32.mrb[0].mxu0
    %v266 = vadd.f32 0.0, %v265
    %v267 = vpop.f32.mrb[0].mxu0
    %v268 = vpop.f32.mrb[0].mxu0
    %v269 = vpop.f32.mrb[0].mxu0
    %270 = vdwg.mxu0
    %v271 = vpack.c.bf16 %v266, %v178
    %v272 = vld [vmem:[%s3] sm:$0xf]
    %v273 = vld [vmem:[%s3 + $0x4] sm:$0xf]
    %v274 = vld [vmem:[%s3 + $0x8] sm:$0xf]
    %v275 = vld [vmem:[%s3 + $0xc] sm:$0xf]
    %v276 = vld [vmem:[%s4] sm:$0x1]
    %v278 = vlaneseq
    %v279 = vshrl.u32 %v278, 7
    %v280 = vsub.s32 0, %v279
    %v281 = vrot.slane %v276, %v280
    %v287 = vunpack.c.l.b16 %v272
    %v288 = vunpack.c.l.b16 %v273
    %v289 = vunpack.c.l.b16 %v274
    %v290 = vunpack.c.l.b16 %v275
    %v291 = vpack.c.b16 %v288, %v287
    %v292 = vpack.c.b16 %v290, %v289
    %vm295 = vcmask 261120
    %v297 = vsel %vm295, %v271, 0
    %299 = vmatprep.subr.bf16.mxu0 0
    %300 = vmatpush1.bf16.msra.mxu0 %v291
    %301 = vmatprep.subr.bf16.mxu0 0
    %302 = vmatpush1.bf16.msra.mxu0 %v292
    %303 = vmatprep.subr.bf16.mxu0 0
    %304 = vmatpush1.bf16.msra.mxu0 0
    %305 = vmatprep.subr.bf16.mxu0 0
    %306 = vmatpush1.bf16.msra.mxu0 0
    %307 = vmatprep.subr.bf16.mxu0 0
    %308 = vmatpush1.bf16.msra.mxu0 0
    %309 = vmatprep.subr.bf16.mxu0 0
    %310 = vmatpush1.bf16.msra.mxu0 0
    %311 = vmatprep.subr.bf16.mxu0 0
    %312 = vmatpush1.bf16.msra.mxu0 0
    %313 = vmatprep.subr.bf16.mxu0 0
    %314 = vmatpush1.bf16.msra.mxu0 0
    %315 = vmatprep.subr.bf16.mxu0 0
    %316 = vmatpush1.bf16.msra.mxu0 0
    %317 = vmatprep.subr.bf16.mxu0 0
    %318 = vmatpush1.bf16.msra.mxu0 0
    %319 = vmatprep.subr.bf16.mxu0 0
    %320 = vmatpush1.bf16.msra.mxu0 0
    %321 = vmatprep.subr.bf16.mxu0 0
    %322 = vmatpush1.bf16.msra.mxu0 0
    %323 = vmatprep.subr.bf16.mxu0 0
    %324 = vmatpush1.bf16.msra.mxu0 0
    %325 = vmatprep.subr.bf16.mxu0 0
    %326 = vmatpush1.bf16.msra.mxu0 0
    %327 = vmatprep.subr.bf16.mxu0 0
    %328 = vmatpush1.bf16.msra.mxu0 0
    %329 = vmatprep.subr.bf16.mxu0 0
    %330 = vmatpush1.bf16.msra.mxu0 0
    %331 = vmatprep.mubr.bf16.mxu0 0
    %332 = vmatmul.mubr.bf16.gmra.mrb[0].mxu0 %v297
    %v333 = vpop.f32.mrb[0].mxu0
    %v334 = vadd.f32 %v281, %v333
    %v335 = vpop.f32.mrb[0].mxu0
    %v336 = vpop.f32.mrb[0].mxu0
    %v337 = vadd.f32 %v281, %v336
    %v338 = vpop.f32.mrb[0].mxu0
    %339 = vdwg.mxu0
    %v340 = vld [vmem:[%s5] sm:$0xf]
    %v341 = vld [vmem:[%s5 + $0x4] sm:$0xf]
    %v342 = vld [vmem:[%s6] sm:$0xf]
    %v343 = vld [vmem:[%s6 + $0x4] sm:$0xf]
    %v346 = vunpack.c.l.b16 %v340
    %v347 = vunpack.c.l.b16 %v341
    %v348 = vpack.c.b16 %v347, %v346
    %vm350 = vcmask 130048
    %v352 = vsel %vm350, 0, 0
    %354 = vmatprep.subr.bf16.mxu0 0
    %355 = vmatpush1.bf16.msra.mxu0 %v348
    %356 = vmatprep.subr.bf16.mxu0 0
    %357 = vmatpush1.bf16.msra.mxu0 0
    %358 = vmatprep.subr.bf16.mxu0 0
    %359 = vmatpush1.bf16.msra.mxu0 0
    %360 = vmatprep.subr.bf16.mxu0 0
    %361 = vmatpush1.bf16.msra.mxu0 0
    %362 = vmatprep.subr.bf16.mxu0 0
    %363 = vmatpush1.bf16.msra.mxu0 0
    %364 = vmatprep.subr.bf16.mxu0 0
    %365 = vmatpush1.bf16.msra.mxu0 0
    %366 = vmatprep.subr.bf16.mxu0 0
    %367 = vmatpush1.bf16.msra.mxu0 0
    %368 = vmatprep.subr.bf16.mxu0 0
    %369 = vmatpush1.bf16.msra.mxu0 0
    %370 = vmatprep.subr.bf16.mxu0 0
    %371 = vmatpush1.bf16.msra.mxu0 0
    %372 = vmatprep.subr.bf16.mxu0 0
    %373 = vmatpush1.bf16.msra.mxu0 0
    %374 = vmatprep.subr.bf16.mxu0 0
    %375 = vmatpush1.bf16.msra.mxu0 0
    %376 = vmatprep.subr.bf16.mxu0 0
    %377 = vmatpush1.bf16.msra.mxu0 0
    %378 = vmatprep.subr.bf16.mxu0 0
    %379 = vmatpush1.bf16.msra.mxu0 0
    %380 = vmatprep.subr.bf16.mxu0 0
    %381 = vmatpush1.bf16.msra.mxu0 0
    %382 = vmatprep.subr.bf16.mxu0 0
    %383 = vmatpush1.bf16.msra.mxu0 0
    %384 = vmatprep.subr.bf16.mxu0 0
    %385 = vmatpush1.bf16.msra.mxu0 0
    %386 = vmatprep.mubr.bf16.mxu0 0
    %387 = vmatmul.mubr.bf16.gmra.mrb[0].mxu0 %v352
    %v388 = vpop.f32.mrb[0].mxu0
    %v389 = vadd.f32 0.0, %v388
    %v390 = vpop.f32.mrb[0].mxu0
    %v391 = vpop.f32.mrb[0].mxu0
    %v392 = vpop.f32.mrb[0].mxu0
    %393 = vdwg.mxu0
    %v395 = vrot.slane %v389, 1
    %v398 = vadd.f32 %v334, %v389
    %v399 = vadd.f32 %v337, %v395
    %v402 = vunpack.c.l.b16 %v342
    %v403 = vunpack.c.l.b16 %v343
    %v404 = vpack.c.b16 %v403, %v402
    %406 = vmatprep.subr.bf16.mxu0 0
    %407 = vmatpush1.bf16.msra.mxu0 %v404
    %408 = vmatprep.subr.bf16.mxu0 0
    %409 = vmatpush1.bf16.msra.mxu0 0
    %410 = vmatprep.subr.bf16.mxu0 0
    %411 = vmatpush1.bf16.msra.mxu0 0
    %412 = vmatprep.subr.bf16.mxu0 0
    %413 = vmatpush1.bf16.msra.mxu0 0
    %414 = vmatprep.subr.bf16.mxu0 0
    %415 = vmatpush1.bf16.msra.mxu0 0
    %416 = vmatprep.subr.bf16.mxu0 0
    %417 = vmatpush1.bf16.msra.mxu0 0
    %418 = vmatprep.subr.bf16.mxu0 0
    %419 = vmatpush1.bf16.msra.mxu0 0
    %420 = vmatprep.subr.bf16.mxu0 0
    %421 = vmatpush1.bf16.msra.mxu0 0
    %422 = vmatprep.subr.bf16.mxu0 0
    %423 = vmatpush1.bf16.msra.mxu0 0
    %424 = vmatprep.subr.bf16.mxu0 0
    %425 = vmatpush1.bf16.msra.mxu0 0
    %426 = vmatprep.subr.bf16.mxu0 0
    %427 = vmatpush1.bf16.msra.mxu0 0
    %428 = vmatprep.subr.bf16.mxu0 0
    %429 = vmatpush1.bf16.msra.mxu0 0
    %430 = vmatprep.subr.bf16.mxu0 0
    %431 = vmatpush1.bf16.msra.mxu0 0
    %432 = vmatprep.subr.bf16.mxu0 0
    %433 = vmatpush1.bf16.msra.mxu0 0
    %434 = vmatprep.subr.bf16.mxu0 0
    %435 = vmatpush1.bf16.msra.mxu0 0
    %436 = vmatprep.subr.bf16.mxu0 0
    %437 = vmatpush1.bf16.msra.mxu0 0
    %438 = vmatprep.mubr.bf16.mxu0 0
    %439 = vmatmul.mubr.bf16.gmra.mrb[0].mxu0 %v352
    %v440 = vpop.f32.mrb[0].mxu0
    %v441 = vadd.f32 0.0, %v440
    %v442 = vpop.f32.mrb[0].mxu0
    %v443 = vpop.f32.mrb[0].mxu0
    %v444 = vpop.f32.mrb[0].mxu0
    %445 = vdwg.mxu0
    %v447 = vrot.slane %v441, 1
    %v448 = vrot.slane %v441, 2
    %449 = vrot.lane.b32.xlu0 %v447, 64
    %v450 = vpop.permute.xlu0 %449
    %451 = vrot.lane.b32.xlu0 %v448, 64
    %v452 = vpop.permute.xlu0 %451
    %v455 = vadd.f32 %v334, %v450
    %v456 = vadd.f32 %v337, %v452
    %v457 = vxor.u32 %v398, 2147483648
    %v458 = vxor.u32 %v399, 2147483648
    %v459 = vmul.f32 %v457, 1.442695
    %v460 = vpow.pop %v459
    %v461 = vmul.f32 %v458, 1.442695
    %v462 = vpow.pop %v461
    %v463 = vadd.f32 %v460, 1.0
    %v464 = vadd.f32 %v462, 1.0
    %v465 = vrcp.pop %v463
    %v466 = vmul.f32 1.0, %v465
    %v467 = vrcp.pop %v464
    %v468 = vmul.f32 1.0, %v467
    %v469 = vtanh.pop %v398
    %v470 = vtanh.pop %v399
    %v471 = vmul.f32 %v466, 0.0
    %v472 = vmul.f32 %v468, 0.0
    %475 = vrot.lane.b32.xlu0 %v469, 80
    %v476 = vpop.permute.xlu0 %475
    %477 = vrot.lane.b32.xlu0 %v470, 80
    %v478 = vpop.permute.xlu0 %477
    %v481 = vmul.f32 %v466, %v476
    %v482 = vmul.f32 %v468, %v478
    %485 = vrot.lane.b32.xlu0 %v481, 16
    %v486 = vpop.permute.xlu0 %485
    %487 = vrot.lane.b32.xlu0 %v482, 16
    %v488 = vpop.permute.xlu0 %487
    %v491 = vadd.f32 %v471, %v486
    %v492 = vadd.f32 %v472, %v488
    %v493 = vtanh.pop %v491
    %v494 = vtanh.pop %v492
    %497 = vrot.lane.b32.xlu0 %v493, 16
    %v498 = vpop.permute.xlu0 %497
    %499 = vrot.lane.b32.xlu0 %v494, 16
    %v500 = vpop.permute.xlu0 %499
    %v503 = vmul.f32 %v466, %v498
    %v504 = vmul.f32 %v468, %v500
    %v505 = vxor.u32 %v455, 2147483648
    %v506 = vxor.u32 %v456, 2147483648
    %v507 = vmul.f32 %v505, 1.442695
    %v508 = vpow.pop %v507
    %v509 = vmul.f32 %v506, 1.442695
    %v510 = vpow.pop %v509
    %v511 = vadd.f32 %v508, 1.0
    %v512 = vadd.f32 %v510, 1.0
    %v513 = vrcp.pop %v511
    %v514 = vmul.f32 1.0, %v513
    %v515 = vrcp.pop %v512
    %v516 = vmul.f32 1.0, %v515
    %v517 = vtanh.pop %v455
    %v518 = vtanh.pop %v456
    %v519 = vmul.f32 %v514, 0.0
    %v520 = vmul.f32 %v516, 0.0
    %523 = vrot.lane.b32.xlu0 %v517, 80
    %v524 = vpop.permute.xlu0 %523
    %525 = vrot.lane.b32.xlu0 %v518, 80
    %v526 = vpop.permute.xlu0 %525
    %v529 = vmul.f32 %v514, %v524
    %v530 = vmul.f32 %v516, %v526
    %533 = vrot.lane.b32.xlu0 %v529, 16
    %v534 = vpop.permute.xlu0 %533
    %535 = vrot.lane.b32.xlu0 %v530, 16
    %v536 = vpop.permute.xlu0 %535
    %v539 = vadd.f32 %v519, %v534
    %v540 = vadd.f32 %v520, %v536
    %v541 = vtanh.pop %v539
    %v542 = vtanh.pop %v540
    %545 = vrot.lane.b32.xlu0 %v541, 16
    %v546 = vpop.permute.xlu0 %545
    %547 = vrot.lane.b32.xlu0 %v542, 16
    %v548 = vpop.permute.xlu0 %547
    %v551 = vmul.f32 %v514, %v546
    %v552 = vmul.f32 %v516, %v548
    %v553 = vpack.c.bf16 %v503, %v503
    %v554 = vpack.c.bf16 %v504, %v504
    %v557 = vunpack.c.l.b16 %v553
    %v558 = vunpack.c.l.b16 %v554
    %v559 = vrot.slane %v558, 7
    %vm560 = vcmask 1041409
    %v561 = vsel %vm560, %v559, %v557
    %v562 = vpack.c.b16 %v561, %v561
    %563 = vrot.lane.b32.xlu0 %v562, 96
    %v564 = vpop.permute.xlu0 %563
    %v566 = vsel %vm350, %v564, 0
    %568 = vmatprep.subr.bf16.mxu0 0
    %569 = vmatpush1.bf16.msra.mxu0 %v348
    %570 = vmatprep.subr.bf16.mxu0 0
    %571 = vmatpush1.bf16.msra.mxu0 0
    %572 = vmatprep.subr.bf16.mxu0 0
    %573 = vmatpush1.bf16.msra.mxu0 0
    %574 = vmatprep.subr.bf16.mxu0 0
    %575 = vmatpush1.bf16.msra.mxu0 0
    %576 = vmatprep.subr.bf16.mxu0 0
    %577 = vmatpush1.bf16.msra.mxu0 0
    %578 = vmatprep.subr.bf16.mxu0 0
    %579 = vmatpush1.bf16.msra.mxu0 0
    %580 = vmatprep.subr.bf16.mxu0 0
    %581 = vmatpush1.bf16.msra.mxu0 0
    %582 = vmatprep.subr.bf16.mxu0 0
    %583 = vmatpush1.bf16.msra.mxu0 0
    %584 = vmatprep.subr.bf16.mxu0 0
    %585 = vmatpush1.bf16.msra.mxu0 0
    %586 = vmatprep.subr.bf16.mxu0 0
    %587 = vmatpush1.bf16.msra.mxu0 0
    %588 = vmatprep.subr.bf16.mxu0 0
    %589 = vmatpush1.bf16.msra.mxu0 0
    %590 = vmatprep.subr.bf16.mxu0 0
    %591 = vmatpush1.bf16.msra.mxu0 0
    %592 = vmatprep.subr.bf16.mxu0 0
    %593 = vmatpush1.bf16.msra.mxu0 0
    %594 = vmatprep.subr.bf16.mxu0 0
    %595 = vmatpush1.bf16.msra.mxu0 0
    %596 = vmatprep.subr.bf16.mxu0 0
    %597 = vmatpush1.bf16.msra.mxu0 0
    %598 = vmatprep.subr.bf16.mxu0 0
    %599 = vmatpush1.bf16.msra.mxu0 0
    %600 = vmatprep.mubr.bf16.mxu0 0
    %601 = vmatmul.mubr.bf16.gmra.mrb[0].mxu0 %v566
    %v602 = vpop.f32.mrb[0].mxu0
    %v603 = vadd.f32 0.0, %v602
    %v604 = vpop.f32.mrb[0].mxu0
    %v605 = vpop.f32.mrb[0].mxu0
    %v606 = vpop.f32.mrb[0].mxu0
    %607 = vdwg.mxu0
    %v609 = vrot.slane %v603, 7
    %v612 = vadd.f32 %v334, %v609
    %v613 = vadd.f32 %v337, %v603
    %v614 = vpack.c.bf16 %v551, %v551
    %v615 = vpack.c.bf16 %v552, %v552
    %v618 = vunpack.c.l.b16 %v614
    %v619 = vunpack.c.l.b16 %v615
    %v620 = vrot.slane %v618, 7
    %v621 = vrot.slane %v619, 6
    %v622 = vsel %vm560, %v621, %v620
    %v623 = vpack.c.b16 %v622, %v622
    %624 = vrot.lane.b32.xlu0 %v623, 32
    %v625 = vpop.permute.xlu0 %624
    %v627 = vsel %vm350, %v625, 0
    %629 = vmatprep.subr.bf16.mxu0 0
    %630 = vmatpush1.bf16.msra.mxu0 %v404
    %631 = vmatprep.subr.bf16.mxu0 0
    %632 = vmatpush1.bf16.msra.mxu0 0
    %633 = vmatprep.subr.bf16.mxu0 0
    %634 = vmatpush1.bf16.msra.mxu0 0
    %635 = vmatprep.subr.bf16.mxu0 0
    %636 = vmatpush1.bf16.msra.mxu0 0
    %637 = vmatprep.subr.bf16.mxu0 0
    %638 = vmatpush1.bf16.msra.mxu0 0
    %639 = vmatprep.subr.bf16.mxu0 0
    %640 = vmatpush1.bf16.msra.mxu0 0
    %641 = vmatprep.subr.bf16.mxu0 0
    %642 = vmatpush1.bf16.msra.mxu0 0
    %643 = vmatprep.subr.bf16.mxu0 0
    %644 = vmatpush1.bf16.msra.mxu0 0
    %645 = vmatprep.subr.bf16.mxu0 0
    %646 = vmatpush1.bf16.msra.mxu0 0
    %647 = vmatprep.subr.bf16.mxu0 0
    %648 = vmatpush1.bf16.msra.mxu0 0
    %649 = vmatprep.subr.bf16.mxu0 0
    %650 = vmatpush1.bf16.msra.mxu0 0
    %651 = vmatprep.subr.bf16.mxu0 0
    %652 = vmatpush1.bf16.msra.mxu0 0
    %653 = vmatprep.subr.bf16.mxu0 0
    %654 = vmatpush1.bf16.msra.mxu0 0
    %655 = vmatprep.subr.bf16.mxu0 0
    %656 = vmatpush1.bf16.msra.mxu0 0
    %657 = vmatprep.subr.bf16.mxu0 0
    %658 = vmatpush1.bf16.msra.mxu0 0
    %659 = vmatprep.subr.bf16.mxu0 0
    %660 = vmatpush1.bf16.msra.mxu0 0
    %661 = vmatprep.mubr.bf16.mxu0 0
    %662 = vmatmul.mubr.bf16.gmra.mrb[0].mxu0 %v627
    %v663 = vpop.f32.mrb[0].mxu0
    %v664 = vadd.f32 0.0, %v663
    %v665 = vpop.f32.mrb[0].mxu0
    %v666 = vpop.f32.mrb[0].mxu0
    %v667 = vpop.f32.mrb[0].mxu0
    %668 = vdwg.mxu0
    %v670 = vrot.slane %v664, 2
    %v671 = vrot.slane %v664, 3
    %672 = vrot.lane.b32.xlu0 %v670, 64
    %v673 = vpop.permute.xlu0 %672
    %674 = vrot.lane.b32.xlu0 %v671, 64
    %v675 = vpop.permute.xlu0 %674
    %v678 = vadd.f32 %v334, %v673
    %v679 = vadd.f32 %v337, %v675
    %v680 = vxor.u32 %v612, 2147483648
    %v681 = vxor.u32 %v613, 2147483648
    %v682 = vmul.f32 %v680, 1.442695
    %v683 = vpow.pop %v682
    %v684 = vmul.f32 %v681, 1.442695
    %v685 = vpow.pop %v684
    %v686 = vadd.f32 %v683, 1.0
    %v687 = vadd.f32 %v685, 1.0
    %v688 = vrcp.pop %v686
    %v689 = vmul.f32 1.0, %v688
    %v690 = vrcp.pop %v687
    %v691 = vmul.f32 1.0, %v690
    %v692 = vtanh.pop %v612
    %v693 = vtanh.pop %v613
    %v696 = vrot.slane %v491, 7
    %v697 = vrot.slane %v492, 7
    %v700 = vmul.f32 %v689, %v696
    %v701 = vmul.f32 %v691, %v697
    %704 = vrot.lane.b32.xlu0 %v692, 80
    %v705 = vpop.permute.xlu0 %704
    %706 = vrot.lane.b32.xlu0 %v693, 80
    %v707 = vpop.permute.xlu0 %706
    %v710 = vmul.f32 %v689, %v705
    %v711 = vmul.f32 %v691, %v707
    %714 = vrot.lane.b32.xlu0 %v710, 16
    %v715 = vpop.permute.xlu0 %714
    %716 = vrot.lane.b32.xlu0 %v711, 16
    %v717 = vpop.permute.xlu0 %716
    %v720 = vadd.f32 %v700, %v715
    %v721 = vadd.f32 %v701, %v717
    %v722 = vtanh.pop %v720
    %v723 = vtanh.pop %v721
    %726 = vrot.lane.b32.xlu0 %v722, 16
    %v727 = vpop.permute.xlu0 %726
    %728 = vrot.lane.b32.xlu0 %v723, 16
    %v729 = vpop.permute.xlu0 %728
    %v732 = vmul.f32 %v689, %v727
    %v733 = vmul.f32 %v691, %v729
    %v734 = vxor.u32 %v678, 2147483648
    %v735 = vxor.u32 %v679, 2147483648
    %v736 = vmul.f32 %v734, 1.442695
    %v737 = vpow.pop %v736
    %v738 = vmul.f32 %v735, 1.442695
    %v739 = vpow.pop %v738
    %v740 = vadd.f32 %v737, 1.0
    %v741 = vadd.f32 %v739, 1.0
    %v742 = vrcp.pop %v740
    %v743 = vmul.f32 1.0, %v742
    %v744 = vrcp.pop %v741
    %v745 = vmul.f32 1.0, %v744
    %v746 = vtanh.pop %v678
    %v747 = vtanh.pop %v679
    %v750 = vrot.slane %v539, 1
    %v751 = vrot.slane %v540, 1
    %v754 = vmul.f32 %v743, %v750
    %v755 = vmul.f32 %v745, %v751
    %758 = vrot.lane.b32.xlu0 %v746, 80
    %v759 = vpop.permute.xlu0 %758
    %760 = vrot.lane.b32.xlu0 %v747, 80
    %v761 = vpop.permute.xlu0 %760
    %v764 = vmul.f32 %v743, %v759
    %v765 = vmul.f32 %v745, %v761
    %768 = vrot.lane.b32.xlu0 %v764, 16
    %v769 = vpop.permute.xlu0 %768
    %770 = vrot.lane.b32.xlu0 %v765, 16
    %v771 = vpop.permute.xlu0 %770
    %v774 = vadd.f32 %v754, %v769
    %v775 = vadd.f32 %v755, %v771
    %v776 = vtanh.pop %v774
    %v777 = vtanh.pop %v775
    %780 = vrot.lane.b32.xlu0 %v776, 16
    %v781 = vpop.permute.xlu0 %780
    %782 = vrot.lane.b32.xlu0 %v777, 16
    %v783 = vpop.permute.xlu0 %782
    %v786 = vmul.f32 %v743, %v781
    %v787 = vmul.f32 %v745, %v783
    %v788 = vpack.c.bf16 %v732, %v732
    %v789 = vpack.c.bf16 %v733, %v733
    %v792 = vunpack.c.l.b16 %v788
    %v793 = vunpack.c.l.b16 %v789
    %v794 = vrot.slane %v792, 1
    %v795 = vsel %vm560, %v793, %v794
    %v796 = vpack.c.b16 %v795, %v795
    %797 = vrot.lane.b32.xlu0 %v796, 96
    %v798 = vpop.permute.xlu0 %797
    %v800 = vsel %vm350, %v798, 0
    %802 = vmatprep.subr.bf16.mxu0 0
    %803 = vmatpush1.bf16.msra.mxu0 %v348
    %804 = vmatprep.subr.bf16.mxu0 0
    %805 = vmatpush1.bf16.msra.mxu0 0
    %806 = vmatprep.subr.bf16.mxu0 0
    %807 = vmatpush1.bf16.msra.mxu0 0
    %808 = vmatprep.subr.bf16.mxu0 0
    %809 = vmatpush1.bf16.msra.mxu0 0
    %810 = vmatprep.subr.bf16.mxu0 0
    %811 = vmatpush1.bf16.msra.mxu0 0
    %812 = vmatprep.subr.bf16.mxu0 0
    %813 = vmatpush1.bf16.msra.mxu0 0
    %814 = vmatprep.subr.bf16.mxu0 0
    %815 = vmatpush1.bf16.msra.mxu0 0
    %816 = vmatprep.subr.bf16.mxu0 0
    %817 = vmatpush1.bf16.msra.mxu0 0
    %818 = vmatprep.subr.bf16.mxu0 0
    %819 = vmatpush1.bf16.msra.mxu0 0
    %820 = vmatprep.subr.bf16.mxu0 0
    %821 = vmatpush1.bf16.msra.mxu0 0
    %822 = vmatprep.subr.bf16.mxu0 0
    %823 = vmatpush1.bf16.msra.mxu0 0
    %824 = vmatprep.subr.bf16.mxu0 0
    %825 = vmatpush1.bf16.msra.mxu0 0
    %826 = vmatprep.subr.bf16.mxu0 0
    %827 = vmatpush1.bf16.msra.mxu0 0
    %828 = vmatprep.subr.bf16.mxu0 0
    %829 = vmatpush1.bf16.msra.mxu0 0
    %830 = vmatprep.subr.bf16.mxu0 0
    %831 = vmatpush1.bf16.msra.mxu0 0
    %832 = vmatprep.subr.bf16.mxu0 0
    %833 = vmatpush1.bf16.msra.mxu0 0
    %834 = vmatprep.mubr.bf16.mxu0 0
    %835 = vmatmul.mubr.bf16.gmra.mrb[0].mxu0 %v800
    %v836 = vpop.f32.mrb[0].mxu0
    %v837 = vadd.f32 0.0, %v836
    %v838 = vpop.f32.mrb[0].mxu0
    %v839 = vpop.f32.mrb[0].mxu0
    %v840 = vpop.f32.mrb[0].mxu0
    %841 = vdwg.mxu0
    %v843 = vrot.slane %v837, 6
    %v844 = vrot.slane %v837, 7
    %v847 = vadd.f32 %v334, %v843
    %v848 = vadd.f32 %v337, %v844
    %v849 = vpack.c.bf16 %v786, %v786
    %v850 = vpack.c.bf16 %v787, %v787
    %v853 = vunpack.c.l.b16 %v849
    %v854 = vunpack.c.l.b16 %v850
    %v855 = vrot.slane %v853, 6
    %v856 = vrot.slane %v854, 5
    %v857 = vsel %vm560, %v856, %v855
    %v858 = vpack.c.b16 %v857, %v857
    %859 = vrot.lane.b32.xlu0 %v858, 32
    %v860 = vpop.permute.xlu0 %859
    %v862 = vsel %vm350, %v860, 0
    %864 = vmatprep.subr.bf16.mxu0 0
    %865 = vmatpush1.bf16.msra.mxu0 %v404
    %866 = vmatprep.subr.bf16.mxu0 0
    %867 = vmatpush1.bf16.msra.mxu0 0
    %868 = vmatprep.subr.bf16.mxu0 0
    %869 = vmatpush1.bf16.msra.mxu0 0
    %870 = vmatprep.subr.bf16.mxu0 0
    %871 = vmatpush1.bf16.msra.mxu0 0
    %872 = vmatprep.subr.bf16.mxu0 0
    %873 = vmatpush1.bf16.msra.mxu0 0
    %874 = vmatprep.subr.bf16.mxu0 0
    %875 = vmatpush1.bf16.msra.mxu0 0
    %876 = vmatprep.subr.bf16.mxu0 0
    %877 = vmatpush1.bf16.msra.mxu0 0
    %878 = vmatprep.subr.bf16.mxu0 0
    %879 = vmatpush1.bf16.msra.mxu0 0
    %880 = vmatprep.subr.bf16.mxu0 0
    %881 = vmatpush1.bf16.msra.mxu0 0
    %882 = vmatprep.subr.bf16.mxu0 0
    %883 = vmatpush1.bf16.msra.mxu0 0
    %884 = vmatprep.subr.bf16.mxu0 0
    %885 = vmatpush1.bf16.msra.mxu0 0
    %886 = vmatprep.subr.bf16.mxu0 0
    %887 = vmatpush1.bf16.msra.mxu0 0
    %888 = vmatprep.subr.bf16.mxu0 0
    %889 = vmatpush1.bf16.msra.mxu0 0
    %890 = vmatprep.subr.bf16.mxu0 0
    %891 = vmatpush1.bf16.msra.mxu0 0
    %892 = vmatprep.subr.bf16.mxu0 0
    %893 = vmatpush1.bf16.msra.mxu0 0
    %894 = vmatprep.subr.bf16.mxu0 0
    %895 = vmatpush1.bf16.msra.mxu0 0
    %896 = vmatprep.mubr.bf16.mxu0 0
    %897 = vmatmul.mubr.bf16.gmra.mrb[0].mxu0 %v862
    %v898 = vpop.f32.mrb[0].mxu0
    %v899 = vadd.f32 0.0, %v898
    %v900 = vpop.f32.mrb[0].mxu0
    %v901 = vpop.f32.mrb[0].mxu0
    %v902 = vpop.f32.mrb[0].mxu0
    %903 = vdwg.mxu0
    %v905 = vrot.slane %v899, 3
    %v906 = vrot.slane %v899, 4
    %907 = vrot.lane.b32.xlu0 %v905, 64
    %v908 = vpop.permute.xlu0 %907
    %909 = vrot.lane.b32.xlu0 %v906, 64
    %v910 = vpop.permute.xlu0 %909
    %v913 = vadd.f32 %v334, %v908
    %v914 = vadd.f32 %v337, %v910
    %v915 = vxor.u32 %v847, 2147483648
    %v916 = vxor.u32 %v848, 2147483648
    %v917 = vmul.f32 %v915, 1.442695
    %v918 = vpow.pop %v917
    %v919 = vmul.f32 %v916, 1.442695
    %v920 = vpow.pop %v919
    %v921 = vadd.f32 %v918, 1.0
    %v922 = vadd.f32 %v920, 1.0
    %v923 = vrcp.pop %v921
    %v924 = vmul.f32 1.0, %v923
    %v925 = vrcp.pop %v922
    %v926 = vmul.f32 1.0, %v925
    %v927 = vtanh.pop %v847
    %v928 = vtanh.pop %v848
    %v931 = vrot.slane %v720, 7
    %v932 = vrot.slane %v721, 7
    %v935 = vmul.f32 %v924, %v931
    %v936 = vmul.f32 %v926, %v932
    %939 = vrot.lane.b32.xlu0 %v927, 80
    %v940 = vpop.permute.xlu0 %939
    %941 = vrot.lane.b32.xlu0 %v928, 80
    %v942 = vpop.permute.xlu0 %941
    %v945 = vmul.f32 %v924, %v940
    %v946 = vmul.f32 %v926, %v942
    %949 = vrot.lane.b32.xlu0 %v945, 16
    %v950 = vpop.permute.xlu0 %949
    %951 = vrot.lane.b32.xlu0 %v946, 16
    %v952 = vpop.permute.xlu0 %951
    %v955 = vadd.f32 %v935, %v950
    %v956 = vadd.f32 %v936, %v952
    %v957 = vtanh.pop %v955
    %v958 = vtanh.pop %v956
    %961 = vrot.lane.b32.xlu0 %v957, 16
    %v962 = vpop.permute.xlu0 %961
    %963 = vrot.lane.b32.xlu0 %v958, 16
    %v964 = vpop.permute.xlu0 %963
    %v967 = vmul.f32 %v924, %v962
    %v968 = vmul.f32 %v926, %v964
    %v969 = vxor.u32 %v913, 2147483648
    %v970 = vxor.u32 %v914, 2147483648
    %v971 = vmul.f32 %v969, 1.442695
    %v972 = vpow.pop %v971
    %v973 = vmul.f32 %v970, 1.442695
    %v974 = vpow.pop %v973
    %v975 = vadd.f32 %v972, 1.0
    %v976 = vadd.f32 %v974, 1.0
    %v977 = vrcp.pop %v975
    %v978 = vmul.f32 1.0, %v977
    %v979 = vrcp.pop %v976
    %v980 = vmul.f32 1.0, %v979
    %v981 = vtanh.pop %v913
    %v982 = vtanh.pop %v914
    %v985 = vrot.slane %v774, 1
    %v986 = vrot.slane %v775, 1
    %v989 = vmul.f32 %v978, %v985
    %v990 = vmul.f32 %v980, %v986
    %993 = vrot.lane.b32.xlu0 %v981, 80
    %v994 = vpop.permute.xlu0 %993
    %995 = vrot.lane.b32.xlu0 %v982, 80
    %v996 = vpop.permute.xlu0 %995
    %v999 = vmul.f32 %v978, %v994
    %v1000 = vmul.f32 %v980, %v996
    %1003 = vrot.lane.b32.xlu0 %v999, 16
    %v1004 = vpop.permute.xlu0 %1003
    %1005 = vrot.lane.b32.xlu0 %v1000, 16
    %v1006 = vpop.permute.xlu0 %1005
    %v1009 = vadd.f32 %v989, %v1004
    %v1010 = vadd.f32 %v990, %v1006
    %v1011 = vtanh.pop %v1009
    %v1012 = vtanh.pop %v1010
    %1015 = vrot.lane.b32.xlu0 %v1011, 16
    %v1016 = vpop.permute.xlu0 %1015
    %1017 = vrot.lane.b32.xlu0 %v1012, 16
    %v1018 = vpop.permute.xlu0 %1017
    %v1021 = vmul.f32 %v978, %v1016
    %v1022 = vmul.f32 %v980, %v1018
    %v1023 = vpack.c.bf16 %v967, %v967
    %v1024 = vpack.c.bf16 %v968, %v968
    %v1027 = vunpack.c.l.b16 %v1023
    %v1028 = vunpack.c.l.b16 %v1024
    %v1029 = vrot.slane %v1027, 2
    %v1030 = vrot.slane %v1028, 1
    %v1031 = vsel %vm560, %v1030, %v1029
    %v1032 = vpack.c.b16 %v1031, %v1031
    %1033 = vrot.lane.b32.xlu0 %v1032, 96
    %v1034 = vpop.permute.xlu0 %1033
    %v1036 = vsel %vm350, %v1034, 0
    %1038 = vmatprep.subr.bf16.mxu0 0
    %1039 = vmatpush1.bf16.msra.mxu0 %v348
    %1040 = vmatprep.subr.bf16.mxu0 0
    %1041 = vmatpush1.bf16.msra.mxu0 0
    %1042 = vmatprep.subr.bf16.mxu0 0
    %1043 = vmatpush1.bf16.msra.mxu0 0
    %1044 = vmatprep.subr.bf16.mxu0 0
    %1045 = vmatpush1.bf16.msra.mxu0 0
    %1046 = vmatprep.subr.bf16.mxu0 0
    %1047 = vmatpush1.bf16.msra.mxu0 0
    %1048 = vmatprep.subr.bf16.mxu0 0
    %1049 = vmatpush1.bf16.msra.mxu0 0
    %1050 = vmatprep.subr.bf16.mxu0 0
    %1051 = vmatpush1.bf16.msra.mxu0 0
    %1052 = vmatprep.subr.bf16.mxu0 0
    %1053 = vmatpush1.bf16.msra.mxu0 0
    %1054 = vmatprep.subr.bf16.mxu0 0
    %1055 = vmatpush1.bf16.msra.mxu0 0
    %1056 = vmatprep.subr.bf16.mxu0 0
    %1057 = vmatpush1.bf16.msra.mxu0 0
    %1058 = vmatprep.subr.bf16.mxu0 0
    %1059 = vmatpush1.bf16.msra.mxu0 0
    %1060 = vmatprep.subr.bf16.mxu0 0
    %1061 = vmatpush1.bf16.msra.mxu0 0
    %1062 = vmatprep.subr.bf16.mxu0 0
    %1063 = vmatpush1.bf16.msra.mxu0 0
    %1064 = vmatprep.subr.bf16.mxu0 0
    %1065 = vmatpush1.bf16.msra.mxu0 0
    %1066 = vmatprep.subr.bf16.mxu0 0
    %1067 = vmatpush1.bf16.msra.mxu0 0
    %1068 = vmatprep.subr.bf16.mxu0 0
    %1069 = vmatpush1.bf16.msra.mxu0 0
    %1070 = vmatprep.mubr.bf16.mxu0 0
    %1071 = vmatmul.mubr.bf16.gmra.mrb[0].mxu0 %v1036
    %v1072 = vpop.f32.mrb[0].mxu0
    %v1073 = vadd.f32 0.0, %v1072
    %v1074 = vpop.f32.mrb[0].mxu0
    %v1075 = vpop.f32.mrb[0].mxu0
    %v1076 = vpop.f32.mrb[0].mxu0
    %1077 = vdwg.mxu0
    %v1079 = vrot.slane %v1073, 5
    %v1080 = vrot.slane %v1073, 6
    %v1083 = vadd.f32 %v334, %v1079
    %v1084 = vadd.f32 %v337, %v1080
    %v1085 = vpack.c.bf16 %v1021, %v1021
    %v1086 = vpack.c.bf16 %v1022, %v1022
    %v1089 = vunpack.c.l.b16 %v1085
    %v1090 = vunpack.c.l.b16 %v1086
    %v1091 = vrot.slane %v1089, 5
    %v1092 = vrot.slane %v1090, 4
    %v1093 = vsel %vm560, %v1092, %v1091
    %v1094 = vpack.c.b16 %v1093, %v1093
    %1095 = vrot.lane.b32.xlu0 %v1094, 32
    %v1096 = vpop.permute.xlu0 %1095
    %v1098 = vsel %vm350, %v1096, 0
    %1100 = vmatprep.subr.bf16.mxu0 0
    %1101 = vmatpush1.bf16.msra.mxu0 %v404
    %1102 = vmatprep.subr.bf16.mxu0 0
    %1103 = vmatpush1.bf16.msra.mxu0 0
    %1104 = vmatprep.subr.bf16.mxu0 0
    %1105 = vmatpush1.bf16.msra.mxu0 0
    %1106 = vmatprep.subr.bf16.mxu0 0
    %1107 = vmatpush1.bf16.msra.mxu0 0
    %1108 = vmatprep.subr.bf16.mxu0 0
    %1109 = vmatpush1.bf16.msra.mxu0 0
    %1110 = vmatprep.subr.bf16.mxu0 0
    %1111 = vmatpush1.bf16.msra.mxu0 0
    %1112 = vmatprep.subr.bf16.mxu0 0
    %1113 = vmatpush1.bf16.msra.mxu0 0
    %1114 = vmatprep.subr.bf16.mxu0 0
    %1115 = vmatpush1.bf16.msra.mxu0 0
    %1116 = vmatprep.subr.bf16.mxu0 0
    %1117 = vmatpush1.bf16.msra.mxu0 0
    %1118 = vmatprep.subr.bf16.mxu0 0
    %1119 = vmatpush1.bf16.msra.mxu0 0
    %1120 = vmatprep.subr.bf16.mxu0 0
    %1121 = vmatpush1.bf16.msra.mxu0 0
    %1122 = vmatprep.subr.bf16.mxu0 0
    %1123 = vmatpush1.bf16.msra.mxu0 0
    %1124 = vmatprep.subr.bf16.mxu0 0
    %1125 = vmatpush1.bf16.msra.mxu0 0
    %1126 = vmatprep.subr.bf16.mxu0 0
    %1127 = vmatpush1.bf16.msra.mxu0 0
    %1128 = vmatprep.subr.bf16.mxu0 0
    %1129 = vmatpush1.bf16.msra.mxu0 0
    %1130 = vmatprep.subr.bf16.mxu0 0
    %1131 = vmatpush1.bf16.msra.mxu0 0
    %1132 = vmatprep.mubr.bf16.mxu0 0
    %1133 = vmatmul.mubr.bf16.gmra.mrb[0].mxu0 %v1098
    %v1134 = vpop.f32.mrb[0].mxu0
    %v1135 = vadd.f32 0.0, %v1134
    %v1136 = vpop.f32.mrb[0].mxu0
    %v1137 = vpop.f32.mrb[0].mxu0
    %v1138 = vpop.f32.mrb[0].mxu0
    %1139 = vdwg.mxu0
    %v1141 = vrot.slane %v1135, 4
    %v1142 = vrot.slane %v1135, 5
    %1143 = vrot.lane.b32.xlu0 %v1141, 64
    %v1144 = vpop.permute.xlu0 %1143
    %1145 = vrot.lane.b32.xlu0 %v1142, 64
    %v1146 = vpop.permute.xlu0 %1145
    %v1149 = vadd.f32 %v334, %v1144
    %v1150 = vadd.f32 %v337, %v1146
    %v1151 = vxor.u32 %v1083, 2147483648
    %v1152 = vxor.u32 %v1084, 2147483648
    %v1153 = vmul.f32 %v1151, 1.442695
    %v1154 = vpow.pop %v1153
    %v1155 = vmul.f32 %v1152, 1.442695
    %v1156 = vpow.pop %v1155
    %v1157 = vadd.f32 %v1154, 1.0
    %v1158 = vadd.f32 %v1156, 1.0
    %v1159 = vrcp.pop %v1157
    %v1160 = vmul.f32 1.0, %v1159
    %v1161 = vrcp.pop %v1158
    %v1162 = vmul.f32 1.0, %v1161
    %v1163 = vtanh.pop %v1083
    %v1164 = vtanh.pop %v1084
    %v1167 = vrot.slane %v955, 7
    %v1168 = vrot.slane %v956, 7
    %v1171 = vmul.f32 %v1160, %v1167
    %v1172 = vmul.f32 %v1162, %v1168
    %1175 = vrot.lane.b32.xlu0 %v1163, 80
    %v1176 = vpop.permute.xlu0 %1175
    %1177 = vrot.lane.b32.xlu0 %v1164, 80
    %v1178 = vpop.permute.xlu0 %1177
    %v1181 = vmul.f32 %v1160, %v1176
    %v1182 = vmul.f32 %v1162, %v1178
    %1185 = vrot.lane.b32.xlu0 %v1181, 16
    %v1186 = vpop.permute.xlu0 %1185
    %1187 = vrot.lane.b32.xlu0 %v1182, 16
    %v1188 = vpop.permute.xlu0 %1187
    %v1191 = vadd.f32 %v1171, %v1186
    %v1192 = vadd.f32 %v1172, %v1188
    %v1193 = vtanh.pop %v1191
    %v1194 = vtanh.pop %v1192
    %1197 = vrot.lane.b32.xlu0 %v1193, 16
    %v1198 = vpop.permute.xlu0 %1197
    %1199 = vrot.lane.b32.xlu0 %v1194, 16
    %v1200 = vpop.permute.xlu0 %1199
    %v1203 = vmul.f32 %v1160, %v1198
    %v1204 = vmul.f32 %v1162, %v1200
    %v1205 = vxor.u32 %v1149, 2147483648
    %v1206 = vxor.u32 %v1150, 2147483648
    %v1207 = vmul.f32 %v1205, 1.442695
    %v1208 = vpow.pop %v1207
    %v1209 = vmul.f32 %v1206, 1.442695
    %v1210 = vpow.pop %v1209
    %v1211 = vadd.f32 %v1208, 1.0
    %v1212 = vadd.f32 %v1210, 1.0
    %v1213 = vrcp.pop %v1211
    %v1214 = vmul.f32 1.0, %v1213
    %v1215 = vrcp.pop %v1212
    %v1216 = vmul.f32 1.0, %v1215
    %v1217 = vtanh.pop %v1149
    %v1218 = vtanh.pop %v1150
    %v1221 = vrot.slane %v1009, 1
    %v1222 = vrot.slane %v1010, 1
    %v1225 = vmul.f32 %v1214, %v1221
    %v1226 = vmul.f32 %v1216, %v1222
    %1229 = vrot.lane.b32.xlu0 %v1217, 80
    %v1230 = vpop.permute.xlu0 %1229
    %1231 = vrot.lane.b32.xlu0 %v1218, 80
    %v1232 = vpop.permute.xlu0 %1231
    %v1235 = vmul.f32 %v1214, %v1230
    %v1236 = vmul.f32 %v1216, %v1232
    %1239 = vrot.lane.b32.xlu0 %v1235, 16
    %v1240 = vpop.permute.xlu0 %1239
    %1241 = vrot.lane.b32.xlu0 %v1236, 16
    %v1242 = vpop.permute.xlu0 %1241
    %v1245 = vadd.f32 %v1225, %v1240
    %v1246 = vadd.f32 %v1226, %v1242
    %v1247 = vtanh.pop %v1245
    %v1248 = vtanh.pop %v1246
    %1251 = vrot.lane.b32.xlu0 %v1247, 16
    %v1252 = vpop.permute.xlu0 %1251
    %1253 = vrot.lane.b32.xlu0 %v1248, 16
    %v1254 = vpop.permute.xlu0 %1253
    %v1257 = vmul.f32 %v1214, %v1252
    %v1258 = vmul.f32 %v1216, %v1254
    %v1259 = vpack.c.bf16 %v1203, %v1203
    %v1260 = vpack.c.bf16 %v1204, %v1204
    %v1263 = vunpack.c.l.b16 %v1259
    %v1264 = vunpack.c.l.b16 %v1260
    %v1265 = vrot.slane %v1263, 3
    %v1266 = vrot.slane %v1264, 2
    %v1267 = vsel %vm560, %v1266, %v1265
    %v1268 = vpack.c.b16 %v1267, %v1267
    %1269 = vrot.lane.b32.xlu0 %v1268, 96
    %v1270 = vpop.permute.xlu0 %1269
    %v1272 = vsel %vm350, %v1270, 0
    %1274 = vmatprep.subr.bf16.mxu0 0
    %1275 = vmatpush1.bf16.msra.mxu0 %v348
    %1276 = vmatprep.subr.bf16.mxu0 0
    %1277 = vmatpush1.bf16.msra.mxu0 0
    %1278 = vmatprep.subr.bf16.mxu0 0
    %1279 = vmatpush1.bf16.msra.mxu0 0
    %1280 = vmatprep.subr.bf16.mxu0 0
    %1281 = vmatpush1.bf16.msra.mxu0 0
    %1282 = vmatprep.subr.bf16.mxu0 0
    %1283 = vmatpush1.bf16.msra.mxu0 0
    %1284 = vmatprep.subr.bf16.mxu0 0
    %1285 = vmatpush1.bf16.msra.mxu0 0
    %1286 = vmatprep.subr.bf16.mxu0 0
    %1287 = vmatpush1.bf16.msra.mxu0 0
    %1288 = vmatprep.subr.bf16.mxu0 0
    %1289 = vmatpush1.bf16.msra.mxu0 0
    %1290 = vmatprep.subr.bf16.mxu0 0
    %1291 = vmatpush1.bf16.msra.mxu0 0
    %1292 = vmatprep.subr.bf16.mxu0 0
    %1293 = vmatpush1.bf16.msra.mxu0 0
    %1294 = vmatprep.subr.bf16.mxu0 0
    %1295 = vmatpush1.bf16.msra.mxu0 0
    %1296 = vmatprep.subr.bf16.mxu0 0
    %1297 = vmatpush1.bf16.msra.mxu0 0
    %1298 = vmatprep.subr.bf16.mxu0 0
    %1299 = vmatpush1.bf16.msra.mxu0 0
    %1300 = vmatprep.subr.bf16.mxu0 0
    %1301 = vmatpush1.bf16.msra.mxu0 0
    %1302 = vmatprep.subr.bf16.mxu0 0
    %1303 = vmatpush1.bf16.msra.mxu0 0
    %1304 = vmatprep.subr.bf16.mxu0 0
    %1305 = vmatpush1.bf16.msra.mxu0 0
    %1306 = vmatprep.mubr.bf16.mxu0 0
    %1307 = vmatmul.mubr.bf16.gmra.mrb[0].mxu0 %v1272
    %v1308 = vpop.f32.mrb[0].mxu0
    %v1309 = vadd.f32 0.0, %v1308
    %v1310 = vpop.f32.mrb[0].mxu0
    %v1311 = vpop.f32.mrb[0].mxu0
    %v1312 = vpop.f32.mrb[0].mxu0
    %1313 = vdwg.mxu0
    %v1315 = vrot.slane %v1309, 4
    %v1316 = vrot.slane %v1309, 5
    %v1319 = vadd.f32 %v334, %v1315
    %v1320 = vadd.f32 %v337, %v1316
    %v1321 = vpack.c.bf16 %v1257, %v1257
    %v1322 = vpack.c.bf16 %v1258, %v1258
    %v1325 = vunpack.c.l.b16 %v1321
    %v1326 = vunpack.c.l.b16 %v1322
    %v1327 = vrot.slane %v1325, 4
    %v1328 = vrot.slane %v1326, 3
    %v1329 = vsel %vm560, %v1328, %v1327
    %v1330 = vpack.c.b16 %v1329, %v1329
    %1331 = vrot.lane.b32.xlu0 %v1330, 32
    %v1332 = vpop.permute.xlu0 %1331
    %v1334 = vsel %vm350, %v1332, 0
    %1336 = vmatprep.subr.bf16.mxu0 0
    %1337 = vmatpush1.bf16.msra.mxu0 %v404
    %1338 = vmatprep.subr.bf16.mxu0 0
    %1339 = vmatpush1.bf16.msra.mxu0 0
    %1340 = vmatprep.subr.bf16.mxu0 0
    %1341 = vmatpush1.bf16.msra.mxu0 0
    %1342 = vmatprep.subr.bf16.mxu0 0
    %1343 = vmatpush1.bf16.msra.mxu0 0
    %1344 = vmatprep.subr.bf16.mxu0 0
    %1345 = vmatpush1.bf16.msra.mxu0 0
    %1346 = vmatprep.subr.bf16.mxu0 0
    %1347 = vmatpush1.bf16.msra.mxu0 0
    %1348 = vmatprep.subr.bf16.mxu0 0
    %1349 = vmatpush1.bf16.msra.mxu0 0
    %1350 = vmatprep.subr.bf16.mxu0 0
    %1351 = vmatpush1.bf16.msra.mxu0 0
    %1352 = vmatprep.subr.bf16.mxu0 0
    %1353 = vmatpush1.bf16.msra.mxu0 0
    %1354 = vmatprep.subr.bf16.mxu0 0
    %1355 = vmatpush1.bf16.msra.mxu0 0
    %1356 = vmatprep.subr.bf16.mxu0 0
    %1357 = vmatpush1.bf16.msra.mxu0 0
    %1358 = vmatprep.subr.bf16.mxu0 0
    %1359 = vmatpush1.bf16.msra.mxu0 0
    %1360 = vmatprep.subr.bf16.mxu0 0
    %1361 = vmatpush1.bf16.msra.mxu0 0
    %1362 = vmatprep.subr.bf16.mxu0 0
    %1363 = vmatpush1.bf16.msra.mxu0 0
    %1364 = vmatprep.subr.bf16.mxu0 0
    %1365 = vmatpush1.bf16.msra.mxu0 0
    %1366 = vmatprep.subr.bf16.mxu0 0
    %1367 = vmatpush1.bf16.msra.mxu0 0
    %1368 = vmatprep.mubr.bf16.mxu0 0
    %1369 = vmatmul.mubr.bf16.gmra.mrb[0].mxu0 %v1334
    %v1370 = vpop.f32.mrb[0].mxu0
    %v1371 = vadd.f32 0.0, %v1370
    %v1372 = vpop.f32.mrb[0].mxu0
    %v1373 = vpop.f32.mrb[0].mxu0
    %v1374 = vpop.f32.mrb[0].mxu0
    %1375 = vdwg.mxu0
    %v1377 = vrot.slane %v1371, 5
    %v1378 = vrot.slane %v1371, 6
    %1379 = vrot.lane.b32.xlu0 %v1377, 64
    %v1380 = vpop.permute.xlu0 %1379
    %1381 = vrot.lane.b32.xlu0 %v1378, 64
    %v1382 = vpop.permute.xlu0 %1381
    %v1385 = vadd.f32 %v334, %v1380
    %v1386 = vadd.f32 %v337, %v1382
    %v1387 = vxor.u32 %v1319, 2147483648
    %v1388 = vxor.u32 %v1320, 2147483648
    %v1389 = vmul.f32 %v1387, 1.442695
    %v1390 = vpow.pop %v1389
    %v1391 = vmul.f32 %v1388, 1.442695
    %v1392 = vpow.pop %v1391
    %v1393 = vadd.f32 %v1390, 1.0
    %v1394 = vadd.f32 %v1392, 1.0
    %v1395 = vrcp.pop %v1393
    %v1396 = vmul.f32 1.0, %v1395
    %v1397 = vrcp.pop %v1394
    %v1398 = vmul.f32 1.0, %v1397
    %v1399 = vtanh.pop %v1319
    %v1400 = vtanh.pop %v1320
    %v1403 = vrot.slane %v1191, 7
    %v1404 = vrot.slane %v1192, 7
    %v1407 = vmul.f32 %v1396, %v1403
    %v1408 = vmul.f32 %v1398, %v1404
    %1411 = vrot.lane.b32.xlu0 %v1399, 80
    %v1412 = vpop.permute.xlu0 %1411
    %1413 = vrot.lane.b32.xlu0 %v1400, 80
    %v1414 = vpop.permute.xlu0 %1413
    %v1417 = vmul.f32 %v1396, %v1412
    %v1418 = vmul.f32 %v1398, %v1414
    %1421 = vrot.lane.b32.xlu0 %v1417, 16
    %v1422 = vpop.permute.xlu0 %1421
    %1423 = vrot.lane.b32.xlu0 %v1418, 16
    %v1424 = vpop.permute.xlu0 %1423
    %v1427 = vadd.f32 %v1407, %v1422
    %v1428 = vadd.f32 %v1408, %v1424
    %v1429 = vtanh.pop %v1427
    %v1430 = vtanh.pop %v1428
    %1433 = vrot.lane.b32.xlu0 %v1429, 16
    %v1434 = vpop.permute.xlu0 %1433
    %1435 = vrot.lane.b32.xlu0 %v1430, 16
    %v1436 = vpop.permute.xlu0 %1435
    %v1439 = vmul.f32 %v1396, %v1434
    %v1440 = vmul.f32 %v1398, %v1436
    %v1441 = vxor.u32 %v1385, 2147483648
    %v1442 = vxor.u32 %v1386, 2147483648
    %v1443 = vmul.f32 %v1441, 1.442695
    %v1444 = vpow.pop %v1443
    %v1445 = vmul.f32 %v1442, 1.442695
    %v1446 = vpow.pop %v1445
    %v1447 = vadd.f32 %v1444, 1.0
    %v1448 = vadd.f32 %v1446, 1.0
    %v1449 = vrcp.pop %v1447
    %v1450 = vmul.f32 1.0, %v1449
    %v1451 = vrcp.pop %v1448
    %v1452 = vmul.f32 1.0, %v1451
    %v1453 = vtanh.pop %v1385
    %v1454 = vtanh.pop %v1386
    %v1457 = vrot.slane %v1245, 1
    %v1458 = vrot.slane %v1246, 1
    %v1461 = vmul.f32 %v1450, %v1457
    %v1462 = vmul.f32 %v1452, %v1458
    %1465 = vrot.lane.b32.xlu0 %v1453, 80
    %v1466 = vpop.permute.xlu0 %1465
    %1467 = vrot.lane.b32.xlu0 %v1454, 80
    %v1468 = vpop.permute.xlu0 %1467
    %v1471 = vmul.f32 %v1450, %v1466
    %v1472 = vmul.f32 %v1452, %v1468
    %1475 = vrot.lane.b32.xlu0 %v1471, 16
    %v1476 = vpop.permute.xlu0 %1475
    %1477 = vrot.lane.b32.xlu0 %v1472, 16
    %v1478 = vpop.permute.xlu0 %1477
    %v1481 = vadd.f32 %v1461, %v1476
    %v1482 = vadd.f32 %v1462, %v1478
    %v1483 = vtanh.pop %v1481
    %v1484 = vtanh.pop %v1482
    %1487 = vrot.lane.b32.xlu0 %v1483, 16
    %v1488 = vpop.permute.xlu0 %1487
    %1489 = vrot.lane.b32.xlu0 %v1484, 16
    %v1490 = vpop.permute.xlu0 %1489
    %v1493 = vmul.f32 %v1450, %v1488
    %v1494 = vmul.f32 %v1452, %v1490
    %v1495 = vpack.c.bf16 %v1439, %v1439
    %v1496 = vpack.c.bf16 %v1440, %v1440
    %v1499 = vunpack.c.l.b16 %v1495
    %v1500 = vunpack.c.l.b16 %v1496
    %v1501 = vrot.slane %v1499, 4
    %v1502 = vrot.slane %v1500, 3
    %v1503 = vsel %vm560, %v1502, %v1501
    %v1504 = vpack.c.b16 %v1503, %v1503
    %1505 = vrot.lane.b32.xlu0 %v1504, 96
    %v1506 = vpop.permute.xlu0 %1505
    %v1508 = vsel %vm350, %v1506, 0
    %1510 = vmatprep.subr.bf16.mxu0 0
    %1511 = vmatpush1.bf16.msra.mxu0 %v348
    %1512 = vmatprep.subr.bf16.mxu0 0
    %1513 = vmatpush1.bf16.msra.mxu0 0
    %1514 = vmatprep.subr.bf16.mxu0 0
    %1515 = vmatpush1.bf16.msra.mxu0 0
    %1516 = vmatprep.subr.bf16.mxu0 0
    %1517 = vmatpush1.bf16.msra.mxu0 0
    %1518 = vmatprep.subr.bf16.mxu0 0
    %1519 = vmatpush1.bf16.msra.mxu0 0
    %1520 = vmatprep.subr.bf16.mxu0 0
    %1521 = vmatpush1.bf16.msra.mxu0 0
    %1522 = vmatprep.subr.bf16.mxu0 0
    %1523 = vmatpush1.bf16.msra.mxu0 0
    %1524 = vmatprep.subr.bf16.mxu0 0
    %1525 = vmatpush1.bf16.msra.mxu0 0
    %1526 = vmatprep.subr.bf16.mxu0 0
    %1527 = vmatpush1.bf16.msra.mxu0 0
    %1528 = vmatprep.subr.bf16.mxu0 0
    %1529 = vmatpush1.bf16.msra.mxu0 0
    %1530 = vmatprep.subr.bf16.mxu0 0
    %1531 = vmatpush1.bf16.msra.mxu0 0
    %1532 = vmatprep.subr.bf16.mxu0 0
    %1533 = vmatpush1.bf16.msra.mxu0 0
    %1534 = vmatprep.subr.bf16.mxu0 0
    %1535 = vmatpush1.bf16.msra.mxu0 0
    %1536 = vmatprep.subr.bf16.mxu0 0
    %1537 = vmatpush1.bf16.msra.mxu0 0
    %1538 = vmatprep.subr.bf16.mxu0 0
    %1539 = vmatpush1.bf16.msra.mxu0 0
    %1540 = vmatprep.subr.bf16.mxu0 0
    %1541 = vmatpush1.bf16.msra.mxu0 0
    %1542 = vmatprep.mubr.bf16.mxu0 0
    %1543 = vmatmul.mubr.bf16.gmra.mrb[0].mxu0 %v1508
    %v1544 = vpop.f32.mrb[0].mxu0
    %v1545 = vadd.f32 0.0, %v1544
    %v1546 = vpop.f32.mrb[0].mxu0
    %v1547 = vpop.f32.mrb[0].mxu0
    %v1548 = vpop.f32.mrb[0].mxu0
    %1549 = vdwg.mxu0
    %v1551 = vrot.slane %v1545, 3
    %v1552 = vrot.slane %v1545, 4
    %v1555 = vadd.f32 %v334, %v1551
    %v1556 = vadd.f32 %v337, %v1552
    %v1557 = vpack.c.bf16 %v1493, %v1493
    %v1558 = vpack.c.bf16 %v1494, %v1494
    %v1561 = vunpack.c.l.b16 %v1557
    %v1562 = vunpack.c.l.b16 %v1558
    %v1563 = vrot.slane %v1561, 3
    %v1564 = vrot.slane %v1562, 2
    %v1565 = vsel %vm560, %v1564, %v1563
    %v1566 = vpack.c.b16 %v1565, %v1565
    %1567 = vrot.lane.b32.xlu0 %v1566, 32
    %v1568 = vpop.permute.xlu0 %1567
    %v1570 = vsel %vm350, %v1568, 0
    %1572 = vmatprep.subr.bf16.mxu0 0
    %1573 = vmatpush1.bf16.msra.mxu0 %v404
    %1574 = vmatprep.subr.bf16.mxu0 0
    %1575 = vmatpush1.bf16.msra.mxu0 0
    %1576 = vmatprep.subr.bf16.mxu0 0
    %1577 = vmatpush1.bf16.msra.mxu0 0
    %1578 = vmatprep.subr.bf16.mxu0 0
    %1579 = vmatpush1.bf16.msra.mxu0 0
    %1580 = vmatprep.subr.bf16.mxu0 0
    %1581 = vmatpush1.bf16.msra.mxu0 0
    %1582 = vmatprep.subr.bf16.mxu0 0
    %1583 = vmatpush1.bf16.msra.mxu0 0
    %1584 = vmatprep.subr.bf16.mxu0 0
    %1585 = vmatpush1.bf16.msra.mxu0 0
    %1586 = vmatprep.subr.bf16.mxu0 0
    %1587 = vmatpush1.bf16.msra.mxu0 0
    %1588 = vmatprep.subr.bf16.mxu0 0
    %1589 = vmatpush1.bf16.msra.mxu0 0
    %1590 = vmatprep.subr.bf16.mxu0 0
    %1591 = vmatpush1.bf16.msra.mxu0 0
    %1592 = vmatprep.subr.bf16.mxu0 0
    %1593 = vmatpush1.bf16.msra.mxu0 0
    %1594 = vmatprep.subr.bf16.mxu0 0
    %1595 = vmatpush1.bf16.msra.mxu0 0
    %1596 = vmatprep.subr.bf16.mxu0 0
    %1597 = vmatpush1.bf16.msra.mxu0 0
    %1598 = vmatprep.subr.bf16.mxu0 0
    %1599 = vmatpush1.bf16.msra.mxu0 0
    %1600 = vmatprep.subr.bf16.mxu0 0
    %1601 = vmatpush1.bf16.msra.mxu0 0
    %1602 = vmatprep.subr.bf16.mxu0 0
    %1603 = vmatpush1.bf16.msra.mxu0 0
    %1604 = vmatprep.mubr.bf16.mxu0 0
    %1605 = vmatmul.mubr.bf16.gmra.mrb[0].mxu0 %v1570
    %v1606 = vpop.f32.mrb[0].mxu0
    %v1607 = vadd.f32 0.0, %v1606
    %v1608 = vpop.f32.mrb[0].mxu0
    %v1609 = vpop.f32.mrb[0].mxu0
    %v1610 = vpop.f32.mrb[0].mxu0
    %1611 = vdwg.mxu0
    %v1613 = vrot.slane %v1607, 6
    %v1614 = vrot.slane %v1607, 7
    %1615 = vrot.lane.b32.xlu0 %v1613, 64
    %v1616 = vpop.permute.xlu0 %1615
    %1617 = vrot.lane.b32.xlu0 %v1614, 64
    %v1618 = vpop.permute.xlu0 %1617
    %v1621 = vadd.f32 %v334, %v1616
    %v1622 = vadd.f32 %v337, %v1618
    %v1623 = vxor.u32 %v1555, 2147483648
    %v1624 = vxor.u32 %v1556, 2147483648
    %v1625 = vmul.f32 %v1623, 1.442695
    %v1626 = vpow.pop %v1625
    %v1627 = vmul.f32 %v1624, 1.442695
    %v1628 = vpow.pop %v1627
    %v1629 = vadd.f32 %v1626, 1.0
    %v1630 = vadd.f32 %v1628, 1.0
    %v1631 = vrcp.pop %v1629
    %v1632 = vmul.f32 1.0, %v1631
    %v1633 = vrcp.pop %v1630
    %v1634 = vmul.f32 1.0, %v1633
    %v1635 = vtanh.pop %v1555
    %v1636 = vtanh.pop %v1556
    %v1639 = vrot.slane %v1427, 7
    %v1640 = vrot.slane %v1428, 7
    %v1643 = vmul.f32 %v1632, %v1639
    %v1644 = vmul.f32 %v1634, %v1640
    %1647 = vrot.lane.b32.xlu0 %v1635, 80
    %v1648 = vpop.permute.xlu0 %1647
    %1649 = vrot.lane.b32.xlu0 %v1636, 80
    %v1650 = vpop.permute.xlu0 %1649
    %v1653 = vmul.f32 %v1632, %v1648
    %v1654 = vmul.f32 %v1634, %v1650
    %1657 = vrot.lane.b32.xlu0 %v1653, 16
    %v1658 = vpop.permute.xlu0 %1657
    %1659 = vrot.lane.b32.xlu0 %v1654, 16
    %v1660 = vpop.permute.xlu0 %1659
    %v1663 = vadd.f32 %v1643, %v1658
    %v1664 = vadd.f32 %v1644, %v1660
    %v1665 = vtanh.pop %v1663
    %v1666 = vtanh.pop %v1664
    %1669 = vrot.lane.b32.xlu0 %v1665, 16
    %v1670 = vpop.permute.xlu0 %1669
    %1671 = vrot.lane.b32.xlu0 %v1666, 16
    %v1672 = vpop.permute.xlu0 %1671
    %v1675 = vmul.f32 %v1632, %v1670
    %v1676 = vmul.f32 %v1634, %v1672
    %v1677 = vxor.u32 %v1621, 2147483648
    %v1678 = vxor.u32 %v1622, 2147483648
    %v1679 = vmul.f32 %v1677, 1.442695
    %v1680 = vpow.pop %v1679
    %v1681 = vmul.f32 %v1678, 1.442695
    %v1682 = vpow.pop %v1681
    %v1683 = vadd.f32 %v1680, 1.0
    %v1684 = vadd.f32 %v1682, 1.0
    %v1685 = vrcp.pop %v1683
    %v1686 = vmul.f32 1.0, %v1685
    %v1687 = vrcp.pop %v1684
    %v1688 = vmul.f32 1.0, %v1687
    %v1689 = vtanh.pop %v1621
    %v1690 = vtanh.pop %v1622
    %v1693 = vrot.slane %v1481, 1
    %v1694 = vrot.slane %v1482, 1
    %v1697 = vmul.f32 %v1686, %v1693
    %v1698 = vmul.f32 %v1688, %v1694
    %1701 = vrot.lane.b32.xlu0 %v1689, 80
    %v1702 = vpop.permute.xlu0 %1701
    %1703 = vrot.lane.b32.xlu0 %v1690, 80
    %v1704 = vpop.permute.xlu0 %1703
    %v1707 = vmul.f32 %v1686, %v1702
    %v1708 = vmul.f32 %v1688, %v1704
    %1711 = vrot.lane.b32.xlu0 %v1707, 16
    %v1712 = vpop.permute.xlu0 %1711
    %1713 = vrot.lane.b32.xlu0 %v1708, 16
    %v1714 = vpop.permute.xlu0 %1713
    %v1717 = vadd.f32 %v1697, %v1712
    %v1718 = vadd.f32 %v1698, %v1714
    %v1719 = vtanh.pop %v1717
    %v1720 = vtanh.pop %v1718
    %1723 = vrot.lane.b32.xlu0 %v1719, 16
    %v1724 = vpop.permute.xlu0 %1723
    %1725 = vrot.lane.b32.xlu0 %v1720, 16
    %v1726 = vpop.permute.xlu0 %1725
    %v1729 = vmul.f32 %v1686, %v1724
    %v1730 = vmul.f32 %v1688, %v1726
    %v1731 = vpack.c.bf16 %v1675, %v1675
    %v1732 = vpack.c.bf16 %v1676, %v1676
    %v1735 = vunpack.c.l.b16 %v1731
    %v1736 = vunpack.c.l.b16 %v1732
    %v1737 = vrot.slane %v1735, 5
    %v1738 = vrot.slane %v1736, 4
    %v1739 = vsel %vm560, %v1738, %v1737
    %v1740 = vpack.c.b16 %v1739, %v1739
    %1741 = vrot.lane.b32.xlu0 %v1740, 96
    %v1742 = vpop.permute.xlu0 %1741
    %v1744 = vsel %vm350, %v1742, 0
    %1746 = vmatprep.subr.bf16.mxu0 0
    %1747 = vmatpush1.bf16.msra.mxu0 %v348
    %1748 = vmatprep.subr.bf16.mxu0 0
    %1749 = vmatpush1.bf16.msra.mxu0 0
    %1750 = vmatprep.subr.bf16.mxu0 0
    %1751 = vmatpush1.bf16.msra.mxu0 0
    %1752 = vmatprep.subr.bf16.mxu0 0
    %1753 = vmatpush1.bf16.msra.mxu0 0
    %1754 = vmatprep.subr.bf16.mxu0 0
    %1755 = vmatpush1.bf16.msra.mxu0 0
    %1756 = vmatprep.subr.bf16.mxu0 0
    %1757 = vmatpush1.bf16.msra.mxu0 0
    %1758 = vmatprep.subr.bf16.mxu0 0
    %1759 = vmatpush1.bf16.msra.mxu0 0
    %1760 = vmatprep.subr.bf16.mxu0 0
    %1761 = vmatpush1.bf16.msra.mxu0 0
    %1762 = vmatprep.subr.bf16.mxu0 0
    %1763 = vmatpush1.bf16.msra.mxu0 0
    %1764 = vmatprep.subr.bf16.mxu0 0
    %1765 = vmatpush1.bf16.msra.mxu0 0
    %1766 = vmatprep.subr.bf16.mxu0 0
    %1767 = vmatpush1.bf16.msra.mxu0 0
    %1768 = vmatprep.subr.bf16.mxu0 0
    %1769 = vmatpush1.bf16.msra.mxu0 0
    %1770 = vmatprep.subr.bf16.mxu0 0
    %1771 = vmatpush1.bf16.msra.mxu0 0
    %1772 = vmatprep.subr.bf16.mxu0 0
    %1773 = vmatpush1.bf16.msra.mxu0 0
    %1774 = vmatprep.subr.bf16.mxu0 0
    %1775 = vmatpush1.bf16.msra.mxu0 0
    %1776 = vmatprep.subr.bf16.mxu0 0
    %1777 = vmatpush1.bf16.msra.mxu0 0
    %1778 = vmatprep.mubr.bf16.mxu0 0
    %1779 = vmatmul.mubr.bf16.gmra.mrb[0].mxu0 %v1744
    %v1780 = vpop.f32.mrb[0].mxu0
    %v1781 = vadd.f32 0.0, %v1780
    %v1782 = vpop.f32.mrb[0].mxu0
    %v1783 = vpop.f32.mrb[0].mxu0
    %v1784 = vpop.f32.mrb[0].mxu0
    %1785 = vdwg.mxu0
    %v1787 = vrot.slane %v1781, 2
    %v1788 = vrot.slane %v1781, 3
    %v1791 = vadd.f32 %v334, %v1787
    %v1792 = vadd.f32 %v337, %v1788
    %v1793 = vpack.c.bf16 %v1729, %v1729
    %v1794 = vpack.c.bf16 %v1730, %v1730
    %v1797 = vunpack.c.l.b16 %v1793
    %v1798 = vunpack.c.l.b16 %v1794
    %v1799 = vrot.slane %v1797, 2
    %v1800 = vrot.slane %v1798, 1
    %v1801 = vsel %vm560, %v1800, %v1799
    %v1802 = vpack.c.b16 %v1801, %v1801
    %1803 = vrot.lane.b32.xlu0 %v1802, 32
    %v1804 = vpop.permute.xlu0 %1803
    %v1806 = vsel %vm350, %v1804, 0
    %1808 = vmatprep.subr.bf16.mxu0 0
    %1809 = vmatpush1.bf16.msra.mxu0 %v404
    %1810 = vmatprep.subr.bf16.mxu0 0
    %1811 = vmatpush1.bf16.msra.mxu0 0
    %1812 = vmatprep.subr.bf16.mxu0 0
    %1813 = vmatpush1.bf16.msra.mxu0 0
    %1814 = vmatprep.subr.bf16.mxu0 0
    %1815 = vmatpush1.bf16.msra.mxu0 0
    %1816 = vmatprep.subr.bf16.mxu0 0
    %1817 = vmatpush1.bf16.msra.mxu0 0
    %1818 = vmatprep.subr.bf16.mxu0 0
    %1819 = vmatpush1.bf16.msra.mxu0 0
    %1820 = vmatprep.subr.bf16.mxu0 0
    %1821 = vmatpush1.bf16.msra.mxu0 0
    %1822 = vmatprep.subr.bf16.mxu0 0
    %1823 = vmatpush1.bf16.msra.mxu0 0
    %1824 = vmatprep.subr.bf16.mxu0 0
    %1825 = vmatpush1.bf16.msra.mxu0 0
    %1826 = vmatprep.subr.bf16.mxu0 0
    %1827 = vmatpush1.bf16.msra.mxu0 0
    %1828 = vmatprep.subr.bf16.mxu0 0
    %1829 = vmatpush1.bf16.msra.mxu0 0
    %1830 = vmatprep.subr.bf16.mxu0 0
    %1831 = vmatpush1.bf16.msra.mxu0 0
    %1832 = vmatprep.subr.bf16.mxu0 0
    %1833 = vmatpush1.bf16.msra.mxu0 0
    %1834 = vmatprep.subr.bf16.mxu0 0
    %1835 = vmatpush1.bf16.msra.mxu0 0
    %1836 = vmatprep.subr.bf16.mxu0 0
    %1837 = vmatpush1.bf16.msra.mxu0 0
    %1838 = vmatprep.subr.bf16.mxu0 0
    %1839 = vmatpush1.bf16.msra.mxu0 0
    %1840 = vmatprep.mubr.bf16.mxu0 0
    %1841 = vmatmul.mubr.bf16.gmra.mrb[0].mxu0 %v1806
    %v1842 = vpop.f32.mrb[0].mxu0
    %v1843 = vadd.f32 0.0, %v1842
    %v1844 = vpop.f32.mrb[0].mxu0
    %v1845 = vpop.f32.mrb[0].mxu0
    %v1846 = vpop.f32.mrb[0].mxu0
    %1847 = vdwg.mxu0
    %v1849 = vrot.slane %v1843, 7
    %1850 = vrot.lane.b32.xlu0 %v1849, 64
    %v1851 = vpop.permute.xlu0 %1850
    %1852 = vrot.lane.b32.xlu0 %v1843, 64
    %v1853 = vpop.permute.xlu0 %1852
    %v1856 = vadd.f32 %v334, %v1851
    %v1857 = vadd.f32 %v337, %v1853
    %v1858 = vxor.u32 %v1791, 2147483648
    %v1859 = vxor.u32 %v1792, 2147483648
    %v1860 = vmul.f32 %v1858, 1.442695
    %v1861 = vpow.pop %v1860
    %v1862 = vmul.f32 %v1859, 1.442695
    %v1863 = vpow.pop %v1862
    %v1864 = vadd.f32 %v1861, 1.0
    %v1865 = vadd.f32 %v1863, 1.0
    %v1866 = vrcp.pop %v1864
    %v1867 = vmul.f32 1.0, %v1866
    %v1868 = vrcp.pop %v1865
    %v1869 = vmul.f32 1.0, %v1868
    %v1870 = vtanh.pop %v1791
    %v1871 = vtanh.pop %v1792
    %v1874 = vrot.slane %v1663, 7
    %v1875 = vrot.slane %v1664, 7
    %v1878 = vmul.f32 %v1867, %v1874
    %v1879 = vmul.f32 %v1869, %v1875
    %1882 = vrot.lane.b32.xlu0 %v1870, 80
    %v1883 = vpop.permute.xlu0 %1882
    %1884 = vrot.lane.b32.xlu0 %v1871, 80
    %v1885 = vpop.permute.xlu0 %1884
    %v1888 = vmul.f32 %v1867, %v1883
    %v1889 = vmul.f32 %v1869, %v1885
    %1892 = vrot.lane.b32.xlu0 %v1888, 16
    %v1893 = vpop.permute.xlu0 %1892
    %1894 = vrot.lane.b32.xlu0 %v1889, 16
    %v1895 = vpop.permute.xlu0 %1894
    %v1898 = vadd.f32 %v1878, %v1893
    %v1899 = vadd.f32 %v1879, %v1895
    %v1900 = vtanh.pop %v1898
    %v1901 = vtanh.pop %v1899
    %1904 = vrot.lane.b32.xlu0 %v1900, 16
    %v1905 = vpop.permute.xlu0 %1904
    %1906 = vrot.lane.b32.xlu0 %v1901, 16
    %v1907 = vpop.permute.xlu0 %1906
    %v1910 = vmul.f32 %v1867, %v1905
    %v1911 = vmul.f32 %v1869, %v1907
    %v1912 = vxor.u32 %v1856, 2147483648
    %v1913 = vxor.u32 %v1857, 2147483648
    %v1914 = vmul.f32 %v1912, 1.442695
    %v1915 = vpow.pop %v1914
    %v1916 = vmul.f32 %v1913, 1.442695
    %v1917 = vpow.pop %v1916
    %v1918 = vadd.f32 %v1915, 1.0
    %v1919 = vadd.f32 %v1917, 1.0
    %v1920 = vrcp.pop %v1918
    %v1921 = vmul.f32 1.0, %v1920
    %v1922 = vrcp.pop %v1919
    %v1923 = vmul.f32 1.0, %v1922
    %v1924 = vtanh.pop %v1856
    %v1925 = vtanh.pop %v1857
    %v1928 = vrot.slane %v1717, 1
    %v1929 = vrot.slane %v1718, 1
    %v1932 = vmul.f32 %v1921, %v1928
    %v1933 = vmul.f32 %v1923, %v1929
    %1936 = vrot.lane.b32.xlu0 %v1924, 80
    %v1937 = vpop.permute.xlu0 %1936
    %1938 = vrot.lane.b32.xlu0 %v1925, 80
    %v1939 = vpop.permute.xlu0 %1938
    %v1942 = vmul.f32 %v1921, %v1937
    %v1943 = vmul.f32 %v1923, %v1939
    %1946 = vrot.lane.b32.xlu0 %v1942, 16
    %v1947 = vpop.permute.xlu0 %1946
    %1948 = vrot.lane.b32.xlu0 %v1943, 16
    %v1949 = vpop.permute.xlu0 %1948
    %v1952 = vadd.f32 %v1932, %v1947
    %v1953 = vadd.f32 %v1933, %v1949
    %v1954 = vtanh.pop %v1952
    %v1955 = vtanh.pop %v1953
    %1958 = vrot.lane.b32.xlu0 %v1954, 16
    %v1959 = vpop.permute.xlu0 %1958
    %1960 = vrot.lane.b32.xlu0 %v1955, 16
    %v1961 = vpop.permute.xlu0 %1960
    %v1964 = vmul.f32 %v1921, %v1959
    %v1965 = vmul.f32 %v1923, %v1961
    %v1966 = vpack.c.bf16 %v1910, %v1910
    %v1967 = vpack.c.bf16 %v1911, %v1911
    %v1970 = vunpack.c.l.b16 %v1966
    %v1971 = vunpack.c.l.b16 %v1967
    %v1972 = vrot.slane %v1970, 6
    %v1973 = vrot.slane %v1971, 5
    %v1974 = vsel %vm560, %v1973, %v1972
    %v1975 = vpack.c.b16 %v1974, %v1974
    %1976 = vrot.lane.b32.xlu0 %v1975, 96
    %v1977 = vpop.permute.xlu0 %1976
    %v1979 = vsel %vm350, %v1977, 0
    %1981 = vmatprep.subr.bf16.mxu0 0
    %1982 = vmatpush1.bf16.msra.mxu0 %v348
    %1983 = vmatprep.subr.bf16.mxu0 0
    %1984 = vmatpush1.bf16.msra.mxu0 0
    %1985 = vmatprep.subr.bf16.mxu0 0
    %1986 = vmatpush1.bf16.msra.mxu0 0
    %1987 = vmatprep.subr.bf16.mxu0 0
    %1988 = vmatpush1.bf16.msra.mxu0 0
    %1989 = vmatprep.subr.bf16.mxu0 0
    %1990 = vmatpush1.bf16.msra.mxu0 0
    %1991 = vmatprep.subr.bf16.mxu0 0
    %1992 = vmatpush1.bf16.msra.mxu0 0
    %1993 = vmatprep.subr.bf16.mxu0 0
    %1994 = vmatpush1.bf16.msra.mxu0 0
    %1995 = vmatprep.subr.bf16.mxu0 0
    %1996 = vmatpush1.bf16.msra.mxu0 0
    %1997 = vmatprep.subr.bf16.mxu0 0
    %1998 = vmatpush1.bf16.msra.mxu0 0
    %1999 = vmatprep.subr.bf16.mxu0 0
    %2000 = vmatpush1.bf16.msra.mxu0 0
    %2001 = vmatprep.subr.bf16.mxu0 0
    %2002 = vmatpush1.bf16.msra.mxu0 0
    %2003 = vmatprep.subr.bf16.mxu0 0
    %2004 = vmatpush1.bf16.msra.mxu0 0
    %2005 = vmatprep.subr.bf16.mxu0 0
    %2006 = vmatpush1.bf16.msra.mxu0 0
    %2007 = vmatprep.subr.bf16.mxu0 0
    %2008 = vmatpush1.bf16.msra.mxu0 0
    %2009 = vmatprep.subr.bf16.mxu0 0
    %2010 = vmatpush1.bf16.msra.mxu0 0
    %2011 = vmatprep.subr.bf16.mxu0 0
    %2012 = vmatpush1.bf16.msra.mxu0 0
    %2013 = vmatprep.mubr.bf16.mxu0 0
    %2014 = vmatmul.mubr.bf16.gmra.mrb[0].mxu0 %v1979
    %v2015 = vpop.f32.mrb[0].mxu0
    %v2016 = vadd.f32 0.0, %v2015
    %v2017 = vpop.f32.mrb[0].mxu0
    %v2018 = vpop.f32.mrb[0].mxu0
    %v2019 = vpop.f32.mrb[0].mxu0
    %2020 = vdwg.mxu0
    %v2022 = vrot.slane %v2016, 1
    %v2023 = vrot.slane %v2016, 2
    %v2026 = vadd.f32 %v334, %v2022
    %v2027 = vadd.f32 %v337, %v2023
    %v2028 = vpack.c.bf16 %v1964, %v1964
    %v2029 = vpack.c.bf16 %v1965, %v1965
    %v2032 = vunpack.c.l.b16 %v2028
    %v2033 = vunpack.c.l.b16 %v2029
    %v2034 = vrot.slane %v2032, 1
    %v2035 = vsel %vm560, %v2033, %v2034
    %v2036 = vpack.c.b16 %v2035, %v2035
    %2037 = vrot.lane.b32.xlu0 %v2036, 32
    %v2038 = vpop.permute.xlu0 %2037
    %v2040 = vsel %vm350, %v2038, 0
    %2042 = vmatprep.subr.bf16.mxu0 0
    %2043 = vmatpush1.bf16.msra.mxu0 %v404
    %2044 = vmatprep.subr.bf16.mxu0 0
    %2045 = vmatpush1.bf16.msra.mxu0 0
    %2046 = vmatprep.subr.bf16.mxu0 0
    %2047 = vmatpush1.bf16.msra.mxu0 0
    %2048 = vmatprep.subr.bf16.mxu0 0
    %2049 = vmatpush1.bf16.msra.mxu0 0
    %2050 = vmatprep.subr.bf16.mxu0 0
    %2051 = vmatpush1.bf16.msra.mxu0 0
    %2052 = vmatprep.subr.bf16.mxu0 0
    %2053 = vmatpush1.bf16.msra.mxu0 0
    %2054 = vmatprep.subr.bf16.mxu0 0
    %2055 = vmatpush1.bf16.msra.mxu0 0
    %2056 = vmatprep.subr.bf16.mxu0 0
    %2057 = vmatpush1.bf16.msra.mxu0 0
    %2058 = vmatprep.subr.bf16.mxu0 0
    %2059 = vmatpush1.bf16.msra.mxu0 0
    %2060 = vmatprep.subr.bf16.mxu0 0
    %2061 = vmatpush1.bf16.msra.mxu0 0
    %2062 = vmatprep.subr.bf16.mxu0 0
    %2063 = vmatpush1.bf16.msra.mxu0 0
    %2064 = vmatprep.subr.bf16.mxu0 0
    %2065 = vmatpush1.bf16.msra.mxu0 0
    %2066 = vmatprep.subr.bf16.mxu0 0
    %2067 = vmatpush1.bf16.msra.mxu0 0
    %2068 = vmatprep.subr.bf16.mxu0 0
    %2069 = vmatpush1.bf16.msra.mxu0 0
    %2070 = vmatprep.subr.bf16.mxu0 0
    %2071 = vmatpush1.bf16.msra.mxu0 0
    %2072 = vmatprep.subr.bf16.mxu0 0
    %2073 = vmatpush1.bf16.msra.mxu0 0
    %2074 = vmatprep.mubr.bf16.mxu0 0
    %2075 = vmatmul.mubr.bf16.gmra.mrb[0].mxu0 %v2040
    %v2076 = vpop.f32.mrb[0].mxu0
    %v2077 = vadd.f32 0.0, %v2076
    %v2078 = vpop.f32.mrb[0].mxu0
    %v2079 = vpop.f32.mrb[0].mxu0
    %v2080 = vpop.f32.mrb[0].mxu0
    %2081 = vdwg.mxu0
    %v2083 = vrot.slane %v2077, 1
    %2084 = vrot.lane.b32.xlu0 %v2077, 64
    %v2085 = vpop.permute.xlu0 %2084
    %2086 = vrot.lane.b32.xlu0 %v2083, 64
    %v2087 = vpop.permute.xlu0 %2086
    %v2090 = vadd.f32 %v334, %v2085
    %v2091 = vadd.f32 %v337, %v2087
    %v2092 = vxor.u32 %v2026, 2147483648
    %v2093 = vxor.u32 %v2027, 2147483648
    %v2094 = vmul.f32 %v2092, 1.442695
    %v2095 = vpow.pop %v2094
    %v2096 = vmul.f32 %v2093, 1.442695
    %v2097 = vpow.pop %v2096
    %v2098 = vadd.f32 %v2095, 1.0
    %v2099 = vadd.f32 %v2097, 1.0
    %v2100 = vrcp.pop %v2098
    %v2101 = vmul.f32 1.0, %v2100
    %v2102 = vrcp.pop %v2099
    %v2103 = vmul.f32 1.0, %v2102
    %v2104 = vtanh.pop %v2026
    %v2105 = vtanh.pop %v2027
    %v2108 = vrot.slane %v1898, 7
    %v2109 = vrot.slane %v1899, 7
    %v2112 = vmul.f32 %v2101, %v2108
    %v2113 = vmul.f32 %v2103, %v2109
    %2116 = vrot.lane.b32.xlu0 %v2104, 80
    %v2117 = vpop.permute.xlu0 %2116
    %2118 = vrot.lane.b32.xlu0 %v2105, 80
    %v2119 = vpop.permute.xlu0 %2118
    %v2122 = vmul.f32 %v2101, %v2117
    %v2123 = vmul.f32 %v2103, %v2119
    %2126 = vrot.lane.b32.xlu0 %v2122, 16
    %v2127 = vpop.permute.xlu0 %2126
    %2128 = vrot.lane.b32.xlu0 %v2123, 16
    %v2129 = vpop.permute.xlu0 %2128
    %v2132 = vadd.f32 %v2112, %v2127
    %v2133 = vadd.f32 %v2113, %v2129
    %v2134 = vtanh.pop %v2132
    %v2135 = vtanh.pop %v2133
    %2138 = vrot.lane.b32.xlu0 %v2134, 16
    %v2139 = vpop.permute.xlu0 %2138
    %2140 = vrot.lane.b32.xlu0 %v2135, 16
    %v2141 = vpop.permute.xlu0 %2140
    %v2144 = vmul.f32 %v2101, %v2139
    %v2145 = vmul.f32 %v2103, %v2141
    %v2146 = vxor.u32 %v2090, 2147483648
    %v2147 = vxor.u32 %v2091, 2147483648
    %v2148 = vmul.f32 %v2146, 1.442695
    %v2149 = vpow.pop %v2148
    %v2150 = vmul.f32 %v2147, 1.442695
    %v2151 = vpow.pop %v2150
    %v2152 = vadd.f32 %v2149, 1.0
    %v2153 = vadd.f32 %v2151, 1.0
    %v2154 = vrcp.pop %v2152
    %v2155 = vmul.f32 1.0, %v2154
    %v2156 = vrcp.pop %v2153
    %v2157 = vmul.f32 1.0, %v2156
    %v2158 = vtanh.pop %v2090
    %v2159 = vtanh.pop %v2091
    %v2162 = vrot.slane %v1952, 1
    %v2163 = vrot.slane %v1953, 1
    %v2166 = vmul.f32 %v2155, %v2162
    %v2167 = vmul.f32 %v2157, %v2163
    %2170 = vrot.lane.b32.xlu0 %v2158, 80
    %v2171 = vpop.permute.xlu0 %2170
    %2172 = vrot.lane.b32.xlu0 %v2159, 80
    %v2173 = vpop.permute.xlu0 %2172
    %v2176 = vmul.f32 %v2155, %v2171
    %v2177 = vmul.f32 %v2157, %v2173
    %2180 = vrot.lane.b32.xlu0 %v2176, 16
    %v2181 = vpop.permute.xlu0 %2180
    %2182 = vrot.lane.b32.xlu0 %v2177, 16
    %v2183 = vpop.permute.xlu0 %2182
    %v2186 = vadd.f32 %v2166, %v2181
    %v2187 = vadd.f32 %v2167, %v2183
    %v2188 = vtanh.pop %v2186
    %v2189 = vtanh.pop %v2187
    %2192 = vrot.lane.b32.xlu0 %v2188, 16
    %v2193 = vpop.permute.xlu0 %2192
    %2194 = vrot.lane.b32.xlu0 %v2189, 16
    %v2195 = vpop.permute.xlu0 %2194
    %v2198 = vmul.f32 %v2155, %v2193
    %v2199 = vmul.f32 %v2157, %v2195
    %vm2200 = vcmask 1040384
    %v2201 = vsel %vm2200, %v503, %v732
    %v2202 = vsel %vm2200, %v504, %v733
    %vm2203 = vcmask 1041408
    %v2204 = vsel %vm2203, %v2201, %v967
    %v2205 = vsel %vm2203, %v2202, %v968
    %vm2206 = vcmask 1042432
    %v2207 = vsel %vm2206, %v2204, %v1203
    %v2208 = vsel %vm2206, %v2205, %v1204
    %vm2209 = vcmask 1043456
    %v2210 = vsel %vm2209, %v2207, %v1439
    %v2211 = vsel %vm2209, %v2208, %v1440
    %vm2212 = vcmask 1044480
    %v2213 = vsel %vm2212, %v2210, %v1675
    %v2214 = vsel %vm2212, %v2211, %v1676
    %vm2215 = vcmask 1045504
    %v2216 = vsel %vm2215, %v2213, %v1910
    %v2217 = vsel %vm2215, %v2214, %v1911
    %vm2218 = vcmask 1046528
    %v2219 = vsel %vm2218, %v2216, %v2144
    %v2220 = vsel %vm2218, %v2217, %v2145
    %v2221 = vpack.c.bf16 %v2219, %v2219
    %v2222 = vpack.c.bf16 %v2220, %v2220
    %v2223 = vsel %vm2200, %v2198, %v1964
    %v2224 = vsel %vm2200, %v2199, %v1965
    %v2225 = vsel %vm2203, %v2223, %v1729
    %v2226 = vsel %vm2203, %v2224, %v1730
    %v2227 = vsel %vm2206, %v2225, %v1493
    %v2228 = vsel %vm2206, %v2226, %v1494
    %v2229 = vsel %vm2209, %v2227, %v1257
    %v2230 = vsel %vm2209, %v2228, %v1258
    %v2231 = vsel %vm2212, %v2229, %v1021
    %v2232 = vsel %vm2212, %v2230, %v1022
    %v2233 = vsel %vm2215, %v2231, %v786
    %v2234 = vsel %vm2215, %v2232, %v787
    %v2235 = vsel %vm2218, %v2233, %v551
    %v2236 = vsel %vm2218, %v2234, %v552
    %v2237 = vpack.c.bf16 %v2235, %v2235
    %v2238 = vpack.c.bf16 %v2236, %v2236
    %v2239 = vld [vmem:[%s2] sm:$0xf]
    %v2240 = vld [vmem:[%s2 + $0x4] sm:$0xf]
    %2243 = vrot.lane.b32.xlu0 %v2221, 96
    %v2244 = vpop.permute.xlu0 %2243
    %2245 = vrot.lane.b32.xlu0 %v2222, 96
    %v2246 = vpop.permute.xlu0 %2245
    %2249 = vrot.lane.b32.xlu0 %v2237, 48
    %v2250 = vpop.permute.xlu0 %2249
    %2251 = vrot.lane.b32.xlu0 %v2238, 48
    %v2252 = vpop.permute.xlu0 %2251
    %v2255 = vunpack.c.l.b16 %v2239
    %v2256 = vunpack.c.l.b16 %v2240
    %v2257 = vpack.c.b16 %v2255, %v2255
    %v2258 = vpack.c.b16 %v2256, %v2256
    %2259 = vrot.lane.b32.xlu0 %v2257, 32
    %v2260 = vpop.permute.xlu0 %2259
    %2261 = vrot.lane.b32.xlu0 %v2258, 32
    %v2262 = vpop.permute.xlu0 %2261
    %v2265 = vsel %vm350, %v2244, %v2250
    %v2268 = vsel %vm350, %v2246, %v2252
    %v2270 = vsel %vm295, %v2265, %v2260
    %v2272 = vsel %vm295, %v2268, %v2262
    %v2273 = vld [vmem:[%s7] sm:$0xf]
    %v2274 = vld [vmem:[%s7 + $0x4] sm:$0xf]
    %v2275 = vld [vmem:[%s7 + $0x8] sm:$0xf]
    %v2276 = vld [vmem:[%s7 + $0xc] sm:$0xf]
    %v2277 = vld [vmem:[%s7 + $0x10] sm:$0xf]
    %v2278 = vld [vmem:[%s7 + $0x14] sm:$0xf]
    %v2279 = vld [vmem:[%s7 + $0x18] sm:$0xf]
    %v2280 = vld [vmem:[%s7 + $0x1c] sm:$0xf]
    %v2281 = vld [vmem:[%s8] sm:$0x1]
    %v2283 = vlaneseq
    %v2284 = vshrl.u32 %v2283, 7
    %v2285 = vsub.s32 0, %v2284
    %v2286 = vrot.slane %v2281, %v2285
    %v2290 = vunpack.c.l.b16 %v2270
    %v2291 = vunpack.c.l.b16 %v2272
    %v2292 = vpack.c.b16 %v2291, %v2290
    %v2301 = vunpack.c.l.b16 %v2273
    %v2302 = vunpack.c.l.b16 %v2274
    %v2303 = vunpack.c.l.b16 %v2275
    %v2304 = vunpack.c.l.b16 %v2276
    %v2305 = vunpack.c.l.b16 %v2277
    %v2306 = vunpack.c.l.b16 %v2278
    %v2307 = vunpack.c.l.b16 %v2279
    %v2308 = vunpack.c.l.b16 %v2280
    %v2309 = vpack.c.b16 %v2302, %v2301
    %v2310 = vpack.c.b16 %v2304, %v2303
    %v2311 = vpack.c.b16 %v2306, %v2305
    %v2312 = vpack.c.b16 %v2308, %v2307
    %vm2317 = vcmask 523264
    %v2319 = vsel %vm2317, %v2292, 0
    %2321 = vmatprep.subr.bf16.mxu0 0
    %2322 = vmatpush1.bf16.msra.mxu0 %v2309
    %2323 = vmatprep.subr.bf16.mxu0 0
    %2324 = vmatpush1.bf16.msra.mxu0 %v2310
    %2325 = vmatprep.subr.bf16.mxu0 0
    %2326 = vmatpush1.bf16.msra.mxu0 %v2311
    %2327 = vmatprep.subr.bf16.mxu0 0
    %2328 = vmatpush1.bf16.msra.mxu0 %v2312
    %2329 = vmatprep.subr.bf16.mxu0 0
    %2330 = vmatpush1.bf16.msra.mxu0 0
    %2331 = vmatprep.subr.bf16.mxu0 0
    %2332 = vmatpush1.bf16.msra.mxu0 0
    %2333 = vmatprep.subr.bf16.mxu0 0
    %2334 = vmatpush1.bf16.msra.mxu0 0
    %2335 = vmatprep.subr.bf16.mxu0 0
    %2336 = vmatpush1.bf16.msra.mxu0 0
    %2337 = vmatprep.subr.bf16.mxu0 0
    %2338 = vmatpush1.bf16.msra.mxu0 0
    %2339 = vmatprep.subr.bf16.mxu0 0
    %2340 = vmatpush1.bf16.msra.mxu0 0
    %2341 = vmatprep.subr.bf16.mxu0 0
    %2342 = vmatpush1.bf16.msra.mxu0 0
    %2343 = vmatprep.subr.bf16.mxu0 0
    %2344 = vmatpush1.bf16.msra.mxu0 0
    %2345 = vmatprep.subr.bf16.mxu0 0
    %2346 = vmatpush1.bf16.msra.mxu0 0
    %2347 = vmatprep.subr.bf16.mxu0 0
    %2348 = vmatpush1.bf16.msra.mxu0 0
    %2349 = vmatprep.subr.bf16.mxu0 0
    %2350 = vmatpush1.bf16.msra.mxu0 0
    %2351 = vmatprep.subr.bf16.mxu0 0
    %2352 = vmatpush1.bf16.msra.mxu0 0
    %2353 = vmatprep.mubr.bf16.mxu0 0
    %2354 = vmatmul.mubr.bf16.gmra.mrb[0].mxu0 %v2319
    %v2355 = vpop.f32.mrb[0].mxu0
    %v2356 = vadd.f32 %v2286, %v2355
    %v2357 = vpop.f32.mrb[0].mxu0
    %v2358 = vpop.f32.mrb[0].mxu0
    %v2359 = vadd.f32 %v2286, %v2358
    %v2360 = vpop.f32.mrb[0].mxu0
    %2361 = vdwg.mxu0
    %v2362 = vld [vmem:[%s9] sm:$0xf]
    %v2363 = vld [vmem:[%s9 + $0x4] sm:$0xf]
    %v2364 = vld [vmem:[%s9 + $0x8] sm:$0xf]
    %v2365 = vld [vmem:[%s9 + $0xc] sm:$0xf]
    %v2366 = vld [vmem:[%s10] sm:$0x1]
    %v2368 = vlaneseq
    %v2369 = vshrl.u32 %v2368, 7
    %v2370 = vsub.s32 0, %v2369
    %v2371 = vrot.slane %v2366, %v2370
    %v2377 = vunpack.c.l.b16 %v2362
    %v2378 = vunpack.c.l.b16 %v2363
    %v2379 = vunpack.c.l.b16 %v2364
    %v2380 = vunpack.c.l.b16 %v2365
    %v2381 = vpack.c.b16 %v2378, %v2377
    %v2382 = vpack.c.b16 %v2380, %v2379
    %v2385 = vsel %vm295, 0, 0
    %2387 = vmatprep.subr.bf16.mxu0 0
    %2388 = vmatpush1.bf16.msra.mxu0 %v2381
    %2389 = vmatprep.subr.bf16.mxu0 0
    %2390 = vmatpush1.bf16.msra.mxu0 %v2382
    %2391 = vmatprep.subr.bf16.mxu0 0
    %2392 = vmatpush1.bf16.msra.mxu0 0
    %2393 = vmatprep.subr.bf16.mxu0 0
    %2394 = vmatpush1.bf16.msra.mxu0 0
    %2395 = vmatprep.subr.bf16.mxu0 0
    %2396 = vmatpush1.bf16.msra.mxu0 0
    %2397 = vmatprep.subr.bf16.mxu0 0
    %2398 = vmatpush1.bf16.msra.mxu0 0
    %2399 = vmatprep.subr.bf16.mxu0 0
    %2400 = vmatpush1.bf16.msra.mxu0 0
    %2401 = vmatprep.subr.bf16.mxu0 0
    %2402 = vmatpush1.bf16.msra.mxu0 0
    %2403 = vmatprep.subr.bf16.mxu0 0
    %2404 = vmatpush1.bf16.msra.mxu0 0
    %2405 = vmatprep.subr.bf16.mxu0 0
    %2406 = vmatpush1.bf16.msra.mxu0 0
    %2407 = vmatprep.subr.bf16.mxu0 0
    %2408 = vmatpush1.bf16.msra.mxu0 0
    %2409 = vmatprep.subr.bf16.mxu0 0
    %2410 = vmatpush1.bf16.msra.mxu0 0
    %2411 = vmatprep.subr.bf16.mxu0 0
    %2412 = vmatpush1.bf16.msra.mxu0 0
    %2413 = vmatprep.subr.bf16.mxu0 0
    %2414 = vmatpush1.bf16.msra.mxu0 0
    %2415 = vmatprep.subr.bf16.mxu0 0
    %2416 = vmatpush1.bf16.msra.mxu0 0
    %2417 = vmatprep.subr.bf16.mxu0 0
    %2418 = vmatpush1.bf16.msra.mxu0 0
    %2419 = vmatprep.mubr.bf16.mxu0 0
    %2420 = vmatmul.mubr.bf16.gmra.mrb[0].mxu0 %v2385
    %v2421 = vpop.f32.mrb[0].mxu0
    %v2422 = vadd.f32 %v2371, %v2421
    %v2423 = vpop.f32.mrb[0].mxu0
    %v2424 = vpop.f32.mrb[0].mxu0
    %v2425 = vpop.f32.mrb[0].mxu0
    %2426 = vdwg.mxu0
    %v2428 = vrot.slane %v2422, 1
    %v2431 = vadd.f32 %v2356, %v2422
    %v2432 = vadd.f32 %v2359, %v2428
    %v2433 = vxor.u32 %v2431, 2147483648
    %v2434 = vxor.u32 %v2432, 2147483648
    %v2435 = vmul.f32 %v2433, 1.442695
    %v2436 = vpow.pop %v2435
    %v2437 = vmul.f32 %v2434, 1.442695
    %v2438 = vpow.pop %v2437
    %v2439 = vadd.f32 %v2436, 1.0
    %v2440 = vadd.f32 %v2438, 1.0
    %v2441 = vrcp.pop %v2439
    %v2442 = vmul.f32 1.0, %v2441
    %v2443 = vrcp.pop %v2440
    %v2444 = vmul.f32 1.0, %v2443
    %2445 = vrot.lane.b32.xlu0 %v2422, 64
    %v2446 = vpop.permute.xlu0 %2445
    %2447 = vrot.lane.b32.xlu0 %v2428, 64
    %v2448 = vpop.permute.xlu0 %2447
    %v2451 = vmul.f32 %v2442, %v2446
    %v2452 = vmul.f32 %v2444, %v2448
    %2455 = vrot.lane.b32.xlu0 %v2451, 64
    %v2456 = vpop.permute.xlu0 %2455
    %2457 = vrot.lane.b32.xlu0 %v2452, 64
    %v2458 = vpop.permute.xlu0 %2457
    %v2461 = vadd.f32 %v2356, %v2456
    %v2462 = vadd.f32 %v2359, %v2458
    %v2463 = vtanh.pop %v2461
    %v2464 = vtanh.pop %v2462
    %v2465 = vsub.f32 1.0, %v2442
    %v2466 = vsub.f32 1.0, %v2444
    %2469 = vrot.lane.b32.xlu0 %v2463, 96
    %v2470 = vpop.permute.xlu0 %2469
    %2471 = vrot.lane.b32.xlu0 %v2464, 96
    %v2472 = vpop.permute.xlu0 %2471
    %v2475 = vmul.f32 %v2465, %v2470
    %v2476 = vmul.f32 %v2466, %v2472
    %v2477 = vmul.f32 %v2442, 0.0
    %v2478 = vmul.f32 %v2444, 0.0
    %v2479 = vadd.f32 %v2475, %v2477
    %v2480 = vadd.f32 %v2476, %v2478
    %v2481 = vpack.c.bf16 %v2479, %v2479
    %v2482 = vpack.c.bf16 %v2480, %v2480
    %v2485 = vunpack.c.l.b16 %v2481
    %v2486 = vunpack.c.l.b16 %v2482
    %v2487 = vrot.slane %v2486, 7
    %v2488 = vsel %vm560, %v2487, %v2485
    %v2489 = vpack.c.b16 %v2488, %v2488
    %2490 = vrot.lane.b32.xlu0 %v2489, 96
    %v2491 = vpop.permute.xlu0 %2490
    %v2493 = vsel %vm295, %v2491, 0
    %2495 = vmatprep.subr.bf16.mxu0 0
    %2496 = vmatpush1.bf16.msra.mxu0 %v2381
    %2497 = vmatprep.subr.bf16.mxu0 0
    %2498 = vmatpush1.bf16.msra.mxu0 %v2382
    %2499 = vmatprep.subr.bf16.mxu0 0
    %2500 = vmatpush1.bf16.msra.mxu0 0
    %2501 = vmatprep.subr.bf16.mxu0 0
    %2502 = vmatpush1.bf16.msra.mxu0 0
    %2503 = vmatprep.subr.bf16.mxu0 0
    %2504 = vmatpush1.bf16.msra.mxu0 0
    %2505 = vmatprep.subr.bf16.mxu0 0
    %2506 = vmatpush1.bf16.msra.mxu0 0
    %2507 = vmatprep.subr.bf16.mxu0 0
    %2508 = vmatpush1.bf16.msra.mxu0 0
    %2509 = vmatprep.subr.bf16.mxu0 0
    %2510 = vmatpush1.bf16.msra.mxu0 0
    %2511 = vmatprep.subr.bf16.mxu0 0
    %2512 = vmatpush1.bf16.msra.mxu0 0
    %2513 = vmatprep.subr.bf16.mxu0 0
    %2514 = vmatpush1.bf16.msra.mxu0 0
    %2515 = vmatprep.subr.bf16.mxu0 0
    %2516 = vmatpush1.bf16.msra.mxu0 0
    %2517 = vmatprep.subr.bf16.mxu0 0
    %2518 = vmatpush1.bf16.msra.mxu0 0
    %2519 = vmatprep.subr.bf16.mxu0 0
    %2520 = vmatpush1.bf16.msra.mxu0 0
    %2521 = vmatprep.subr.bf16.mxu0 0
    %2522 = vmatpush1.bf16.msra.mxu0 0
    %2523 = vmatprep.subr.bf16.mxu0 0
    %2524 = vmatpush1.bf16.msra.mxu0 0
    %2525 = vmatprep.subr.bf16.mxu0 0
    %2526 = vmatpush1.bf16.msra.mxu0 0
    %2527 = vmatprep.mubr.bf16.mxu0 0
    %2528 = vmatmul.mubr.bf16.gmra.mrb[0].mxu0 %v2493
    %v2529 = vpop.f32.mrb[0].mxu0
    %v2530 = vadd.f32 %v2371, %v2529
    %v2531 = vpop.f32.mrb[0].mxu0
    %v2532 = vpop.f32.mrb[0].mxu0
    %v2533 = vpop.f32.mrb[0].mxu0
    %2534 = vdwg.mxu0
    %v2536 = vrot.slane %v2530, 7
    %v2539 = vadd.f32 %v2356, %v2536
    %v2540 = vadd.f32 %v2359, %v2530
    %v2541 = vxor.u32 %v2539, 2147483648
    %v2542 = vxor.u32 %v2540, 2147483648
    %v2543 = vmul.f32 %v2541, 1.442695
    %v2544 = vpow.pop %v2543
    %v2545 = vmul.f32 %v2542, 1.442695
    %v2546 = vpow.pop %v2545
    %v2547 = vadd.f32 %v2544, 1.0
    %v2548 = vadd.f32 %v2546, 1.0
    %v2549 = vrcp.pop %v2547
    %v2550 = vmul.f32 1.0, %v2549
    %v2551 = vrcp.pop %v2548
    %v2552 = vmul.f32 1.0, %v2551
    %2553 = vrot.lane.b32.xlu0 %v2536, 64
    %v2554 = vpop.permute.xlu0 %2553
    %2555 = vrot.lane.b32.xlu0 %v2530, 64
    %v2556 = vpop.permute.xlu0 %2555
    %v2559 = vmul.f32 %v2550, %v2554
    %v2560 = vmul.f32 %v2552, %v2556
    %2563 = vrot.lane.b32.xlu0 %v2559, 64
    %v2564 = vpop.permute.xlu0 %2563
    %2565 = vrot.lane.b32.xlu0 %v2560, 64
    %v2566 = vpop.permute.xlu0 %2565
    %v2569 = vadd.f32 %v2356, %v2564
    %v2570 = vadd.f32 %v2359, %v2566
    %v2571 = vtanh.pop %v2569
    %v2572 = vtanh.pop %v2570
    %v2573 = vsub.f32 1.0, %v2550
    %v2574 = vsub.f32 1.0, %v2552
    %2577 = vrot.lane.b32.xlu0 %v2571, 96
    %v2578 = vpop.permute.xlu0 %2577
    %2579 = vrot.lane.b32.xlu0 %v2572, 96
    %v2580 = vpop.permute.xlu0 %2579
    %v2583 = vmul.f32 %v2573, %v2578
    %v2584 = vmul.f32 %v2574, %v2580
    %v2587 = vrot.slane %v2479, 7
    %v2588 = vrot.slane %v2480, 7
    %v2591 = vmul.f32 %v2550, %v2587
    %v2592 = vmul.f32 %v2552, %v2588
    %v2593 = vadd.f32 %v2583, %v2591
    %v2594 = vadd.f32 %v2584, %v2592
    %v2595 = vpack.c.bf16 %v2593, %v2593
    %v2596 = vpack.c.bf16 %v2594, %v2594
    %v2599 = vunpack.c.l.b16 %v2595
    %v2600 = vunpack.c.l.b16 %v2596
    %v2601 = vrot.slane %v2599, 1
    %v2602 = vsel %vm560, %v2600, %v2601
    %v2603 = vpack.c.b16 %v2602, %v2602
    %2604 = vrot.lane.b32.xlu0 %v2603, 96
    %v2605 = vpop.permute.xlu0 %2604
    %v2607 = vsel %vm295, %v2605, 0
    %2609 = vmatprep.subr.bf16.mxu0 0
    %2610 = vmatpush1.bf16.msra.mxu0 %v2381
    %2611 = vmatprep.subr.bf16.mxu0 0
    %2612 = vmatpush1.bf16.msra.mxu0 %v2382
    %2613 = vmatprep.subr.bf16.mxu0 0
    %2614 = vmatpush1.bf16.msra.mxu0 0
    %2615 = vmatprep.subr.bf16.mxu0 0
    %2616 = vmatpush1.bf16.msra.mxu0 0
    %2617 = vmatprep.subr.bf16.mxu0 0
    %2618 = vmatpush1.bf16.msra.mxu0 0
    %2619 = vmatprep.subr.bf16.mxu0 0
    %2620 = vmatpush1.bf16.msra.mxu0 0
    %2621 = vmatprep.subr.bf16.mxu0 0
    %2622 = vmatpush1.bf16.msra.mxu0 0
    %2623 = vmatprep.subr.bf16.mxu0 0
    %2624 = vmatpush1.bf16.msra.mxu0 0
    %2625 = vmatprep.subr.bf16.mxu0 0
    %2626 = vmatpush1.bf16.msra.mxu0 0
    %2627 = vmatprep.subr.bf16.mxu0 0
    %2628 = vmatpush1.bf16.msra.mxu0 0
    %2629 = vmatprep.subr.bf16.mxu0 0
    %2630 = vmatpush1.bf16.msra.mxu0 0
    %2631 = vmatprep.subr.bf16.mxu0 0
    %2632 = vmatpush1.bf16.msra.mxu0 0
    %2633 = vmatprep.subr.bf16.mxu0 0
    %2634 = vmatpush1.bf16.msra.mxu0 0
    %2635 = vmatprep.subr.bf16.mxu0 0
    %2636 = vmatpush1.bf16.msra.mxu0 0
    %2637 = vmatprep.subr.bf16.mxu0 0
    %2638 = vmatpush1.bf16.msra.mxu0 0
    %2639 = vmatprep.subr.bf16.mxu0 0
    %2640 = vmatpush1.bf16.msra.mxu0 0
    %2641 = vmatprep.mubr.bf16.mxu0 0
    %2642 = vmatmul.mubr.bf16.gmra.mrb[0].mxu0 %v2607
    %v2643 = vpop.f32.mrb[0].mxu0
    %v2644 = vadd.f32 %v2371, %v2643
    %v2645 = vpop.f32.mrb[0].mxu0
    %v2646 = vpop.f32.mrb[0].mxu0
    %v2647 = vpop.f32.mrb[0].mxu0
    %2648 = vdwg.mxu0
    %v2650 = vrot.slane %v2644, 6
    %v2651 = vrot.slane %v2644, 7
    %v2654 = vadd.f32 %v2356, %v2650
    %v2655 = vadd.f32 %v2359, %v2651
    %v2656 = vxor.u32 %v2654, 2147483648
    %v2657 = vxor.u32 %v2655, 2147483648
    %v2658 = vmul.f32 %v2656, 1.442695
    %v2659 = vpow.pop %v2658
    %v2660 = vmul.f32 %v2657, 1.442695
    %v2661 = vpow.pop %v2660
    %v2662 = vadd.f32 %v2659, 1.0
    %v2663 = vadd.f32 %v2661, 1.0
    %v2664 = vrcp.pop %v2662
    %v2665 = vmul.f32 1.0, %v2664
    %v2666 = vrcp.pop %v2663
    %v2667 = vmul.f32 1.0, %v2666
    %2668 = vrot.lane.b32.xlu0 %v2650, 64
    %v2669 = vpop.permute.xlu0 %2668
    %2670 = vrot.lane.b32.xlu0 %v2651, 64
    %v2671 = vpop.permute.xlu0 %2670
    %v2674 = vmul.f32 %v2665, %v2669
    %v2675 = vmul.f32 %v2667, %v2671
    %2678 = vrot.lane.b32.xlu0 %v2674, 64
    %v2679 = vpop.permute.xlu0 %2678
    %2680 = vrot.lane.b32.xlu0 %v2675, 64
    %v2681 = vpop.permute.xlu0 %2680
    %v2684 = vadd.f32 %v2356, %v2679
    %v2685 = vadd.f32 %v2359, %v2681
    %v2686 = vtanh.pop %v2684
    %v2687 = vtanh.pop %v2685
    %v2688 = vsub.f32 1.0, %v2665
    %v2689 = vsub.f32 1.0, %v2667
    %2692 = vrot.lane.b32.xlu0 %v2686, 96
    %v2693 = vpop.permute.xlu0 %2692
    %2694 = vrot.lane.b32.xlu0 %v2687, 96
    %v2695 = vpop.permute.xlu0 %2694
    %v2698 = vmul.f32 %v2688, %v2693
    %v2699 = vmul.f32 %v2689, %v2695
    %v2702 = vrot.slane %v2593, 7
    %v2703 = vrot.slane %v2594, 7
    %v2706 = vmul.f32 %v2665, %v2702
    %v2707 = vmul.f32 %v2667, %v2703
    %v2708 = vadd.f32 %v2698, %v2706
    %v2709 = vadd.f32 %v2699, %v2707
    %v2710 = vpack.c.bf16 %v2708, %v2708
    %v2711 = vpack.c.bf16 %v2709, %v2709
    %v2714 = vunpack.c.l.b16 %v2710
    %v2715 = vunpack.c.l.b16 %v2711
    %v2716 = vrot.slane %v2714, 2
    %v2717 = vrot.slane %v2715, 1
    %v2718 = vsel %vm560, %v2717, %v2716
    %v2719 = vpack.c.b16 %v2718, %v2718
    %2720 = vrot.lane.b32.xlu0 %v2719, 96
    %v2721 = vpop.permute.xlu0 %2720
    %v2723 = vsel %vm295, %v2721, 0
    %2725 = vmatprep.subr.bf16.mxu0 0
    %2726 = vmatpush1.bf16.msra.mxu0 %v2381
    %2727 = vmatprep.subr.bf16.mxu0 0
    %2728 = vmatpush1.bf16.msra.mxu0 %v2382
    %2729 = vmatprep.subr.bf16.mxu0 0
    %2730 = vmatpush1.bf16.msra.mxu0 0
    %2731 = vmatprep.subr.bf16.mxu0 0
    %2732 = vmatpush1.bf16.msra.mxu0 0
    %2733 = vmatprep.subr.bf16.mxu0 0
    %2734 = vmatpush1.bf16.msra.mxu0 0
    %2735 = vmatprep.subr.bf16.mxu0 0
    %2736 = vmatpush1.bf16.msra.mxu0 0
    %2737 = vmatprep.subr.bf16.mxu0 0
    %2738 = vmatpush1.bf16.msra.mxu0 0
    %2739 = vmatprep.subr.bf16.mxu0 0
    %2740 = vmatpush1.bf16.msra.mxu0 0
    %2741 = vmatprep.subr.bf16.mxu0 0
    %2742 = vmatpush1.bf16.msra.mxu0 0
    %2743 = vmatprep.subr.bf16.mxu0 0
    %2744 = vmatpush1.bf16.msra.mxu0 0
    %2745 = vmatprep.subr.bf16.mxu0 0
    %2746 = vmatpush1.bf16.msra.mxu0 0
    %2747 = vmatprep.subr.bf16.mxu0 0
    %2748 = vmatpush1.bf16.msra.mxu0 0
    %2749 = vmatprep.subr.bf16.mxu0 0
    %2750 = vmatpush1.bf16.msra.mxu0 0
    %2751 = vmatprep.subr.bf16.mxu0 0
    %2752 = vmatpush1.bf16.msra.mxu0 0
    %2753 = vmatprep.subr.bf16.mxu0 0
    %2754 = vmatpush1.bf16.msra.mxu0 0
    %2755 = vmatprep.subr.bf16.mxu0 0
    %2756 = vmatpush1.bf16.msra.mxu0 0
    %2757 = vmatprep.mubr.bf16.mxu0 0
    %2758 = vmatmul.mubr.bf16.gmra.mrb[0].mxu0 %v2723
    %v2759 = vpop.f32.mrb[0].mxu0
    %v2760 = vadd.f32 %v2371, %v2759
    %v2761 = vpop.f32.mrb[0].mxu0
    %v2762 = vpop.f32.mrb[0].mxu0
    %v2763 = vpop.f32.mrb[0].mxu0
    %2764 = vdwg.mxu0
    %v2766 = vrot.slane %v2760, 5
    %v2767 = vrot.slane %v2760, 6
    %v2770 = vadd.f32 %v2356, %v2766
    %v2771 = vadd.f32 %v2359, %v2767
    %v2772 = vxor.u32 %v2770, 2147483648
    %v2773 = vxor.u32 %v2771, 2147483648
    %v2774 = vmul.f32 %v2772, 1.442695
    %v2775 = vpow.pop %v2774
    %v2776 = vmul.f32 %v2773, 1.442695
    %v2777 = vpow.pop %v2776
    %v2778 = vadd.f32 %v2775, 1.0
    %v2779 = vadd.f32 %v2777, 1.0
    %v2780 = vrcp.pop %v2778
    %v2781 = vmul.f32 1.0, %v2780
    %v2782 = vrcp.pop %v2779
    %v2783 = vmul.f32 1.0, %v2782
    %2784 = vrot.lane.b32.xlu0 %v2766, 64
    %v2785 = vpop.permute.xlu0 %2784
    %2786 = vrot.lane.b32.xlu0 %v2767, 64
    %v2787 = vpop.permute.xlu0 %2786
    %v2790 = vmul.f32 %v2781, %v2785
    %v2791 = vmul.f32 %v2783, %v2787
    %2794 = vrot.lane.b32.xlu0 %v2790, 64
    %v2795 = vpop.permute.xlu0 %2794
    %2796 = vrot.lane.b32.xlu0 %v2791, 64
    %v2797 = vpop.permute.xlu0 %2796
    %v2800 = vadd.f32 %v2356, %v2795
    %v2801 = vadd.f32 %v2359, %v2797
    %v2802 = vtanh.pop %v2800
    %v2803 = vtanh.pop %v2801
    %v2804 = vsub.f32 1.0, %v2781
    %v2805 = vsub.f32 1.0, %v2783
    %2808 = vrot.lane.b32.xlu0 %v2802, 96
    %v2809 = vpop.permute.xlu0 %2808
    %2810 = vrot.lane.b32.xlu0 %v2803, 96
    %v2811 = vpop.permute.xlu0 %2810
    %v2814 = vmul.f32 %v2804, %v2809
    %v2815 = vmul.f32 %v2805, %v2811
    %v2818 = vrot.slane %v2708, 7
    %v2819 = vrot.slane %v2709, 7
    %v2822 = vmul.f32 %v2781, %v2818
    %v2823 = vmul.f32 %v2783, %v2819
    %v2824 = vadd.f32 %v2814, %v2822
    %v2825 = vadd.f32 %v2815, %v2823
    %v2826 = vpack.c.bf16 %v2824, %v2824
    %v2827 = vpack.c.bf16 %v2825, %v2825
    %v2830 = vunpack.c.l.b16 %v2826
    %v2831 = vunpack.c.l.b16 %v2827
    %v2832 = vrot.slane %v2830, 3
    %v2833 = vrot.slane %v2831, 2
    %v2834 = vsel %vm560, %v2833, %v2832
    %v2835 = vpack.c.b16 %v2834, %v2834
    %2836 = vrot.lane.b32.xlu0 %v2835, 96
    %v2837 = vpop.permute.xlu0 %2836
    %v2839 = vsel %vm295, %v2837, 0
    %2841 = vmatprep.subr.bf16.mxu0 0
    %2842 = vmatpush1.bf16.msra.mxu0 %v2381
    %2843 = vmatprep.subr.bf16.mxu0 0
    %2844 = vmatpush1.bf16.msra.mxu0 %v2382
    %2845 = vmatprep.subr.bf16.mxu0 0
    %2846 = vmatpush1.bf16.msra.mxu0 0
    %2847 = vmatprep.subr.bf16.mxu0 0
    %2848 = vmatpush1.bf16.msra.mxu0 0
    %2849 = vmatprep.subr.bf16.mxu0 0
    %2850 = vmatpush1.bf16.msra.mxu0 0
    %2851 = vmatprep.subr.bf16.mxu0 0
    %2852 = vmatpush1.bf16.msra.mxu0 0
    %2853 = vmatprep.subr.bf16.mxu0 0
    %2854 = vmatpush1.bf16.msra.mxu0 0
    %2855 = vmatprep.subr.bf16.mxu0 0
    %2856 = vmatpush1.bf16.msra.mxu0 0
    %2857 = vmatprep.subr.bf16.mxu0 0
    %2858 = vmatpush1.bf16.msra.mxu0 0
    %2859 = vmatprep.subr.bf16.mxu0 0
    %2860 = vmatpush1.bf16.msra.mxu0 0
    %2861 = vmatprep.subr.bf16.mxu0 0
    %2862 = vmatpush1.bf16.msra.mxu0 0
    %2863 = vmatprep.subr.bf16.mxu0 0
    %2864 = vmatpush1.bf16.msra.mxu0 0
    %2865 = vmatprep.subr.bf16.mxu0 0
    %2866 = vmatpush1.bf16.msra.mxu0 0
    %2867 = vmatprep.subr.bf16.mxu0 0
    %2868 = vmatpush1.bf16.msra.mxu0 0
    %2869 = vmatprep.subr.bf16.mxu0 0
    %2870 = vmatpush1.bf16.msra.mxu0 0
    %2871 = vmatprep.subr.bf16.mxu0 0
    %2872 = vmatpush1.bf16.msra.mxu0 0
    %2873 = vmatprep.mubr.bf16.mxu0 0
    %2874 = vmatmul.mubr.bf16.gmra.mrb[0].mxu0 %v2839
    %v2875 = vpop.f32.mrb[0].mxu0
    %v2876 = vadd.f32 %v2371, %v2875
    %v2877 = vpop.f32.mrb[0].mxu0
    %v2878 = vpop.f32.mrb[0].mxu0
    %v2879 = vpop.f32.mrb[0].mxu0
    %2880 = vdwg.mxu0
    %v2882 = vrot.slane %v2876, 4
    %v2883 = vrot.slane %v2876, 5
    %v2886 = vadd.f32 %v2356, %v2882
    %v2887 = vadd.f32 %v2359, %v2883
    %v2888 = vxor.u32 %v2886, 2147483648
    %v2889 = vxor.u32 %v2887, 2147483648
    %v2890 = vmul.f32 %v2888, 1.442695
    %v2891 = vpow.pop %v2890
    %v2892 = vmul.f32 %v2889, 1.442695
    %v2893 = vpow.pop %v2892
    %v2894 = vadd.f32 %v2891, 1.0
    %v2895 = vadd.f32 %v2893, 1.0
    %v2896 = vrcp.pop %v2894
    %v2897 = vmul.f32 1.0, %v2896
    %v2898 = vrcp.pop %v2895
    %v2899 = vmul.f32 1.0, %v2898
    %2900 = vrot.lane.b32.xlu0 %v2882, 64
    %v2901 = vpop.permute.xlu0 %2900
    %2902 = vrot.lane.b32.xlu0 %v2883, 64
    %v2903 = vpop.permute.xlu0 %2902
    %v2906 = vmul.f32 %v2897, %v2901
    %v2907 = vmul.f32 %v2899, %v2903
    %2910 = vrot.lane.b32.xlu0 %v2906, 64
    %v2911 = vpop.permute.xlu0 %2910
    %2912 = vrot.lane.b32.xlu0 %v2907, 64
    %v2913 = vpop.permute.xlu0 %2912
    %v2916 = vadd.f32 %v2356, %v2911
    %v2917 = vadd.f32 %v2359, %v2913
    %v2918 = vtanh.pop %v2916
    %v2919 = vtanh.pop %v2917
    %v2920 = vsub.f32 1.0, %v2897
    %v2921 = vsub.f32 1.0, %v2899
    %2924 = vrot.lane.b32.xlu0 %v2918, 96
    %v2925 = vpop.permute.xlu0 %2924
    %2926 = vrot.lane.b32.xlu0 %v2919, 96
    %v2927 = vpop.permute.xlu0 %2926
    %v2930 = vmul.f32 %v2920, %v2925
    %v2931 = vmul.f32 %v2921, %v2927
    %v2934 = vrot.slane %v2824, 7
    %v2935 = vrot.slane %v2825, 7
    %v2938 = vmul.f32 %v2897, %v2934
    %v2939 = vmul.f32 %v2899, %v2935
    %v2940 = vadd.f32 %v2930, %v2938
    %v2941 = vadd.f32 %v2931, %v2939
    %v2942 = vpack.c.bf16 %v2940, %v2940
    %v2943 = vpack.c.bf16 %v2941, %v2941
    %v2946 = vunpack.c.l.b16 %v2942
    %v2947 = vunpack.c.l.b16 %v2943
    %v2948 = vrot.slane %v2946, 4
    %v2949 = vrot.slane %v2947, 3
    %v2950 = vsel %vm560, %v2949, %v2948
    %v2951 = vpack.c.b16 %v2950, %v2950
    %2952 = vrot.lane.b32.xlu0 %v2951, 96
    %v2953 = vpop.permute.xlu0 %2952
    %v2955 = vsel %vm295, %v2953, 0
    %2957 = vmatprep.subr.bf16.mxu0 0
    %2958 = vmatpush1.bf16.msra.mxu0 %v2381
    %2959 = vmatprep.subr.bf16.mxu0 0
    %2960 = vmatpush1.bf16.msra.mxu0 %v2382
    %2961 = vmatprep.subr.bf16.mxu0 0
    %2962 = vmatpush1.bf16.msra.mxu0 0
    %2963 = vmatprep.subr.bf16.mxu0 0
    %2964 = vmatpush1.bf16.msra.mxu0 0
    %2965 = vmatprep.subr.bf16.mxu0 0
    %2966 = vmatpush1.bf16.msra.mxu0 0
    %2967 = vmatprep.subr.bf16.mxu0 0
    %2968 = vmatpush1.bf16.msra.mxu0 0
    %2969 = vmatprep.subr.bf16.mxu0 0
    %2970 = vmatpush1.bf16.msra.mxu0 0
    %2971 = vmatprep.subr.bf16.mxu0 0
    %2972 = vmatpush1.bf16.msra.mxu0 0
    %2973 = vmatprep.subr.bf16.mxu0 0
    %2974 = vmatpush1.bf16.msra.mxu0 0
    %2975 = vmatprep.subr.bf16.mxu0 0
    %2976 = vmatpush1.bf16.msra.mxu0 0
    %2977 = vmatprep.subr.bf16.mxu0 0
    %2978 = vmatpush1.bf16.msra.mxu0 0
    %2979 = vmatprep.subr.bf16.mxu0 0
    %2980 = vmatpush1.bf16.msra.mxu0 0
    %2981 = vmatprep.subr.bf16.mxu0 0
    %2982 = vmatpush1.bf16.msra.mxu0 0
    %2983 = vmatprep.subr.bf16.mxu0 0
    %2984 = vmatpush1.bf16.msra.mxu0 0
    %2985 = vmatprep.subr.bf16.mxu0 0
    %2986 = vmatpush1.bf16.msra.mxu0 0
    %2987 = vmatprep.subr.bf16.mxu0 0
    %2988 = vmatpush1.bf16.msra.mxu0 0
    %2989 = vmatprep.mubr.bf16.mxu0 0
    %2990 = vmatmul.mubr.bf16.gmra.mrb[0].mxu0 %v2955
    %v2991 = vpop.f32.mrb[0].mxu0
    %v2992 = vadd.f32 %v2371, %v2991
    %v2993 = vpop.f32.mrb[0].mxu0
    %v2994 = vpop.f32.mrb[0].mxu0
    %v2995 = vpop.f32.mrb[0].mxu0
    %2996 = vdwg.mxu0
    %v2998 = vrot.slane %v2992, 3
    %v2999 = vrot.slane %v2992, 4
    %v3002 = vadd.f32 %v2356, %v2998
    %v3003 = vadd.f32 %v2359, %v2999
    %v3004 = vxor.u32 %v3002, 2147483648
    %v3005 = vxor.u32 %v3003, 2147483648
    %v3006 = vmul.f32 %v3004, 1.442695
    %v3007 = vpow.pop %v3006
    %v3008 = vmul.f32 %v3005, 1.442695
    %v3009 = vpow.pop %v3008
    %v3010 = vadd.f32 %v3007, 1.0
    %v3011 = vadd.f32 %v3009, 1.0
    %v3012 = vrcp.pop %v3010
    %v3013 = vmul.f32 1.0, %v3012
    %v3014 = vrcp.pop %v3011
    %v3015 = vmul.f32 1.0, %v3014
    %3016 = vrot.lane.b32.xlu0 %v2998, 64
    %v3017 = vpop.permute.xlu0 %3016
    %3018 = vrot.lane.b32.xlu0 %v2999, 64
    %v3019 = vpop.permute.xlu0 %3018
    %v3022 = vmul.f32 %v3013, %v3017
    %v3023 = vmul.f32 %v3015, %v3019
    %3026 = vrot.lane.b32.xlu0 %v3022, 64
    %v3027 = vpop.permute.xlu0 %3026
    %3028 = vrot.lane.b32.xlu0 %v3023, 64
    %v3029 = vpop.permute.xlu0 %3028
    %v3032 = vadd.f32 %v2356, %v3027
    %v3033 = vadd.f32 %v2359, %v3029
    %v3034 = vtanh.pop %v3032
    %v3035 = vtanh.pop %v3033
    %v3036 = vsub.f32 1.0, %v3013
    %v3037 = vsub.f32 1.0, %v3015
    %3040 = vrot.lane.b32.xlu0 %v3034, 96
    %v3041 = vpop.permute.xlu0 %3040
    %3042 = vrot.lane.b32.xlu0 %v3035, 96
    %v3043 = vpop.permute.xlu0 %3042
    %v3046 = vmul.f32 %v3036, %v3041
    %v3047 = vmul.f32 %v3037, %v3043
    %v3050 = vrot.slane %v2940, 7
    %v3051 = vrot.slane %v2941, 7
    %v3054 = vmul.f32 %v3013, %v3050
    %v3055 = vmul.f32 %v3015, %v3051
    %v3056 = vadd.f32 %v3046, %v3054
    %v3057 = vadd.f32 %v3047, %v3055
    %v3058 = vpack.c.bf16 %v3056, %v3056
    %v3059 = vpack.c.bf16 %v3057, %v3057
    %v3062 = vunpack.c.l.b16 %v3058
    %v3063 = vunpack.c.l.b16 %v3059
    %v3064 = vrot.slane %v3062, 5
    %v3065 = vrot.slane %v3063, 4
    %v3066 = vsel %vm560, %v3065, %v3064
    %v3067 = vpack.c.b16 %v3066, %v3066
    %3068 = vrot.lane.b32.xlu0 %v3067, 96
    %v3069 = vpop.permute.xlu0 %3068
    %v3071 = vsel %vm295, %v3069, 0
    %3073 = vmatprep.subr.bf16.mxu0 0
    %3074 = vmatpush1.bf16.msra.mxu0 %v2381
    %3075 = vmatprep.subr.bf16.mxu0 0
    %3076 = vmatpush1.bf16.msra.mxu0 %v2382
    %3077 = vmatprep.subr.bf16.mxu0 0
    %3078 = vmatpush1.bf16.msra.mxu0 0
    %3079 = vmatprep.subr.bf16.mxu0 0
    %3080 = vmatpush1.bf16.msra.mxu0 0
    %3081 = vmatprep.subr.bf16.mxu0 0
    %3082 = vmatpush1.bf16.msra.mxu0 0
    %3083 = vmatprep.subr.bf16.mxu0 0
    %3084 = vmatpush1.bf16.msra.mxu0 0
    %3085 = vmatprep.subr.bf16.mxu0 0
    %3086 = vmatpush1.bf16.msra.mxu0 0
    %3087 = vmatprep.subr.bf16.mxu0 0
    %3088 = vmatpush1.bf16.msra.mxu0 0
    %3089 = vmatprep.subr.bf16.mxu0 0
    %3090 = vmatpush1.bf16.msra.mxu0 0
    %3091 = vmatprep.subr.bf16.mxu0 0
    %3092 = vmatpush1.bf16.msra.mxu0 0
    %3093 = vmatprep.subr.bf16.mxu0 0
    %3094 = vmatpush1.bf16.msra.mxu0 0
    %3095 = vmatprep.subr.bf16.mxu0 0
    %3096 = vmatpush1.bf16.msra.mxu0 0
    %3097 = vmatprep.subr.bf16.mxu0 0
    %3098 = vmatpush1.bf16.msra.mxu0 0
    %3099 = vmatprep.subr.bf16.mxu0 0
    %3100 = vmatpush1.bf16.msra.mxu0 0
    %3101 = vmatprep.subr.bf16.mxu0 0
    %3102 = vmatpush1.bf16.msra.mxu0 0
    %3103 = vmatprep.subr.bf16.mxu0 0
    %3104 = vmatpush1.bf16.msra.mxu0 0
    %3105 = vmatprep.mubr.bf16.mxu0 0
    %3106 = vmatmul.mubr.bf16.gmra.mrb[0].mxu0 %v3071
    %v3107 = vpop.f32.mrb[0].mxu0
    %v3108 = vadd.f32 %v2371, %v3107
    %v3109 = vpop.f32.mrb[0].mxu0
    %v3110 = vpop.f32.mrb[0].mxu0
    %v3111 = vpop.f32.mrb[0].mxu0
    %3112 = vdwg.mxu0
    %v3114 = vrot.slane %v3108, 2
    %v3115 = vrot.slane %v3108, 3
    %v3118 = vadd.f32 %v2356, %v3114
    %v3119 = vadd.f32 %v2359, %v3115
    %v3120 = vxor.u32 %v3118, 2147483648
    %v3121 = vxor.u32 %v3119, 2147483648
    %v3122 = vmul.f32 %v3120, 1.442695
    %v3123 = vpow.pop %v3122
    %v3124 = vmul.f32 %v3121, 1.442695
    %v3125 = vpow.pop %v3124
    %v3126 = vadd.f32 %v3123, 1.0
    %v3127 = vadd.f32 %v3125, 1.0
    %v3128 = vrcp.pop %v3126
    %v3129 = vmul.f32 1.0, %v3128
    %v3130 = vrcp.pop %v3127
    %v3131 = vmul.f32 1.0, %v3130
    %3132 = vrot.lane.b32.xlu0 %v3114, 64
    %v3133 = vpop.permute.xlu0 %3132
    %3134 = vrot.lane.b32.xlu0 %v3115, 64
    %v3135 = vpop.permute.xlu0 %3134
    %v3138 = vmul.f32 %v3129, %v3133
    %v3139 = vmul.f32 %v3131, %v3135
    %3142 = vrot.lane.b32.xlu0 %v3138, 64
    %v3143 = vpop.permute.xlu0 %3142
    %3144 = vrot.lane.b32.xlu0 %v3139, 64
    %v3145 = vpop.permute.xlu0 %3144
    %v3148 = vadd.f32 %v2356, %v3143
    %v3149 = vadd.f32 %v2359, %v3145
    %v3150 = vtanh.pop %v3148
    %v3151 = vtanh.pop %v3149
    %v3152 = vsub.f32 1.0, %v3129
    %v3153 = vsub.f32 1.0, %v3131
    %3156 = vrot.lane.b32.xlu0 %v3150, 96
    %v3157 = vpop.permute.xlu0 %3156
    %3158 = vrot.lane.b32.xlu0 %v3151, 96
    %v3159 = vpop.permute.xlu0 %3158
    %v3162 = vmul.f32 %v3152, %v3157
    %v3163 = vmul.f32 %v3153, %v3159
    %v3166 = vrot.slane %v3056, 7
    %v3167 = vrot.slane %v3057, 7
    %v3170 = vmul.f32 %v3129, %v3166
    %v3171 = vmul.f32 %v3131, %v3167
    %v3172 = vadd.f32 %v3162, %v3170
    %v3173 = vadd.f32 %v3163, %v3171
    %v3174 = vpack.c.bf16 %v3172, %v3172
    %v3175 = vpack.c.bf16 %v3173, %v3173
    %v3178 = vunpack.c.l.b16 %v3174
    %v3179 = vunpack.c.l.b16 %v3175
    %v3180 = vrot.slane %v3178, 6
    %v3181 = vrot.slane %v3179, 5
    %v3182 = vsel %vm560, %v3181, %v3180
    %v3183 = vpack.c.b16 %v3182, %v3182
    %3184 = vrot.lane.b32.xlu0 %v3183, 96
    %v3185 = vpop.permute.xlu0 %3184
    %v3187 = vsel %vm295, %v3185, 0
    %3189 = vmatprep.subr.bf16.mxu0 0
    %3190 = vmatpush1.bf16.msra.mxu0 %v2381
    %3191 = vmatprep.subr.bf16.mxu0 0
    %3192 = vmatpush1.bf16.msra.mxu0 %v2382
    %3193 = vmatprep.subr.bf16.mxu0 0
    %3194 = vmatpush1.bf16.msra.mxu0 0
    %3195 = vmatprep.subr.bf16.mxu0 0
    %3196 = vmatpush1.bf16.msra.mxu0 0
    %3197 = vmatprep.subr.bf16.mxu0 0
    %3198 = vmatpush1.bf16.msra.mxu0 0
    %3199 = vmatprep.subr.bf16.mxu0 0
    %3200 = vmatpush1.bf16.msra.mxu0 0
    %3201 = vmatprep.subr.bf16.mxu0 0
    %3202 = vmatpush1.bf16.msra.mxu0 0
    %3203 = vmatprep.subr.bf16.mxu0 0
    %3204 = vmatpush1.bf16.msra.mxu0 0
    %3205 = vmatprep.subr.bf16.mxu0 0
    %3206 = vmatpush1.bf16.msra.mxu0 0
    %3207 = vmatprep.subr.bf16.mxu0 0
    %3208 = vmatpush1.bf16.msra.mxu0 0
    %3209 = vmatprep.subr.bf16.mxu0 0
    %3210 = vmatpush1.bf16.msra.mxu0 0
    %3211 = vmatprep.subr.bf16.mxu0 0
    %3212 = vmatpush1.bf16.msra.mxu0 0
    %3213 = vmatprep.subr.bf16.mxu0 0
    %3214 = vmatpush1.bf16.msra.mxu0 0
    %3215 = vmatprep.subr.bf16.mxu0 0
    %3216 = vmatpush1.bf16.msra.mxu0 0
    %3217 = vmatprep.subr.bf16.mxu0 0
    %3218 = vmatpush1.bf16.msra.mxu0 0
    %3219 = vmatprep.subr.bf16.mxu0 0
    %3220 = vmatpush1.bf16.msra.mxu0 0
    %3221 = vmatprep.mubr.bf16.mxu0 0
    %3222 = vmatmul.mubr.bf16.gmra.mrb[0].mxu0 %v3187
    %v3223 = vpop.f32.mrb[0].mxu0
    %v3224 = vadd.f32 %v2371, %v3223
    %v3225 = vpop.f32.mrb[0].mxu0
    %v3226 = vpop.f32.mrb[0].mxu0
    %v3227 = vpop.f32.mrb[0].mxu0
    %3228 = vdwg.mxu0
    %v3230 = vrot.slane %v3224, 1
    %v3231 = vrot.slane %v3224, 2
    %v3234 = vadd.f32 %v2356, %v3230
    %v3235 = vadd.f32 %v2359, %v3231
    %v3236 = vxor.u32 %v3234, 2147483648
    %v3237 = vxor.u32 %v3235, 2147483648
    %v3238 = vmul.f32 %v3236, 1.442695
    %v3239 = vpow.pop %v3238
    %v3240 = vmul.f32 %v3237, 1.442695
    %v3241 = vpow.pop %v3240
    %v3242 = vadd.f32 %v3239, 1.0
    %v3243 = vadd.f32 %v3241, 1.0
    %v3244 = vrcp.pop %v3242
    %v3245 = vmul.f32 1.0, %v3244
    %v3246 = vrcp.pop %v3243
    %v3247 = vmul.f32 1.0, %v3246
    %3248 = vrot.lane.b32.xlu0 %v3230, 64
    %v3249 = vpop.permute.xlu0 %3248
    %3250 = vrot.lane.b32.xlu0 %v3231, 64
    %v3251 = vpop.permute.xlu0 %3250
    %v3254 = vmul.f32 %v3245, %v3249
    %v3255 = vmul.f32 %v3247, %v3251
    %3258 = vrot.lane.b32.xlu0 %v3254, 64
    %v3259 = vpop.permute.xlu0 %3258
    %3260 = vrot.lane.b32.xlu0 %v3255, 64
    %v3261 = vpop.permute.xlu0 %3260
    %v3264 = vadd.f32 %v2356, %v3259
    %v3265 = vadd.f32 %v2359, %v3261
    %v3266 = vtanh.pop %v3264
    %v3267 = vtanh.pop %v3265
    %v3268 = vsub.f32 1.0, %v3245
    %v3269 = vsub.f32 1.0, %v3247
    %3272 = vrot.lane.b32.xlu0 %v3266, 96
    %v3273 = vpop.permute.xlu0 %3272
    %3274 = vrot.lane.b32.xlu0 %v3267, 96
    %v3275 = vpop.permute.xlu0 %3274
    %v3278 = vmul.f32 %v3268, %v3273
    %v3279 = vmul.f32 %v3269, %v3275
    %v3282 = vrot.slane %v3172, 7
    %v3283 = vrot.slane %v3173, 7
    %v3286 = vmul.f32 %v3245, %v3282
    %v3287 = vmul.f32 %v3247, %v3283
    %v3288 = vadd.f32 %v3278, %v3286
    %v3289 = vadd.f32 %v3279, %v3287
    %v3290 = vsel %vm2200, %v2479, %v2593
    %v3291 = vsel %vm2200, %v2480, %v2594
    %v3292 = vsel %vm2203, %v3290, %v2708
    %v3293 = vsel %vm2203, %v3291, %v2709
    %v3294 = vsel %vm2206, %v3292, %v2824
    %v3295 = vsel %vm2206, %v3293, %v2825
    %v3296 = vsel %vm2209, %v3294, %v2940
    %v3297 = vsel %vm2209, %v3295, %v2941
    %v3298 = vsel %vm2212, %v3296, %v3056
    %v3299 = vsel %vm2212, %v3297, %v3057
    %v3300 = vsel %vm2215, %v3298, %v3172
    %v3301 = vsel %vm2215, %v3299, %v3173
    %v3302 = vsel %vm2218, %v3300, %v3288
    %v3303 = vsel %vm2218, %v3301, %v3289
    %v3304 = vpack.c.bf16 %v3303, %v3302
    %v3305 = vld [vmem:[%s11] sm:$0xf]
    %v3306 = vld [vmem:[%s11 + $0x4] sm:$0xf]
    %v3307 = vld [vmem:[%s11 + $0x8] sm:$0xf]
    %v3308 = vld [vmem:[%s11 + $0xc] sm:$0xf]
    %v3309 = vld [vmem:[%s12] sm:$0x1]
    %v3311 = vlaneseq
    %v3312 = vshrl.u32 %v3311, 7
    %v3313 = vsub.s32 0, %v3312
    %v3314 = vrot.slane %v3309, %v3313
    %3317 = vrot.lane.b32.xlu0 %v3304, 96
    %v3318 = vpop.permute.xlu0 %3317
    %v3323 = vunpack.c.l.b16 %v3305
    %v3324 = vunpack.c.l.b16 %v3306
    %v3325 = vunpack.c.l.b16 %v3307
    %v3326 = vunpack.c.l.b16 %v3308
    %v3327 = vpack.c.b16 %v3324, %v3323
    %v3328 = vpack.c.b16 %v3326, %v3325
    %v3332 = vsel %vm295, %v3318, 0
    %3334 = vmatprep.subr.bf16.mxu0 0
    %3335 = vmatpush1.bf16.msra.mxu0 %v3327
    %3336 = vmatprep.subr.bf16.mxu0 0
    %3337 = vmatpush1.bf16.msra.mxu0 %v3328
    %3338 = vmatprep.subr.bf16.mxu0 0
    %3339 = vmatpush1.bf16.msra.mxu0 0
    %3340 = vmatprep.subr.bf16.mxu0 0
    %3341 = vmatpush1.bf16.msra.mxu0 0
    %3342 = vmatprep.subr.bf16.mxu0 0
    %3343 = vmatpush1.bf16.msra.mxu0 0
    %3344 = vmatprep.subr.bf16.mxu0 0
    %3345 = vmatpush1.bf16.msra.mxu0 0
    %3346 = vmatprep.subr.bf16.mxu0 0
    %3347 = vmatpush1.bf16.msra.mxu0 0
    %3348 = vmatprep.subr.bf16.mxu0 0
    %3349 = vmatpush1.bf16.msra.mxu0 0
    %3350 = vmatprep.subr.bf16.mxu0 0
    %3351 = vmatpush1.bf16.msra.mxu0 0
    %3352 = vmatprep.subr.bf16.mxu0 0
    %3353 = vmatpush1.bf16.msra.mxu0 0
    %3354 = vmatprep.subr.bf16.mxu0 0
    %3355 = vmatpush1.bf16.msra.mxu0 0
    %3356 = vmatprep.subr.bf16.mxu0 0
    %3357 = vmatpush1.bf16.msra.mxu0 0
    %3358 = vmatprep.subr.bf16.mxu0 0
    %3359 = vmatpush1.bf16.msra.mxu0 0
    %3360 = vmatprep.subr.bf16.mxu0 0
    %3361 = vmatpush1.bf16.msra.mxu0 0
    %3362 = vmatprep.subr.bf16.mxu0 0
    %3363 = vmatpush1.bf16.msra.mxu0 0
    %3364 = vmatprep.subr.bf16.mxu0 0
    %3365 = vmatpush1.bf16.msra.mxu0 0
    %3366 = vmatprep.mubr.bf16.mxu0 0
    %3367 = vmatmul.mubr.bf16.gmra.mrb[0].mxu0 %v3332
    %v3368 = vpop.f32.mrb[0].mxu0
    %v3369 = vadd.f32 %v3314, %v3368
    %v3370 = vpop.f32.mrb[0].mxu0
    %v3371 = vpop.f32.mrb[0].mxu0
    %v3372 = vadd.f32 %v3314, %v3371
    %v3373 = vpop.f32.mrb[0].mxu0
    %3374 = vdwg.mxu0
    %3375 = vst [vmem:[#allocation2] sm:$0xff] %v3369
    %3376 = vst [vmem:[#allocation2 + $0x8] sm:$0xff] %v3372
    // Predicated region
    $region54: #{tpu_custom_call.1} parent=1 // pred_check
      _
    $region55: #{tpu_custom_call.1} parent=1 // pred_check_branch
      %3378 = sbr.rel (0) target = $region57
    $region56: #{tpu_custom_call.1} parent=1 // pred_region
      %s3380 = ssub.s32 256, 256
      %3381 = vsyncadd [#allocation3], %s3380
      %s3382 = sshll.u32 [#allocation2], 4
      %s3383 = int_to_ptr.vmem [resolvable:$true] %s3382
      %3388 = dma.vmem_to_hbm [thread:$0]  %s3383, 256, %s13, [#allocation3], 128, 128, 8
    $region57: #{tpu_custom_call.1} parent=1 // pred_fallthru
      _
    // Predicated region
    $region58: #{tpu_custom_call.1} parent=1 // pred_check
      _
    $region59: #{tpu_custom_call.1} parent=1 // pred_check_branch
      %3390 = sbr.rel (0) target = $region61
    $region60: #{tpu_custom_call.1} parent=1 // pred_region
      %s3392 = ssub.s32 256, 256
      %3393 = vsyncadd [#allocation5], %s3392
      %s3394 = sshll.u32 [#allocation4], 4
      %s3395 = int_to_ptr.vmem [resolvable:$true] %s3394
      %3400 = dma.vmem_to_hbm [thread:$0]  %s3395, 256, %s14, [#allocation5], 128, 128, 8
    $region61: #{tpu_custom_call.1} parent=1 // pred_fallthru
      _
    // Predicated region
    $region62: #{tpu_custom_call.1} parent=1 // pred_check
      _
    $region63: #{tpu_custom_call.1} parent=1 // pred_check_branch
      %3402 = sbr.rel (0) target = $region65
    $region64: #{tpu_custom_call.1} parent=1 // pred_region
      %3403 = dma.done [#allocation3], 256
    $region65: #{tpu_custom_call.1} parent=1 // pred_fallthru
      _
    // Predicated region
    $region66: #{tpu_custom_call.1} parent=1 // pred_check
      _
    $region67: #{tpu_custom_call.1} parent=1 // pred_check_branch
      %3405 = sbr.rel (0) target = $region69
    $region68: #{tpu_custom_call.1} parent=1 // pred_region
      %3406 = dma.done [#allocation5], 256
    $region69: #{tpu_custom_call.1} parent=1 // pred_fallthru
      _
    %3407 = vsyncpa [#allocation3], 1
    %3408 = vsyncpa [#allocation5], 1

</llo_original>
